<compile_context>
chip_gen: v5e
topology: v5e:2x2
jax: 0.10.0
libtpu: 0.0.40
codegen_flags: <defaults>
</compile_context>

<pallas_src>
import math
import jax
import jax.numpy as jnp
from jax.experimental import pallas as pl
from jax.experimental.pallas import tpu as pltpu

NUM_HEADS = 8
LN_EPS = 1e-5
FF_HIDDEN = 80   # fixed by the module: nn.Linear(E, 80)


def decoder_kernel(x_ref, enc_ref,
                   s1_w, s1_b, a1_iw, a1_ib, a1_ow, a1_ob,
                   s2_w, s2_b, a2_wq, a2_bq, a2_wkv, a2_bkv, a2_ow, a2_ob,
                   ln_w, ln_b, f1_w, f1_b, f2_w, f2_b,
                   o_ref):
    Nb, L, E = x_ref.shape
    S = enc_ref.shape[1]
    H = NUM_HEADS
    dh = E // H
    f32 = jnp.float32

    # Flatten the batch block into one (rows, E) slab for all row-wise ops.
    x = x_ref[...].reshape(Nb * L, E)        # (Nb*L, E)
    enc = enc_ref[...].reshape(Nb * S, E)    # (Nb*S, E)

    def linear(a, w_ref, b_ref):
        return jnp.dot(a, w_ref[...], preferred_element_type=f32) + b_ref[...]

    def layer_norm(a):
        mu = jnp.mean(a, axis=-1, keepdims=True)
        c = a - mu
        var = jnp.mean(c * c, axis=-1, keepdims=True)
        return c * jax.lax.rsqrt(var + LN_EPS) * ln_w[...] + ln_b[...]

    # Lane index, hoisted once (used to build per-head value masks).
    lane = jax.lax.broadcasted_iota(jnp.int32, (1, 1, E), 2)

    def attention(q, k, v, Lq, Lk, ow_ref, ob_ref):
        # q: (Nb*Lq, E) -- already q-scaled (scale folded into weights).
        # k, v: (Nb*Lk, E).
        q3 = q.reshape(Nb, Lq, E)
        k3 = k.reshape(Nb, Lk, E)
        v3 = v.reshape(Nb, Lk, E)
        ctx = jnp.zeros((Nb, Lq, E), f32)
        for h in range(H):                         # static unroll over heads
            lo = h * dh
            qh = q3[:, :, lo:lo + dh]              # (Nb, Lq, dh)
            kh = k3[:, :, lo:lo + dh]              # (Nb, Lk, dh)
            sc = jnp.einsum('nld,nsd->nls', qh, kh,
                            preferred_element_type=f32)          # (Nb, Lq, Lk)
            sc = sc - jnp.max(sc, axis=-1, keepdims=True)
            p = jnp.exp(sc)
            p = p * pl.reciprocal(jnp.sum(p, axis=-1, keepdims=True), approx=True)
            # Lane-masked P@V: each head contributes only its own dh columns of
            # the context, so the multi-head context assembles by summation
            # (no lane concatenation / sub-lane stores needed).
            vh = jnp.where((lane >= lo) & (lane < lo + dh), v3, 0.0)
            ctx = ctx + jnp.einsum('nls,nse->nle', p, vh,
                                   preferred_element_type=f32)   # (Nb, Lq, E)
        ctx2 = ctx.reshape(Nb * Lq, E)
        # Single fused out-projection (replaces 8 K=dh matmuls).
        return jnp.dot(ctx2, ow_ref[...], preferred_element_type=f32) + ob_ref[...]

    # ---------------- Decoder forward ----------------
    # Self-attention: q = k = v = state1(x); packed QKV projection.
    s1 = linear(x, s1_w, s1_b)                                        # (Nb*L, E)
    qkv1 = jnp.dot(s1, a1_iw[...], preferred_element_type=f32) + a1_ib[...]  # (Nb*L, 3E)
    o1 = attention(qkv1[:, 0:E], qkv1[:, E:2 * E], qkv1[:, 2 * E:3 * E],
                   L, L, a1_ow, a1_ob)
    o2 = layer_norm(o1 + x)

    # Cross-attention: q = state2(o2), k = v = encoder output; packed KV proj.
    s2 = linear(o2, s2_w, s2_b)
    q2 = jnp.dot(s2, a2_wq[...], preferred_element_type=f32) + a2_bq[...]    # (Nb*L, E)
    kv2 = jnp.dot(enc, a2_wkv[...], preferred_element_type=f32) + a2_bkv[...]  # (Nb*S, 2E)
    o3 = attention(q2, kv2[:, 0:E], kv2[:, E:2 * E], L, S, a2_ow, a2_ob)
    o4 = layer_norm(o2 + o3)

    # FeedForward + final Add&Norm.
    h1 = jnp.maximum(linear(o4, f1_w, f1_b), 0.0)
    o5 = linear(h1, f2_w, f2_b)
    o6 = layer_norm(o5 + o4)

    o_ref[...] = o6.reshape(Nb, L, E)


def decoder_forward(x_lne, enc_sne, params, block_n=None):
    """x_lne: (L, N, E), enc_sne: (S, N, E) -- PyTorch MHA layout."""
    x = jnp.transpose(x_lne, (1, 0, 2)).astype(jnp.float32)      # (N, L, E)
    enc = jnp.transpose(enc_sne, (1, 0, 2)).astype(jnp.float32)  # (N, S, E)
    N, L, E = x.shape
    S = enc.shape[1]
    dh = E // NUM_HEADS
    scale = 1.0 / math.sqrt(dh)

    # Batch block size: aim for >=128 slab rows (Nb*L) when N allows it.
    if block_n is None:
        block_n = min(N, max(1, 128 // max(L, 1)))
    Nb = max(1, block_n)
    n_pad = (-N) % Nb
    if n_pad:
        x = jnp.pad(x, ((0, n_pad), (0, 0), (0, 0)))
        enc = jnp.pad(enc, ((0, n_pad), (0, 0), (0, 0)))
    Np = N + n_pad

    # Kernel-ready params: fold the 1/sqrt(dh) q-scale into the q projection,
    # keep self-attn QKV packed, split cross-attn into q and packed kv.
    p = params
    a1_iw_s = p["a1_iw"].at[:, :E].multiply(scale)
    a1_ib_s = p["a1_ib"].at[:, :E].multiply(scale)
    plist = [p["s1_w"], p["s1_b"], a1_iw_s, a1_ib_s, p["a1_ow"], p["a1_ob"],
             p["s2_w"], p["s2_b"],
             p["a2_iw"][:, :E] * scale, p["a2_ib"][:, :E] * scale,   # q proj (scaled)
             p["a2_iw"][:, E:], p["a2_ib"][:, E:],                   # packed kv proj
             p["a2_ow"], p["a2_ob"],
             p["ln_w"], p["ln_b"], p["f1_w"], p["f1_b"], p["f2_w"], p["f2_b"]]

    grid = (Np // Nb,)
    out = pl.pallas_call(
        decoder_kernel,
        out_shape=jax.ShapeDtypeStruct((Np, L, E), jnp.float32),
        grid=grid,
        in_specs=[pl.BlockSpec((Nb, L, E), lambda n: (n, 0, 0)),
                  pl.BlockSpec((Nb, S, E), lambda n: (n, 0, 0))]
                 + [pl.BlockSpec(w.shape, lambda n: (0, 0)) for w in plist],
        out_specs=pl.BlockSpec((Nb, L, E), lambda n: (n, 0, 0)),
        # Batch blocks are independent -> "parallel" (v7x shards across both TCs).
        # NOTE: for large E, also set vmem_limit_bytes (params are double-buffered).
        compiler_params=pltpu.CompilerParams(dimension_semantics=("parallel",)),
    )(x, enc, *plist)
    out = out[:N]
    return jnp.transpose(out, (1, 0, 2))                             # back to (L, N, E)


def make_params(key, E, hidden=FF_HIDDEN, scale=0.1):
    ks = iter(jax.random.split(key, 16))

    def w(shape):
        return (scale * jax.random.normal(next(ks), shape)).astype(jnp.float32)

    return {
        "s1_w": w((E, E)), "s1_b": w((1, E)),
        "a1_iw": w((E, 3 * E)), "a1_ib": w((1, 3 * E)),
        "a1_ow": w((E, E)), "a1_ob": w((1, E)),
        "s2_w": w((E, E)), "s2_b": w((1, E)),
        "a2_iw": w((E, 3 * E)), "a2_ib": w((1, 3 * E)),
        "a2_ow": w((E, E)), "a2_ob": w((1, E)),
        "ln_w": jnp.ones((1, E), jnp.float32),    # LayerNorm default init
        "ln_b": jnp.zeros((1, E), jnp.float32),
        "f1_w": w((E, hidden)), "f1_b": w((1, hidden)),
        "f2_w": w((hidden, E)), "f2_b": w((1, E)),
    }


def reference_decoder(x, enc, p):
    """Pure-JAX reference on (N, L, E) / (N, S, E)."""
    E = x.shape[-1]
    H, dh = NUM_HEADS, x.shape[-1] // NUM_HEADS
    hp = jax.lax.Precision.HIGHEST

    def lin(a, w, b):
        return jnp.einsum("...i,ij->...j", a, w, precision=hp) + b

    def ln(a):
        mu = a.mean(-1, keepdims=True)
        c = a - mu
        var = (c * c).mean(-1, keepdims=True)
        return c / jnp.sqrt(var + LN_EPS) * p["ln_w"] + p["ln_b"]

    def mha(q_in, kv_in, iw, ib, ow, ob):
        q = lin(q_in, iw[:, :E], ib[:, :E]) * (dh ** -0.5)
        k = lin(kv_in, iw[:, E:2 * E], ib[:, E:2 * E])
        v = lin(kv_in, iw[:, 2 * E:], ib[:, 2 * E:])
        N, Lq, _ = q.shape
        Lk = k.shape[1]
        q = q.reshape(N, Lq, H, dh).transpose(0, 2, 1, 3)
        k = k.reshape(N, Lk, H, dh).transpose(0, 2, 1, 3)
        v = v.reshape(N, Lk, H, dh).transpose(0, 2, 1, 3)
        s = jnp.einsum("nhqd,nhkd->nhqk", q, k, precision=hp)
        a = jax.nn.softmax(s, axis=-1)
        o = jnp.einsum("nhqk,nhkd->nhqd", a, v, precision=hp)
        o = o.transpose(0, 2, 1, 3).reshape(N, Lq, E)
        return lin(o, ow, ob)

    s1 = lin(x, p["s1_w"], p["s1_b"])
    o1 = mha(s1, s1, p["a1_iw"], p["a1_ib"], p["a1_ow"], p["a1_ob"])
    o2 = ln(o1 + x)
    s2 = lin(o2, p["s2_w"], p["s2_b"])
    o3 = mha(s2, enc, p["a2_iw"], p["a2_ib"], p["a2_ow"], p["a2_ob"])
    o4 = ln(o2 + o3)
    h = jax.nn.relu(lin(o4, p["f1_w"], p["f1_b"]))
    o5 = lin(h, p["f2_w"], p["f2_b"])
    return ln(o5 + o4)


if __name__ == "__main__":
    # seq, enc-seq, batch, embedding (E % 8 heads == 0; E=128 keeps lanes dense)
    L, S, N, E = 8, 16, 8, 128
    key = jax.random.PRNGKey(0)
    kx, ke, kp = jax.random.split(key, 3)
    x = jax.random.normal(kx, (L, N, E), jnp.float32)
    enc = jax.random.normal(ke, (S, N, E), jnp.float32)
    params = make_params(kp, E)

    # block_n=4 -> grid=(2,), two batch elements... 4 elements per program step.
    out = decoder_forward(x, enc, params, block_n=4)
    out = jax.block_until_ready(out)

    ref = reference_decoder(jnp.transpose(x, (1, 0, 2)),
                            jnp.transpose(enc, (1, 0, 2)), params)
    ref = jnp.transpose(ref, (1, 0, 2))

    assert out.shape == (L, N, E)
    assert bool(jnp.isfinite(out).all())
    err = float(jnp.max(jnp.abs(out - ref)))
    # Tolerance covers MXU rounding and the approx EUP reciprocal in softmax.
    assert err < 2e-2, f"max abs err vs reference: {err}"
    print("KERNEL_OK")
</pallas_src>

<mosaic_0001>
module attributes {stable_mosaic.version = 11 : i64} {
  func.func @decoder_kernel(%arg0: i32, %arg1: memref<4x8x128xf32, #tpu.memory_space<vmem>>, %arg2: memref<4x16x128xf32, #tpu.memory_space<vmem>>, %arg3: memref<128x128xf32, #tpu.memory_space<vmem>>, %arg4: memref<1x128xf32, #tpu.memory_space<vmem>>, %arg5: memref<128x384xf32, #tpu.memory_space<vmem>>, %arg6: memref<1x384xf32, #tpu.memory_space<vmem>>, %arg7: memref<128x128xf32, #tpu.memory_space<vmem>>, %arg8: memref<1x128xf32, #tpu.memory_space<vmem>>, %arg9: memref<128x128xf32, #tpu.memory_space<vmem>>, %arg10: memref<1x128xf32, #tpu.memory_space<vmem>>, %arg11: memref<128x128xf32, #tpu.memory_space<vmem>>, %arg12: memref<1x128xf32, #tpu.memory_space<vmem>>, %arg13: memref<128x256xf32, #tpu.memory_space<vmem>>, %arg14: memref<1x256xf32, #tpu.memory_space<vmem>>, %arg15: memref<128x128xf32, #tpu.memory_space<vmem>>, %arg16: memref<1x128xf32, #tpu.memory_space<vmem>>, %arg17: memref<1x128xf32, #tpu.memory_space<vmem>>, %arg18: memref<1x128xf32, #tpu.memory_space<vmem>>, %arg19: memref<128x80xf32, #tpu.memory_space<vmem>>, %arg20: memref<1x80xf32, #tpu.memory_space<vmem>>, %arg21: memref<80x128xf32, #tpu.memory_space<vmem>>, %arg22: memref<1x128xf32, #tpu.memory_space<vmem>>, %arg23: memref<4x8x128xf32, #tpu.memory_space<vmem>>) attributes {dimension_semantics = [#tpu.dimension_semantics<parallel>], iteration_bounds = array<i64: 2>, scalar_prefetch = 0 : i64, scratch_operands = 0 : i64, tpu.core_type = #tpu.core_type<tc>, window_params = [{transform_indices = @transform_0, window_bounds = array<i64: 4, 8, 128>}, {transform_indices = @transform_1, window_bounds = array<i64: 4, 16, 128>}, {pipeline_mode = #tpu.pipeline_mode<synchronous>, transform_indices = @transform_2, window_bounds = array<i64: 128, 128>}, {pipeline_mode = #tpu.pipeline_mode<synchronous>, transform_indices = @transform_3, window_bounds = array<i64: 1, 128>}, {pipeline_mode = #tpu.pipeline_mode<synchronous>, transform_indices = @transform_4, window_bounds = array<i64: 128, 384>}, {pipeline_mode = #tpu.pipeline_mode<synchronous>, transform_indices = @transform_5, window_bounds = array<i64: 1, 384>}, {pipeline_mode = #tpu.pipeline_mode<synchronous>, transform_indices = @transform_6, window_bounds = array<i64: 128, 128>}, {pipeline_mode = #tpu.pipeline_mode<synchronous>, transform_indices = @transform_7, window_bounds = array<i64: 1, 128>}, {pipeline_mode = #tpu.pipeline_mode<synchronous>, transform_indices = @transform_8, window_bounds = array<i64: 128, 128>}, {pipeline_mode = #tpu.pipeline_mode<synchronous>, transform_indices = @transform_9, window_bounds = array<i64: 1, 128>}, {pipeline_mode = #tpu.pipeline_mode<synchronous>, transform_indices = @transform_10, window_bounds = array<i64: 128, 128>}, {pipeline_mode = #tpu.pipeline_mode<synchronous>, transform_indices = @transform_11, window_bounds = array<i64: 1, 128>}, {pipeline_mode = #tpu.pipeline_mode<synchronous>, transform_indices = @transform_12, window_bounds = array<i64: 128, 256>}, {pipeline_mode = #tpu.pipeline_mode<synchronous>, transform_indices = @transform_13, window_bounds = array<i64: 1, 256>}, {pipeline_mode = #tpu.pipeline_mode<synchronous>, transform_indices = @transform_14, window_bounds = array<i64: 128, 128>}, {pipeline_mode = #tpu.pipeline_mode<synchronous>, transform_indices = @transform_15, window_bounds = array<i64: 1, 128>}, {pipeline_mode = #tpu.pipeline_mode<synchronous>, transform_indices = @transform_16, window_bounds = array<i64: 1, 128>}, {pipeline_mode = #tpu.pipeline_mode<synchronous>, transform_indices = @transform_17, window_bounds = array<i64: 1, 128>}, {pipeline_mode = #tpu.pipeline_mode<synchronous>, transform_indices = @transform_18, window_bounds = array<i64: 128, 80>}, {pipeline_mode = #tpu.pipeline_mode<synchronous>, transform_indices = @transform_19, window_bounds = array<i64: 1, 80>}, {pipeline_mode = #tpu.pipeline_mode<synchronous>, transform_indices = @transform_20, window_bounds = array<i64: 80, 128>}, {pipeline_mode = #tpu.pipeline_mode<synchronous>, transform_indices = @transform_21, window_bounds = array<i64: 1, 128>}, {transform_indices = @transform_22, window_bounds = array<i64: 4, 8, 128>}]} {
    %c0 = arith.constant 0 : index
    %c0_0 = arith.constant 0 : index
    %c0_1 = arith.constant 0 : index
    %0 = vector.load %arg1[%c0, %c0_0, %c0_1] : memref<4x8x128xf32, #tpu.memory_space<vmem>>, vector<4x8x128xf32>
    %1 = vector.shape_cast %0 : vector<4x8x128xf32> to vector<32x128xf32>
    %c0_2 = arith.constant 0 : index
    %c0_3 = arith.constant 0 : index
    %c0_4 = arith.constant 0 : index
    %2 = vector.load %arg2[%c0_2, %c0_3, %c0_4] : memref<4x16x128xf32, #tpu.memory_space<vmem>>, vector<4x16x128xf32>
    %3 = vector.shape_cast %2 : vector<4x16x128xf32> to vector<64x128xf32>
    %4 = tpu.iota {dimensions = array<i32: 2>} : vector<1x1x128xi32>
    %c0_5 = arith.constant 0 : index
    %c0_6 = arith.constant 0 : index
    %5 = vector.load %arg3[%c0_5, %c0_6] : memref<128x128xf32, #tpu.memory_space<vmem>>, vector<128x128xf32>
    %cst = arith.constant dense<0.000000e+00> : vector<32x128xf32>
    %6 = tpu.matmul %1, %5, %cst {dimension_numbers = #tpu.dot_dimension_numbers<[1], [0], [0], [1], [0, 0, 1, 1], [], []>} : vector<32x128xf32>, vector<128x128xf32>, vector<32x128xf32> -> vector<32x128xf32>
    %c0_7 = arith.constant 0 : index
    %c0_8 = arith.constant 0 : index
    %7 = vector.load %arg4[%c0_7, %c0_8] : memref<1x128xf32, #tpu.memory_space<vmem>>, vector<1x128xf32>
    %8 = vector.broadcast %7 : vector<1x128xf32> to vector<32x128xf32>
    %9 = arith.addf %6, %8 : vector<32x128xf32>
    %c0_9 = arith.constant 0 : index
    %c0_10 = arith.constant 0 : index
    %10 = vector.load %arg5[%c0_9, %c0_10] : memref<128x384xf32, #tpu.memory_space<vmem>>, vector<128x384xf32>
    %cst_11 = arith.constant dense<0.000000e+00> : vector<32x384xf32>
    %11 = tpu.matmul %9, %10, %cst_11 {dimension_numbers = #tpu.dot_dimension_numbers<[1], [0], [0], [1], [0, 0, 1, 1], [], []>} : vector<32x128xf32>, vector<128x384xf32>, vector<32x384xf32> -> vector<32x384xf32>
    %c0_12 = arith.constant 0 : index
    %c0_13 = arith.constant 0 : index
    %12 = vector.load %arg6[%c0_12, %c0_13] : memref<1x384xf32, #tpu.memory_space<vmem>>, vector<1x384xf32>
    %13 = vector.broadcast %12 : vector<1x384xf32> to vector<32x384xf32>
    %14 = arith.addf %11, %13 : vector<32x384xf32>
    %15 = vector.extract_strided_slice %14 {offsets = [0, 0], sizes = [32, 128], strides = [1, 1]} : vector<32x384xf32> to vector<32x128xf32>
    %16 = vector.extract_strided_slice %14 {offsets = [0, 128], sizes = [32, 128], strides = [1, 1]} : vector<32x384xf32> to vector<32x128xf32>
    %17 = vector.extract_strided_slice %14 {offsets = [0, 256], sizes = [32, 128], strides = [1, 1]} : vector<32x384xf32> to vector<32x128xf32>
    %18 = vector.shape_cast %15 : vector<32x128xf32> to vector<4x8x128xf32>
    %19 = vector.shape_cast %16 : vector<32x128xf32> to vector<4x8x128xf32>
    %20 = vector.shape_cast %17 : vector<32x128xf32> to vector<4x8x128xf32>
    %cst_14 = arith.constant 0.000000e+00 : f32
    %21 = vector.broadcast %cst_14 : f32 to vector<4x8x128xf32>
    %22 = vector.extract_strided_slice %18 {offsets = [0, 0, 0], sizes = [4, 8, 16], strides = [1, 1, 1]} : vector<4x8x128xf32> to vector<4x8x16xf32>
    %23 = vector.extract_strided_slice %19 {offsets = [0, 0, 0], sizes = [4, 8, 16], strides = [1, 1, 1]} : vector<4x8x128xf32> to vector<4x8x16xf32>
    "tpu.trace_start"() <{level = 10 : i32, message = "nld,nsd->nls"}> : () -> ()
    %cst_15 = arith.constant dense<0.000000e+00> : vector<4x8x8xf32>
    %24 = tpu.matmul %22, %23, %cst_15 {dimension_numbers = #tpu.dot_dimension_numbers<[2], [2], [1], [1], [0, 0, 0, 1, 1, 1], [0], [0]>} : vector<4x8x16xf32>, vector<4x8x16xf32>, vector<4x8x8xf32> -> vector<4x8x8xf32>
    "tpu.trace_stop"() : () -> ()
    %cst_16 = arith.constant dense<0xFF800000> : vector<4x8xf32>
    %25 = vector.multi_reduction <maximumf>, %24, %cst_16 [2] : vector<4x8x8xf32> to vector<4x8xf32>
    %26 = vector.shape_cast %25 : vector<4x8xf32> to vector<4x8x1xf32>
    %27 = vector.broadcast %26 : vector<4x8x1xf32> to vector<4x8x8xf32>
    %28 = arith.subf %24, %27 : vector<4x8x8xf32>
    %29 = math.exp %28 : vector<4x8x8xf32>
    %cst_17 = arith.constant dense<0.000000e+00> : vector<4x8xf32>
    %30 = vector.multi_reduction <add>, %29, %cst_17 [2] : vector<4x8x8xf32> to vector<4x8xf32>
    %31 = vector.shape_cast %30 : vector<4x8xf32> to vector<4x8x1xf32>
    %32 = tpu.reciprocal %31 {approx = true} : vector<4x8x1xf32> -> vector<4x8x1xf32>
    %33 = vector.broadcast %32 : vector<4x8x1xf32> to vector<4x8x8xf32>
    %34 = arith.mulf %29, %33 : vector<4x8x8xf32>
    %c0_i32 = arith.constant 0 : i32
    %35 = vector.broadcast %c0_i32 : i32 to vector<1x1x128xi32>
    %36 = arith.cmpi sge, %4, %35 : vector<1x1x128xi32>
    %c16_i32 = arith.constant 16 : i32
    %37 = vector.broadcast %c16_i32 : i32 to vector<1x1x128xi32>
    %38 = arith.cmpi slt, %4, %37 : vector<1x1x128xi32>
    %39 = arith.andi %36, %38 : vector<1x1x128xi1>
    %cst_18 = arith.constant 0.000000e+00 : f32
    %40 = vector.shape_cast %39 : vector<1x1x128xi1> to vector<1x1x128xi1>
    %41 = vector.broadcast %40 : vector<1x1x128xi1> to vector<4x8x128xi1>
    %42 = vector.broadcast %cst_18 : f32 to vector<4x8x128xf32>
    %43 = arith.select %41, %20, %42 : vector<4x8x128xi1>, vector<4x8x128xf32>
    "tpu.trace_start"() <{level = 10 : i32, message = "nls,nse->nle"}> : () -> ()
    %cst_19 = arith.constant dense<0.000000e+00> : vector<4x8x128xf32>
    %44 = tpu.matmul %34, %43, %cst_19 {dimension_numbers = #tpu.dot_dimension_numbers<[2], [1], [1], [2], [0, 0, 0, 1, 1, 2], [0], [0]>} : vector<4x8x8xf32>, vector<4x8x128xf32>, vector<4x8x128xf32> -> vector<4x8x128xf32>
    "tpu.trace_stop"() : () -> ()
    %45 = arith.addf %21, %44 : vector<4x8x128xf32>
    %46 = vector.extract_strided_slice %18 {offsets = [0, 0, 16], sizes = [4, 8, 16], strides = [1, 1, 1]} : vector<4x8x128xf32> to vector<4x8x16xf32>
    %47 = vector.extract_strided_slice %19 {offsets = [0, 0, 16], sizes = [4, 8, 16], strides = [1, 1, 1]} : vector<4x8x128xf32> to vector<4x8x16xf32>
    "tpu.trace_start"() <{level = 10 : i32, message = "nld,nsd->nls"}> : () -> ()
    %cst_20 = arith.constant dense<0.000000e+00> : vector<4x8x8xf32>
    %48 = tpu.matmul %46, %47, %cst_20 {dimension_numbers = #tpu.dot_dimension_numbers<[2], [2], [1], [1], [0, 0, 0, 1, 1, 1], [0], [0]>} : vector<4x8x16xf32>, vector<4x8x16xf32>, vector<4x8x8xf32> -> vector<4x8x8xf32>
    "tpu.trace_stop"() : () -> ()
    %cst_21 = arith.constant dense<0xFF800000> : vector<4x8xf32>
    %49 = vector.multi_reduction <maximumf>, %48, %cst_21 [2] : vector<4x8x8xf32> to vector<4x8xf32>
    %50 = vector.shape_cast %49 : vector<4x8xf32> to vector<4x8x1xf32>
    %51 = vector.broadcast %50 : vector<4x8x1xf32> to vector<4x8x8xf32>
    %52 = arith.subf %48, %51 : vector<4x8x8xf32>
    %53 = math.exp %52 : vector<4x8x8xf32>
    %cst_22 = arith.constant dense<0.000000e+00> : vector<4x8xf32>
    %54 = vector.multi_reduction <add>, %53, %cst_22 [2] : vector<4x8x8xf32> to vector<4x8xf32>
    %55 = vector.shape_cast %54 : vector<4x8xf32> to vector<4x8x1xf32>
    %56 = tpu.reciprocal %55 {approx = true} : vector<4x8x1xf32> -> vector<4x8x1xf32>
    %57 = vector.broadcast %56 : vector<4x8x1xf32> to vector<4x8x8xf32>
    %58 = arith.mulf %53, %57 : vector<4x8x8xf32>
    %c16_i32_23 = arith.constant 16 : i32
    %59 = vector.broadcast %c16_i32_23 : i32 to vector<1x1x128xi32>
    %60 = arith.cmpi sge, %4, %59 : vector<1x1x128xi32>
    %c32_i32 = arith.constant 32 : i32
    %61 = vector.broadcast %c32_i32 : i32 to vector<1x1x128xi32>
    %62 = arith.cmpi slt, %4, %61 : vector<1x1x128xi32>
    %63 = arith.andi %60, %62 : vector<1x1x128xi1>
    %cst_24 = arith.constant 0.000000e+00 : f32
    %64 = vector.shape_cast %63 : vector<1x1x128xi1> to vector<1x1x128xi1>
    %65 = vector.broadcast %64 : vector<1x1x128xi1> to vector<4x8x128xi1>
    %66 = vector.broadcast %cst_24 : f32 to vector<4x8x128xf32>
    %67 = arith.select %65, %20, %66 : vector<4x8x128xi1>, vector<4x8x128xf32>
    "tpu.trace_start"() <{level = 10 : i32, message = "nls,nse->nle"}> : () -> ()
    %cst_25 = arith.constant dense<0.000000e+00> : vector<4x8x128xf32>
    %68 = tpu.matmul %58, %67, %cst_25 {dimension_numbers = #tpu.dot_dimension_numbers<[2], [1], [1], [2], [0, 0, 0, 1, 1, 2], [0], [0]>} : vector<4x8x8xf32>, vector<4x8x128xf32>, vector<4x8x128xf32> -> vector<4x8x128xf32>
    "tpu.trace_stop"() : () -> ()
    %69 = arith.addf %45, %68 : vector<4x8x128xf32>
    %70 = vector.extract_strided_slice %18 {offsets = [0, 0, 32], sizes = [4, 8, 16], strides = [1, 1, 1]} : vector<4x8x128xf32> to vector<4x8x16xf32>
    %71 = vector.extract_strided_slice %19 {offsets = [0, 0, 32], sizes = [4, 8, 16], strides = [1, 1, 1]} : vector<4x8x128xf32> to vector<4x8x16xf32>
    "tpu.trace_start"() <{level = 10 : i32, message = "nld,nsd->nls"}> : () -> ()
    %cst_26 = arith.constant dense<0.000000e+00> : vector<4x8x8xf32>
    %72 = tpu.matmul %70, %71, %cst_26 {dimension_numbers = #tpu.dot_dimension_numbers<[2], [2], [1], [1], [0, 0, 0, 1, 1, 1], [0], [0]>} : vector<4x8x16xf32>, vector<4x8x16xf32>, vector<4x8x8xf32> -> vector<4x8x8xf32>
    "tpu.trace_stop"() : () -> ()
    %cst_27 = arith.constant dense<0xFF800000> : vector<4x8xf32>
    %73 = vector.multi_reduction <maximumf>, %72, %cst_27 [2] : vector<4x8x8xf32> to vector<4x8xf32>
    %74 = vector.shape_cast %73 : vector<4x8xf32> to vector<4x8x1xf32>
    %75 = vector.broadcast %74 : vector<4x8x1xf32> to vector<4x8x8xf32>
    %76 = arith.subf %72, %75 : vector<4x8x8xf32>
    %77 = math.exp %76 : vector<4x8x8xf32>
    %cst_28 = arith.constant dense<0.000000e+00> : vector<4x8xf32>
    %78 = vector.multi_reduction <add>, %77, %cst_28 [2] : vector<4x8x8xf32> to vector<4x8xf32>
    %79 = vector.shape_cast %78 : vector<4x8xf32> to vector<4x8x1xf32>
    %80 = tpu.reciprocal %79 {approx = true} : vector<4x8x1xf32> -> vector<4x8x1xf32>
    %81 = vector.broadcast %80 : vector<4x8x1xf32> to vector<4x8x8xf32>
    %82 = arith.mulf %77, %81 : vector<4x8x8xf32>
    %c32_i32_29 = arith.constant 32 : i32
    %83 = vector.broadcast %c32_i32_29 : i32 to vector<1x1x128xi32>
    %84 = arith.cmpi sge, %4, %83 : vector<1x1x128xi32>
    %c48_i32 = arith.constant 48 : i32
    %85 = vector.broadcast %c48_i32 : i32 to vector<1x1x128xi32>
    %86 = arith.cmpi slt, %4, %85 : vector<1x1x128xi32>
    %87 = arith.andi %84, %86 : vector<1x1x128xi1>
    %cst_30 = arith.constant 0.000000e+00 : f32
    %88 = vector.shape_cast %87 : vector<1x1x128xi1> to vector<1x1x128xi1>
    %89 = vector.broadcast %88 : vector<1x1x128xi1> to vector<4x8x128xi1>
    %90 = vector.broadcast %cst_30 : f32 to vector<4x8x128xf32>
    %91 = arith.select %89, %20, %90 : vector<4x8x128xi1>, vector<4x8x128xf32>
    "tpu.trace_start"() <{level = 10 : i32, message = "nls,nse->nle"}> : () -> ()
    %cst_31 = arith.constant dense<0.000000e+00> : vector<4x8x128xf32>
    %92 = tpu.matmul %82, %91, %cst_31 {dimension_numbers = #tpu.dot_dimension_numbers<[2], [1], [1], [2], [0, 0, 0, 1, 1, 2], [0], [0]>} : vector<4x8x8xf32>, vector<4x8x128xf32>, vector<4x8x128xf32> -> vector<4x8x128xf32>
    "tpu.trace_stop"() : () -> ()
    %93 = arith.addf %69, %92 : vector<4x8x128xf32>
    %94 = vector.extract_strided_slice %18 {offsets = [0, 0, 48], sizes = [4, 8, 16], strides = [1, 1, 1]} : vector<4x8x128xf32> to vector<4x8x16xf32>
    %95 = vector.extract_strided_slice %19 {offsets = [0, 0, 48], sizes = [4, 8, 16], strides = [1, 1, 1]} : vector<4x8x128xf32> to vector<4x8x16xf32>
    "tpu.trace_start"() <{level = 10 : i32, message = "nld,nsd->nls"}> : () -> ()
    %cst_32 = arith.constant dense<0.000000e+00> : vector<4x8x8xf32>
    %96 = tpu.matmul %94, %95, %cst_32 {dimension_numbers = #tpu.dot_dimension_numbers<[2], [2], [1], [1], [0, 0, 0, 1, 1, 1], [0], [0]>} : vector<4x8x16xf32>, vector<4x8x16xf32>, vector<4x8x8xf32> -> vector<4x8x8xf32>
    "tpu.trace_stop"() : () -> ()
    %cst_33 = arith.constant dense<0xFF800000> : vector<4x8xf32>
    %97 = vector.multi_reduction <maximumf>, %96, %cst_33 [2] : vector<4x8x8xf32> to vector<4x8xf32>
    %98 = vector.shape_cast %97 : vector<4x8xf32> to vector<4x8x1xf32>
    %99 = vector.broadcast %98 : vector<4x8x1xf32> to vector<4x8x8xf32>
    %100 = arith.subf %96, %99 : vector<4x8x8xf32>
    %101 = math.exp %100 : vector<4x8x8xf32>
    %cst_34 = arith.constant dense<0.000000e+00> : vector<4x8xf32>
    %102 = vector.multi_reduction <add>, %101, %cst_34 [2] : vector<4x8x8xf32> to vector<4x8xf32>
    %103 = vector.shape_cast %102 : vector<4x8xf32> to vector<4x8x1xf32>
    %104 = tpu.reciprocal %103 {approx = true} : vector<4x8x1xf32> -> vector<4x8x1xf32>
    %105 = vector.broadcast %104 : vector<4x8x1xf32> to vector<4x8x8xf32>
    %106 = arith.mulf %101, %105 : vector<4x8x8xf32>
    %c48_i32_35 = arith.constant 48 : i32
    %107 = vector.broadcast %c48_i32_35 : i32 to vector<1x1x128xi32>
    %108 = arith.cmpi sge, %4, %107 : vector<1x1x128xi32>
    %c64_i32 = arith.constant 64 : i32
    %109 = vector.broadcast %c64_i32 : i32 to vector<1x1x128xi32>
    %110 = arith.cmpi slt, %4, %109 : vector<1x1x128xi32>
    %111 = arith.andi %108, %110 : vector<1x1x128xi1>
    %cst_36 = arith.constant 0.000000e+00 : f32
    %112 = vector.shape_cast %111 : vector<1x1x128xi1> to vector<1x1x128xi1>
    %113 = vector.broadcast %112 : vector<1x1x128xi1> to vector<4x8x128xi1>
    %114 = vector.broadcast %cst_36 : f32 to vector<4x8x128xf32>
    %115 = arith.select %113, %20, %114 : vector<4x8x128xi1>, vector<4x8x128xf32>
    "tpu.trace_start"() <{level = 10 : i32, message = "nls,nse->nle"}> : () -> ()
    %cst_37 = arith.constant dense<0.000000e+00> : vector<4x8x128xf32>
    %116 = tpu.matmul %106, %115, %cst_37 {dimension_numbers = #tpu.dot_dimension_numbers<[2], [1], [1], [2], [0, 0, 0, 1, 1, 2], [0], [0]>} : vector<4x8x8xf32>, vector<4x8x128xf32>, vector<4x8x128xf32> -> vector<4x8x128xf32>
    "tpu.trace_stop"() : () -> ()
    %117 = arith.addf %93, %116 : vector<4x8x128xf32>
    %118 = vector.extract_strided_slice %18 {offsets = [0, 0, 64], sizes = [4, 8, 16], strides = [1, 1, 1]} : vector<4x8x128xf32> to vector<4x8x16xf32>
    %119 = vector.extract_strided_slice %19 {offsets = [0, 0, 64], sizes = [4, 8, 16], strides = [1, 1, 1]} : vector<4x8x128xf32> to vector<4x8x16xf32>
    "tpu.trace_start"() <{level = 10 : i32, message = "nld,nsd->nls"}> : () -> ()
    %cst_38 = arith.constant dense<0.000000e+00> : vector<4x8x8xf32>
    %120 = tpu.matmul %118, %119, %cst_38 {dimension_numbers = #tpu.dot_dimension_numbers<[2], [2], [1], [1], [0, 0, 0, 1, 1, 1], [0], [0]>} : vector<4x8x16xf32>, vector<4x8x16xf32>, vector<4x8x8xf32> -> vector<4x8x8xf32>
    "tpu.trace_stop"() : () -> ()
    %cst_39 = arith.constant dense<0xFF800000> : vector<4x8xf32>
    %121 = vector.multi_reduction <maximumf>, %120, %cst_39 [2] : vector<4x8x8xf32> to vector<4x8xf32>
    %122 = vector.shape_cast %121 : vector<4x8xf32> to vector<4x8x1xf32>
    %123 = vector.broadcast %122 : vector<4x8x1xf32> to vector<4x8x8xf32>
    %124 = arith.subf %120, %123 : vector<4x8x8xf32>
    %125 = math.exp %124 : vector<4x8x8xf32>
    %cst_40 = arith.constant dense<0.000000e+00> : vector<4x8xf32>
    %126 = vector.multi_reduction <add>, %125, %cst_40 [2] : vector<4x8x8xf32> to vector<4x8xf32>
    %127 = vector.shape_cast %126 : vector<4x8xf32> to vector<4x8x1xf32>
    %128 = tpu.reciprocal %127 {approx = true} : vector<4x8x1xf32> -> vector<4x8x1xf32>
    %129 = vector.broadcast %128 : vector<4x8x1xf32> to vector<4x8x8xf32>
    %130 = arith.mulf %125, %129 : vector<4x8x8xf32>
    %c64_i32_41 = arith.constant 64 : i32
    %131 = vector.broadcast %c64_i32_41 : i32 to vector<1x1x128xi32>
    %132 = arith.cmpi sge, %4, %131 : vector<1x1x128xi32>
    %c80_i32 = arith.constant 80 : i32
    %133 = vector.broadcast %c80_i32 : i32 to vector<1x1x128xi32>
    %134 = arith.cmpi slt, %4, %133 : vector<1x1x128xi32>
    %135 = arith.andi %132, %134 : vector<1x1x128xi1>
    %cst_42 = arith.constant 0.000000e+00 : f32
    %136 = vector.shape_cast %135 : vector<1x1x128xi1> to vector<1x1x128xi1>
    %137 = vector.broadcast %136 : vector<1x1x128xi1> to vector<4x8x128xi1>
    %138 = vector.broadcast %cst_42 : f32 to vector<4x8x128xf32>
    %139 = arith.select %137, %20, %138 : vector<4x8x128xi1>, vector<4x8x128xf32>
    "tpu.trace_start"() <{level = 10 : i32, message = "nls,nse->nle"}> : () -> ()
    %cst_43 = arith.constant dense<0.000000e+00> : vector<4x8x128xf32>
    %140 = tpu.matmul %130, %139, %cst_43 {dimension_numbers = #tpu.dot_dimension_numbers<[2], [1], [1], [2], [0, 0, 0, 1, 1, 2], [0], [0]>} : vector<4x8x8xf32>, vector<4x8x128xf32>, vector<4x8x128xf32> -> vector<4x8x128xf32>
    "tpu.trace_stop"() : () -> ()
    %141 = arith.addf %117, %140 : vector<4x8x128xf32>
    %142 = vector.extract_strided_slice %18 {offsets = [0, 0, 80], sizes = [4, 8, 16], strides = [1, 1, 1]} : vector<4x8x128xf32> to vector<4x8x16xf32>
    %143 = vector.extract_strided_slice %19 {offsets = [0, 0, 80], sizes = [4, 8, 16], strides = [1, 1, 1]} : vector<4x8x128xf32> to vector<4x8x16xf32>
    "tpu.trace_start"() <{level = 10 : i32, message = "nld,nsd->nls"}> : () -> ()
    %cst_44 = arith.constant dense<0.000000e+00> : vector<4x8x8xf32>
    %144 = tpu.matmul %142, %143, %cst_44 {dimension_numbers = #tpu.dot_dimension_numbers<[2], [2], [1], [1], [0, 0, 0, 1, 1, 1], [0], [0]>} : vector<4x8x16xf32>, vector<4x8x16xf32>, vector<4x8x8xf32> -> vector<4x8x8xf32>
    "tpu.trace_stop"() : () -> ()
    %cst_45 = arith.constant dense<0xFF800000> : vector<4x8xf32>
    %145 = vector.multi_reduction <maximumf>, %144, %cst_45 [2] : vector<4x8x8xf32> to vector<4x8xf32>
    %146 = vector.shape_cast %145 : vector<4x8xf32> to vector<4x8x1xf32>
    %147 = vector.broadcast %146 : vector<4x8x1xf32> to vector<4x8x8xf32>
    %148 = arith.subf %144, %147 : vector<4x8x8xf32>
    %149 = math.exp %148 : vector<4x8x8xf32>
    %cst_46 = arith.constant dense<0.000000e+00> : vector<4x8xf32>
    %150 = vector.multi_reduction <add>, %149, %cst_46 [2] : vector<4x8x8xf32> to vector<4x8xf32>
    %151 = vector.shape_cast %150 : vector<4x8xf32> to vector<4x8x1xf32>
    %152 = tpu.reciprocal %151 {approx = true} : vector<4x8x1xf32> -> vector<4x8x1xf32>
    %153 = vector.broadcast %152 : vector<4x8x1xf32> to vector<4x8x8xf32>
    %154 = arith.mulf %149, %153 : vector<4x8x8xf32>
    %c80_i32_47 = arith.constant 80 : i32
    %155 = vector.broadcast %c80_i32_47 : i32 to vector<1x1x128xi32>
    %156 = arith.cmpi sge, %4, %155 : vector<1x1x128xi32>
    %c96_i32 = arith.constant 96 : i32
    %157 = vector.broadcast %c96_i32 : i32 to vector<1x1x128xi32>
    %158 = arith.cmpi slt, %4, %157 : vector<1x1x128xi32>
    %159 = arith.andi %156, %158 : vector<1x1x128xi1>
    %cst_48 = arith.constant 0.000000e+00 : f32
    %160 = vector.shape_cast %159 : vector<1x1x128xi1> to vector<1x1x128xi1>
    %161 = vector.broadcast %160 : vector<1x1x128xi1> to vector<4x8x128xi1>
    %162 = vector.broadcast %cst_48 : f32 to vector<4x8x128xf32>
    %163 = arith.select %161, %20, %162 : vector<4x8x128xi1>, vector<4x8x128xf32>
    "tpu.trace_start"() <{level = 10 : i32, message = "nls,nse->nle"}> : () -> ()
    %cst_49 = arith.constant dense<0.000000e+00> : vector<4x8x128xf32>
    %164 = tpu.matmul %154, %163, %cst_49 {dimension_numbers = #tpu.dot_dimension_numbers<[2], [1], [1], [2], [0, 0, 0, 1, 1, 2], [0], [0]>} : vector<4x8x8xf32>, vector<4x8x128xf32>, vector<4x8x128xf32> -> vector<4x8x128xf32>
    "tpu.trace_stop"() : () -> ()
    %165 = arith.addf %141, %164 : vector<4x8x128xf32>
    %166 = vector.extract_strided_slice %18 {offsets = [0, 0, 96], sizes = [4, 8, 16], strides = [1, 1, 1]} : vector<4x8x128xf32> to vector<4x8x16xf32>
    %167 = vector.extract_strided_slice %19 {offsets = [0, 0, 96], sizes = [4, 8, 16], strides = [1, 1, 1]} : vector<4x8x128xf32> to vector<4x8x16xf32>
    "tpu.trace_start"() <{level = 10 : i32, message = "nld,nsd->nls"}> : () -> ()
    %cst_50 = arith.constant dense<0.000000e+00> : vector<4x8x8xf32>
    %168 = tpu.matmul %166, %167, %cst_50 {dimension_numbers = #tpu.dot_dimension_numbers<[2], [2], [1], [1], [0, 0, 0, 1, 1, 1], [0], [0]>} : vector<4x8x16xf32>, vector<4x8x16xf32>, vector<4x8x8xf32> -> vector<4x8x8xf32>
    "tpu.trace_stop"() : () -> ()
    %cst_51 = arith.constant dense<0xFF800000> : vector<4x8xf32>
    %169 = vector.multi_reduction <maximumf>, %168, %cst_51 [2] : vector<4x8x8xf32> to vector<4x8xf32>
    %170 = vector.shape_cast %169 : vector<4x8xf32> to vector<4x8x1xf32>
    %171 = vector.broadcast %170 : vector<4x8x1xf32> to vector<4x8x8xf32>
    %172 = arith.subf %168, %171 : vector<4x8x8xf32>
    %173 = math.exp %172 : vector<4x8x8xf32>
    %cst_52 = arith.constant dense<0.000000e+00> : vector<4x8xf32>
    %174 = vector.multi_reduction <add>, %173, %cst_52 [2] : vector<4x8x8xf32> to vector<4x8xf32>
    %175 = vector.shape_cast %174 : vector<4x8xf32> to vector<4x8x1xf32>
    %176 = tpu.reciprocal %175 {approx = true} : vector<4x8x1xf32> -> vector<4x8x1xf32>
    %177 = vector.broadcast %176 : vector<4x8x1xf32> to vector<4x8x8xf32>
    %178 = arith.mulf %173, %177 : vector<4x8x8xf32>
    %c96_i32_53 = arith.constant 96 : i32
    %179 = vector.broadcast %c96_i32_53 : i32 to vector<1x1x128xi32>
    %180 = arith.cmpi sge, %4, %179 : vector<1x1x128xi32>
    %c112_i32 = arith.constant 112 : i32
    %181 = vector.broadcast %c112_i32 : i32 to vector<1x1x128xi32>
    %182 = arith.cmpi slt, %4, %181 : vector<1x1x128xi32>
    %183 = arith.andi %180, %182 : vector<1x1x128xi1>
    %cst_54 = arith.constant 0.000000e+00 : f32
    %184 = vector.shape_cast %183 : vector<1x1x128xi1> to vector<1x1x128xi1>
    %185 = vector.broadcast %184 : vector<1x1x128xi1> to vector<4x8x128xi1>
    %186 = vector.broadcast %cst_54 : f32 to vector<4x8x128xf32>
    %187 = arith.select %185, %20, %186 : vector<4x8x128xi1>, vector<4x8x128xf32>
    "tpu.trace_start"() <{level = 10 : i32, message = "nls,nse->nle"}> : () -> ()
    %cst_55 = arith.constant dense<0.000000e+00> : vector<4x8x128xf32>
    %188 = tpu.matmul %178, %187, %cst_55 {dimension_numbers = #tpu.dot_dimension_numbers<[2], [1], [1], [2], [0, 0, 0, 1, 1, 2], [0], [0]>} : vector<4x8x8xf32>, vector<4x8x128xf32>, vector<4x8x128xf32> -> vector<4x8x128xf32>
    "tpu.trace_stop"() : () -> ()
    %189 = arith.addf %165, %188 : vector<4x8x128xf32>
    %190 = vector.extract_strided_slice %18 {offsets = [0, 0, 112], sizes = [4, 8, 16], strides = [1, 1, 1]} : vector<4x8x128xf32> to vector<4x8x16xf32>
    %191 = vector.extract_strided_slice %19 {offsets = [0, 0, 112], sizes = [4, 8, 16], strides = [1, 1, 1]} : vector<4x8x128xf32> to vector<4x8x16xf32>
    "tpu.trace_start"() <{level = 10 : i32, message = "nld,nsd->nls"}> : () -> ()
    %cst_56 = arith.constant dense<0.000000e+00> : vector<4x8x8xf32>
    %192 = tpu.matmul %190, %191, %cst_56 {dimension_numbers = #tpu.dot_dimension_numbers<[2], [2], [1], [1], [0, 0, 0, 1, 1, 1], [0], [0]>} : vector<4x8x16xf32>, vector<4x8x16xf32>, vector<4x8x8xf32> -> vector<4x8x8xf32>
    "tpu.trace_stop"() : () -> ()
    %cst_57 = arith.constant dense<0xFF800000> : vector<4x8xf32>
    %193 = vector.multi_reduction <maximumf>, %192, %cst_57 [2] : vector<4x8x8xf32> to vector<4x8xf32>
    %194 = vector.shape_cast %193 : vector<4x8xf32> to vector<4x8x1xf32>
    %195 = vector.broadcast %194 : vector<4x8x1xf32> to vector<4x8x8xf32>
    %196 = arith.subf %192, %195 : vector<4x8x8xf32>
    %197 = math.exp %196 : vector<4x8x8xf32>
    %cst_58 = arith.constant dense<0.000000e+00> : vector<4x8xf32>
    %198 = vector.multi_reduction <add>, %197, %cst_58 [2] : vector<4x8x8xf32> to vector<4x8xf32>
    %199 = vector.shape_cast %198 : vector<4x8xf32> to vector<4x8x1xf32>
    %200 = tpu.reciprocal %199 {approx = true} : vector<4x8x1xf32> -> vector<4x8x1xf32>
    %201 = vector.broadcast %200 : vector<4x8x1xf32> to vector<4x8x8xf32>
    %202 = arith.mulf %197, %201 : vector<4x8x8xf32>
    %c112_i32_59 = arith.constant 112 : i32
    %203 = vector.broadcast %c112_i32_59 : i32 to vector<1x1x128xi32>
    %204 = arith.cmpi sge, %4, %203 : vector<1x1x128xi32>
    %c128_i32 = arith.constant 128 : i32
    %205 = vector.broadcast %c128_i32 : i32 to vector<1x1x128xi32>
    %206 = arith.cmpi slt, %4, %205 : vector<1x1x128xi32>
    %207 = arith.andi %204, %206 : vector<1x1x128xi1>
    %cst_60 = arith.constant 0.000000e+00 : f32
    %208 = vector.shape_cast %207 : vector<1x1x128xi1> to vector<1x1x128xi1>
    %209 = vector.broadcast %208 : vector<1x1x128xi1> to vector<4x8x128xi1>
    %210 = vector.broadcast %cst_60 : f32 to vector<4x8x128xf32>
    %211 = arith.select %209, %20, %210 : vector<4x8x128xi1>, vector<4x8x128xf32>
    "tpu.trace_start"() <{level = 10 : i32, message = "nls,nse->nle"}> : () -> ()
    %cst_61 = arith.constant dense<0.000000e+00> : vector<4x8x128xf32>
    %212 = tpu.matmul %202, %211, %cst_61 {dimension_numbers = #tpu.dot_dimension_numbers<[2], [1], [1], [2], [0, 0, 0, 1, 1, 2], [0], [0]>} : vector<4x8x8xf32>, vector<4x8x128xf32>, vector<4x8x128xf32> -> vector<4x8x128xf32>
    "tpu.trace_stop"() : () -> ()
    %213 = arith.addf %189, %212 : vector<4x8x128xf32>
    %214 = vector.shape_cast %213 : vector<4x8x128xf32> to vector<32x128xf32>
    %c0_62 = arith.constant 0 : index
    %c0_63 = arith.constant 0 : index
    %215 = vector.load %arg7[%c0_62, %c0_63] : memref<128x128xf32, #tpu.memory_space<vmem>>, vector<128x128xf32>
    %cst_64 = arith.constant dense<0.000000e+00> : vector<32x128xf32>
    %216 = tpu.matmul %214, %215, %cst_64 {dimension_numbers = #tpu.dot_dimension_numbers<[1], [0], [0], [1], [0, 0, 1, 1], [], []>} : vector<32x128xf32>, vector<128x128xf32>, vector<32x128xf32> -> vector<32x128xf32>
    %c0_65 = arith.constant 0 : index
    %c0_66 = arith.constant 0 : index
    %217 = vector.load %arg8[%c0_65, %c0_66] : memref<1x128xf32, #tpu.memory_space<vmem>>, vector<1x128xf32>
    %218 = vector.broadcast %217 : vector<1x128xf32> to vector<32x128xf32>
    %219 = arith.addf %216, %218 : vector<32x128xf32>
    %220 = arith.addf %219, %1 : vector<32x128xf32>
    %cst_67 = arith.constant dense<0.000000e+00> : vector<32xf32>
    %221 = vector.multi_reduction <add>, %220, %cst_67 [1] : vector<32x128xf32> to vector<32xf32>
    %222 = vector.shape_cast %221 : vector<32xf32> to vector<32x1xf32>
    %cst_68 = arith.constant 1.280000e+02 : f32
    %223 = vector.broadcast %cst_68 : f32 to vector<32x1xf32>
    %224 = arith.divf %222, %223 : vector<32x1xf32>
    %225 = vector.broadcast %224 : vector<32x1xf32> to vector<32x128xf32>
    %226 = arith.subf %220, %225 : vector<32x128xf32>
    %227 = arith.mulf %226, %226 : vector<32x128xf32>
    %cst_69 = arith.constant dense<0.000000e+00> : vector<32xf32>
    %228 = vector.multi_reduction <add>, %227, %cst_69 [1] : vector<32x128xf32> to vector<32xf32>
    %229 = vector.shape_cast %228 : vector<32xf32> to vector<32x1xf32>
    %cst_70 = arith.constant 1.280000e+02 : f32
    %230 = vector.broadcast %cst_70 : f32 to vector<32x1xf32>
    %231 = arith.divf %229, %230 : vector<32x1xf32>
    %cst_71 = arith.constant 9.99999974E-6 : f32
    %232 = vector.broadcast %cst_71 : f32 to vector<32x1xf32>
    %233 = arith.addf %231, %232 : vector<32x1xf32>
    %234 = math.rsqrt %233 : vector<32x1xf32>
    %235 = vector.broadcast %234 : vector<32x1xf32> to vector<32x128xf32>
    %236 = arith.mulf %226, %235 : vector<32x128xf32>
    %c0_72 = arith.constant 0 : index
    %c0_73 = arith.constant 0 : index
    %237 = vector.load %arg17[%c0_72, %c0_73] : memref<1x128xf32, #tpu.memory_space<vmem>>, vector<1x128xf32>
    %238 = vector.broadcast %237 : vector<1x128xf32> to vector<32x128xf32>
    %239 = arith.mulf %236, %238 : vector<32x128xf32>
    %c0_74 = arith.constant 0 : index
    %c0_75 = arith.constant 0 : index
    %240 = vector.load %arg18[%c0_74, %c0_75] : memref<1x128xf32, #tpu.memory_space<vmem>>, vector<1x128xf32>
    %241 = vector.broadcast %240 : vector<1x128xf32> to vector<32x128xf32>
    %242 = arith.addf %239, %241 : vector<32x128xf32>
    %c0_76 = arith.constant 0 : index
    %c0_77 = arith.constant 0 : index
    %243 = vector.load %arg9[%c0_76, %c0_77] : memref<128x128xf32, #tpu.memory_space<vmem>>, vector<128x128xf32>
    %cst_78 = arith.constant dense<0.000000e+00> : vector<32x128xf32>
    %244 = tpu.matmul %242, %243, %cst_78 {dimension_numbers = #tpu.dot_dimension_numbers<[1], [0], [0], [1], [0, 0, 1, 1], [], []>} : vector<32x128xf32>, vector<128x128xf32>, vector<32x128xf32> -> vector<32x128xf32>
    %c0_79 = arith.constant 0 : index
    %c0_80 = arith.constant 0 : index
    %245 = vector.load %arg10[%c0_79, %c0_80] : memref<1x128xf32, #tpu.memory_space<vmem>>, vector<1x128xf32>
    %246 = vector.broadcast %245 : vector<1x128xf32> to vector<32x128xf32>
    %247 = arith.addf %244, %246 : vector<32x128xf32>
    %c0_81 = arith.constant 0 : index
    %c0_82 = arith.constant 0 : index
    %248 = vector.load %arg11[%c0_81, %c0_82] : memref<128x128xf32, #tpu.memory_space<vmem>>, vector<128x128xf32>
    %cst_83 = arith.constant dense<0.000000e+00> : vector<32x128xf32>
    %249 = tpu.matmul %247, %248, %cst_83 {dimension_numbers = #tpu.dot_dimension_numbers<[1], [0], [0], [1], [0, 0, 1, 1], [], []>} : vector<32x128xf32>, vector<128x128xf32>, vector<32x128xf32> -> vector<32x128xf32>
    %c0_84 = arith.constant 0 : index
    %c0_85 = arith.constant 0 : index
    %250 = vector.load %arg12[%c0_84, %c0_85] : memref<1x128xf32, #tpu.memory_space<vmem>>, vector<1x128xf32>
    %251 = vector.broadcast %250 : vector<1x128xf32> to vector<32x128xf32>
    %252 = arith.addf %249, %251 : vector<32x128xf32>
    %c0_86 = arith.constant 0 : index
    %c0_87 = arith.constant 0 : index
    %253 = vector.load %arg13[%c0_86, %c0_87] : memref<128x256xf32, #tpu.memory_space<vmem>>, vector<128x256xf32>
    %cst_88 = arith.constant dense<0.000000e+00> : vector<64x256xf32>
    %254 = tpu.matmul %3, %253, %cst_88 {dimension_numbers = #tpu.dot_dimension_numbers<[1], [0], [0], [1], [0, 0, 1, 1], [], []>} : vector<64x128xf32>, vector<128x256xf32>, vector<64x256xf32> -> vector<64x256xf32>
    %c0_89 = arith.constant 0 : index
    %c0_90 = arith.constant 0 : index
    %255 = vector.load %arg14[%c0_89, %c0_90] : memref<1x256xf32, #tpu.memory_space<vmem>>, vector<1x256xf32>
    %256 = vector.broadcast %255 : vector<1x256xf32> to vector<64x256xf32>
    %257 = arith.addf %254, %256 : vector<64x256xf32>
    %258 = vector.extract_strided_slice %257 {offsets = [0, 0], sizes = [64, 128], strides = [1, 1]} : vector<64x256xf32> to vector<64x128xf32>
    %259 = vector.extract_strided_slice %257 {offsets = [0, 128], sizes = [64, 128], strides = [1, 1]} : vector<64x256xf32> to vector<64x128xf32>
    %260 = vector.shape_cast %252 : vector<32x128xf32> to vector<4x8x128xf32>
    %261 = vector.shape_cast %258 : vector<64x128xf32> to vector<4x16x128xf32>
    %262 = vector.shape_cast %259 : vector<64x128xf32> to vector<4x16x128xf32>
    %cst_91 = arith.constant 0.000000e+00 : f32
    %263 = vector.broadcast %cst_91 : f32 to vector<4x8x128xf32>
    %264 = vector.extract_strided_slice %260 {offsets = [0, 0, 0], sizes = [4, 8, 16], strides = [1, 1, 1]} : vector<4x8x128xf32> to vector<4x8x16xf32>
    %265 = vector.extract_strided_slice %261 {offsets = [0, 0, 0], sizes = [4, 16, 16], strides = [1, 1, 1]} : vector<4x16x128xf32> to vector<4x16x16xf32>
    "tpu.trace_start"() <{level = 10 : i32, message = "nld,nsd->nls"}> : () -> ()
    %cst_92 = arith.constant dense<0.000000e+00> : vector<4x8x16xf32>
    %266 = tpu.matmul %264, %265, %cst_92 {dimension_numbers = #tpu.dot_dimension_numbers<[2], [2], [1], [1], [0, 0, 0, 1, 1, 1], [0], [0]>} : vector<4x8x16xf32>, vector<4x16x16xf32>, vector<4x8x16xf32> -> vector<4x8x16xf32>
    "tpu.trace_stop"() : () -> ()
    %cst_93 = arith.constant dense<0xFF800000> : vector<4x8xf32>
    %267 = vector.multi_reduction <maximumf>, %266, %cst_93 [2] : vector<4x8x16xf32> to vector<4x8xf32>
    %268 = vector.shape_cast %267 : vector<4x8xf32> to vector<4x8x1xf32>
    %269 = vector.broadcast %268 : vector<4x8x1xf32> to vector<4x8x16xf32>
    %270 = arith.subf %266, %269 : vector<4x8x16xf32>
    %271 = math.exp %270 : vector<4x8x16xf32>
    %cst_94 = arith.constant dense<0.000000e+00> : vector<4x8xf32>
    %272 = vector.multi_reduction <add>, %271, %cst_94 [2] : vector<4x8x16xf32> to vector<4x8xf32>
    %273 = vector.shape_cast %272 : vector<4x8xf32> to vector<4x8x1xf32>
    %274 = tpu.reciprocal %273 {approx = true} : vector<4x8x1xf32> -> vector<4x8x1xf32>
    %275 = vector.broadcast %274 : vector<4x8x1xf32> to vector<4x8x16xf32>
    %276 = arith.mulf %271, %275 : vector<4x8x16xf32>
    %c0_i32_95 = arith.constant 0 : i32
    %277 = vector.broadcast %c0_i32_95 : i32 to vector<1x1x128xi32>
    %278 = arith.cmpi sge, %4, %277 : vector<1x1x128xi32>
    %c16_i32_96 = arith.constant 16 : i32
    %279 = vector.broadcast %c16_i32_96 : i32 to vector<1x1x128xi32>
    %280 = arith.cmpi slt, %4, %279 : vector<1x1x128xi32>
    %281 = arith.andi %278, %280 : vector<1x1x128xi1>
    %cst_97 = arith.constant 0.000000e+00 : f32
    %282 = vector.shape_cast %281 : vector<1x1x128xi1> to vector<1x1x128xi1>
    %283 = vector.broadcast %282 : vector<1x1x128xi1> to vector<4x16x128xi1>
    %284 = vector.broadcast %cst_97 : f32 to vector<4x16x128xf32>
    %285 = arith.select %283, %262, %284 : vector<4x16x128xi1>, vector<4x16x128xf32>
    "tpu.trace_start"() <{level = 10 : i32, message = "nls,nse->nle"}> : () -> ()
    %cst_98 = arith.constant dense<0.000000e+00> : vector<4x8x128xf32>
    %286 = tpu.matmul %276, %285, %cst_98 {dimension_numbers = #tpu.dot_dimension_numbers<[2], [1], [1], [2], [0, 0, 0, 1, 1, 2], [0], [0]>} : vector<4x8x16xf32>, vector<4x16x128xf32>, vector<4x8x128xf32> -> vector<4x8x128xf32>
    "tpu.trace_stop"() : () -> ()
    %287 = arith.addf %263, %286 : vector<4x8x128xf32>
    %288 = vector.extract_strided_slice %260 {offsets = [0, 0, 16], sizes = [4, 8, 16], strides = [1, 1, 1]} : vector<4x8x128xf32> to vector<4x8x16xf32>
    %289 = vector.extract_strided_slice %261 {offsets = [0, 0, 16], sizes = [4, 16, 16], strides = [1, 1, 1]} : vector<4x16x128xf32> to vector<4x16x16xf32>
    "tpu.trace_start"() <{level = 10 : i32, message = "nld,nsd->nls"}> : () -> ()
    %cst_99 = arith.constant dense<0.000000e+00> : vector<4x8x16xf32>
    %290 = tpu.matmul %288, %289, %cst_99 {dimension_numbers = #tpu.dot_dimension_numbers<[2], [2], [1], [1], [0, 0, 0, 1, 1, 1], [0], [0]>} : vector<4x8x16xf32>, vector<4x16x16xf32>, vector<4x8x16xf32> -> vector<4x8x16xf32>
    "tpu.trace_stop"() : () -> ()
    %cst_100 = arith.constant dense<0xFF800000> : vector<4x8xf32>
    %291 = vector.multi_reduction <maximumf>, %290, %cst_100 [2] : vector<4x8x16xf32> to vector<4x8xf32>
    %292 = vector.shape_cast %291 : vector<4x8xf32> to vector<4x8x1xf32>
    %293 = vector.broadcast %292 : vector<4x8x1xf32> to vector<4x8x16xf32>
    %294 = arith.subf %290, %293 : vector<4x8x16xf32>
    %295 = math.exp %294 : vector<4x8x16xf32>
    %cst_101 = arith.constant dense<0.000000e+00> : vector<4x8xf32>
    %296 = vector.multi_reduction <add>, %295, %cst_101 [2] : vector<4x8x16xf32> to vector<4x8xf32>
    %297 = vector.shape_cast %296 : vector<4x8xf32> to vector<4x8x1xf32>
    %298 = tpu.reciprocal %297 {approx = true} : vector<4x8x1xf32> -> vector<4x8x1xf32>
    %299 = vector.broadcast %298 : vector<4x8x1xf32> to vector<4x8x16xf32>
    %300 = arith.mulf %295, %299 : vector<4x8x16xf32>
    %c16_i32_102 = arith.constant 16 : i32
    %301 = vector.broadcast %c16_i32_102 : i32 to vector<1x1x128xi32>
    %302 = arith.cmpi sge, %4, %301 : vector<1x1x128xi32>
    %c32_i32_103 = arith.constant 32 : i32
    %303 = vector.broadcast %c32_i32_103 : i32 to vector<1x1x128xi32>
    %304 = arith.cmpi slt, %4, %303 : vector<1x1x128xi32>
    %305 = arith.andi %302, %304 : vector<1x1x128xi1>
    %cst_104 = arith.constant 0.000000e+00 : f32
    %306 = vector.shape_cast %305 : vector<1x1x128xi1> to vector<1x1x128xi1>
    %307 = vector.broadcast %306 : vector<1x1x128xi1> to vector<4x16x128xi1>
    %308 = vector.broadcast %cst_104 : f32 to vector<4x16x128xf32>
    %309 = arith.select %307, %262, %308 : vector<4x16x128xi1>, vector<4x16x128xf32>
    "tpu.trace_start"() <{level = 10 : i32, message = "nls,nse->nle"}> : () -> ()
    %cst_105 = arith.constant dense<0.000000e+00> : vector<4x8x128xf32>
    %310 = tpu.matmul %300, %309, %cst_105 {dimension_numbers = #tpu.dot_dimension_numbers<[2], [1], [1], [2], [0, 0, 0, 1, 1, 2], [0], [0]>} : vector<4x8x16xf32>, vector<4x16x128xf32>, vector<4x8x128xf32> -> vector<4x8x128xf32>
    "tpu.trace_stop"() : () -> ()
    %311 = arith.addf %287, %310 : vector<4x8x128xf32>
    %312 = vector.extract_strided_slice %260 {offsets = [0, 0, 32], sizes = [4, 8, 16], strides = [1, 1, 1]} : vector<4x8x128xf32> to vector<4x8x16xf32>
    %313 = vector.extract_strided_slice %261 {offsets = [0, 0, 32], sizes = [4, 16, 16], strides = [1, 1, 1]} : vector<4x16x128xf32> to vector<4x16x16xf32>
    "tpu.trace_start"() <{level = 10 : i32, message = "nld,nsd->nls"}> : () -> ()
    %cst_106 = arith.constant dense<0.000000e+00> : vector<4x8x16xf32>
    %314 = tpu.matmul %312, %313, %cst_106 {dimension_numbers = #tpu.dot_dimension_numbers<[2], [2], [1], [1], [0, 0, 0, 1, 1, 1], [0], [0]>} : vector<4x8x16xf32>, vector<4x16x16xf32>, vector<4x8x16xf32> -> vector<4x8x16xf32>
    "tpu.trace_stop"() : () -> ()
    %cst_107 = arith.constant dense<0xFF800000> : vector<4x8xf32>
    %315 = vector.multi_reduction <maximumf>, %314, %cst_107 [2] : vector<4x8x16xf32> to vector<4x8xf32>
    %316 = vector.shape_cast %315 : vector<4x8xf32> to vector<4x8x1xf32>
    %317 = vector.broadcast %316 : vector<4x8x1xf32> to vector<4x8x16xf32>
    %318 = arith.subf %314, %317 : vector<4x8x16xf32>
    %319 = math.exp %318 : vector<4x8x16xf32>
    %cst_108 = arith.constant dense<0.000000e+00> : vector<4x8xf32>
    %320 = vector.multi_reduction <add>, %319, %cst_108 [2] : vector<4x8x16xf32> to vector<4x8xf32>
    %321 = vector.shape_cast %320 : vector<4x8xf32> to vector<4x8x1xf32>
    %322 = tpu.reciprocal %321 {approx = true} : vector<4x8x1xf32> -> vector<4x8x1xf32>
    %323 = vector.broadcast %322 : vector<4x8x1xf32> to vector<4x8x16xf32>
    %324 = arith.mulf %319, %323 : vector<4x8x16xf32>
    %c32_i32_109 = arith.constant 32 : i32
    %325 = vector.broadcast %c32_i32_109 : i32 to vector<1x1x128xi32>
    %326 = arith.cmpi sge, %4, %325 : vector<1x1x128xi32>
    %c48_i32_110 = arith.constant 48 : i32
    %327 = vector.broadcast %c48_i32_110 : i32 to vector<1x1x128xi32>
    %328 = arith.cmpi slt, %4, %327 : vector<1x1x128xi32>
    %329 = arith.andi %326, %328 : vector<1x1x128xi1>
    %cst_111 = arith.constant 0.000000e+00 : f32
    %330 = vector.shape_cast %329 : vector<1x1x128xi1> to vector<1x1x128xi1>
    %331 = vector.broadcast %330 : vector<1x1x128xi1> to vector<4x16x128xi1>
    %332 = vector.broadcast %cst_111 : f32 to vector<4x16x128xf32>
    %333 = arith.select %331, %262, %332 : vector<4x16x128xi1>, vector<4x16x128xf32>
    "tpu.trace_start"() <{level = 10 : i32, message = "nls,nse->nle"}> : () -> ()
    %cst_112 = arith.constant dense<0.000000e+00> : vector<4x8x128xf32>
    %334 = tpu.matmul %324, %333, %cst_112 {dimension_numbers = #tpu.dot_dimension_numbers<[2], [1], [1], [2], [0, 0, 0, 1, 1, 2], [0], [0]>} : vector<4x8x16xf32>, vector<4x16x128xf32>, vector<4x8x128xf32> -> vector<4x8x128xf32>
    "tpu.trace_stop"() : () -> ()
    %335 = arith.addf %311, %334 : vector<4x8x128xf32>
    %336 = vector.extract_strided_slice %260 {offsets = [0, 0, 48], sizes = [4, 8, 16], strides = [1, 1, 1]} : vector<4x8x128xf32> to vector<4x8x16xf32>
    %337 = vector.extract_strided_slice %261 {offsets = [0, 0, 48], sizes = [4, 16, 16], strides = [1, 1, 1]} : vector<4x16x128xf32> to vector<4x16x16xf32>
    "tpu.trace_start"() <{level = 10 : i32, message = "nld,nsd->nls"}> : () -> ()
    %cst_113 = arith.constant dense<0.000000e+00> : vector<4x8x16xf32>
    %338 = tpu.matmul %336, %337, %cst_113 {dimension_numbers = #tpu.dot_dimension_numbers<[2], [2], [1], [1], [0, 0, 0, 1, 1, 1], [0], [0]>} : vector<4x8x16xf32>, vector<4x16x16xf32>, vector<4x8x16xf32> -> vector<4x8x16xf32>
    "tpu.trace_stop"() : () -> ()
    %cst_114 = arith.constant dense<0xFF800000> : vector<4x8xf32>
    %339 = vector.multi_reduction <maximumf>, %338, %cst_114 [2] : vector<4x8x16xf32> to vector<4x8xf32>
    %340 = vector.shape_cast %339 : vector<4x8xf32> to vector<4x8x1xf32>
    %341 = vector.broadcast %340 : vector<4x8x1xf32> to vector<4x8x16xf32>
    %342 = arith.subf %338, %341 : vector<4x8x16xf32>
    %343 = math.exp %342 : vector<4x8x16xf32>
    %cst_115 = arith.constant dense<0.000000e+00> : vector<4x8xf32>
    %344 = vector.multi_reduction <add>, %343, %cst_115 [2] : vector<4x8x16xf32> to vector<4x8xf32>
    %345 = vector.shape_cast %344 : vector<4x8xf32> to vector<4x8x1xf32>
    %346 = tpu.reciprocal %345 {approx = true} : vector<4x8x1xf32> -> vector<4x8x1xf32>
    %347 = vector.broadcast %346 : vector<4x8x1xf32> to vector<4x8x16xf32>
    %348 = arith.mulf %343, %347 : vector<4x8x16xf32>
    %c48_i32_116 = arith.constant 48 : i32
    %349 = vector.broadcast %c48_i32_116 : i32 to vector<1x1x128xi32>
    %350 = arith.cmpi sge, %4, %349 : vector<1x1x128xi32>
    %c64_i32_117 = arith.constant 64 : i32
    %351 = vector.broadcast %c64_i32_117 : i32 to vector<1x1x128xi32>
    %352 = arith.cmpi slt, %4, %351 : vector<1x1x128xi32>
    %353 = arith.andi %350, %352 : vector<1x1x128xi1>
    %cst_118 = arith.constant 0.000000e+00 : f32
    %354 = vector.shape_cast %353 : vector<1x1x128xi1> to vector<1x1x128xi1>
    %355 = vector.broadcast %354 : vector<1x1x128xi1> to vector<4x16x128xi1>
    %356 = vector.broadcast %cst_118 : f32 to vector<4x16x128xf32>
    %357 = arith.select %355, %262, %356 : vector<4x16x128xi1>, vector<4x16x128xf32>
    "tpu.trace_start"() <{level = 10 : i32, message = "nls,nse->nle"}> : () -> ()
    %cst_119 = arith.constant dense<0.000000e+00> : vector<4x8x128xf32>
    %358 = tpu.matmul %348, %357, %cst_119 {dimension_numbers = #tpu.dot_dimension_numbers<[2], [1], [1], [2], [0, 0, 0, 1, 1, 2], [0], [0]>} : vector<4x8x16xf32>, vector<4x16x128xf32>, vector<4x8x128xf32> -> vector<4x8x128xf32>
    "tpu.trace_stop"() : () -> ()
    %359 = arith.addf %335, %358 : vector<4x8x128xf32>
    %360 = vector.extract_strided_slice %260 {offsets = [0, 0, 64], sizes = [4, 8, 16], strides = [1, 1, 1]} : vector<4x8x128xf32> to vector<4x8x16xf32>
    %361 = vector.extract_strided_slice %261 {offsets = [0, 0, 64], sizes = [4, 16, 16], strides = [1, 1, 1]} : vector<4x16x128xf32> to vector<4x16x16xf32>
    "tpu.trace_start"() <{level = 10 : i32, message = "nld,nsd->nls"}> : () -> ()
    %cst_120 = arith.constant dense<0.000000e+00> : vector<4x8x16xf32>
    %362 = tpu.matmul %360, %361, %cst_120 {dimension_numbers = #tpu.dot_dimension_numbers<[2], [2], [1], [1], [0, 0, 0, 1, 1, 1], [0], [0]>} : vector<4x8x16xf32>, vector<4x16x16xf32>, vector<4x8x16xf32> -> vector<4x8x16xf32>
    "tpu.trace_stop"() : () -> ()
    %cst_121 = arith.constant dense<0xFF800000> : vector<4x8xf32>
    %363 = vector.multi_reduction <maximumf>, %362, %cst_121 [2] : vector<4x8x16xf32> to vector<4x8xf32>
    %364 = vector.shape_cast %363 : vector<4x8xf32> to vector<4x8x1xf32>
    %365 = vector.broadcast %364 : vector<4x8x1xf32> to vector<4x8x16xf32>
    %366 = arith.subf %362, %365 : vector<4x8x16xf32>
    %367 = math.exp %366 : vector<4x8x16xf32>
    %cst_122 = arith.constant dense<0.000000e+00> : vector<4x8xf32>
    %368 = vector.multi_reduction <add>, %367, %cst_122 [2] : vector<4x8x16xf32> to vector<4x8xf32>
    %369 = vector.shape_cast %368 : vector<4x8xf32> to vector<4x8x1xf32>
    %370 = tpu.reciprocal %369 {approx = true} : vector<4x8x1xf32> -> vector<4x8x1xf32>
    %371 = vector.broadcast %370 : vector<4x8x1xf32> to vector<4x8x16xf32>
    %372 = arith.mulf %367, %371 : vector<4x8x16xf32>
    %c64_i32_123 = arith.constant 64 : i32
    %373 = vector.broadcast %c64_i32_123 : i32 to vector<1x1x128xi32>
    %374 = arith.cmpi sge, %4, %373 : vector<1x1x128xi32>
    %c80_i32_124 = arith.constant 80 : i32
    %375 = vector.broadcast %c80_i32_124 : i32 to vector<1x1x128xi32>
    %376 = arith.cmpi slt, %4, %375 : vector<1x1x128xi32>
    %377 = arith.andi %374, %376 : vector<1x1x128xi1>
    %cst_125 = arith.constant 0.000000e+00 : f32
    %378 = vector.shape_cast %377 : vector<1x1x128xi1> to vector<1x1x128xi1>
    %379 = vector.broadcast %378 : vector<1x1x128xi1> to vector<4x16x128xi1>
    %380 = vector.broadcast %cst_125 : f32 to vector<4x16x128xf32>
    %381 = arith.select %379, %262, %380 : vector<4x16x128xi1>, vector<4x16x128xf32>
    "tpu.trace_start"() <{level = 10 : i32, message = "nls,nse->nle"}> : () -> ()
    %cst_126 = arith.constant dense<0.000000e+00> : vector<4x8x128xf32>
    %382 = tpu.matmul %372, %381, %cst_126 {dimension_numbers = #tpu.dot_dimension_numbers<[2], [1], [1], [2], [0, 0, 0, 1, 1, 2], [0], [0]>} : vector<4x8x16xf32>, vector<4x16x128xf32>, vector<4x8x128xf32> -> vector<4x8x128xf32>
    "tpu.trace_stop"() : () -> ()
    %383 = arith.addf %359, %382 : vector<4x8x128xf32>
    %384 = vector.extract_strided_slice %260 {offsets = [0, 0, 80], sizes = [4, 8, 16], strides = [1, 1, 1]} : vector<4x8x128xf32> to vector<4x8x16xf32>
    %385 = vector.extract_strided_slice %261 {offsets = [0, 0, 80], sizes = [4, 16, 16], strides = [1, 1, 1]} : vector<4x16x128xf32> to vector<4x16x16xf32>
    "tpu.trace_start"() <{level = 10 : i32, message = "nld,nsd->nls"}> : () -> ()
    %cst_127 = arith.constant dense<0.000000e+00> : vector<4x8x16xf32>
    %386 = tpu.matmul %384, %385, %cst_127 {dimension_numbers = #tpu.dot_dimension_numbers<[2], [2], [1], [1], [0, 0, 0, 1, 1, 1], [0], [0]>} : vector<4x8x16xf32>, vector<4x16x16xf32>, vector<4x8x16xf32> -> vector<4x8x16xf32>
    "tpu.trace_stop"() : () -> ()
    %cst_128 = arith.constant dense<0xFF800000> : vector<4x8xf32>
    %387 = vector.multi_reduction <maximumf>, %386, %cst_128 [2] : vector<4x8x16xf32> to vector<4x8xf32>
    %388 = vector.shape_cast %387 : vector<4x8xf32> to vector<4x8x1xf32>
    %389 = vector.broadcast %388 : vector<4x8x1xf32> to vector<4x8x16xf32>
    %390 = arith.subf %386, %389 : vector<4x8x16xf32>
    %391 = math.exp %390 : vector<4x8x16xf32>
    %cst_129 = arith.constant dense<0.000000e+00> : vector<4x8xf32>
    %392 = vector.multi_reduction <add>, %391, %cst_129 [2] : vector<4x8x16xf32> to vector<4x8xf32>
    %393 = vector.shape_cast %392 : vector<4x8xf32> to vector<4x8x1xf32>
    %394 = tpu.reciprocal %393 {approx = true} : vector<4x8x1xf32> -> vector<4x8x1xf32>
    %395 = vector.broadcast %394 : vector<4x8x1xf32> to vector<4x8x16xf32>
    %396 = arith.mulf %391, %395 : vector<4x8x16xf32>
    %c80_i32_130 = arith.constant 80 : i32
    %397 = vector.broadcast %c80_i32_130 : i32 to vector<1x1x128xi32>
    %398 = arith.cmpi sge, %4, %397 : vector<1x1x128xi32>
    %c96_i32_131 = arith.constant 96 : i32
    %399 = vector.broadcast %c96_i32_131 : i32 to vector<1x1x128xi32>
    %400 = arith.cmpi slt, %4, %399 : vector<1x1x128xi32>
    %401 = arith.andi %398, %400 : vector<1x1x128xi1>
    %cst_132 = arith.constant 0.000000e+00 : f32
    %402 = vector.shape_cast %401 : vector<1x1x128xi1> to vector<1x1x128xi1>
    %403 = vector.broadcast %402 : vector<1x1x128xi1> to vector<4x16x128xi1>
    %404 = vector.broadcast %cst_132 : f32 to vector<4x16x128xf32>
    %405 = arith.select %403, %262, %404 : vector<4x16x128xi1>, vector<4x16x128xf32>
    "tpu.trace_start"() <{level = 10 : i32, message = "nls,nse->nle"}> : () -> ()
    %cst_133 = arith.constant dense<0.000000e+00> : vector<4x8x128xf32>
    %406 = tpu.matmul %396, %405, %cst_133 {dimension_numbers = #tpu.dot_dimension_numbers<[2], [1], [1], [2], [0, 0, 0, 1, 1, 2], [0], [0]>} : vector<4x8x16xf32>, vector<4x16x128xf32>, vector<4x8x128xf32> -> vector<4x8x128xf32>
    "tpu.trace_stop"() : () -> ()
    %407 = arith.addf %383, %406 : vector<4x8x128xf32>
    %408 = vector.extract_strided_slice %260 {offsets = [0, 0, 96], sizes = [4, 8, 16], strides = [1, 1, 1]} : vector<4x8x128xf32> to vector<4x8x16xf32>
    %409 = vector.extract_strided_slice %261 {offsets = [0, 0, 96], sizes = [4, 16, 16], strides = [1, 1, 1]} : vector<4x16x128xf32> to vector<4x16x16xf32>
    "tpu.trace_start"() <{level = 10 : i32, message = "nld,nsd->nls"}> : () -> ()
    %cst_134 = arith.constant dense<0.000000e+00> : vector<4x8x16xf32>
    %410 = tpu.matmul %408, %409, %cst_134 {dimension_numbers = #tpu.dot_dimension_numbers<[2], [2], [1], [1], [0, 0, 0, 1, 1, 1], [0], [0]>} : vector<4x8x16xf32>, vector<4x16x16xf32>, vector<4x8x16xf32> -> vector<4x8x16xf32>
    "tpu.trace_stop"() : () -> ()
    %cst_135 = arith.constant dense<0xFF800000> : vector<4x8xf32>
    %411 = vector.multi_reduction <maximumf>, %410, %cst_135 [2] : vector<4x8x16xf32> to vector<4x8xf32>
    %412 = vector.shape_cast %411 : vector<4x8xf32> to vector<4x8x1xf32>
    %413 = vector.broadcast %412 : vector<4x8x1xf32> to vector<4x8x16xf32>
    %414 = arith.subf %410, %413 : vector<4x8x16xf32>
    %415 = math.exp %414 : vector<4x8x16xf32>
    %cst_136 = arith.constant dense<0.000000e+00> : vector<4x8xf32>
    %416 = vector.multi_reduction <add>, %415, %cst_136 [2] : vector<4x8x16xf32> to vector<4x8xf32>
    %417 = vector.shape_cast %416 : vector<4x8xf32> to vector<4x8x1xf32>
    %418 = tpu.reciprocal %417 {approx = true} : vector<4x8x1xf32> -> vector<4x8x1xf32>
    %419 = vector.broadcast %418 : vector<4x8x1xf32> to vector<4x8x16xf32>
    %420 = arith.mulf %415, %419 : vector<4x8x16xf32>
    %c96_i32_137 = arith.constant 96 : i32
    %421 = vector.broadcast %c96_i32_137 : i32 to vector<1x1x128xi32>
    %422 = arith.cmpi sge, %4, %421 : vector<1x1x128xi32>
    %c112_i32_138 = arith.constant 112 : i32
    %423 = vector.broadcast %c112_i32_138 : i32 to vector<1x1x128xi32>
    %424 = arith.cmpi slt, %4, %423 : vector<1x1x128xi32>
    %425 = arith.andi %422, %424 : vector<1x1x128xi1>
    %cst_139 = arith.constant 0.000000e+00 : f32
    %426 = vector.shape_cast %425 : vector<1x1x128xi1> to vector<1x1x128xi1>
    %427 = vector.broadcast %426 : vector<1x1x128xi1> to vector<4x16x128xi1>
    %428 = vector.broadcast %cst_139 : f32 to vector<4x16x128xf32>
    %429 = arith.select %427, %262, %428 : vector<4x16x128xi1>, vector<4x16x128xf32>
    "tpu.trace_start"() <{level = 10 : i32, message = "nls,nse->nle"}> : () -> ()
    %cst_140 = arith.constant dense<0.000000e+00> : vector<4x8x128xf32>
    %430 = tpu.matmul %420, %429, %cst_140 {dimension_numbers = #tpu.dot_dimension_numbers<[2], [1], [1], [2], [0, 0, 0, 1, 1, 2], [0], [0]>} : vector<4x8x16xf32>, vector<4x16x128xf32>, vector<4x8x128xf32> -> vector<4x8x128xf32>
    "tpu.trace_stop"() : () -> ()
    %431 = arith.addf %407, %430 : vector<4x8x128xf32>
    %432 = vector.extract_strided_slice %260 {offsets = [0, 0, 112], sizes = [4, 8, 16], strides = [1, 1, 1]} : vector<4x8x128xf32> to vector<4x8x16xf32>
    %433 = vector.extract_strided_slice %261 {offsets = [0, 0, 112], sizes = [4, 16, 16], strides = [1, 1, 1]} : vector<4x16x128xf32> to vector<4x16x16xf32>
    "tpu.trace_start"() <{level = 10 : i32, message = "nld,nsd->nls"}> : () -> ()
    %cst_141 = arith.constant dense<0.000000e+00> : vector<4x8x16xf32>
    %434 = tpu.matmul %432, %433, %cst_141 {dimension_numbers = #tpu.dot_dimension_numbers<[2], [2], [1], [1], [0, 0, 0, 1, 1, 1], [0], [0]>} : vector<4x8x16xf32>, vector<4x16x16xf32>, vector<4x8x16xf32> -> vector<4x8x16xf32>
    "tpu.trace_stop"() : () -> ()
    %cst_142 = arith.constant dense<0xFF800000> : vector<4x8xf32>
    %435 = vector.multi_reduction <maximumf>, %434, %cst_142 [2] : vector<4x8x16xf32> to vector<4x8xf32>
    %436 = vector.shape_cast %435 : vector<4x8xf32> to vector<4x8x1xf32>
    %437 = vector.broadcast %436 : vector<4x8x1xf32> to vector<4x8x16xf32>
    %438 = arith.subf %434, %437 : vector<4x8x16xf32>
    %439 = math.exp %438 : vector<4x8x16xf32>
    %cst_143 = arith.constant dense<0.000000e+00> : vector<4x8xf32>
    %440 = vector.multi_reduction <add>, %439, %cst_143 [2] : vector<4x8x16xf32> to vector<4x8xf32>
    %441 = vector.shape_cast %440 : vector<4x8xf32> to vector<4x8x1xf32>
    %442 = tpu.reciprocal %441 {approx = true} : vector<4x8x1xf32> -> vector<4x8x1xf32>
    %443 = vector.broadcast %442 : vector<4x8x1xf32> to vector<4x8x16xf32>
    %444 = arith.mulf %439, %443 : vector<4x8x16xf32>
    %c112_i32_144 = arith.constant 112 : i32
    %445 = vector.broadcast %c112_i32_144 : i32 to vector<1x1x128xi32>
    %446 = arith.cmpi sge, %4, %445 : vector<1x1x128xi32>
    %c128_i32_145 = arith.constant 128 : i32
    %447 = vector.broadcast %c128_i32_145 : i32 to vector<1x1x128xi32>
    %448 = arith.cmpi slt, %4, %447 : vector<1x1x128xi32>
    %449 = arith.andi %446, %448 : vector<1x1x128xi1>
    %cst_146 = arith.constant 0.000000e+00 : f32
    %450 = vector.shape_cast %449 : vector<1x1x128xi1> to vector<1x1x128xi1>
    %451 = vector.broadcast %450 : vector<1x1x128xi1> to vector<4x16x128xi1>
    %452 = vector.broadcast %cst_146 : f32 to vector<4x16x128xf32>
    %453 = arith.select %451, %262, %452 : vector<4x16x128xi1>, vector<4x16x128xf32>
    "tpu.trace_start"() <{level = 10 : i32, message = "nls,nse->nle"}> : () -> ()
    %cst_147 = arith.constant dense<0.000000e+00> : vector<4x8x128xf32>
    %454 = tpu.matmul %444, %453, %cst_147 {dimension_numbers = #tpu.dot_dimension_numbers<[2], [1], [1], [2], [0, 0, 0, 1, 1, 2], [0], [0]>} : vector<4x8x16xf32>, vector<4x16x128xf32>, vector<4x8x128xf32> -> vector<4x8x128xf32>
    "tpu.trace_stop"() : () -> ()
    %455 = arith.addf %431, %454 : vector<4x8x128xf32>
    %456 = vector.shape_cast %455 : vector<4x8x128xf32> to vector<32x128xf32>
    %c0_148 = arith.constant 0 : index
    %c0_149 = arith.constant 0 : index
    %457 = vector.load %arg15[%c0_148, %c0_149] : memref<128x128xf32, #tpu.memory_space<vmem>>, vector<128x128xf32>
    %cst_150 = arith.constant dense<0.000000e+00> : vector<32x128xf32>
    %458 = tpu.matmul %456, %457, %cst_150 {dimension_numbers = #tpu.dot_dimension_numbers<[1], [0], [0], [1], [0, 0, 1, 1], [], []>} : vector<32x128xf32>, vector<128x128xf32>, vector<32x128xf32> -> vector<32x128xf32>
    %c0_151 = arith.constant 0 : index
    %c0_152 = arith.constant 0 : index
    %459 = vector.load %arg16[%c0_151, %c0_152] : memref<1x128xf32, #tpu.memory_space<vmem>>, vector<1x128xf32>
    %460 = vector.broadcast %459 : vector<1x128xf32> to vector<32x128xf32>
    %461 = arith.addf %458, %460 : vector<32x128xf32>
    %462 = arith.addf %242, %461 : vector<32x128xf32>
    %cst_153 = arith.constant dense<0.000000e+00> : vector<32xf32>
    %463 = vector.multi_reduction <add>, %462, %cst_153 [1] : vector<32x128xf32> to vector<32xf32>
    %464 = vector.shape_cast %463 : vector<32xf32> to vector<32x1xf32>
    %cst_154 = arith.constant 1.280000e+02 : f32
    %465 = vector.broadcast %cst_154 : f32 to vector<32x1xf32>
    %466 = arith.divf %464, %465 : vector<32x1xf32>
    %467 = vector.broadcast %466 : vector<32x1xf32> to vector<32x128xf32>
    %468 = arith.subf %462, %467 : vector<32x128xf32>
    %469 = arith.mulf %468, %468 : vector<32x128xf32>
    %cst_155 = arith.constant dense<0.000000e+00> : vector<32xf32>
    %470 = vector.multi_reduction <add>, %469, %cst_155 [1] : vector<32x128xf32> to vector<32xf32>
    %471 = vector.shape_cast %470 : vector<32xf32> to vector<32x1xf32>
    %cst_156 = arith.constant 1.280000e+02 : f32
    %472 = vector.broadcast %cst_156 : f32 to vector<32x1xf32>
    %473 = arith.divf %471, %472 : vector<32x1xf32>
    %cst_157 = arith.constant 9.99999974E-6 : f32
    %474 = vector.broadcast %cst_157 : f32 to vector<32x1xf32>
    %475 = arith.addf %473, %474 : vector<32x1xf32>
    %476 = math.rsqrt %475 : vector<32x1xf32>
    %477 = vector.broadcast %476 : vector<32x1xf32> to vector<32x128xf32>
    %478 = arith.mulf %468, %477 : vector<32x128xf32>
    %c0_158 = arith.constant 0 : index
    %c0_159 = arith.constant 0 : index
    %479 = vector.load %arg17[%c0_158, %c0_159] : memref<1x128xf32, #tpu.memory_space<vmem>>, vector<1x128xf32>
    %480 = vector.broadcast %479 : vector<1x128xf32> to vector<32x128xf32>
    %481 = arith.mulf %478, %480 : vector<32x128xf32>
    %c0_160 = arith.constant 0 : index
    %c0_161 = arith.constant 0 : index
    %482 = vector.load %arg18[%c0_160, %c0_161] : memref<1x128xf32, #tpu.memory_space<vmem>>, vector<1x128xf32>
    %483 = vector.broadcast %482 : vector<1x128xf32> to vector<32x128xf32>
    %484 = arith.addf %481, %483 : vector<32x128xf32>
    %c0_162 = arith.constant 0 : index
    %c0_163 = arith.constant 0 : index
    %485 = vector.load %arg19[%c0_162, %c0_163] : memref<128x80xf32, #tpu.memory_space<vmem>>, vector<128x80xf32>
    %cst_164 = arith.constant dense<0.000000e+00> : vector<32x80xf32>
    %486 = tpu.matmul %484, %485, %cst_164 {dimension_numbers = #tpu.dot_dimension_numbers<[1], [0], [0], [1], [0, 0, 1, 1], [], []>} : vector<32x128xf32>, vector<128x80xf32>, vector<32x80xf32> -> vector<32x80xf32>
    %c0_165 = arith.constant 0 : index
    %c0_166 = arith.constant 0 : index
    %487 = vector.load %arg20[%c0_165, %c0_166] : memref<1x80xf32, #tpu.memory_space<vmem>>, vector<1x80xf32>
    %488 = vector.broadcast %487 : vector<1x80xf32> to vector<32x80xf32>
    %489 = arith.addf %486, %488 : vector<32x80xf32>
    %cst_167 = arith.constant 0.000000e+00 : f32
    %490 = vector.broadcast %cst_167 : f32 to vector<32x80xf32>
    %491 = arith.maximumf %489, %490 : vector<32x80xf32>
    %c0_168 = arith.constant 0 : index
    %c0_169 = arith.constant 0 : index
    %492 = vector.load %arg21[%c0_168, %c0_169] : memref<80x128xf32, #tpu.memory_space<vmem>>, vector<80x128xf32>
    %cst_170 = arith.constant dense<0.000000e+00> : vector<32x128xf32>
    %493 = tpu.matmul %491, %492, %cst_170 {dimension_numbers = #tpu.dot_dimension_numbers<[1], [0], [0], [1], [0, 0, 1, 1], [], []>} : vector<32x80xf32>, vector<80x128xf32>, vector<32x128xf32> -> vector<32x128xf32>
    %c0_171 = arith.constant 0 : index
    %c0_172 = arith.constant 0 : index
    %494 = vector.load %arg22[%c0_171, %c0_172] : memref<1x128xf32, #tpu.memory_space<vmem>>, vector<1x128xf32>
    %495 = vector.broadcast %494 : vector<1x128xf32> to vector<32x128xf32>
    %496 = arith.addf %493, %495 : vector<32x128xf32>
    %497 = arith.addf %496, %484 : vector<32x128xf32>
    %cst_173 = arith.constant dense<0.000000e+00> : vector<32xf32>
    %498 = vector.multi_reduction <add>, %497, %cst_173 [1] : vector<32x128xf32> to vector<32xf32>
    %499 = vector.shape_cast %498 : vector<32xf32> to vector<32x1xf32>
    %cst_174 = arith.constant 1.280000e+02 : f32
    %500 = vector.broadcast %cst_174 : f32 to vector<32x1xf32>
    %501 = arith.divf %499, %500 : vector<32x1xf32>
    %502 = vector.broadcast %501 : vector<32x1xf32> to vector<32x128xf32>
    %503 = arith.subf %497, %502 : vector<32x128xf32>
    %504 = arith.mulf %503, %503 : vector<32x128xf32>
    %cst_175 = arith.constant dense<0.000000e+00> : vector<32xf32>
    %505 = vector.multi_reduction <add>, %504, %cst_175 [1] : vector<32x128xf32> to vector<32xf32>
    %506 = vector.shape_cast %505 : vector<32xf32> to vector<32x1xf32>
    %cst_176 = arith.constant 1.280000e+02 : f32
    %507 = vector.broadcast %cst_176 : f32 to vector<32x1xf32>
    %508 = arith.divf %506, %507 : vector<32x1xf32>
    %cst_177 = arith.constant 9.99999974E-6 : f32
    %509 = vector.broadcast %cst_177 : f32 to vector<32x1xf32>
    %510 = arith.addf %508, %509 : vector<32x1xf32>
    %511 = math.rsqrt %510 : vector<32x1xf32>
    %512 = vector.broadcast %511 : vector<32x1xf32> to vector<32x128xf32>
    %513 = arith.mulf %503, %512 : vector<32x128xf32>
    %c0_178 = arith.constant 0 : index
    %c0_179 = arith.constant 0 : index
    %514 = vector.load %arg17[%c0_178, %c0_179] : memref<1x128xf32, #tpu.memory_space<vmem>>, vector<1x128xf32>
    %515 = vector.broadcast %514 : vector<1x128xf32> to vector<32x128xf32>
    %516 = arith.mulf %513, %515 : vector<32x128xf32>
    %c0_180 = arith.constant 0 : index
    %c0_181 = arith.constant 0 : index
    %517 = vector.load %arg18[%c0_180, %c0_181] : memref<1x128xf32, #tpu.memory_space<vmem>>, vector<1x128xf32>
    %518 = vector.broadcast %517 : vector<1x128xf32> to vector<32x128xf32>
    %519 = arith.addf %516, %518 : vector<32x128xf32>
    %520 = vector.shape_cast %519 : vector<32x128xf32> to vector<4x8x128xf32>
    %c0_182 = arith.constant 0 : index
    %c0_183 = arith.constant 0 : index
    %c0_184 = arith.constant 0 : index
    %521 = vector.load %arg23[%c0_182, %c0_183, %c0_184] : memref<4x8x128xf32, #tpu.memory_space<vmem>>, vector<4x8x128xf32>
    tpu.vector_store %arg23[%c0_182, %c0_183, %c0_184], %520 {strides = array<i32>} : memref<4x8x128xf32, #tpu.memory_space<vmem>>, vector<4x8x128xf32>,
    return
  }
  func.func @transform_0(%arg0: i32) -> (i32, i32, i32) {
    %c0_i32 = arith.constant 0 : i32
    %c0_i32_0 = arith.constant 0 : i32
    %c0_i32_1 = arith.constant 0 : i32
    return %arg0, %c0_i32, %c0_i32_0 : i32, i32, i32
  }
  func.func @transform_1(%arg0: i32) -> (i32, i32, i32) {
    %c0_i32 = arith.constant 0 : i32
    %c0_i32_0 = arith.constant 0 : i32
    %c0_i32_1 = arith.constant 0 : i32
    return %arg0, %c0_i32, %c0_i32_0 : i32, i32, i32
  }
  func.func @transform_2(%arg0: i32) -> (i32, i32) {
    %c0_i32 = arith.constant 0 : i32
    %c0_i32_0 = arith.constant 0 : i32
    %c0_i32_1 = arith.constant 0 : i32
    return %c0_i32, %c0_i32_0 : i32, i32
  }
  func.func @transform_3(%arg0: i32) -> (i32, i32) {
    %c0_i32 = arith.constant 0 : i32
    %c0_i32_0 = arith.constant 0 : i32
    %c0_i32_1 = arith.constant 0 : i32
    return %c0_i32, %c0_i32_0 : i32, i32
  }
  func.func @transform_4(%arg0: i32) -> (i32, i32) {
    %c0_i32 = arith.constant 0 : i32
    %c0_i32_0 = arith.constant 0 : i32
    %c0_i32_1 = arith.constant 0 : i32
    return %c0_i32, %c0_i32_0 : i32, i32
  }
  func.func @transform_5(%arg0: i32) -> (i32, i32) {
    %c0_i32 = arith.constant 0 : i32
    %c0_i32_0 = arith.constant 0 : i32
    %c0_i32_1 = arith.constant 0 : i32
    return %c0_i32, %c0_i32_0 : i32, i32
  }
  func.func @transform_6(%arg0: i32) -> (i32, i32) {
    %c0_i32 = arith.constant 0 : i32
    %c0_i32_0 = arith.constant 0 : i32
    %c0_i32_1 = arith.constant 0 : i32
    return %c0_i32, %c0_i32_0 : i32, i32
  }
  func.func @transform_7(%arg0: i32) -> (i32, i32) {
    %c0_i32 = arith.constant 0 : i32
    %c0_i32_0 = arith.constant 0 : i32
    %c0_i32_1 = arith.constant 0 : i32
    return %c0_i32, %c0_i32_0 : i32, i32
  }
  func.func @transform_8(%arg0: i32) -> (i32, i32) {
    %c0_i32 = arith.constant 0 : i32
    %c0_i32_0 = arith.constant 0 : i32
    %c0_i32_1 = arith.constant 0 : i32
    return %c0_i32, %c0_i32_0 : i32, i32
  }
  func.func @transform_9(%arg0: i32) -> (i32, i32) {
    %c0_i32 = arith.constant 0 : i32
    %c0_i32_0 = arith.constant 0 : i32
    %c0_i32_1 = arith.constant 0 : i32
    return %c0_i32, %c0_i32_0 : i32, i32
  }
  func.func @transform_10(%arg0: i32) -> (i32, i32) {
    %c0_i32 = arith.constant 0 : i32
    %c0_i32_0 = arith.constant 0 : i32
    %c0_i32_1 = arith.constant 0 : i32
    return %c0_i32, %c0_i32_0 : i32, i32
  }
  func.func @transform_11(%arg0: i32) -> (i32, i32) {
    %c0_i32 = arith.constant 0 : i32
    %c0_i32_0 = arith.constant 0 : i32
    %c0_i32_1 = arith.constant 0 : i32
    return %c0_i32, %c0_i32_0 : i32, i32
  }
  func.func @transform_12(%arg0: i32) -> (i32, i32) {
    %c0_i32 = arith.constant 0 : i32
    %c0_i32_0 = arith.constant 0 : i32
    %c0_i32_1 = arith.constant 0 : i32
    return %c0_i32, %c0_i32_0 : i32, i32
  }
  func.func @transform_13(%arg0: i32) -> (i32, i32) {
    %c0_i32 = arith.constant 0 : i32
    %c0_i32_0 = arith.constant 0 : i32
    %c0_i32_1 = arith.constant 0 : i32
    return %c0_i32, %c0_i32_0 : i32, i32
  }
  func.func @transform_14(%arg0: i32) -> (i32, i32) {
    %c0_i32 = arith.constant 0 : i32
    %c0_i32_0 = arith.constant 0 : i32
    %c0_i32_1 = arith.constant 0 : i32
    return %c0_i32, %c0_i32_0 : i32, i32
  }
  func.func @transform_15(%arg0: i32) -> (i32, i32) {
    %c0_i32 = arith.constant 0 : i32
    %c0_i32_0 = arith.constant 0 : i32
    %c0_i32_1 = arith.constant 0 : i32
    return %c0_i32, %c0_i32_0 : i32, i32
  }
  func.func @transform_16(%arg0: i32) -> (i32, i32) {
    %c0_i32 = arith.constant 0 : i32
    %c0_i32_0 = arith.constant 0 : i32
    %c0_i32_1 = arith.constant 0 : i32
    return %c0_i32, %c0_i32_0 : i32, i32
  }
  func.func @transform_17(%arg0: i32) -> (i32, i32) {
    %c0_i32 = arith.constant 0 : i32
    %c0_i32_0 = arith.constant 0 : i32
    %c0_i32_1 = arith.constant 0 : i32
    return %c0_i32, %c0_i32_0 : i32, i32
  }
  func.func @transform_18(%arg0: i32) -> (i32, i32) {
    %c0_i32 = arith.constant 0 : i32
    %c0_i32_0 = arith.constant 0 : i32
    %c0_i32_1 = arith.constant 0 : i32
    return %c0_i32, %c0_i32_0 : i32, i32
  }
  func.func @transform_19(%arg0: i32) -> (i32, i32) {
    %c0_i32 = arith.constant 0 : i32
    %c0_i32_0 = arith.constant 0 : i32
    %c0_i32_1 = arith.constant 0 : i32
    return %c0_i32, %c0_i32_0 : i32, i32
  }
  func.func @transform_20(%arg0: i32) -> (i32, i32) {
    %c0_i32 = arith.constant 0 : i32
    %c0_i32_0 = arith.constant 0 : i32
    %c0_i32_1 = arith.constant 0 : i32
    return %c0_i32, %c0_i32_0 : i32, i32
  }
  func.func @transform_21(%arg0: i32) -> (i32, i32) {
    %c0_i32 = arith.constant 0 : i32
    %c0_i32_0 = arith.constant 0 : i32
    %c0_i32_1 = arith.constant 0 : i32
    return %c0_i32, %c0_i32_0 : i32, i32
  }
  func.func @transform_22(%arg0: i32) -> (i32, i32, i32) {
    %c0_i32 = arith.constant 0 : i32
    %c0_i32_0 = arith.constant 0 : i32
    %c0_i32_1 = arith.constant 0 : i32
    return %arg0, %c0_i32, %c0_i32_0 : i32, i32, i32
  }
}

</mosaic_0001>

<llo_original>
// kernel: tpu_custom_call.1
$region0: #{tpu_custom_call.1}
  #allocation0 [shape = 'u32[]', space=smem, size = 0x4, offset = 0x4, fixed_abs, tag = 'smem constant byte address 0x4 - core index']
  #allocation1 [shape = 'u32[72,128]{1,0:T(1,128)}', space=vmem, size = 0x9000, scoped, tag = 'internal scratch']
  %s0 = inlined_call_operand.hbm [shape: f32[8,8,128], index: 0, kind: input, shape index: {}]
  %s1 = inlined_call_operand.vmem [shape: f32[8,16,128], index: 1, kind: input, shape index: {}]
  %s2 = inlined_call_operand.hbm [shape: f32[128,128], index: 2, kind: input, shape index: {}]
  %s3 = inlined_call_operand.hbm [shape: f32[1,128], index: 3, kind: input, shape index: {}]
  %s4 = inlined_call_operand.hbm [shape: f32[128,384], index: 4, kind: input, shape index: {}]
  %s5 = inlined_call_operand.hbm [shape: f32[1,384], index: 5, kind: input, shape index: {}]
  %s6 = inlined_call_operand.hbm [shape: f32[128,128], index: 6, kind: input, shape index: {}]
  %s7 = inlined_call_operand.vmem [shape: f32[1,128], index: 7, kind: input, shape index: {}]
  %s8 = inlined_call_operand.hbm [shape: f32[128,128], index: 8, kind: input, shape index: {}]
  %s9 = inlined_call_operand.vmem [shape: f32[1,128], index: 9, kind: input, shape index: {}]
  %s10 = inlined_call_operand.hbm [shape: f32[128,128], index: 10, kind: input, shape index: {}]
  %s11 = inlined_call_operand.vmem [shape: f32[1,128], index: 11, kind: input, shape index: {}]
  %s12 = inlined_call_operand.hbm [shape: f32[128,256], index: 12, kind: input, shape index: {}]
  %s13 = inlined_call_operand.vmem [shape: f32[1,256], index: 13, kind: input, shape index: {}]
  %s14 = inlined_call_operand.hbm [shape: f32[128,128], index: 14, kind: input, shape index: {}]
  %s15 = inlined_call_operand.vmem [shape: f32[1,128], index: 15, kind: input, shape index: {}]
  %s16 = inlined_call_operand.vmem [shape: f32[1,128], index: 16, kind: input, shape index: {}]
  %s17 = inlined_call_operand.vmem [shape: f32[1,128], index: 17, kind: input, shape index: {}]
  %s18 = inlined_call_operand.vmem [shape: f32[128,80], index: 18, kind: input, shape index: {}]
  %s19 = inlined_call_operand.vmem [shape: f32[1,80], index: 19, kind: input, shape index: {}]
  %s20 = inlined_call_operand.vmem [shape: f32[80,128], index: 20, kind: input, shape index: {}]
  %s21 = inlined_call_operand.vmem [shape: f32[1,128], index: 21, kind: input, shape index: {}]
  %s22 = inlined_call_operand.hbm [shape: f32[8,8,128], index: 22, kind: output, shape index: {}]
  %s23 = sld [smem:[#allocation0]]
  $region161: #{tpu_custom_call.1} parent=0
    _
  %s25 = ssub.s32 1, %s23
  %s26 = scalar_select 0, %s25, %s23
  $region1: #{tpu_custom_call.1} parent=0
    #allocation2 [shape = 'u8[32768]{0}', space=vmem, size = 0x8000, scoped, tag = 'input window, operand 0']
    #allocation3 [shape = 's32[2]{0}', space=sflag, size = 0x8, scoped, tag = 'scoped memory for tpu_custom_call.1']
    #allocation4 [shape = 's32[2]{0}', space=sflag, size = 0x8, scoped, tag = 'scoped memory for tpu_custom_call.1']
    #allocation5 [shape = 'u8[65536]{0}', space=vmem, size = 0x10000, scoped, tag = 'input window, operand 2, single buffered']
    #allocation6 [shape = 's32[1]{0}', space=sflag, size = 0x4, scoped, tag = 'scoped memory for tpu_custom_call.1']
    #allocation7 [shape = 'u8[512]{0}', space=vmem, size = 0x400, scoped, tag = 'input window, operand 3, single buffered']
    #allocation8 [shape = 'u8[196608]{0}', space=vmem, size = 0x30000, scoped, tag = 'input window, operand 4, single buffered']
    #allocation9 [shape = 's32[1]{0}', space=sflag, size = 0x4, scoped, tag = 'scoped memory for tpu_custom_call.1']
    #allocation10 [shape = 'u8[1536]{0}', space=vmem, size = 0x800, scoped, tag = 'input window, operand 5, single buffered']
    #allocation11 [shape = 'u8[65536]{0}', space=vmem, size = 0x10000, scoped, tag = 'input window, operand 6, single buffered']
    #allocation12 [shape = 's32[1]{0}', space=sflag, size = 0x4, scoped, tag = 'scoped memory for tpu_custom_call.1']
    #allocation13 [shape = 'u8[65536]{0}', space=vmem, size = 0x10000, scoped, tag = 'input window, operand 8, single buffered']
    #allocation14 [shape = 'u8[65536]{0}', space=vmem, size = 0x10000, scoped, tag = 'input window, operand 10, single buffered']
    #allocation15 [shape = 's32[1]{0}', space=sflag, size = 0x4, scoped, tag = 'scoped memory for tpu_custom_call.1']
    #allocation16 [shape = 'u8[131072]{0}', space=vmem, size = 0x20000, scoped, tag = 'input window, operand 12, single buffered']
    #allocation17 [shape = 'u8[65536]{0}', space=vmem, size = 0x10000, scoped, tag = 'input window, operand 14, single buffered']
    #allocation18 [shape = 's32[1]{0}', space=sflag, size = 0x4, scoped, tag = 'scoped memory for tpu_custom_call.1']
    #allocation19 [shape = 'u8[32768]{0}', space=vmem, size = 0x8000, scoped, tag = 'output window, operand 0']
    %27 = vsyncpa [#allocation3], 0
    %s28 = scalar_lea.sflag [#allocation3], 1
    %29 = vsyncpa %s28, 0
    %30 = vsyncpa [#allocation6], 0
    %31 = vsyncpa [#allocation9], 0
    %32 = vsyncpa [#allocation12], 0
    %33 = vsyncpa [#allocation15], 0
    %34 = vsyncpa [#allocation18], 0
    %35 = vsyncpa [#allocation4], 0
    %s36 = scalar_lea.sflag [#allocation4], 1
    %37 = vsyncpa %s36, 0
    loop: start=0, step=1, limit=4
    $region2: #{tpu_custom_call.1} parent=1 // loop_pre_header
      _
    $region3: #{tpu_custom_call.1} parent=1 // loop_header
      %s39 = sphi 0, %s43
      %p40 = scmp.ge.s32.totalorder %s39, 4
      %s49 = sphi 0, %s51
      %s52 = sphi 0, %s49
      %s53 = sphi 0, %s52
      %s69 = sphi 0, %s53
      %s75 = sphi 0, %s77
      %s78 = sphi 0, %s75
      %s79 = sphi 0, %s78
      %s95 = sphi 0, %s79
      %s99 = sphi 0, %s99
      %s101 = sphi 0, %s99
      %s102 = sphi 0, %s101
      %s116 = sphi 0, %s102
      %s120 = sphi 0, %s120
      %s122 = sphi 0, %s120
      %s123 = sphi 0, %s122
      %s137 = sphi 0, %s123
      %s141 = sphi 0, %s141
      %s143 = sphi 0, %s141
      %s144 = sphi 0, %s143
      %s158 = sphi 0, %s144
      %s162 = sphi 0, %s162
      %s164 = sphi 0, %s162
      %s165 = sphi 0, %s164
      %s179 = sphi 0, %s165
      %s183 = sphi 0, %s183
      %s185 = sphi 0, %s183
      %s186 = sphi 0, %s185
      %s200 = sphi 0, %s186
      %s204 = sphi 0, %s204
      %s206 = sphi 0, %s204
      %s207 = sphi 0, %s206
      %s221 = sphi 0, %s207
      %s225 = sphi 0, %s225
      %s227 = sphi 0, %s225
      %s228 = sphi 0, %s227
      %s242 = sphi 0, %s228
      %s246 = sphi 0, %s246
      %s248 = sphi 0, %s246
      %s249 = sphi 0, %s248
      %s263 = sphi 0, %s249
      %s267 = sphi 0, %s267
      %s269 = sphi 0, %s267
      %s270 = sphi 0, %s269
      %s284 = sphi 0, %s270
      %s288 = sphi 0, %s288
      %s290 = sphi 0, %s288
      %s291 = sphi 0, %s290
      %s305 = sphi 0, %s291
      %s309 = sphi 0, %s309
      %s311 = sphi 0, %s309
      %s312 = sphi 0, %s311
      %s326 = sphi 0, %s312
      %s330 = sphi 0, %s330
      %s332 = sphi 0, %s330
      %s333 = sphi 0, %s332
      %s347 = sphi 0, %s333
      %s351 = sphi 0, %s351
      %s353 = sphi 0, %s351
      %s354 = sphi 0, %s353
      %s368 = sphi 0, %s354
      %s372 = sphi 0, %s372
      %s374 = sphi 0, %s372
      %s375 = sphi 0, %s374
      %s389 = sphi 0, %s375
      %s393 = sphi 0, %s393
      %s395 = sphi 0, %s393
      %s396 = sphi 0, %s395
      %s410 = sphi 0, %s396
      %s414 = sphi 0, %s414
      %s416 = sphi 0, %s414
      %s417 = sphi 0, %s416
      %s431 = sphi 0, %s417
      %s435 = sphi 0, %s435
      %s437 = sphi 0, %s435
      %s438 = sphi 0, %s437
      %s452 = sphi 0, %s438
      %s456 = sphi 0, %s456
      %s458 = sphi 0, %s456
      %s459 = sphi 0, %s458
      %s473 = sphi 0, %s459
      %s477 = sphi 0, %s477
      %s479 = sphi 0, %s477
      %s480 = sphi 0, %s479
      %s494 = sphi 0, %s480
      %s498 = sphi 0, %s498
      %s500 = sphi 0, %s498
      %s501 = sphi 0, %s500
      %s515 = sphi 0, %s501
      %s521 = sphi 0, %s523
      %s524 = sphi 0, %s521
      %s525 = sphi 0, %s524
      %s541 = sphi 0, %s525
    $region4: #{tpu_custom_call.1} parent=1 // loop_header_branch
      %42 = sbr.rel (%p40) target = $region8
    $region5: #{tpu_custom_call.1} parent=1 // loop_body
      %s44 = ssub.s32 %s39, 1
      %s45 = ssub.s32 %s39, 2
      %s46 = sadd.s32 %s39, 1
      %s47 = ssub.s32 %s39, %s46
      %p48 = scmp.eq.s32.totalorder %s47, 0
      %s50 = sadd.s32 %s49, 1
      %s51 = scalar_select %p48, %s49, %s50
      %p54 = pneg %p48
      %p55 = scmp.eq.s32.totalorder %s39, 1
      %p56 = por %p54, %p55
      %p57 = scmp.ne.s32.totalorder %s49, %s52
      %p58 = scmp.eq.s32.totalorder %s39, 0
      %p59 = por %p57, %p58
      %p60 = scmp.ne.s32.totalorder %s49, %s52
      %p61 = scmp.eq.s32.totalorder %s44, 1
      %p62 = por %p60, %p61
      %p63 = scmp.ne.s32.totalorder %s52, %s53
      %p64 = scmp.eq.s32.totalorder %s44, 0
      %p65 = por %p63, %p64
      %p66 = scmp.ne.s32.totalorder %s52, %s53
      %p67 = scmp.eq.s32.totalorder %s45, 1
      %p68 = por %p66, %p67
      %p70 = scmp.ne.s32.totalorder %s53, %s69
      %p71 = scmp.eq.s32.totalorder %s45, 0
      %p72 = por %p70, %p71
      %s73 = ssub.s32 %s39, %s46
      %p74 = scmp.eq.s32.totalorder %s73, 0
      %s76 = sadd.s32 %s75, 1
      %s77 = scalar_select %p74, %s75, %s76
      %p80 = pneg %p74
      %p81 = scmp.eq.s32.totalorder %s39, 1
      %p82 = por %p80, %p81
      %p83 = scmp.ne.s32.totalorder %s75, %s78
      %p84 = scmp.eq.s32.totalorder %s39, 0
      %p85 = por %p83, %p84
      %p86 = scmp.ne.s32.totalorder %s75, %s78
      %p87 = scmp.eq.s32.totalorder %s44, 1
      %p88 = por %p86, %p87
      %p89 = scmp.ne.s32.totalorder %s78, %s79
      %p90 = scmp.eq.s32.totalorder %s44, 0
      %p91 = por %p89, %p90
      %p92 = scmp.ne.s32.totalorder %s78, %s79
      %p93 = scmp.eq.s32.totalorder %s45, 1
      %p94 = por %p92, %p93
      %p96 = scmp.ne.s32.totalorder %s79, %s95
      %p97 = scmp.eq.s32.totalorder %s45, 0
      %p98 = por %p96, %p97
      %s100 = sadd.s32 %s99, 1
      %p103 = scmp.eq.s32.totalorder %s39, 1
      %p104 = scmp.ne.s32.totalorder %s99, %s101
      %p105 = scmp.eq.s32.totalorder %s39, 0
      %p106 = por %p104, %p105
      %p107 = scmp.ne.s32.totalorder %s99, %s101
      %p108 = scmp.eq.s32.totalorder %s44, 1
      %p109 = por %p107, %p108
      %p110 = scmp.ne.s32.totalorder %s101, %s102
      %p111 = scmp.eq.s32.totalorder %s44, 0
      %p112 = por %p110, %p111
      %p113 = scmp.ne.s32.totalorder %s101, %s102
      %p114 = scmp.eq.s32.totalorder %s45, 1
      %p115 = por %p113, %p114
      %p117 = scmp.ne.s32.totalorder %s102, %s116
      %p118 = scmp.eq.s32.totalorder %s45, 0
      %p119 = por %p117, %p118
      %s121 = sadd.s32 %s120, 1
      %p124 = scmp.eq.s32.totalorder %s39, 1
      %p125 = scmp.ne.s32.totalorder %s120, %s122
      %p126 = scmp.eq.s32.totalorder %s39, 0
      %p127 = por %p125, %p126
      %p128 = scmp.ne.s32.totalorder %s120, %s122
      %p129 = scmp.eq.s32.totalorder %s44, 1
      %p130 = por %p128, %p129
      %p131 = scmp.ne.s32.totalorder %s122, %s123
      %p132 = scmp.eq.s32.totalorder %s44, 0
      %p133 = por %p131, %p132
      %p134 = scmp.ne.s32.totalorder %s122, %s123
      %p135 = scmp.eq.s32.totalorder %s45, 1
      %p136 = por %p134, %p135
      %p138 = scmp.ne.s32.totalorder %s123, %s137
      %p139 = scmp.eq.s32.totalorder %s45, 0
      %p140 = por %p138, %p139
      %s142 = sadd.s32 %s141, 1
      %p145 = scmp.eq.s32.totalorder %s39, 1
      %p146 = scmp.ne.s32.totalorder %s141, %s143
      %p147 = scmp.eq.s32.totalorder %s39, 0
      %p148 = por %p146, %p147
      %p149 = scmp.ne.s32.totalorder %s141, %s143
      %p150 = scmp.eq.s32.totalorder %s44, 1
      %p151 = por %p149, %p150
      %p152 = scmp.ne.s32.totalorder %s143, %s144
      %p153 = scmp.eq.s32.totalorder %s44, 0
      %p154 = por %p152, %p153
      %p155 = scmp.ne.s32.totalorder %s143, %s144
      %p156 = scmp.eq.s32.totalorder %s45, 1
      %p157 = por %p155, %p156
      %p159 = scmp.ne.s32.totalorder %s144, %s158
      %p160 = scmp.eq.s32.totalorder %s45, 0
      %p161 = por %p159, %p160
      %s163 = sadd.s32 %s162, 1
      %p166 = scmp.eq.s32.totalorder %s39, 1
      %p167 = scmp.ne.s32.totalorder %s162, %s164
      %p168 = scmp.eq.s32.totalorder %s39, 0
      %p169 = por %p167, %p168
      %p170 = scmp.ne.s32.totalorder %s162, %s164
      %p171 = scmp.eq.s32.totalorder %s44, 1
      %p172 = por %p170, %p171
      %p173 = scmp.ne.s32.totalorder %s164, %s165
      %p174 = scmp.eq.s32.totalorder %s44, 0
      %p175 = por %p173, %p174
      %p176 = scmp.ne.s32.totalorder %s164, %s165
      %p177 = scmp.eq.s32.totalorder %s45, 1
      %p178 = por %p176, %p177
      %p180 = scmp.ne.s32.totalorder %s165, %s179
      %p181 = scmp.eq.s32.totalorder %s45, 0
      %p182 = por %p180, %p181
      %s184 = sadd.s32 %s183, 1
      %p187 = scmp.eq.s32.totalorder %s39, 1
      %p188 = scmp.ne.s32.totalorder %s183, %s185
      %p189 = scmp.eq.s32.totalorder %s39, 0
      %p190 = por %p188, %p189
      %p191 = scmp.ne.s32.totalorder %s183, %s185
      %p192 = scmp.eq.s32.totalorder %s44, 1
      %p193 = por %p191, %p192
      %p194 = scmp.ne.s32.totalorder %s185, %s186
      %p195 = scmp.eq.s32.totalorder %s44, 0
      %p196 = por %p194, %p195
      %p197 = scmp.ne.s32.totalorder %s185, %s186
      %p198 = scmp.eq.s32.totalorder %s45, 1
      %p199 = por %p197, %p198
      %p201 = scmp.ne.s32.totalorder %s186, %s200
      %p202 = scmp.eq.s32.totalorder %s45, 0
      %p203 = por %p201, %p202
      %s205 = sadd.s32 %s204, 1
      %p208 = scmp.eq.s32.totalorder %s39, 1
      %p209 = scmp.ne.s32.totalorder %s204, %s206
      %p210 = scmp.eq.s32.totalorder %s39, 0
      %p211 = por %p209, %p210
      %p212 = scmp.ne.s32.totalorder %s204, %s206
      %p213 = scmp.eq.s32.totalorder %s44, 1
      %p214 = por %p212, %p213
      %p215 = scmp.ne.s32.totalorder %s206, %s207
      %p216 = scmp.eq.s32.totalorder %s44, 0
      %p217 = por %p215, %p216
      %p218 = scmp.ne.s32.totalorder %s206, %s207
      %p219 = scmp.eq.s32.totalorder %s45, 1
      %p220 = por %p218, %p219
      %p222 = scmp.ne.s32.totalorder %s207, %s221
      %p223 = scmp.eq.s32.totalorder %s45, 0
      %p224 = por %p222, %p223
      %s226 = sadd.s32 %s225, 1
      %p229 = scmp.eq.s32.totalorder %s39, 1
      %p230 = scmp.ne.s32.totalorder %s225, %s227
      %p231 = scmp.eq.s32.totalorder %s39, 0
      %p232 = por %p230, %p231
      %p233 = scmp.ne.s32.totalorder %s225, %s227
      %p234 = scmp.eq.s32.totalorder %s44, 1
      %p235 = por %p233, %p234
      %p236 = scmp.ne.s32.totalorder %s227, %s228
      %p237 = scmp.eq.s32.totalorder %s44, 0
      %p238 = por %p236, %p237
      %p239 = scmp.ne.s32.totalorder %s227, %s228
      %p240 = scmp.eq.s32.totalorder %s45, 1
      %p241 = por %p239, %p240
      %p243 = scmp.ne.s32.totalorder %s228, %s242
      %p244 = scmp.eq.s32.totalorder %s45, 0
      %p245 = por %p243, %p244
      %s247 = sadd.s32 %s246, 1
      %p250 = scmp.eq.s32.totalorder %s39, 1
      %p251 = scmp.ne.s32.totalorder %s246, %s248
      %p252 = scmp.eq.s32.totalorder %s39, 0
      %p253 = por %p251, %p252
      %p254 = scmp.ne.s32.totalorder %s246, %s248
      %p255 = scmp.eq.s32.totalorder %s44, 1
      %p256 = por %p254, %p255
      %p257 = scmp.ne.s32.totalorder %s248, %s249
      %p258 = scmp.eq.s32.totalorder %s44, 0
      %p259 = por %p257, %p258
      %p260 = scmp.ne.s32.totalorder %s248, %s249
      %p261 = scmp.eq.s32.totalorder %s45, 1
      %p262 = por %p260, %p261
      %p264 = scmp.ne.s32.totalorder %s249, %s263
      %p265 = scmp.eq.s32.totalorder %s45, 0
      %p266 = por %p264, %p265
      %s268 = sadd.s32 %s267, 1
      %p271 = scmp.eq.s32.totalorder %s39, 1
      %p272 = scmp.ne.s32.totalorder %s267, %s269
      %p273 = scmp.eq.s32.totalorder %s39, 0
      %p274 = por %p272, %p273
      %p275 = scmp.ne.s32.totalorder %s267, %s269
      %p276 = scmp.eq.s32.totalorder %s44, 1
      %p277 = por %p275, %p276
      %p278 = scmp.ne.s32.totalorder %s269, %s270
      %p279 = scmp.eq.s32.totalorder %s44, 0
      %p280 = por %p278, %p279
      %p281 = scmp.ne.s32.totalorder %s269, %s270
      %p282 = scmp.eq.s32.totalorder %s45, 1
      %p283 = por %p281, %p282
      %p285 = scmp.ne.s32.totalorder %s270, %s284
      %p286 = scmp.eq.s32.totalorder %s45, 0
      %p287 = por %p285, %p286
      %s289 = sadd.s32 %s288, 1
      %p292 = scmp.eq.s32.totalorder %s39, 1
      %p293 = scmp.ne.s32.totalorder %s288, %s290
      %p294 = scmp.eq.s32.totalorder %s39, 0
      %p295 = por %p293, %p294
      %p296 = scmp.ne.s32.totalorder %s288, %s290
      %p297 = scmp.eq.s32.totalorder %s44, 1
      %p298 = por %p296, %p297
      %p299 = scmp.ne.s32.totalorder %s290, %s291
      %p300 = scmp.eq.s32.totalorder %s44, 0
      %p301 = por %p299, %p300
      %p302 = scmp.ne.s32.totalorder %s290, %s291
      %p303 = scmp.eq.s32.totalorder %s45, 1
      %p304 = por %p302, %p303
      %p306 = scmp.ne.s32.totalorder %s291, %s305
      %p307 = scmp.eq.s32.totalorder %s45, 0
      %p308 = por %p306, %p307
      %s310 = sadd.s32 %s309, 1
      %p313 = scmp.eq.s32.totalorder %s39, 1
      %p314 = scmp.ne.s32.totalorder %s309, %s311
      %p315 = scmp.eq.s32.totalorder %s39, 0
      %p316 = por %p314, %p315
      %p317 = scmp.ne.s32.totalorder %s309, %s311
      %p318 = scmp.eq.s32.totalorder %s44, 1
      %p319 = por %p317, %p318
      %p320 = scmp.ne.s32.totalorder %s311, %s312
      %p321 = scmp.eq.s32.totalorder %s44, 0
      %p322 = por %p320, %p321
      %p323 = scmp.ne.s32.totalorder %s311, %s312
      %p324 = scmp.eq.s32.totalorder %s45, 1
      %p325 = por %p323, %p324
      %p327 = scmp.ne.s32.totalorder %s312, %s326
      %p328 = scmp.eq.s32.totalorder %s45, 0
      %p329 = por %p327, %p328
      %s331 = sadd.s32 %s330, 1
      %p334 = scmp.eq.s32.totalorder %s39, 1
      %p335 = scmp.ne.s32.totalorder %s330, %s332
      %p336 = scmp.eq.s32.totalorder %s39, 0
      %p337 = por %p335, %p336
      %p338 = scmp.ne.s32.totalorder %s330, %s332
      %p339 = scmp.eq.s32.totalorder %s44, 1
      %p340 = por %p338, %p339
      %p341 = scmp.ne.s32.totalorder %s332, %s333
      %p342 = scmp.eq.s32.totalorder %s44, 0
      %p343 = por %p341, %p342
      %p344 = scmp.ne.s32.totalorder %s332, %s333
      %p345 = scmp.eq.s32.totalorder %s45, 1
      %p346 = por %p344, %p345
      %p348 = scmp.ne.s32.totalorder %s333, %s347
      %p349 = scmp.eq.s32.totalorder %s45, 0
      %p350 = por %p348, %p349
      %s352 = sadd.s32 %s351, 1
      %p355 = scmp.eq.s32.totalorder %s39, 1
      %p356 = scmp.ne.s32.totalorder %s351, %s353
      %p357 = scmp.eq.s32.totalorder %s39, 0
      %p358 = por %p356, %p357
      %p359 = scmp.ne.s32.totalorder %s351, %s353
      %p360 = scmp.eq.s32.totalorder %s44, 1
      %p361 = por %p359, %p360
      %p362 = scmp.ne.s32.totalorder %s353, %s354
      %p363 = scmp.eq.s32.totalorder %s44, 0
      %p364 = por %p362, %p363
      %p365 = scmp.ne.s32.totalorder %s353, %s354
      %p366 = scmp.eq.s32.totalorder %s45, 1
      %p367 = por %p365, %p366
      %p369 = scmp.ne.s32.totalorder %s354, %s368
      %p370 = scmp.eq.s32.totalorder %s45, 0
      %p371 = por %p369, %p370
      %s373 = sadd.s32 %s372, 1
      %p376 = scmp.eq.s32.totalorder %s39, 1
      %p377 = scmp.ne.s32.totalorder %s372, %s374
      %p378 = scmp.eq.s32.totalorder %s39, 0
      %p379 = por %p377, %p378
      %p380 = scmp.ne.s32.totalorder %s372, %s374
      %p381 = scmp.eq.s32.totalorder %s44, 1
      %p382 = por %p380, %p381
      %p383 = scmp.ne.s32.totalorder %s374, %s375
      %p384 = scmp.eq.s32.totalorder %s44, 0
      %p385 = por %p383, %p384
      %p386 = scmp.ne.s32.totalorder %s374, %s375
      %p387 = scmp.eq.s32.totalorder %s45, 1
      %p388 = por %p386, %p387
      %p390 = scmp.ne.s32.totalorder %s375, %s389
      %p391 = scmp.eq.s32.totalorder %s45, 0
      %p392 = por %p390, %p391
      %s394 = sadd.s32 %s393, 1
      %p397 = scmp.eq.s32.totalorder %s39, 1
      %p398 = scmp.ne.s32.totalorder %s393, %s395
      %p399 = scmp.eq.s32.totalorder %s39, 0
      %p400 = por %p398, %p399
      %p401 = scmp.ne.s32.totalorder %s393, %s395
      %p402 = scmp.eq.s32.totalorder %s44, 1
      %p403 = por %p401, %p402
      %p404 = scmp.ne.s32.totalorder %s395, %s396
      %p405 = scmp.eq.s32.totalorder %s44, 0
      %p406 = por %p404, %p405
      %p407 = scmp.ne.s32.totalorder %s395, %s396
      %p408 = scmp.eq.s32.totalorder %s45, 1
      %p409 = por %p407, %p408
      %p411 = scmp.ne.s32.totalorder %s396, %s410
      %p412 = scmp.eq.s32.totalorder %s45, 0
      %p413 = por %p411, %p412
      %s415 = sadd.s32 %s414, 1
      %p418 = scmp.eq.s32.totalorder %s39, 1
      %p419 = scmp.ne.s32.totalorder %s414, %s416
      %p420 = scmp.eq.s32.totalorder %s39, 0
      %p421 = por %p419, %p420
      %p422 = scmp.ne.s32.totalorder %s414, %s416
      %p423 = scmp.eq.s32.totalorder %s44, 1
      %p424 = por %p422, %p423
      %p425 = scmp.ne.s32.totalorder %s416, %s417
      %p426 = scmp.eq.s32.totalorder %s44, 0
      %p427 = por %p425, %p426
      %p428 = scmp.ne.s32.totalorder %s416, %s417
      %p429 = scmp.eq.s32.totalorder %s45, 1
      %p430 = por %p428, %p429
      %p432 = scmp.ne.s32.totalorder %s417, %s431
      %p433 = scmp.eq.s32.totalorder %s45, 0
      %p434 = por %p432, %p433
      %s436 = sadd.s32 %s435, 1
      %p439 = scmp.eq.s32.totalorder %s39, 1
      %p440 = scmp.ne.s32.totalorder %s435, %s437
      %p441 = scmp.eq.s32.totalorder %s39, 0
      %p442 = por %p440, %p441
      %p443 = scmp.ne.s32.totalorder %s435, %s437
      %p444 = scmp.eq.s32.totalorder %s44, 1
      %p445 = por %p443, %p444
      %p446 = scmp.ne.s32.totalorder %s437, %s438
      %p447 = scmp.eq.s32.totalorder %s44, 0
      %p448 = por %p446, %p447
      %p449 = scmp.ne.s32.totalorder %s437, %s438
      %p450 = scmp.eq.s32.totalorder %s45, 1
      %p451 = por %p449, %p450
      %p453 = scmp.ne.s32.totalorder %s438, %s452
      %p454 = scmp.eq.s32.totalorder %s45, 0
      %p455 = por %p453, %p454
      %s457 = sadd.s32 %s456, 1
      %p460 = scmp.eq.s32.totalorder %s39, 1
      %p461 = scmp.ne.s32.totalorder %s456, %s458
      %p462 = scmp.eq.s32.totalorder %s39, 0
      %p463 = por %p461, %p462
      %p464 = scmp.ne.s32.totalorder %s456, %s458
      %p465 = scmp.eq.s32.totalorder %s44, 1
      %p466 = por %p464, %p465
      %p467 = scmp.ne.s32.totalorder %s458, %s459
      %p468 = scmp.eq.s32.totalorder %s44, 0
      %p469 = por %p467, %p468
      %p470 = scmp.ne.s32.totalorder %s458, %s459
      %p471 = scmp.eq.s32.totalorder %s45, 1
      %p472 = por %p470, %p471
      %p474 = scmp.ne.s32.totalorder %s459, %s473
      %p475 = scmp.eq.s32.totalorder %s45, 0
      %p476 = por %p474, %p475
      %s478 = sadd.s32 %s477, 1
      %p481 = scmp.eq.s32.totalorder %s39, 1
      %p482 = scmp.ne.s32.totalorder %s477, %s479
      %p483 = scmp.eq.s32.totalorder %s39, 0
      %p484 = por %p482, %p483
      %p485 = scmp.ne.s32.totalorder %s477, %s479
      %p486 = scmp.eq.s32.totalorder %s44, 1
      %p487 = por %p485, %p486
      %p488 = scmp.ne.s32.totalorder %s479, %s480
      %p489 = scmp.eq.s32.totalorder %s44, 0
      %p490 = por %p488, %p489
      %p491 = scmp.ne.s32.totalorder %s479, %s480
      %p492 = scmp.eq.s32.totalorder %s45, 1
      %p493 = por %p491, %p492
      %p495 = scmp.ne.s32.totalorder %s480, %s494
      %p496 = scmp.eq.s32.totalorder %s45, 0
      %p497 = por %p495, %p496
      %s499 = sadd.s32 %s498, 1
      %p502 = scmp.eq.s32.totalorder %s39, 1
      %p503 = scmp.ne.s32.totalorder %s498, %s500
      %p504 = scmp.eq.s32.totalorder %s39, 0
      %p505 = por %p503, %p504
      %p506 = scmp.ne.s32.totalorder %s498, %s500
      %p507 = scmp.eq.s32.totalorder %s44, 1
      %p508 = por %p506, %p507
      %p509 = scmp.ne.s32.totalorder %s500, %s501
      %p510 = scmp.eq.s32.totalorder %s44, 0
      %p511 = por %p509, %p510
      %p512 = scmp.ne.s32.totalorder %s500, %s501
      %p513 = scmp.eq.s32.totalorder %s45, 1
      %p514 = por %p512, %p513
      %p516 = scmp.ne.s32.totalorder %s501, %s515
      %p517 = scmp.eq.s32.totalorder %s45, 0
      %p518 = por %p516, %p517
      %s519 = ssub.s32 %s39, %s46
      %p520 = scmp.eq.s32.totalorder %s519, 0
      %s522 = sadd.s32 %s521, 1
      %s523 = scalar_select %p520, %s521, %s522
      %p526 = pneg %p520
      %p527 = scmp.eq.s32.totalorder %s39, 1
      %p528 = por %p526, %p527
      %p529 = scmp.ne.s32.totalorder %s521, %s524
      %p530 = scmp.eq.s32.totalorder %s39, 0
      %p531 = por %p529, %p530
      %p532 = scmp.ne.s32.totalorder %s521, %s524
      %p533 = scmp.eq.s32.totalorder %s44, 1
      %p534 = por %p532, %p533
      %p535 = scmp.ne.s32.totalorder %s524, %s525
      %p536 = scmp.eq.s32.totalorder %s44, 0
      %p537 = por %p535, %p536
      %p538 = scmp.ne.s32.totalorder %s524, %s525
      %p539 = scmp.eq.s32.totalorder %s45, 1
      %p540 = por %p538, %p539
      %p542 = scmp.ne.s32.totalorder %s525, %s541
      %p543 = scmp.eq.s32.totalorder %s45, 0
      %p544 = por %p542, %p543
      %p545 = scmp.le.s32.totalorder 1, %s39
      %p546 = scmp.lt.s32.totalorder %s39, 3
      %p547 = pnand %p545, %p546
      %p548 = pneg %p547
      // Predicated region
      $region9: #{tpu_custom_call.1} parent=5 // pred_check
        _
      $region10: #{tpu_custom_call.1} parent=5 // pred_check_branch
        %550 = sbr.rel (%p547) target = $region12
      $region11: #{tpu_custom_call.1} parent=5 // pred_region
        %s551 = ssub.s32 %s39, 1
        // Predicated region
        $region13: #{tpu_custom_call.1} parent=11 // pred_check
          %p552 = pneg %p112
        $region14: #{tpu_custom_call.1} parent=11 // pred_check_branch
          %554 = sbr.rel (%p552) target = $region16
        $region15: #{tpu_custom_call.1} parent=11 // pred_region
          %556 = vsyncadd [#allocation6], 0
          %s557 = sshll.u32 %s2, 4
          %s558 = int_to_ptr.hbm [resolvable:$true] %s557
          %s559 = sshll.u32 [#allocation5], 4
          %s560 = int_to_ptr.vmem [resolvable:$true] %s559
          %565 = dma.hbm_to_vmem [thread:$0]  %s558, 2048, %s560, [#allocation6], 128, 128, 8
        $region16: #{tpu_custom_call.1} parent=11 // pred_fallthru
          _
        // Predicated region
        $region17: #{tpu_custom_call.1} parent=11 // pred_check
          %p566 = pneg %p133
        $region18: #{tpu_custom_call.1} parent=11 // pred_check_branch
          %568 = sbr.rel (%p566) target = $region20
        $region19: #{tpu_custom_call.1} parent=11 // pred_region
          %570 = vsyncadd [#allocation6], 0
          %s572 = sshll.u32 %s3, 4
          %s573 = int_to_ptr.hbm [resolvable:$true] %s572
          %s574 = sshll.u32 [#allocation7], 4
          %s575 = int_to_ptr.vmem [resolvable:$true] %s574
          %577 = dma.hbm_to_vmem [thread:$0]  %s573, 16, %s575, [#allocation6]
        $region20: #{tpu_custom_call.1} parent=11 // pred_fallthru
          _
        // Predicated region
        $region21: #{tpu_custom_call.1} parent=11 // pred_check
          %p578 = pneg %p154
        $region22: #{tpu_custom_call.1} parent=11 // pred_check_branch
          %580 = sbr.rel (%p578) target = $region24
        $region23: #{tpu_custom_call.1} parent=11 // pred_region
          %582 = vsyncadd [#allocation9], 0
          %s583 = sshll.u32 %s4, 4
          %s584 = int_to_ptr.hbm [resolvable:$true] %s583
          %s585 = sshll.u32 [#allocation8], 4
          %s586 = int_to_ptr.vmem [resolvable:$true] %s585
          %591 = dma.hbm_to_vmem [thread:$0]  %s584, 6144, %s586, [#allocation9], 384, 384, 24
        $region24: #{tpu_custom_call.1} parent=11 // pred_fallthru
          _
        // Predicated region
        $region25: #{tpu_custom_call.1} parent=11 // pred_check
          %p592 = pneg %p175
        $region26: #{tpu_custom_call.1} parent=11 // pred_check_branch
          %594 = sbr.rel (%p592) target = $region28
        $region27: #{tpu_custom_call.1} parent=11 // pred_region
          %596 = vsyncadd [#allocation9], 0
          %s598 = sshll.u32 %s5, 4
          %s599 = int_to_ptr.hbm [resolvable:$true] %s598
          %s600 = sshll.u32 [#allocation10], 4
          %s601 = int_to_ptr.vmem [resolvable:$true] %s600
          %603 = dma.hbm_to_vmem [thread:$0]  %s599, 48, %s601, [#allocation9]
        $region28: #{tpu_custom_call.1} parent=11 // pred_fallthru
          _
        // Predicated region
        $region29: #{tpu_custom_call.1} parent=11 // pred_check
          %p604 = pneg %p196
        $region30: #{tpu_custom_call.1} parent=11 // pred_check_branch
          %606 = sbr.rel (%p604) target = $region32
        $region31: #{tpu_custom_call.1} parent=11 // pred_region
          %608 = vsyncadd [#allocation12], 0
          %s609 = sshll.u32 %s6, 4
          %s610 = int_to_ptr.hbm [resolvable:$true] %s609
          %s611 = sshll.u32 [#allocation11], 4
          %s612 = int_to_ptr.vmem [resolvable:$true] %s611
          %617 = dma.hbm_to_vmem [thread:$0]  %s610, 2048, %s612, [#allocation12], 128, 128, 8
        $region32: #{tpu_custom_call.1} parent=11 // pred_fallthru
          _
        // Predicated region
        $region33: #{tpu_custom_call.1} parent=11 // pred_check
          %p618 = pneg %p217
        $region34: #{tpu_custom_call.1} parent=11 // pred_check_branch
          %620 = sbr.rel (%p618) target = $region36
        $region35: #{tpu_custom_call.1} parent=11 // pred_region
          _
        $region36: #{tpu_custom_call.1} parent=11 // pred_fallthru
          _
        // Predicated region
        $region37: #{tpu_custom_call.1} parent=11 // pred_check
          %p621 = pneg %p238
        $region38: #{tpu_custom_call.1} parent=11 // pred_check_branch
          %623 = sbr.rel (%p621) target = $region40
        $region39: #{tpu_custom_call.1} parent=11 // pred_region
          %625 = vsyncadd [#allocation12], 0
          %s626 = sshll.u32 %s8, 4
          %s627 = int_to_ptr.hbm [resolvable:$true] %s626
          %s628 = sshll.u32 [#allocation13], 4
          %s629 = int_to_ptr.vmem [resolvable:$true] %s628
          %634 = dma.hbm_to_vmem [thread:$0]  %s627, 2048, %s629, [#allocation12], 128, 128, 8
        $region40: #{tpu_custom_call.1} parent=11 // pred_fallthru
          _
        // Predicated region
        $region41: #{tpu_custom_call.1} parent=11 // pred_check
          %p635 = pneg %p259
        $region42: #{tpu_custom_call.1} parent=11 // pred_check_branch
          %637 = sbr.rel (%p635) target = $region44
        $region43: #{tpu_custom_call.1} parent=11 // pred_region
          _
        $region44: #{tpu_custom_call.1} parent=11 // pred_fallthru
          _
        // Predicated region
        $region45: #{tpu_custom_call.1} parent=11 // pred_check
          %p638 = pneg %p280
        $region46: #{tpu_custom_call.1} parent=11 // pred_check_branch
          %640 = sbr.rel (%p638) target = $region48
        $region47: #{tpu_custom_call.1} parent=11 // pred_region
          %642 = vsyncadd [#allocation15], 0
          %s643 = sshll.u32 %s10, 4
          %s644 = int_to_ptr.hbm [resolvable:$true] %s643
          %s645 = sshll.u32 [#allocation14], 4
          %s646 = int_to_ptr.vmem [resolvable:$true] %s645
          %651 = dma.hbm_to_vmem [thread:$0]  %s644, 2048, %s646, [#allocation15], 128, 128, 8
        $region48: #{tpu_custom_call.1} parent=11 // pred_fallthru
          _
        // Predicated region
        $region49: #{tpu_custom_call.1} parent=11 // pred_check
          %p652 = pneg %p301
        $region50: #{tpu_custom_call.1} parent=11 // pred_check_branch
          %654 = sbr.rel (%p652) target = $region52
        $region51: #{tpu_custom_call.1} parent=11 // pred_region
          _
        $region52: #{tpu_custom_call.1} parent=11 // pred_fallthru
          _
        // Predicated region
        $region53: #{tpu_custom_call.1} parent=11 // pred_check
          %p655 = pneg %p322
        $region54: #{tpu_custom_call.1} parent=11 // pred_check_branch
          %657 = sbr.rel (%p655) target = $region56
        $region55: #{tpu_custom_call.1} parent=11 // pred_region
          %659 = vsyncadd [#allocation15], 0
          %s660 = sshll.u32 %s12, 4
          %s661 = int_to_ptr.hbm [resolvable:$true] %s660
          %s662 = sshll.u32 [#allocation16], 4
          %s663 = int_to_ptr.vmem [resolvable:$true] %s662
          %668 = dma.hbm_to_vmem [thread:$0]  %s661, 4096, %s663, [#allocation15], 256, 256, 16
        $region56: #{tpu_custom_call.1} parent=11 // pred_fallthru
          _
        // Predicated region
        $region57: #{tpu_custom_call.1} parent=11 // pred_check
          %p669 = pneg %p343
        $region58: #{tpu_custom_call.1} parent=11 // pred_check_branch
          %671 = sbr.rel (%p669) target = $region60
        $region59: #{tpu_custom_call.1} parent=11 // pred_region
          _
        $region60: #{tpu_custom_call.1} parent=11 // pred_fallthru
          _
        // Predicated region
        $region61: #{tpu_custom_call.1} parent=11 // pred_check
          %p672 = pneg %p364
        $region62: #{tpu_custom_call.1} parent=11 // pred_check_branch
          %674 = sbr.rel (%p672) target = $region64
        $region63: #{tpu_custom_call.1} parent=11 // pred_region
          %676 = vsyncadd [#allocation18], 0
          %s677 = sshll.u32 %s14, 4
          %s678 = int_to_ptr.hbm [resolvable:$true] %s677
          %s679 = sshll.u32 [#allocation17], 4
          %s680 = int_to_ptr.vmem [resolvable:$true] %s679
          %685 = dma.hbm_to_vmem [thread:$0]  %s678, 2048, %s680, [#allocation18], 128, 128, 8
        $region64: #{tpu_custom_call.1} parent=11 // pred_fallthru
          _
        // Predicated region
        $region65: #{tpu_custom_call.1} parent=11 // pred_check
          %p686 = pneg %p385
        $region66: #{tpu_custom_call.1} parent=11 // pred_check_branch
          %688 = sbr.rel (%p686) target = $region68
        $region67: #{tpu_custom_call.1} parent=11 // pred_region
          _
        $region68: #{tpu_custom_call.1} parent=11 // pred_fallthru
          _
        // Predicated region
        $region69: #{tpu_custom_call.1} parent=11 // pred_check
          %p689 = pneg %p406
        $region70: #{tpu_custom_call.1} parent=11 // pred_check_branch
          %691 = sbr.rel (%p689) target = $region72
        $region71: #{tpu_custom_call.1} parent=11 // pred_region
          _
        $region72: #{tpu_custom_call.1} parent=11 // pred_fallthru
          _
        // Predicated region
        $region73: #{tpu_custom_call.1} parent=11 // pred_check
          %p692 = pneg %p427
        $region74: #{tpu_custom_call.1} parent=11 // pred_check_branch
          %694 = sbr.rel (%p692) target = $region76
        $region75: #{tpu_custom_call.1} parent=11 // pred_region
          _
        $region76: #{tpu_custom_call.1} parent=11 // pred_fallthru
          _
        // Predicated region
        $region77: #{tpu_custom_call.1} parent=11 // pred_check
          %p695 = pneg %p448
        $region78: #{tpu_custom_call.1} parent=11 // pred_check_branch
          %697 = sbr.rel (%p695) target = $region80
        $region79: #{tpu_custom_call.1} parent=11 // pred_region
          _
        $region80: #{tpu_custom_call.1} parent=11 // pred_fallthru
          _
        // Predicated region
        $region81: #{tpu_custom_call.1} parent=11 // pred_check
          %p698 = pneg %p469
        $region82: #{tpu_custom_call.1} parent=11 // pred_check_branch
          %700 = sbr.rel (%p698) target = $region84
        $region83: #{tpu_custom_call.1} parent=11 // pred_region
          _
        $region84: #{tpu_custom_call.1} parent=11 // pred_fallthru
          _
        // Predicated region
        $region85: #{tpu_custom_call.1} parent=11 // pred_check
          %p701 = pneg %p490
        $region86: #{tpu_custom_call.1} parent=11 // pred_check_branch
          %703 = sbr.rel (%p701) target = $region88
        $region87: #{tpu_custom_call.1} parent=11 // pred_region
          _
        $region88: #{tpu_custom_call.1} parent=11 // pred_fallthru
          _
        // Predicated region
        $region89: #{tpu_custom_call.1} parent=11 // pred_check
          %p704 = pneg %p511
        $region90: #{tpu_custom_call.1} parent=11 // pred_check_branch
          %706 = sbr.rel (%p704) target = $region92
        $region91: #{tpu_custom_call.1} parent=11 // pred_region
          _
        $region92: #{tpu_custom_call.1} parent=11 // pred_fallthru
          _
      $region12: #{tpu_custom_call.1} parent=5 // pred_fallthru
        _
      %p707 = scmp.lt.s32.totalorder %s39, 2
      // Predicated region
      $region93: #{tpu_custom_call.1} parent=5 // pred_check
        %p708 = pneg %p707
      $region94: #{tpu_custom_call.1} parent=5 // pred_check_branch
        %710 = sbr.rel (%p708) target = $region96
      $region95: #{tpu_custom_call.1} parent=5 // pred_region
        // Predicated region
        $region97: #{tpu_custom_call.1} parent=95 // pred_check
          %p711 = pneg %p59
        $region98: #{tpu_custom_call.1} parent=95 // pred_check_branch
          %713 = sbr.rel (%p711) target = $region100
        $region99: #{tpu_custom_call.1} parent=95 // pred_region
          %s714 = sand.u32 %s49, 1
          %s715 = scalar_lea.sflag [#allocation3], %s714
          %s716 = sand.u32 %s49, 1
          %s717 = smul.addr %s716, 32
          %s718 = scalar_lea.vmem [#allocation2], %s717
          %s719 = smul.u32 4, %s39
          %721 = vsyncadd %s715, 0
          %s722 = smul.addr %s719, 8
          %s723 = scalar_lea.hbm %s0, %s722
          %s724 = sshll.u32 %s723, 4
          %s725 = int_to_ptr.hbm [resolvable:$true] %s724
          %s726 = sshll.u32 %s718, 4
          %s727 = int_to_ptr.vmem [resolvable:$true] %s726
          %732 = dma.hbm_to_vmem [thread:$0]  %s725, 512, %s727, %s715, 128, 128, 8
        $region100: #{tpu_custom_call.1} parent=95 // pred_fallthru
          _
        // Predicated region
        $region101: #{tpu_custom_call.1} parent=95 // pred_check
          %p733 = pneg %p85
        $region102: #{tpu_custom_call.1} parent=95 // pred_check_branch
          %735 = sbr.rel (%p733) target = $region104
        $region103: #{tpu_custom_call.1} parent=95 // pred_region
          %s736 = smul.u32 4, %s39
          %p737 = scmp.lt.s32.totalorder %s736, 7
          %s738 = scalar_select %p737, %s736, 7
          %s739 = smul.addr %s738, 2
          %s740 = smul.addr %s739, 8
          %s741 = scalar_lea.vmem %s1, %s740
          %s742 = smul.u32 4, %s39
        $region104: #{tpu_custom_call.1} parent=95 // pred_fallthru
          _
      $region96: #{tpu_custom_call.1} parent=5 // pred_fallthru
        _
      %p743 = scmp.le.s32.totalorder 1, %s39
      %p744 = scmp.lt.s32.totalorder %s39, 3
      %p745 = pnand %p743, %p744
      %p746 = pneg %p745
      // Predicated region
      $region105: #{tpu_custom_call.1} parent=5 // pred_check
        _
      $region106: #{tpu_custom_call.1} parent=5 // pred_check_branch
        %748 = sbr.rel (%p745) target = $region108
      $region107: #{tpu_custom_call.1} parent=5 // pred_region
        %s749 = ssub.s32 %s39, 1
        %s750 = sand.u32 %s52, 1
        %s751 = scalar_lea.sflag [#allocation3], %s750
        %s752 = sand.u32 %s52, 1
        %s753 = smul.addr %s752, 32
        %s754 = scalar_lea.vmem [#allocation2], %s753
        // Predicated region
        $region109: #{tpu_custom_call.1} parent=107 // pred_check
          %p755 = pneg %p65
        $region110: #{tpu_custom_call.1} parent=107 // pred_check_branch
          %757 = sbr.rel (%p755) target = $region112
        $region111: #{tpu_custom_call.1} parent=107 // pred_region
          %759 = dma.done %s751, 512
        $region112: #{tpu_custom_call.1} parent=107 // pred_fallthru
          _
        // Predicated region
        $region113: #{tpu_custom_call.1} parent=107 // pred_check
          %p760 = pneg %p112
        $region114: #{tpu_custom_call.1} parent=107 // pred_check_branch
          %762 = sbr.rel (%p760) target = $region116
        $region115: #{tpu_custom_call.1} parent=107 // pred_region
          %764 = dma.done [#allocation6], 2048
        $region116: #{tpu_custom_call.1} parent=107 // pred_fallthru
          _
        // Predicated region
        $region117: #{tpu_custom_call.1} parent=107 // pred_check
          %p765 = pneg %p133
        $region118: #{tpu_custom_call.1} parent=107 // pred_check_branch
          %767 = sbr.rel (%p765) target = $region120
        $region119: #{tpu_custom_call.1} parent=107 // pred_region
          %769 = dma.done [#allocation6], 16
        $region120: #{tpu_custom_call.1} parent=107 // pred_fallthru
          _
        // Predicated region
        $region121: #{tpu_custom_call.1} parent=107 // pred_check
          %p770 = pneg %p154
        $region122: #{tpu_custom_call.1} parent=107 // pred_check_branch
          %772 = sbr.rel (%p770) target = $region124
        $region123: #{tpu_custom_call.1} parent=107 // pred_region
          %774 = dma.done [#allocation9], 6144
        $region124: #{tpu_custom_call.1} parent=107 // pred_fallthru
          _
        // Predicated region
        $region125: #{tpu_custom_call.1} parent=107 // pred_check
          %p775 = pneg %p175
        $region126: #{tpu_custom_call.1} parent=107 // pred_check_branch
          %777 = sbr.rel (%p775) target = $region128
        $region127: #{tpu_custom_call.1} parent=107 // pred_region
          %779 = dma.done [#allocation9], 48
        $region128: #{tpu_custom_call.1} parent=107 // pred_fallthru
          _
        // Predicated region
        $region129: #{tpu_custom_call.1} parent=107 // pred_check
          %p780 = pneg %p196
        $region130: #{tpu_custom_call.1} parent=107 // pred_check_branch
          %782 = sbr.rel (%p780) target = $region132
        $region131: #{tpu_custom_call.1} parent=107 // pred_region
          %784 = dma.done [#allocation12], 2048
        $region132: #{tpu_custom_call.1} parent=107 // pred_fallthru
          _
        // Predicated region
        $region133: #{tpu_custom_call.1} parent=107 // pred_check
          %p785 = pneg %p238
        $region134: #{tpu_custom_call.1} parent=107 // pred_check_branch
          %787 = sbr.rel (%p785) target = $region136
        $region135: #{tpu_custom_call.1} parent=107 // pred_region
          %789 = dma.done [#allocation12], 2048
        $region136: #{tpu_custom_call.1} parent=107 // pred_fallthru
          _
        // Predicated region
        $region137: #{tpu_custom_call.1} parent=107 // pred_check
          %p790 = pneg %p280
        $region138: #{tpu_custom_call.1} parent=107 // pred_check_branch
          %792 = sbr.rel (%p790) target = $region140
        $region139: #{tpu_custom_call.1} parent=107 // pred_region
          %794 = dma.done [#allocation15], 2048
        $region140: #{tpu_custom_call.1} parent=107 // pred_fallthru
          _
        // Predicated region
        $region141: #{tpu_custom_call.1} parent=107 // pred_check
          %p795 = pneg %p322
        $region142: #{tpu_custom_call.1} parent=107 // pred_check_branch
          %797 = sbr.rel (%p795) target = $region144
        $region143: #{tpu_custom_call.1} parent=107 // pred_region
          %799 = dma.done [#allocation15], 4096
        $region144: #{tpu_custom_call.1} parent=107 // pred_fallthru
          _
        // Predicated region
        $region145: #{tpu_custom_call.1} parent=107 // pred_check
          %p800 = pneg %p364
        $region146: #{tpu_custom_call.1} parent=107 // pred_check_branch
          %802 = sbr.rel (%p800) target = $region148
        $region147: #{tpu_custom_call.1} parent=107 // pred_region
          %804 = dma.done [#allocation18], 2048
        $region148: #{tpu_custom_call.1} parent=107 // pred_fallthru
          _
        %s805 = sand.u32 %s52, 1
        %s806 = scalar_lea.sflag [#allocation3], %s805
        %s807 = sand.u32 %s52, 1
        %s808 = smul.addr %s807, 32
        %s809 = scalar_lea.vmem [#allocation2], %s808
        %p810 = pneg %p65
        %p811 = pneg %p62
        %s812 = smul.u32 4, %s44
        %p813 = scmp.lt.s32.totalorder %s812, 7
        %s814 = scalar_select %p813, %s812, 7
        %s815 = smul.addr %s814, 2
        %s816 = smul.addr %s815, 8
        %s817 = scalar_lea.vmem %s1, %s816
        %p818 = pneg %p91
        %p819 = pneg %p88
        %p820 = pneg %p112
        %p821 = pneg %p109
        %p822 = pneg %p133
        %p823 = pneg %p130
        %p824 = pneg %p154
        %p825 = pneg %p151
        %p826 = pneg %p175
        %p827 = pneg %p172
        %p828 = pneg %p196
        %p829 = pneg %p193
        %p830 = pneg %p217
        %p831 = pneg %p214
        %p832 = pneg %p238
        %p833 = pneg %p235
        %p834 = pneg %p259
        %p835 = pneg %p256
        %p836 = pneg %p280
        %p837 = pneg %p277
        %p838 = pneg %p301
        %p839 = pneg %p298
        %p840 = pneg %p322
        %p841 = pneg %p319
        %p842 = pneg %p343
        %p843 = pneg %p340
        %p844 = pneg %p364
        %p845 = pneg %p361
        %p846 = pneg %p385
        %p847 = pneg %p382
        %p848 = pneg %p406
        %p849 = pneg %p403
        %p850 = pneg %p427
        %p851 = pneg %p424
        %p852 = pneg %p448
        %p853 = pneg %p445
        %p854 = pneg %p469
        %p855 = pneg %p466
        %p856 = pneg %p490
        %p857 = pneg %p487
        %p858 = pneg %p511
        %p859 = pneg %p508
        %p860 = pneg %p537
        %p861 = pneg %p534
        %s862 = sand.u32 %s524, 1
        %s863 = scalar_lea.sflag [#allocation4], %s862
        %s864 = sand.u32 %s524, 1
        %s865 = smul.addr %s864, 32
        %s866 = scalar_lea.vmem [#allocation19], %s865
        %s867 = smul.u32 4, %s44
        %s868 = smul.u32 4, %s44
        %p869 = scmp.lt.s32.totalorder %s868, 7
        %s870 = scalar_select %p869, %s868, 7
        %s871 = smul.addr %s870, 2
        %s872 = smul.addr %s871, 8
        %s873 = scalar_lea.vmem %s1, %s872
        %s874 = smul.u32 4, %s44
        %s875 = smul.u32 4, %s44
        %v876 = vld [vmem:[%s754] sm:$0xff]
        %v877 = vld [vmem:[%s754 + $0x8] sm:$0xff]
        %v878 = vld [vmem:[%s754 + $0x10] sm:$0xff]
        %v879 = vld [vmem:[%s754 + $0x18] sm:$0xff]
        %v880 = vld [vmem:[%s873] sm:$0xff]
        %v881 = vld [vmem:[%s873 + $0x8] sm:$0xff]
        %v882 = vld [vmem:[%s873 + $0x10] sm:$0xff]
        %v883 = vld [vmem:[%s873 + $0x18] sm:$0xff]
        %v884 = vld [vmem:[%s873 + $0x20] sm:$0xff]
        %v885 = vld [vmem:[%s873 + $0x28] sm:$0xff]
        %v886 = vld [vmem:[%s873 + $0x30] sm:$0xff]
        %v887 = vld [vmem:[%s873 + $0x38] sm:$0xff]
        %v888 = vlaneseq
        %v889 = vand.u32 %v888, 127
        %v890 = vld [vmem:[#allocation5] sm:$0xff]
        %v891 = vld [vmem:[#allocation5 + $0x8] sm:$0xff]
        %v892 = vld [vmem:[#allocation5 + $0x10] sm:$0xff]
        %v893 = vld [vmem:[#allocation5 + $0x18] sm:$0xff]
        %v894 = vld [vmem:[#allocation5 + $0x20] sm:$0xff]
        %v895 = vld [vmem:[#allocation5 + $0x28] sm:$0xff]
        %v896 = vld [vmem:[#allocation5 + $0x30] sm:$0xff]
        %v897 = vld [vmem:[#allocation5 + $0x38] sm:$0xff]
        %v898 = vld [vmem:[#allocation5 + $0x40] sm:$0xff]
        %v899 = vld [vmem:[#allocation5 + $0x48] sm:$0xff]
        %v900 = vld [vmem:[#allocation5 + $0x50] sm:$0xff]
        %v901 = vld [vmem:[#allocation5 + $0x58] sm:$0xff]
        %v902 = vld [vmem:[#allocation5 + $0x60] sm:$0xff]
        %v903 = vld [vmem:[#allocation5 + $0x68] sm:$0xff]
        %v904 = vld [vmem:[#allocation5 + $0x70] sm:$0xff]
        %v905 = vld [vmem:[#allocation5 + $0x78] sm:$0xff]
        %v906 = vld [vmem:[#allocation7] sm:$0x1]
        %v908 = vperm.slane %v906, 0
        %910 = vmatpush.msra.mxu0 %v905
        %911 = vmatpush.msra.mxu0 %v904
        %912 = vmatpush.msra.mxu0 %v903
        %913 = vmatpush.msra.mxu0 %v902
        %914 = vmatpush.msra.mxu0 %v901
        %915 = vmatpush.msra.mxu0 %v900
        %916 = vmatpush.msra.mxu0 %v899
        %917 = vmatpush.msra.mxu0 %v898
        %918 = vmatpush.msra.mxu0 %v897
        %919 = vmatpush.msra.mxu0 %v896
        %920 = vmatpush.msra.mxu0 %v895
        %921 = vmatpush.msra.mxu0 %v894
        %922 = vmatpush.msra.mxu0 %v893
        %923 = vmatpush.msra.mxu0 %v892
        %924 = vmatpush.msra.mxu0 %v891
        %925 = vmatpush.msra.mxu0 %v890
        %926 = vmatmul.f32.gmra.mxu0 %v876
        %v927 = vpop.f32.mrf.mxu0
        %v928 = vadd.f32 %v908, %v927
        %929 = vmatmul.f32.gmra.mxu0 %v877
        %v930 = vpop.f32.mrf.mxu0
        %v931 = vadd.f32 %v908, %v930
        %932 = vmatmul.f32.gmra.mxu0 %v878
        %v933 = vpop.f32.mrf.mxu0
        %v934 = vadd.f32 %v908, %v933
        %935 = vmatmul.f32.gmra.mxu0 %v879
        %v936 = vpop.f32.mrf.mxu0
        %v937 = vadd.f32 %v908, %v936
        %938 = vdwg.mxu0
        %v939 = vld [vmem:[#allocation8] sm:$0xff]
        %v940 = vld [vmem:[#allocation8 + $0x8] sm:$0xff]
        %v941 = vld [vmem:[#allocation8 + $0x10] sm:$0xff]
        %v942 = vld [vmem:[#allocation8 + $0x18] sm:$0xff]
        %v943 = vld [vmem:[#allocation8 + $0x20] sm:$0xff]
        %v944 = vld [vmem:[#allocation8 + $0x28] sm:$0xff]
        %v945 = vld [vmem:[#allocation8 + $0x30] sm:$0xff]
        %v946 = vld [vmem:[#allocation8 + $0x38] sm:$0xff]
        %v947 = vld [vmem:[#allocation8 + $0x40] sm:$0xff]
        %v948 = vld [vmem:[#allocation8 + $0x48] sm:$0xff]
        %v949 = vld [vmem:[#allocation8 + $0x50] sm:$0xff]
        %v950 = vld [vmem:[#allocation8 + $0x58] sm:$0xff]
        %v951 = vld [vmem:[#allocation8 + $0x60] sm:$0xff]
        %v952 = vld [vmem:[#allocation8 + $0x68] sm:$0xff]
        %v953 = vld [vmem:[#allocation8 + $0x70] sm:$0xff]
        %v954 = vld [vmem:[#allocation8 + $0x78] sm:$0xff]
        %v955 = vld [vmem:[#allocation8 + $0x80] sm:$0xff]
        %v956 = vld [vmem:[#allocation8 + $0x88] sm:$0xff]
        %v957 = vld [vmem:[#allocation8 + $0x90] sm:$0xff]
        %v958 = vld [vmem:[#allocation8 + $0x98] sm:$0xff]
        %v959 = vld [vmem:[#allocation8 + $0xa0] sm:$0xff]
        %v960 = vld [vmem:[#allocation8 + $0xa8] sm:$0xff]
        %v961 = vld [vmem:[#allocation8 + $0xb0] sm:$0xff]
        %v962 = vld [vmem:[#allocation8 + $0xb8] sm:$0xff]
        %v963 = vld [vmem:[#allocation8 + $0xc0] sm:$0xff]
        %v964 = vld [vmem:[#allocation8 + $0xc8] sm:$0xff]
        %v965 = vld [vmem:[#allocation8 + $0xd0] sm:$0xff]
        %v966 = vld [vmem:[#allocation8 + $0xd8] sm:$0xff]
        %v967 = vld [vmem:[#allocation8 + $0xe0] sm:$0xff]
        %v968 = vld [vmem:[#allocation8 + $0xe8] sm:$0xff]
        %v969 = vld [vmem:[#allocation8 + $0xf0] sm:$0xff]
        %v970 = vld [vmem:[#allocation8 + $0xf8] sm:$0xff]
        %v971 = vld [vmem:[#allocation8 + $0x100] sm:$0xff]
        %v972 = vld [vmem:[#allocation8 + $0x108] sm:$0xff]
        %v973 = vld [vmem:[#allocation8 + $0x110] sm:$0xff]
        %v974 = vld [vmem:[#allocation8 + $0x118] sm:$0xff]
        %v975 = vld [vmem:[#allocation8 + $0x120] sm:$0xff]
        %v976 = vld [vmem:[#allocation8 + $0x128] sm:$0xff]
        %v977 = vld [vmem:[#allocation8 + $0x130] sm:$0xff]
        %v978 = vld [vmem:[#allocation8 + $0x138] sm:$0xff]
        %v979 = vld [vmem:[#allocation8 + $0x140] sm:$0xff]
        %v980 = vld [vmem:[#allocation8 + $0x148] sm:$0xff]
        %v981 = vld [vmem:[#allocation8 + $0x150] sm:$0xff]
        %v982 = vld [vmem:[#allocation8 + $0x158] sm:$0xff]
        %v983 = vld [vmem:[#allocation8 + $0x160] sm:$0xff]
        %v984 = vld [vmem:[#allocation8 + $0x168] sm:$0xff]
        %v985 = vld [vmem:[#allocation8 + $0x170] sm:$0xff]
        %v986 = vld [vmem:[#allocation8 + $0x178] sm:$0xff]
        %v987 = vld [vmem:[#allocation10] sm:$0x7]
        %v989 = vperm.slane %v987, 0
        %v990 = vperm.slane %v987, 1
        %v991 = vperm.slane %v987, 2
        %995 = vmatpush.msra.mxu0 %v984
        %996 = vmatpush.msra.mxu0 %v981
        %997 = vmatpush.msra.mxu0 %v978
        %998 = vmatpush.msra.mxu0 %v975
        %999 = vmatpush.msra.mxu0 %v972
        %1000 = vmatpush.msra.mxu0 %v969
        %1001 = vmatpush.msra.mxu0 %v966
        %1002 = vmatpush.msra.mxu0 %v963
        %1003 = vmatpush.msra.mxu0 %v960
        %1004 = vmatpush.msra.mxu0 %v957
        %1005 = vmatpush.msra.mxu0 %v954
        %1006 = vmatpush.msra.mxu0 %v951
        %1007 = vmatpush.msra.mxu0 %v948
        %1008 = vmatpush.msra.mxu0 %v945
        %1009 = vmatpush.msra.mxu0 %v942
        %1010 = vmatpush.msra.mxu0 %v939
        %1011 = vmatmul.f32.gmra.mxu0 %v928
        %v1012 = vpop.f32.mrf.mxu0
        %v1013 = vadd.f32 %v989, %v1012
        %1014 = vmatmul.f32.gmra.mxu0 %v931
        %v1015 = vpop.f32.mrf.mxu0
        %v1016 = vadd.f32 %v989, %v1015
        %1017 = vmatmul.f32.gmra.mxu0 %v934
        %v1018 = vpop.f32.mrf.mxu0
        %v1019 = vadd.f32 %v989, %v1018
        %1020 = vmatmul.f32.gmra.mxu0 %v937
        %v1021 = vpop.f32.mrf.mxu0
        %v1022 = vadd.f32 %v989, %v1021
        %1023 = vdwg.mxu0
        %1024 = vmatpush.msra.mxu0 %v985
        %1025 = vmatpush.msra.mxu0 %v982
        %1026 = vmatpush.msra.mxu0 %v979
        %1027 = vmatpush.msra.mxu0 %v976
        %1028 = vmatpush.msra.mxu0 %v973
        %1029 = vmatpush.msra.mxu0 %v970
        %1030 = vmatpush.msra.mxu0 %v967
        %1031 = vmatpush.msra.mxu0 %v964
        %1032 = vmatpush.msra.mxu0 %v961
        %1033 = vmatpush.msra.mxu0 %v958
        %1034 = vmatpush.msra.mxu0 %v955
        %1035 = vmatpush.msra.mxu0 %v952
        %1036 = vmatpush.msra.mxu0 %v949
        %1037 = vmatpush.msra.mxu0 %v946
        %1038 = vmatpush.msra.mxu0 %v943
        %1039 = vmatpush.msra.mxu0 %v940
        %1040 = vmatmul.f32.gmra.mxu0 %v928
        %v1041 = vpop.f32.mrf.mxu0
        %v1042 = vadd.f32 %v990, %v1041
        %1043 = vmatmul.f32.gmra.mxu0 %v931
        %v1044 = vpop.f32.mrf.mxu0
        %v1045 = vadd.f32 %v990, %v1044
        %1046 = vmatmul.f32.gmra.mxu0 %v934
        %v1047 = vpop.f32.mrf.mxu0
        %v1048 = vadd.f32 %v990, %v1047
        %1049 = vmatmul.f32.gmra.mxu0 %v937
        %v1050 = vpop.f32.mrf.mxu0
        %v1051 = vadd.f32 %v990, %v1050
        %1052 = vdwg.mxu0
        %1053 = vmatpush.msra.mxu0 %v986
        %1054 = vmatpush.msra.mxu0 %v983
        %1055 = vmatpush.msra.mxu0 %v980
        %1056 = vmatpush.msra.mxu0 %v977
        %1057 = vmatpush.msra.mxu0 %v974
        %1058 = vmatpush.msra.mxu0 %v971
        %1059 = vmatpush.msra.mxu0 %v968
        %1060 = vmatpush.msra.mxu0 %v965
        %1061 = vmatpush.msra.mxu0 %v962
        %1062 = vmatpush.msra.mxu0 %v959
        %1063 = vmatpush.msra.mxu0 %v956
        %1064 = vmatpush.msra.mxu0 %v953
        %1065 = vmatpush.msra.mxu0 %v950
        %1066 = vmatpush.msra.mxu0 %v947
        %1067 = vmatpush.msra.mxu0 %v944
        %1068 = vmatpush.msra.mxu0 %v941
        %1069 = vmatmul.f32.gmra.mxu0 %v928
        %v1070 = vpop.f32.mrf.mxu0
        %v1071 = vadd.f32 %v991, %v1070
        %1072 = vmatmul.f32.gmra.mxu0 %v931
        %v1073 = vpop.f32.mrf.mxu0
        %v1074 = vadd.f32 %v991, %v1073
        %1075 = vmatmul.f32.gmra.mxu0 %v934
        %v1076 = vpop.f32.mrf.mxu0
        %v1077 = vadd.f32 %v991, %v1076
        %1078 = vmatmul.f32.gmra.mxu0 %v937
        %v1079 = vpop.f32.mrf.mxu0
        %v1080 = vadd.f32 %v991, %v1079
        %1081 = vdwg.mxu0
        %vm1082 = vcmask 130048
        %v1084 = vsel %vm1082, %v1013, 0
        %v1087 = vsel %vm1082, %v1042, 0
        %1089 = vmatpush.xpose.msra.mxu0 0.0
        %1090 = vmatpush.xpose.msra.mxu0 0.0
        %1091 = vmatpush.xpose.msra.mxu0 0.0
        %1092 = vmatpush.xpose.msra.mxu0 0.0
        %1093 = vmatpush.xpose.msra.mxu0 0.0
        %1094 = vmatpush.xpose.msra.mxu0 0.0
        %1095 = vmatpush.xpose.msra.mxu0 0.0
        %1096 = vmatpush.xpose.msra.mxu0 0.0
        %1097 = vmatpush.xpose.msra.mxu0 0.0
        %1098 = vmatpush.xpose.msra.mxu0 0.0
        %1099 = vmatpush.xpose.msra.mxu0 0.0
        %1100 = vmatpush.xpose.msra.mxu0 0.0
        %1101 = vmatpush.xpose.msra.mxu0 0.0
        %1102 = vmatpush.xpose.msra.mxu0 0.0
        %1103 = vmatpush.xpose.msra.mxu0 0.0
        %1104 = vmatpush.xpose.msra.mxu0 %v1087
        %1105 = vmatmul.f32.gmra.mxu0 %v1084
        %v1106 = vpop.f32.mrf.mxu0
        %v1107 = vadd.f32 0.0, %v1106
        %1108 = vdwg.mxu0
        %v1110 = vsel %vm1082, %v1016, 0
        %v1113 = vsel %vm1082, %v1045, 0
        %1115 = vmatpush.xpose.msra.mxu0 0.0
        %1116 = vmatpush.xpose.msra.mxu0 0.0
        %1117 = vmatpush.xpose.msra.mxu0 0.0
        %1118 = vmatpush.xpose.msra.mxu0 0.0
        %1119 = vmatpush.xpose.msra.mxu0 0.0
        %1120 = vmatpush.xpose.msra.mxu0 0.0
        %1121 = vmatpush.xpose.msra.mxu0 0.0
        %1122 = vmatpush.xpose.msra.mxu0 0.0
        %1123 = vmatpush.xpose.msra.mxu0 0.0
        %1124 = vmatpush.xpose.msra.mxu0 0.0
        %1125 = vmatpush.xpose.msra.mxu0 0.0
        %1126 = vmatpush.xpose.msra.mxu0 0.0
        %1127 = vmatpush.xpose.msra.mxu0 0.0
        %1128 = vmatpush.xpose.msra.mxu0 0.0
        %1129 = vmatpush.xpose.msra.mxu0 0.0
        %1130 = vmatpush.xpose.msra.mxu0 %v1113
        %1131 = vmatmul.f32.gmra.mxu0 %v1110
        %v1132 = vpop.f32.mrf.mxu0
        %v1133 = vadd.f32 0.0, %v1132
        %1134 = vdwg.mxu0
        %v1136 = vsel %vm1082, %v1019, 0
        %v1139 = vsel %vm1082, %v1048, 0
        %1141 = vmatpush.xpose.msra.mxu0 0.0
        %1142 = vmatpush.xpose.msra.mxu0 0.0
        %1143 = vmatpush.xpose.msra.mxu0 0.0
        %1144 = vmatpush.xpose.msra.mxu0 0.0
        %1145 = vmatpush.xpose.msra.mxu0 0.0
        %1146 = vmatpush.xpose.msra.mxu0 0.0
        %1147 = vmatpush.xpose.msra.mxu0 0.0
        %1148 = vmatpush.xpose.msra.mxu0 0.0
        %1149 = vmatpush.xpose.msra.mxu0 0.0
        %1150 = vmatpush.xpose.msra.mxu0 0.0
        %1151 = vmatpush.xpose.msra.mxu0 0.0
        %1152 = vmatpush.xpose.msra.mxu0 0.0
        %1153 = vmatpush.xpose.msra.mxu0 0.0
        %1154 = vmatpush.xpose.msra.mxu0 0.0
        %1155 = vmatpush.xpose.msra.mxu0 0.0
        %1156 = vmatpush.xpose.msra.mxu0 %v1139
        %1157 = vmatmul.f32.gmra.mxu0 %v1136
        %v1158 = vpop.f32.mrf.mxu0
        %v1159 = vadd.f32 0.0, %v1158
        %1160 = vdwg.mxu0
        %v1162 = vsel %vm1082, %v1022, 0
        %v1165 = vsel %vm1082, %v1051, 0
        %1167 = vmatpush.xpose.msra.mxu0 0.0
        %1168 = vmatpush.xpose.msra.mxu0 0.0
        %1169 = vmatpush.xpose.msra.mxu0 0.0
        %1170 = vmatpush.xpose.msra.mxu0 0.0
        %1171 = vmatpush.xpose.msra.mxu0 0.0
        %1172 = vmatpush.xpose.msra.mxu0 0.0
        %1173 = vmatpush.xpose.msra.mxu0 0.0
        %1174 = vmatpush.xpose.msra.mxu0 0.0
        %1175 = vmatpush.xpose.msra.mxu0 0.0
        %1176 = vmatpush.xpose.msra.mxu0 0.0
        %1177 = vmatpush.xpose.msra.mxu0 0.0
        %1178 = vmatpush.xpose.msra.mxu0 0.0
        %1179 = vmatpush.xpose.msra.mxu0 0.0
        %1180 = vmatpush.xpose.msra.mxu0 0.0
        %1181 = vmatpush.xpose.msra.mxu0 0.0
        %1182 = vmatpush.xpose.msra.mxu0 %v1165
        %1183 = vmatmul.f32.gmra.mxu0 %v1162
        %v1184 = vpop.f32.mrf.mxu0
        %v1185 = vadd.f32 0.0, %v1184
        %1186 = vdwg.mxu0
        %vm1187 = vcmask 64512
        %v1188 = vsel %vm1187, %v1107, -inf
        %1189 = vmax.xlane.f32.xlu0 %v1188
        %v1190 = vpop.xlane.xlu0 %1189
        %v1191 = vsel %vm1187, %v1133, -inf
        %1192 = vmax.xlane.f32.xlu0 %v1191
        %v1193 = vpop.xlane.xlu0 %1192
        %v1194 = vsel %vm1187, %v1159, -inf
        %1195 = vmax.xlane.f32.xlu0 %v1194
        %v1196 = vpop.xlane.xlu0 %1195
        %v1197 = vsel %vm1187, %v1185, -inf
        %1198 = vmax.xlane.f32.xlu0 %v1197
        %v1199 = vpop.xlane.xlu0 %1198
        %v1200 = vsub.f32 %v1107, %v1190
        %v1201 = vsub.f32 %v1133, %v1193
        %v1202 = vsub.f32 %v1159, %v1196
        %v1203 = vsub.f32 %v1185, %v1199
        %v1204 = vmul.f32 %v1200, 1.442695
        %v1205 = vpow.pop %v1204
        %v1206 = vmul.f32 %v1201, 1.442695
        %v1207 = vpow.pop %v1206
        %v1208 = vmul.f32 %v1202, 1.442695
        %v1209 = vpow.pop %v1208
        %v1210 = vmul.f32 %v1203, 1.442695
        %v1211 = vpow.pop %v1210
        %v1212 = vsel %vm1187, %v1205, 0.0
        %1213 = vadd.xlane.f32.xlu0 %v1212
        %v1214 = vpop.xlane.xlu0 %1213
        %v1215 = vsel %vm1187, %v1207, 0.0
        %1216 = vadd.xlane.f32.xlu0 %v1215
        %v1217 = vpop.xlane.xlu0 %1216
        %v1218 = vsel %vm1187, %v1209, 0.0
        %1219 = vadd.xlane.f32.xlu0 %v1218
        %v1220 = vpop.xlane.xlu0 %1219
        %v1221 = vsel %vm1187, %v1211, 0.0
        %1222 = vadd.xlane.f32.xlu0 %v1221
        %v1223 = vpop.xlane.xlu0 %1222
        %v1224 = vrcp.pop %v1214
        %v1225 = vrcp.pop %v1217
        %v1226 = vrcp.pop %v1220
        %v1227 = vrcp.pop %v1223
        %v1228 = vmul.f32 %v1205, %v1224
        %v1229 = vmul.f32 %v1207, %v1225
        %v1230 = vmul.f32 %v1209, %v1226
        %v1231 = vmul.f32 %v1211, %v1227
        %vm1232 = vcmp.ge.s32.totalorder %v889, 0
        %vm1233 = vcmp.lt.s32.totalorder %v889, 16
        %vm1234 = vmand %vm1232, %vm1233
        %v1235 = vsel %vm1234, 1, 0
        %vm1236 = vcmp.eq.s32.totalorder %v1235, 1
        %v1237 = vsel %vm1236, %v1071, 0.0
        %v1238 = vsel %vm1236, %v1074, 0.0
        %v1239 = vsel %vm1236, %v1077, 0.0
        %v1240 = vsel %vm1236, %v1080, 0.0
        %1241 = vrot.lane.b32.xlu0 %v1013, 112
        %v1242 = vpop.permute.xlu0 %1241
        %1243 = vrot.lane.b32.xlu0 %v1042, 112
        %v1244 = vpop.permute.xlu0 %1243
        %v1245 = vsel %vm1082, %v1242, 0
        %v1247 = vsel %vm1082, %v1244, 0
        %1249 = vmatpush.xpose.msra.mxu0 0.0
        %1250 = vmatpush.xpose.msra.mxu0 0.0
        %1251 = vmatpush.xpose.msra.mxu0 0.0
        %1252 = vmatpush.xpose.msra.mxu0 0.0
        %1253 = vmatpush.xpose.msra.mxu0 0.0
        %1254 = vmatpush.xpose.msra.mxu0 0.0
        %1255 = vmatpush.xpose.msra.mxu0 0.0
        %1256 = vmatpush.xpose.msra.mxu0 0.0
        %1257 = vmatpush.xpose.msra.mxu0 0.0
        %1258 = vmatpush.xpose.msra.mxu0 0.0
        %1259 = vmatpush.xpose.msra.mxu0 0.0
        %1260 = vmatpush.xpose.msra.mxu0 0.0
        %1261 = vmatpush.xpose.msra.mxu0 0.0
        %1262 = vmatpush.xpose.msra.mxu0 0.0
        %1263 = vmatpush.xpose.msra.mxu0 0.0
        %1264 = vmatpush.xpose.msra.mxu0 %v1247
        %1265 = vmatmul.f32.gmra.mxu0 %v1245
        %v1266 = vpop.f32.mrf.mxu0
        %v1267 = vadd.f32 0.0, %v1266
        %1268 = vdwg.mxu0
        %1269 = vrot.lane.b32.xlu0 %v1016, 112
        %v1270 = vpop.permute.xlu0 %1269
        %1271 = vrot.lane.b32.xlu0 %v1045, 112
        %v1272 = vpop.permute.xlu0 %1271
        %v1273 = vsel %vm1082, %v1270, 0
        %v1275 = vsel %vm1082, %v1272, 0
        %1277 = vmatpush.xpose.msra.mxu0 0.0
        %1278 = vmatpush.xpose.msra.mxu0 0.0
        %1279 = vmatpush.xpose.msra.mxu0 0.0
        %1280 = vmatpush.xpose.msra.mxu0 0.0
        %1281 = vmatpush.xpose.msra.mxu0 0.0
        %1282 = vmatpush.xpose.msra.mxu0 0.0
        %1283 = vmatpush.xpose.msra.mxu0 0.0
        %1284 = vmatpush.xpose.msra.mxu0 0.0
        %1285 = vmatpush.xpose.msra.mxu0 0.0
        %1286 = vmatpush.xpose.msra.mxu0 0.0
        %1287 = vmatpush.xpose.msra.mxu0 0.0
        %1288 = vmatpush.xpose.msra.mxu0 0.0
        %1289 = vmatpush.xpose.msra.mxu0 0.0
        %1290 = vmatpush.xpose.msra.mxu0 0.0
        %1291 = vmatpush.xpose.msra.mxu0 0.0
        %1292 = vmatpush.xpose.msra.mxu0 %v1275
        %1293 = vmatmul.f32.gmra.mxu0 %v1273
        %v1294 = vpop.f32.mrf.mxu0
        %v1295 = vadd.f32 0.0, %v1294
        %1296 = vdwg.mxu0
        %1297 = vrot.lane.b32.xlu0 %v1019, 112
        %v1298 = vpop.permute.xlu0 %1297
        %1299 = vrot.lane.b32.xlu0 %v1048, 112
        %v1300 = vpop.permute.xlu0 %1299
        %v1301 = vsel %vm1082, %v1298, 0
        %v1303 = vsel %vm1082, %v1300, 0
        %1305 = vmatpush.xpose.msra.mxu0 0.0
        %1306 = vmatpush.xpose.msra.mxu0 0.0
        %1307 = vmatpush.xpose.msra.mxu0 0.0
        %1308 = vmatpush.xpose.msra.mxu0 0.0
        %1309 = vmatpush.xpose.msra.mxu0 0.0
        %1310 = vmatpush.xpose.msra.mxu0 0.0
        %1311 = vmatpush.xpose.msra.mxu0 0.0
        %1312 = vmatpush.xpose.msra.mxu0 0.0
        %1313 = vmatpush.xpose.msra.mxu0 0.0
        %1314 = vmatpush.xpose.msra.mxu0 0.0
        %1315 = vmatpush.xpose.msra.mxu0 0.0
        %1316 = vmatpush.xpose.msra.mxu0 0.0
        %1317 = vmatpush.xpose.msra.mxu0 0.0
        %1318 = vmatpush.xpose.msra.mxu0 0.0
        %1319 = vmatpush.xpose.msra.mxu0 0.0
        %1320 = vmatpush.xpose.msra.mxu0 %v1303
        %1321 = vmatmul.f32.gmra.mxu0 %v1301
        %v1322 = vpop.f32.mrf.mxu0
        %v1323 = vadd.f32 0.0, %v1322
        %1324 = vdwg.mxu0
        %1325 = vrot.lane.b32.xlu0 %v1022, 112
        %v1326 = vpop.permute.xlu0 %1325
        %1327 = vrot.lane.b32.xlu0 %v1051, 112
        %v1328 = vpop.permute.xlu0 %1327
        %v1329 = vsel %vm1082, %v1326, 0
        %v1331 = vsel %vm1082, %v1328, 0
        %1333 = vmatpush.xpose.msra.mxu0 0.0
        %1334 = vmatpush.xpose.msra.mxu0 0.0
        %1335 = vmatpush.xpose.msra.mxu0 0.0
        %1336 = vmatpush.xpose.msra.mxu0 0.0
        %1337 = vmatpush.xpose.msra.mxu0 0.0
        %1338 = vmatpush.xpose.msra.mxu0 0.0
        %1339 = vmatpush.xpose.msra.mxu0 0.0
        %1340 = vmatpush.xpose.msra.mxu0 0.0
        %1341 = vmatpush.xpose.msra.mxu0 0.0
        %1342 = vmatpush.xpose.msra.mxu0 0.0
        %1343 = vmatpush.xpose.msra.mxu0 0.0
        %1344 = vmatpush.xpose.msra.mxu0 0.0
        %1345 = vmatpush.xpose.msra.mxu0 0.0
        %1346 = vmatpush.xpose.msra.mxu0 0.0
        %1347 = vmatpush.xpose.msra.mxu0 0.0
        %1348 = vmatpush.xpose.msra.mxu0 %v1331
        %1349 = vmatmul.f32.gmra.mxu0 %v1329
        %v1350 = vpop.f32.mrf.mxu0
        %v1351 = vadd.f32 0.0, %v1350
        %1352 = vdwg.mxu0
        %v1353 = vsel %vm1187, %v1267, -inf
        %1354 = vmax.xlane.f32.xlu0 %v1353
        %v1355 = vpop.xlane.xlu0 %1354
        %v1356 = vsel %vm1187, %v1295, -inf
        %1357 = vmax.xlane.f32.xlu0 %v1356
        %v1358 = vpop.xlane.xlu0 %1357
        %v1359 = vsel %vm1187, %v1323, -inf
        %1360 = vmax.xlane.f32.xlu0 %v1359
        %v1361 = vpop.xlane.xlu0 %1360
        %v1362 = vsel %vm1187, %v1351, -inf
        %1363 = vmax.xlane.f32.xlu0 %v1362
        %v1364 = vpop.xlane.xlu0 %1363
        %v1365 = vsub.f32 %v1267, %v1355
        %v1366 = vsub.f32 %v1295, %v1358
        %v1367 = vsub.f32 %v1323, %v1361
        %v1368 = vsub.f32 %v1351, %v1364
        %v1369 = vmul.f32 %v1365, 1.442695
        %v1370 = vpow.pop %v1369
        %v1371 = vmul.f32 %v1366, 1.442695
        %v1372 = vpow.pop %v1371
        %v1373 = vmul.f32 %v1367, 1.442695
        %v1374 = vpow.pop %v1373
        %v1375 = vmul.f32 %v1368, 1.442695
        %v1376 = vpow.pop %v1375
        %v1377 = vsel %vm1187, %v1370, 0.0
        %1378 = vadd.xlane.f32.xlu0 %v1377
        %v1379 = vpop.xlane.xlu0 %1378
        %v1380 = vsel %vm1187, %v1372, 0.0
        %1381 = vadd.xlane.f32.xlu0 %v1380
        %v1382 = vpop.xlane.xlu0 %1381
        %v1383 = vsel %vm1187, %v1374, 0.0
        %1384 = vadd.xlane.f32.xlu0 %v1383
        %v1385 = vpop.xlane.xlu0 %1384
        %v1386 = vsel %vm1187, %v1376, 0.0
        %1387 = vadd.xlane.f32.xlu0 %v1386
        %v1388 = vpop.xlane.xlu0 %1387
        %v1389 = vrcp.pop %v1379
        %v1390 = vrcp.pop %v1382
        %v1391 = vrcp.pop %v1385
        %v1392 = vrcp.pop %v1388
        %v1393 = vmul.f32 %v1370, %v1389
        %v1394 = vmul.f32 %v1372, %v1390
        %v1395 = vmul.f32 %v1374, %v1391
        %v1396 = vmul.f32 %v1376, %v1392
        %vm1397 = vcmp.ge.s32.totalorder %v889, 16
        %vm1398 = vcmp.lt.s32.totalorder %v889, 32
        %vm1399 = vmand %vm1397, %vm1398
        %v1400 = vsel %vm1399, 1, 0
        %vm1401 = vcmp.eq.s32.totalorder %v1400, 1
        %v1402 = vsel %vm1401, %v1071, 0.0
        %v1403 = vsel %vm1401, %v1074, 0.0
        %v1404 = vsel %vm1401, %v1077, 0.0
        %v1405 = vsel %vm1401, %v1080, 0.0
        %v1407 = vsel %vm1187, %v1393, 0
        %1409 = vmatpush.msra.mxu0 0.0
        %1410 = vmatpush.msra.mxu0 0.0
        %1411 = vmatpush.msra.mxu0 0.0
        %1412 = vmatpush.msra.mxu0 0.0
        %1413 = vmatpush.msra.mxu0 0.0
        %1414 = vmatpush.msra.mxu0 0.0
        %1415 = vmatpush.msra.mxu0 0.0
        %1416 = vmatpush.msra.mxu0 0.0
        %1417 = vmatpush.msra.mxu0 0.0
        %1418 = vmatpush.msra.mxu0 0.0
        %1419 = vmatpush.msra.mxu0 0.0
        %1420 = vmatpush.msra.mxu0 0.0
        %1421 = vmatpush.msra.mxu0 0.0
        %1422 = vmatpush.msra.mxu0 0.0
        %1423 = vmatpush.msra.mxu0 0.0
        %1424 = vmatpush.msra.mxu0 %v1402
        %1425 = vmatmul.f32.gmra.mxu0 %v1407
        %v1426 = vpop.f32.mrf.mxu0
        %v1427 = vadd.f32 0.0, %v1426
        %1428 = vdwg.mxu0
        %v1430 = vsel %vm1187, %v1394, 0
        %1432 = vmatpush.msra.mxu0 0.0
        %1433 = vmatpush.msra.mxu0 0.0
        %1434 = vmatpush.msra.mxu0 0.0
        %1435 = vmatpush.msra.mxu0 0.0
        %1436 = vmatpush.msra.mxu0 0.0
        %1437 = vmatpush.msra.mxu0 0.0
        %1438 = vmatpush.msra.mxu0 0.0
        %1439 = vmatpush.msra.mxu0 0.0
        %1440 = vmatpush.msra.mxu0 0.0
        %1441 = vmatpush.msra.mxu0 0.0
        %1442 = vmatpush.msra.mxu0 0.0
        %1443 = vmatpush.msra.mxu0 0.0
        %1444 = vmatpush.msra.mxu0 0.0
        %1445 = vmatpush.msra.mxu0 0.0
        %1446 = vmatpush.msra.mxu0 0.0
        %1447 = vmatpush.msra.mxu0 %v1403
        %1448 = vmatmul.f32.gmra.mxu0 %v1430
        %v1449 = vpop.f32.mrf.mxu0
        %v1450 = vadd.f32 0.0, %v1449
        %1451 = vdwg.mxu0
        %v1453 = vsel %vm1187, %v1395, 0
        %1455 = vmatpush.msra.mxu0 0.0
        %1456 = vmatpush.msra.mxu0 0.0
        %1457 = vmatpush.msra.mxu0 0.0
        %1458 = vmatpush.msra.mxu0 0.0
        %1459 = vmatpush.msra.mxu0 0.0
        %1460 = vmatpush.msra.mxu0 0.0
        %1461 = vmatpush.msra.mxu0 0.0
        %1462 = vmatpush.msra.mxu0 0.0
        %1463 = vmatpush.msra.mxu0 0.0
        %1464 = vmatpush.msra.mxu0 0.0
        %1465 = vmatpush.msra.mxu0 0.0
        %1466 = vmatpush.msra.mxu0 0.0
        %1467 = vmatpush.msra.mxu0 0.0
        %1468 = vmatpush.msra.mxu0 0.0
        %1469 = vmatpush.msra.mxu0 0.0
        %1470 = vmatpush.msra.mxu0 %v1404
        %1471 = vmatmul.f32.gmra.mxu0 %v1453
        %v1472 = vpop.f32.mrf.mxu0
        %v1473 = vadd.f32 0.0, %v1472
        %1474 = vdwg.mxu0
        %v1476 = vsel %vm1187, %v1396, 0
        %1478 = vmatpush.msra.mxu0 0.0
        %1479 = vmatpush.msra.mxu0 0.0
        %1480 = vmatpush.msra.mxu0 0.0
        %1481 = vmatpush.msra.mxu0 0.0
        %1482 = vmatpush.msra.mxu0 0.0
        %1483 = vmatpush.msra.mxu0 0.0
        %1484 = vmatpush.msra.mxu0 0.0
        %1485 = vmatpush.msra.mxu0 0.0
        %1486 = vmatpush.msra.mxu0 0.0
        %1487 = vmatpush.msra.mxu0 0.0
        %1488 = vmatpush.msra.mxu0 0.0
        %1489 = vmatpush.msra.mxu0 0.0
        %1490 = vmatpush.msra.mxu0 0.0
        %1491 = vmatpush.msra.mxu0 0.0
        %1492 = vmatpush.msra.mxu0 0.0
        %1493 = vmatpush.msra.mxu0 %v1405
        %1494 = vmatmul.f32.gmra.mxu0 %v1476
        %v1495 = vpop.f32.mrf.mxu0
        %v1496 = vadd.f32 0.0, %v1495
        %1497 = vdwg.mxu0
        %v1499 = vsel %vm1187, %v1228, 0
        %1501 = vmatpush.msra.mxu0 0.0
        %1502 = vmatpush.msra.mxu0 0.0
        %1503 = vmatpush.msra.mxu0 0.0
        %1504 = vmatpush.msra.mxu0 0.0
        %1505 = vmatpush.msra.mxu0 0.0
        %1506 = vmatpush.msra.mxu0 0.0
        %1507 = vmatpush.msra.mxu0 0.0
        %1508 = vmatpush.msra.mxu0 0.0
        %1509 = vmatpush.msra.mxu0 0.0
        %1510 = vmatpush.msra.mxu0 0.0
        %1511 = vmatpush.msra.mxu0 0.0
        %1512 = vmatpush.msra.mxu0 0.0
        %1513 = vmatpush.msra.mxu0 0.0
        %1514 = vmatpush.msra.mxu0 0.0
        %1515 = vmatpush.msra.mxu0 0.0
        %1516 = vmatpush.msra.mxu0 %v1237
        %1517 = vmatmul.f32.gmra.mxu0 %v1499
        %v1518 = vpop.f32.mrf.mxu0
        %v1519 = vadd.f32 %v1427, %v1518
        %1520 = vdwg.mxu0
        %v1522 = vsel %vm1187, %v1229, 0
        %1524 = vmatpush.msra.mxu0 0.0
        %1525 = vmatpush.msra.mxu0 0.0
        %1526 = vmatpush.msra.mxu0 0.0
        %1527 = vmatpush.msra.mxu0 0.0
        %1528 = vmatpush.msra.mxu0 0.0
        %1529 = vmatpush.msra.mxu0 0.0
        %1530 = vmatpush.msra.mxu0 0.0
        %1531 = vmatpush.msra.mxu0 0.0
        %1532 = vmatpush.msra.mxu0 0.0
        %1533 = vmatpush.msra.mxu0 0.0
        %1534 = vmatpush.msra.mxu0 0.0
        %1535 = vmatpush.msra.mxu0 0.0
        %1536 = vmatpush.msra.mxu0 0.0
        %1537 = vmatpush.msra.mxu0 0.0
        %1538 = vmatpush.msra.mxu0 0.0
        %1539 = vmatpush.msra.mxu0 %v1238
        %1540 = vmatmul.f32.gmra.mxu0 %v1522
        %v1541 = vpop.f32.mrf.mxu0
        %v1542 = vadd.f32 %v1450, %v1541
        %1543 = vdwg.mxu0
        %v1545 = vsel %vm1187, %v1230, 0
        %1547 = vmatpush.msra.mxu0 0.0
        %1548 = vmatpush.msra.mxu0 0.0
        %1549 = vmatpush.msra.mxu0 0.0
        %1550 = vmatpush.msra.mxu0 0.0
        %1551 = vmatpush.msra.mxu0 0.0
        %1552 = vmatpush.msra.mxu0 0.0
        %1553 = vmatpush.msra.mxu0 0.0
        %1554 = vmatpush.msra.mxu0 0.0
        %1555 = vmatpush.msra.mxu0 0.0
        %1556 = vmatpush.msra.mxu0 0.0
        %1557 = vmatpush.msra.mxu0 0.0
        %1558 = vmatpush.msra.mxu0 0.0
        %1559 = vmatpush.msra.mxu0 0.0
        %1560 = vmatpush.msra.mxu0 0.0
        %1561 = vmatpush.msra.mxu0 0.0
        %1562 = vmatpush.msra.mxu0 %v1239
        %1563 = vmatmul.f32.gmra.mxu0 %v1545
        %v1564 = vpop.f32.mrf.mxu0
        %v1565 = vadd.f32 %v1473, %v1564
        %1566 = vdwg.mxu0
        %v1568 = vsel %vm1187, %v1231, 0
        %1570 = vmatpush.msra.mxu0 0.0
        %1571 = vmatpush.msra.mxu0 0.0
        %1572 = vmatpush.msra.mxu0 0.0
        %1573 = vmatpush.msra.mxu0 0.0
        %1574 = vmatpush.msra.mxu0 0.0
        %1575 = vmatpush.msra.mxu0 0.0
        %1576 = vmatpush.msra.mxu0 0.0
        %1577 = vmatpush.msra.mxu0 0.0
        %1578 = vmatpush.msra.mxu0 0.0
        %1579 = vmatpush.msra.mxu0 0.0
        %1580 = vmatpush.msra.mxu0 0.0
        %1581 = vmatpush.msra.mxu0 0.0
        %1582 = vmatpush.msra.mxu0 0.0
        %1583 = vmatpush.msra.mxu0 0.0
        %1584 = vmatpush.msra.mxu0 0.0
        %1585 = vmatpush.msra.mxu0 %v1240
        %1586 = vmatmul.f32.gmra.mxu0 %v1568
        %v1587 = vpop.f32.mrf.mxu0
        %v1588 = vadd.f32 %v1496, %v1587
        %1589 = vdwg.mxu0
        %1590 = vrot.lane.b32.xlu0 %v1013, 96
        %v1591 = vpop.permute.xlu0 %1590
        %1592 = vrot.lane.b32.xlu0 %v1042, 96
        %v1593 = vpop.permute.xlu0 %1592
        %v1594 = vsel %vm1082, %v1591, 0
        %v1596 = vsel %vm1082, %v1593, 0
        %1598 = vmatpush.xpose.msra.mxu0 0.0
        %1599 = vmatpush.xpose.msra.mxu0 0.0
        %1600 = vmatpush.xpose.msra.mxu0 0.0
        %1601 = vmatpush.xpose.msra.mxu0 0.0
        %1602 = vmatpush.xpose.msra.mxu0 0.0
        %1603 = vmatpush.xpose.msra.mxu0 0.0
        %1604 = vmatpush.xpose.msra.mxu0 0.0
        %1605 = vmatpush.xpose.msra.mxu0 0.0
        %1606 = vmatpush.xpose.msra.mxu0 0.0
        %1607 = vmatpush.xpose.msra.mxu0 0.0
        %1608 = vmatpush.xpose.msra.mxu0 0.0
        %1609 = vmatpush.xpose.msra.mxu0 0.0
        %1610 = vmatpush.xpose.msra.mxu0 0.0
        %1611 = vmatpush.xpose.msra.mxu0 0.0
        %1612 = vmatpush.xpose.msra.mxu0 0.0
        %1613 = vmatpush.xpose.msra.mxu0 %v1596
        %1614 = vmatmul.f32.gmra.mxu0 %v1594
        %v1615 = vpop.f32.mrf.mxu0
        %v1616 = vadd.f32 0.0, %v1615
        %1617 = vdwg.mxu0
        %1618 = vrot.lane.b32.xlu0 %v1016, 96
        %v1619 = vpop.permute.xlu0 %1618
        %1620 = vrot.lane.b32.xlu0 %v1045, 96
        %v1621 = vpop.permute.xlu0 %1620
        %v1622 = vsel %vm1082, %v1619, 0
        %v1624 = vsel %vm1082, %v1621, 0
        %1626 = vmatpush.xpose.msra.mxu0 0.0
        %1627 = vmatpush.xpose.msra.mxu0 0.0
        %1628 = vmatpush.xpose.msra.mxu0 0.0
        %1629 = vmatpush.xpose.msra.mxu0 0.0
        %1630 = vmatpush.xpose.msra.mxu0 0.0
        %1631 = vmatpush.xpose.msra.mxu0 0.0
        %1632 = vmatpush.xpose.msra.mxu0 0.0
        %1633 = vmatpush.xpose.msra.mxu0 0.0
        %1634 = vmatpush.xpose.msra.mxu0 0.0
        %1635 = vmatpush.xpose.msra.mxu0 0.0
        %1636 = vmatpush.xpose.msra.mxu0 0.0
        %1637 = vmatpush.xpose.msra.mxu0 0.0
        %1638 = vmatpush.xpose.msra.mxu0 0.0
        %1639 = vmatpush.xpose.msra.mxu0 0.0
        %1640 = vmatpush.xpose.msra.mxu0 0.0
        %1641 = vmatpush.xpose.msra.mxu0 %v1624
        %1642 = vmatmul.f32.gmra.mxu0 %v1622
        %v1643 = vpop.f32.mrf.mxu0
        %v1644 = vadd.f32 0.0, %v1643
        %1645 = vdwg.mxu0
        %1646 = vrot.lane.b32.xlu0 %v1019, 96
        %v1647 = vpop.permute.xlu0 %1646
        %1648 = vrot.lane.b32.xlu0 %v1048, 96
        %v1649 = vpop.permute.xlu0 %1648
        %v1650 = vsel %vm1082, %v1647, 0
        %v1652 = vsel %vm1082, %v1649, 0
        %1654 = vmatpush.xpose.msra.mxu0 0.0
        %1655 = vmatpush.xpose.msra.mxu0 0.0
        %1656 = vmatpush.xpose.msra.mxu0 0.0
        %1657 = vmatpush.xpose.msra.mxu0 0.0
        %1658 = vmatpush.xpose.msra.mxu0 0.0
        %1659 = vmatpush.xpose.msra.mxu0 0.0
        %1660 = vmatpush.xpose.msra.mxu0 0.0
        %1661 = vmatpush.xpose.msra.mxu0 0.0
        %1662 = vmatpush.xpose.msra.mxu0 0.0
        %1663 = vmatpush.xpose.msra.mxu0 0.0
        %1664 = vmatpush.xpose.msra.mxu0 0.0
        %1665 = vmatpush.xpose.msra.mxu0 0.0
        %1666 = vmatpush.xpose.msra.mxu0 0.0
        %1667 = vmatpush.xpose.msra.mxu0 0.0
        %1668 = vmatpush.xpose.msra.mxu0 0.0
        %1669 = vmatpush.xpose.msra.mxu0 %v1652
        %1670 = vmatmul.f32.gmra.mxu0 %v1650
        %v1671 = vpop.f32.mrf.mxu0
        %v1672 = vadd.f32 0.0, %v1671
        %1673 = vdwg.mxu0
        %1674 = vrot.lane.b32.xlu0 %v1022, 96
        %v1675 = vpop.permute.xlu0 %1674
        %1676 = vrot.lane.b32.xlu0 %v1051, 96
        %v1677 = vpop.permute.xlu0 %1676
        %v1678 = vsel %vm1082, %v1675, 0
        %v1680 = vsel %vm1082, %v1677, 0
        %1682 = vmatpush.xpose.msra.mxu0 0.0
        %1683 = vmatpush.xpose.msra.mxu0 0.0
        %1684 = vmatpush.xpose.msra.mxu0 0.0
        %1685 = vmatpush.xpose.msra.mxu0 0.0
        %1686 = vmatpush.xpose.msra.mxu0 0.0
        %1687 = vmatpush.xpose.msra.mxu0 0.0
        %1688 = vmatpush.xpose.msra.mxu0 0.0
        %1689 = vmatpush.xpose.msra.mxu0 0.0
        %1690 = vmatpush.xpose.msra.mxu0 0.0
        %1691 = vmatpush.xpose.msra.mxu0 0.0
        %1692 = vmatpush.xpose.msra.mxu0 0.0
        %1693 = vmatpush.xpose.msra.mxu0 0.0
        %1694 = vmatpush.xpose.msra.mxu0 0.0
        %1695 = vmatpush.xpose.msra.mxu0 0.0
        %1696 = vmatpush.xpose.msra.mxu0 0.0
        %1697 = vmatpush.xpose.msra.mxu0 %v1680
        %1698 = vmatmul.f32.gmra.mxu0 %v1678
        %v1699 = vpop.f32.mrf.mxu0
        %v1700 = vadd.f32 0.0, %v1699
        %1701 = vdwg.mxu0
        %v1702 = vsel %vm1187, %v1616, -inf
        %1703 = vmax.xlane.f32.xlu0 %v1702
        %v1704 = vpop.xlane.xlu0 %1703
        %v1705 = vsel %vm1187, %v1644, -inf
        %1706 = vmax.xlane.f32.xlu0 %v1705
        %v1707 = vpop.xlane.xlu0 %1706
        %v1708 = vsel %vm1187, %v1672, -inf
        %1709 = vmax.xlane.f32.xlu0 %v1708
        %v1710 = vpop.xlane.xlu0 %1709
        %v1711 = vsel %vm1187, %v1700, -inf
        %1712 = vmax.xlane.f32.xlu0 %v1711
        %v1713 = vpop.xlane.xlu0 %1712
        %v1714 = vsub.f32 %v1616, %v1704
        %v1715 = vsub.f32 %v1644, %v1707
        %v1716 = vsub.f32 %v1672, %v1710
        %v1717 = vsub.f32 %v1700, %v1713
        %v1718 = vmul.f32 %v1714, 1.442695
        %v1719 = vpow.pop %v1718
        %v1720 = vmul.f32 %v1715, 1.442695
        %v1721 = vpow.pop %v1720
        %v1722 = vmul.f32 %v1716, 1.442695
        %v1723 = vpow.pop %v1722
        %v1724 = vmul.f32 %v1717, 1.442695
        %v1725 = vpow.pop %v1724
        %v1726 = vsel %vm1187, %v1719, 0.0
        %1727 = vadd.xlane.f32.xlu0 %v1726
        %v1728 = vpop.xlane.xlu0 %1727
        %v1729 = vsel %vm1187, %v1721, 0.0
        %1730 = vadd.xlane.f32.xlu0 %v1729
        %v1731 = vpop.xlane.xlu0 %1730
        %v1732 = vsel %vm1187, %v1723, 0.0
        %1733 = vadd.xlane.f32.xlu0 %v1732
        %v1734 = vpop.xlane.xlu0 %1733
        %v1735 = vsel %vm1187, %v1725, 0.0
        %1736 = vadd.xlane.f32.xlu0 %v1735
        %v1737 = vpop.xlane.xlu0 %1736
        %v1738 = vrcp.pop %v1728
        %v1739 = vrcp.pop %v1731
        %v1740 = vrcp.pop %v1734
        %v1741 = vrcp.pop %v1737
        %v1742 = vmul.f32 %v1719, %v1738
        %v1743 = vmul.f32 %v1721, %v1739
        %v1744 = vmul.f32 %v1723, %v1740
        %v1745 = vmul.f32 %v1725, %v1741
        %vm1746 = vcmp.ge.s32.totalorder %v889, 32
        %vm1747 = vcmp.lt.s32.totalorder %v889, 48
        %vm1748 = vmand %vm1746, %vm1747
        %v1749 = vsel %vm1748, 1, 0
        %vm1750 = vcmp.eq.s32.totalorder %v1749, 1
        %v1751 = vsel %vm1750, %v1071, 0.0
        %v1752 = vsel %vm1750, %v1074, 0.0
        %v1753 = vsel %vm1750, %v1077, 0.0
        %v1754 = vsel %vm1750, %v1080, 0.0
        %v1756 = vsel %vm1187, %v1742, 0
        %1758 = vmatpush.msra.mxu0 0.0
        %1759 = vmatpush.msra.mxu0 0.0
        %1760 = vmatpush.msra.mxu0 0.0
        %1761 = vmatpush.msra.mxu0 0.0
        %1762 = vmatpush.msra.mxu0 0.0
        %1763 = vmatpush.msra.mxu0 0.0
        %1764 = vmatpush.msra.mxu0 0.0
        %1765 = vmatpush.msra.mxu0 0.0
        %1766 = vmatpush.msra.mxu0 0.0
        %1767 = vmatpush.msra.mxu0 0.0
        %1768 = vmatpush.msra.mxu0 0.0
        %1769 = vmatpush.msra.mxu0 0.0
        %1770 = vmatpush.msra.mxu0 0.0
        %1771 = vmatpush.msra.mxu0 0.0
        %1772 = vmatpush.msra.mxu0 0.0
        %1773 = vmatpush.msra.mxu0 %v1751
        %1774 = vmatmul.f32.gmra.mxu0 %v1756
        %v1775 = vpop.f32.mrf.mxu0
        %v1776 = vadd.f32 0.0, %v1775
        %1777 = vdwg.mxu0
        %v1779 = vsel %vm1187, %v1743, 0
        %1781 = vmatpush.msra.mxu0 0.0
        %1782 = vmatpush.msra.mxu0 0.0
        %1783 = vmatpush.msra.mxu0 0.0
        %1784 = vmatpush.msra.mxu0 0.0
        %1785 = vmatpush.msra.mxu0 0.0
        %1786 = vmatpush.msra.mxu0 0.0
        %1787 = vmatpush.msra.mxu0 0.0
        %1788 = vmatpush.msra.mxu0 0.0
        %1789 = vmatpush.msra.mxu0 0.0
        %1790 = vmatpush.msra.mxu0 0.0
        %1791 = vmatpush.msra.mxu0 0.0
        %1792 = vmatpush.msra.mxu0 0.0
        %1793 = vmatpush.msra.mxu0 0.0
        %1794 = vmatpush.msra.mxu0 0.0
        %1795 = vmatpush.msra.mxu0 0.0
        %1796 = vmatpush.msra.mxu0 %v1752
        %1797 = vmatmul.f32.gmra.mxu0 %v1779
        %v1798 = vpop.f32.mrf.mxu0
        %v1799 = vadd.f32 0.0, %v1798
        %1800 = vdwg.mxu0
        %v1802 = vsel %vm1187, %v1744, 0
        %1804 = vmatpush.msra.mxu0 0.0
        %1805 = vmatpush.msra.mxu0 0.0
        %1806 = vmatpush.msra.mxu0 0.0
        %1807 = vmatpush.msra.mxu0 0.0
        %1808 = vmatpush.msra.mxu0 0.0
        %1809 = vmatpush.msra.mxu0 0.0
        %1810 = vmatpush.msra.mxu0 0.0
        %1811 = vmatpush.msra.mxu0 0.0
        %1812 = vmatpush.msra.mxu0 0.0
        %1813 = vmatpush.msra.mxu0 0.0
        %1814 = vmatpush.msra.mxu0 0.0
        %1815 = vmatpush.msra.mxu0 0.0
        %1816 = vmatpush.msra.mxu0 0.0
        %1817 = vmatpush.msra.mxu0 0.0
        %1818 = vmatpush.msra.mxu0 0.0
        %1819 = vmatpush.msra.mxu0 %v1753
        %1820 = vmatmul.f32.gmra.mxu0 %v1802
        %v1821 = vpop.f32.mrf.mxu0
        %v1822 = vadd.f32 0.0, %v1821
        %1823 = vdwg.mxu0
        %v1825 = vsel %vm1187, %v1745, 0
        %1827 = vmatpush.msra.mxu0 0.0
        %1828 = vmatpush.msra.mxu0 0.0
        %1829 = vmatpush.msra.mxu0 0.0
        %1830 = vmatpush.msra.mxu0 0.0
        %1831 = vmatpush.msra.mxu0 0.0
        %1832 = vmatpush.msra.mxu0 0.0
        %1833 = vmatpush.msra.mxu0 0.0
        %1834 = vmatpush.msra.mxu0 0.0
        %1835 = vmatpush.msra.mxu0 0.0
        %1836 = vmatpush.msra.mxu0 0.0
        %1837 = vmatpush.msra.mxu0 0.0
        %1838 = vmatpush.msra.mxu0 0.0
        %1839 = vmatpush.msra.mxu0 0.0
        %1840 = vmatpush.msra.mxu0 0.0
        %1841 = vmatpush.msra.mxu0 0.0
        %1842 = vmatpush.msra.mxu0 %v1754
        %1843 = vmatmul.f32.gmra.mxu0 %v1825
        %v1844 = vpop.f32.mrf.mxu0
        %v1845 = vadd.f32 0.0, %v1844
        %1846 = vdwg.mxu0
        %v1847 = vadd.f32 %v1519, %v1776
        %v1848 = vadd.f32 %v1542, %v1799
        %v1849 = vadd.f32 %v1565, %v1822
        %v1850 = vadd.f32 %v1588, %v1845
        %1851 = vrot.lane.b32.xlu0 %v1013, 80
        %v1852 = vpop.permute.xlu0 %1851
        %1853 = vrot.lane.b32.xlu0 %v1042, 80
        %v1854 = vpop.permute.xlu0 %1853
        %v1855 = vsel %vm1082, %v1852, 0
        %v1857 = vsel %vm1082, %v1854, 0
        %1859 = vmatpush.xpose.msra.mxu0 0.0
        %1860 = vmatpush.xpose.msra.mxu0 0.0
        %1861 = vmatpush.xpose.msra.mxu0 0.0
        %1862 = vmatpush.xpose.msra.mxu0 0.0
        %1863 = vmatpush.xpose.msra.mxu0 0.0
        %1864 = vmatpush.xpose.msra.mxu0 0.0
        %1865 = vmatpush.xpose.msra.mxu0 0.0
        %1866 = vmatpush.xpose.msra.mxu0 0.0
        %1867 = vmatpush.xpose.msra.mxu0 0.0
        %1868 = vmatpush.xpose.msra.mxu0 0.0
        %1869 = vmatpush.xpose.msra.mxu0 0.0
        %1870 = vmatpush.xpose.msra.mxu0 0.0
        %1871 = vmatpush.xpose.msra.mxu0 0.0
        %1872 = vmatpush.xpose.msra.mxu0 0.0
        %1873 = vmatpush.xpose.msra.mxu0 0.0
        %1874 = vmatpush.xpose.msra.mxu0 %v1857
        %1875 = vmatmul.f32.gmra.mxu0 %v1855
        %v1876 = vpop.f32.mrf.mxu0
        %v1877 = vadd.f32 0.0, %v1876
        %1878 = vdwg.mxu0
        %1879 = vrot.lane.b32.xlu0 %v1016, 80
        %v1880 = vpop.permute.xlu0 %1879
        %1881 = vrot.lane.b32.xlu0 %v1045, 80
        %v1882 = vpop.permute.xlu0 %1881
        %v1883 = vsel %vm1082, %v1880, 0
        %v1885 = vsel %vm1082, %v1882, 0
        %1887 = vmatpush.xpose.msra.mxu0 0.0
        %1888 = vmatpush.xpose.msra.mxu0 0.0
        %1889 = vmatpush.xpose.msra.mxu0 0.0
        %1890 = vmatpush.xpose.msra.mxu0 0.0
        %1891 = vmatpush.xpose.msra.mxu0 0.0
        %1892 = vmatpush.xpose.msra.mxu0 0.0
        %1893 = vmatpush.xpose.msra.mxu0 0.0
        %1894 = vmatpush.xpose.msra.mxu0 0.0
        %1895 = vmatpush.xpose.msra.mxu0 0.0
        %1896 = vmatpush.xpose.msra.mxu0 0.0
        %1897 = vmatpush.xpose.msra.mxu0 0.0
        %1898 = vmatpush.xpose.msra.mxu0 0.0
        %1899 = vmatpush.xpose.msra.mxu0 0.0
        %1900 = vmatpush.xpose.msra.mxu0 0.0
        %1901 = vmatpush.xpose.msra.mxu0 0.0
        %1902 = vmatpush.xpose.msra.mxu0 %v1885
        %1903 = vmatmul.f32.gmra.mxu0 %v1883
        %v1904 = vpop.f32.mrf.mxu0
        %v1905 = vadd.f32 0.0, %v1904
        %1906 = vdwg.mxu0
        %1907 = vrot.lane.b32.xlu0 %v1019, 80
        %v1908 = vpop.permute.xlu0 %1907
        %1909 = vrot.lane.b32.xlu0 %v1048, 80
        %v1910 = vpop.permute.xlu0 %1909
        %v1911 = vsel %vm1082, %v1908, 0
        %v1913 = vsel %vm1082, %v1910, 0
        %1915 = vmatpush.xpose.msra.mxu0 0.0
        %1916 = vmatpush.xpose.msra.mxu0 0.0
        %1917 = vmatpush.xpose.msra.mxu0 0.0
        %1918 = vmatpush.xpose.msra.mxu0 0.0
        %1919 = vmatpush.xpose.msra.mxu0 0.0
        %1920 = vmatpush.xpose.msra.mxu0 0.0
        %1921 = vmatpush.xpose.msra.mxu0 0.0
        %1922 = vmatpush.xpose.msra.mxu0 0.0
        %1923 = vmatpush.xpose.msra.mxu0 0.0
        %1924 = vmatpush.xpose.msra.mxu0 0.0
        %1925 = vmatpush.xpose.msra.mxu0 0.0
        %1926 = vmatpush.xpose.msra.mxu0 0.0
        %1927 = vmatpush.xpose.msra.mxu0 0.0
        %1928 = vmatpush.xpose.msra.mxu0 0.0
        %1929 = vmatpush.xpose.msra.mxu0 0.0
        %1930 = vmatpush.xpose.msra.mxu0 %v1913
        %1931 = vmatmul.f32.gmra.mxu0 %v1911
        %v1932 = vpop.f32.mrf.mxu0
        %v1933 = vadd.f32 0.0, %v1932
        %1934 = vdwg.mxu0
        %1935 = vrot.lane.b32.xlu0 %v1022, 80
        %v1936 = vpop.permute.xlu0 %1935
        %1937 = vrot.lane.b32.xlu0 %v1051, 80
        %v1938 = vpop.permute.xlu0 %1937
        %v1939 = vsel %vm1082, %v1936, 0
        %v1941 = vsel %vm1082, %v1938, 0
        %1943 = vmatpush.xpose.msra.mxu0 0.0
        %1944 = vmatpush.xpose.msra.mxu0 0.0
        %1945 = vmatpush.xpose.msra.mxu0 0.0
        %1946 = vmatpush.xpose.msra.mxu0 0.0
        %1947 = vmatpush.xpose.msra.mxu0 0.0
        %1948 = vmatpush.xpose.msra.mxu0 0.0
        %1949 = vmatpush.xpose.msra.mxu0 0.0
        %1950 = vmatpush.xpose.msra.mxu0 0.0
        %1951 = vmatpush.xpose.msra.mxu0 0.0
        %1952 = vmatpush.xpose.msra.mxu0 0.0
        %1953 = vmatpush.xpose.msra.mxu0 0.0
        %1954 = vmatpush.xpose.msra.mxu0 0.0
        %1955 = vmatpush.xpose.msra.mxu0 0.0
        %1956 = vmatpush.xpose.msra.mxu0 0.0
        %1957 = vmatpush.xpose.msra.mxu0 0.0
        %1958 = vmatpush.xpose.msra.mxu0 %v1941
        %1959 = vmatmul.f32.gmra.mxu0 %v1939
        %v1960 = vpop.f32.mrf.mxu0
        %v1961 = vadd.f32 0.0, %v1960
        %1962 = vdwg.mxu0
        %v1963 = vsel %vm1187, %v1877, -inf
        %1964 = vmax.xlane.f32.xlu0 %v1963
        %v1965 = vpop.xlane.xlu0 %1964
        %v1966 = vsel %vm1187, %v1905, -inf
        %1967 = vmax.xlane.f32.xlu0 %v1966
        %v1968 = vpop.xlane.xlu0 %1967
        %v1969 = vsel %vm1187, %v1933, -inf
        %1970 = vmax.xlane.f32.xlu0 %v1969
        %v1971 = vpop.xlane.xlu0 %1970
        %v1972 = vsel %vm1187, %v1961, -inf
        %1973 = vmax.xlane.f32.xlu0 %v1972
        %v1974 = vpop.xlane.xlu0 %1973
        %v1975 = vsub.f32 %v1877, %v1965
        %v1976 = vsub.f32 %v1905, %v1968
        %v1977 = vsub.f32 %v1933, %v1971
        %v1978 = vsub.f32 %v1961, %v1974
        %v1979 = vmul.f32 %v1975, 1.442695
        %v1980 = vpow.pop %v1979
        %v1981 = vmul.f32 %v1976, 1.442695
        %v1982 = vpow.pop %v1981
        %v1983 = vmul.f32 %v1977, 1.442695
        %v1984 = vpow.pop %v1983
        %v1985 = vmul.f32 %v1978, 1.442695
        %v1986 = vpow.pop %v1985
        %v1987 = vsel %vm1187, %v1980, 0.0
        %1988 = vadd.xlane.f32.xlu0 %v1987
        %v1989 = vpop.xlane.xlu0 %1988
        %v1990 = vsel %vm1187, %v1982, 0.0
        %1991 = vadd.xlane.f32.xlu0 %v1990
        %v1992 = vpop.xlane.xlu0 %1991
        %v1993 = vsel %vm1187, %v1984, 0.0
        %1994 = vadd.xlane.f32.xlu0 %v1993
        %v1995 = vpop.xlane.xlu0 %1994
        %v1996 = vsel %vm1187, %v1986, 0.0
        %1997 = vadd.xlane.f32.xlu0 %v1996
        %v1998 = vpop.xlane.xlu0 %1997
        %v1999 = vrcp.pop %v1989
        %v2000 = vrcp.pop %v1992
        %v2001 = vrcp.pop %v1995
        %v2002 = vrcp.pop %v1998
        %v2003 = vmul.f32 %v1980, %v1999
        %v2004 = vmul.f32 %v1982, %v2000
        %v2005 = vmul.f32 %v1984, %v2001
        %v2006 = vmul.f32 %v1986, %v2002
        %vm2007 = vcmp.ge.s32.totalorder %v889, 48
        %vm2008 = vcmp.lt.s32.totalorder %v889, 64
        %vm2009 = vmand %vm2007, %vm2008
        %v2010 = vsel %vm2009, 1, 0
        %vm2011 = vcmp.eq.s32.totalorder %v2010, 1
        %v2012 = vsel %vm2011, %v1071, 0.0
        %v2013 = vsel %vm2011, %v1074, 0.0
        %v2014 = vsel %vm2011, %v1077, 0.0
        %v2015 = vsel %vm2011, %v1080, 0.0
        %v2017 = vsel %vm1187, %v2003, 0
        %2019 = vmatpush.msra.mxu0 0.0
        %2020 = vmatpush.msra.mxu0 0.0
        %2021 = vmatpush.msra.mxu0 0.0
        %2022 = vmatpush.msra.mxu0 0.0
        %2023 = vmatpush.msra.mxu0 0.0
        %2024 = vmatpush.msra.mxu0 0.0
        %2025 = vmatpush.msra.mxu0 0.0
        %2026 = vmatpush.msra.mxu0 0.0
        %2027 = vmatpush.msra.mxu0 0.0
        %2028 = vmatpush.msra.mxu0 0.0
        %2029 = vmatpush.msra.mxu0 0.0
        %2030 = vmatpush.msra.mxu0 0.0
        %2031 = vmatpush.msra.mxu0 0.0
        %2032 = vmatpush.msra.mxu0 0.0
        %2033 = vmatpush.msra.mxu0 0.0
        %2034 = vmatpush.msra.mxu0 %v2012
        %2035 = vmatmul.f32.gmra.mxu0 %v2017
        %v2036 = vpop.f32.mrf.mxu0
        %v2037 = vadd.f32 0.0, %v2036
        %2038 = vdwg.mxu0
        %v2040 = vsel %vm1187, %v2004, 0
        %2042 = vmatpush.msra.mxu0 0.0
        %2043 = vmatpush.msra.mxu0 0.0
        %2044 = vmatpush.msra.mxu0 0.0
        %2045 = vmatpush.msra.mxu0 0.0
        %2046 = vmatpush.msra.mxu0 0.0
        %2047 = vmatpush.msra.mxu0 0.0
        %2048 = vmatpush.msra.mxu0 0.0
        %2049 = vmatpush.msra.mxu0 0.0
        %2050 = vmatpush.msra.mxu0 0.0
        %2051 = vmatpush.msra.mxu0 0.0
        %2052 = vmatpush.msra.mxu0 0.0
        %2053 = vmatpush.msra.mxu0 0.0
        %2054 = vmatpush.msra.mxu0 0.0
        %2055 = vmatpush.msra.mxu0 0.0
        %2056 = vmatpush.msra.mxu0 0.0
        %2057 = vmatpush.msra.mxu0 %v2013
        %2058 = vmatmul.f32.gmra.mxu0 %v2040
        %v2059 = vpop.f32.mrf.mxu0
        %v2060 = vadd.f32 0.0, %v2059
        %2061 = vdwg.mxu0
        %v2063 = vsel %vm1187, %v2005, 0
        %2065 = vmatpush.msra.mxu0 0.0
        %2066 = vmatpush.msra.mxu0 0.0
        %2067 = vmatpush.msra.mxu0 0.0
        %2068 = vmatpush.msra.mxu0 0.0
        %2069 = vmatpush.msra.mxu0 0.0
        %2070 = vmatpush.msra.mxu0 0.0
        %2071 = vmatpush.msra.mxu0 0.0
        %2072 = vmatpush.msra.mxu0 0.0
        %2073 = vmatpush.msra.mxu0 0.0
        %2074 = vmatpush.msra.mxu0 0.0
        %2075 = vmatpush.msra.mxu0 0.0
        %2076 = vmatpush.msra.mxu0 0.0
        %2077 = vmatpush.msra.mxu0 0.0
        %2078 = vmatpush.msra.mxu0 0.0
        %2079 = vmatpush.msra.mxu0 0.0
        %2080 = vmatpush.msra.mxu0 %v2014
        %2081 = vmatmul.f32.gmra.mxu0 %v2063
        %v2082 = vpop.f32.mrf.mxu0
        %v2083 = vadd.f32 0.0, %v2082
        %2084 = vdwg.mxu0
        %v2086 = vsel %vm1187, %v2006, 0
        %2088 = vmatpush.msra.mxu0 0.0
        %2089 = vmatpush.msra.mxu0 0.0
        %2090 = vmatpush.msra.mxu0 0.0
        %2091 = vmatpush.msra.mxu0 0.0
        %2092 = vmatpush.msra.mxu0 0.0
        %2093 = vmatpush.msra.mxu0 0.0
        %2094 = vmatpush.msra.mxu0 0.0
        %2095 = vmatpush.msra.mxu0 0.0
        %2096 = vmatpush.msra.mxu0 0.0
        %2097 = vmatpush.msra.mxu0 0.0
        %2098 = vmatpush.msra.mxu0 0.0
        %2099 = vmatpush.msra.mxu0 0.0
        %2100 = vmatpush.msra.mxu0 0.0
        %2101 = vmatpush.msra.mxu0 0.0
        %2102 = vmatpush.msra.mxu0 0.0
        %2103 = vmatpush.msra.mxu0 %v2015
        %2104 = vmatmul.f32.gmra.mxu0 %v2086
        %v2105 = vpop.f32.mrf.mxu0
        %v2106 = vadd.f32 0.0, %v2105
        %2107 = vdwg.mxu0
        %v2108 = vadd.f32 %v1847, %v2037
        %v2109 = vadd.f32 %v1848, %v2060
        %v2110 = vadd.f32 %v1849, %v2083
        %v2111 = vadd.f32 %v1850, %v2106
        %2112 = vrot.lane.b32.xlu0 %v1013, 64
        %v2113 = vpop.permute.xlu0 %2112
        %2114 = vrot.lane.b32.xlu0 %v1042, 64
        %v2115 = vpop.permute.xlu0 %2114
        %v2116 = vsel %vm1082, %v2113, 0
        %v2118 = vsel %vm1082, %v2115, 0
        %2120 = vmatpush.xpose.msra.mxu0 0.0
        %2121 = vmatpush.xpose.msra.mxu0 0.0
        %2122 = vmatpush.xpose.msra.mxu0 0.0
        %2123 = vmatpush.xpose.msra.mxu0 0.0
        %2124 = vmatpush.xpose.msra.mxu0 0.0
        %2125 = vmatpush.xpose.msra.mxu0 0.0
        %2126 = vmatpush.xpose.msra.mxu0 0.0
        %2127 = vmatpush.xpose.msra.mxu0 0.0
        %2128 = vmatpush.xpose.msra.mxu0 0.0
        %2129 = vmatpush.xpose.msra.mxu0 0.0
        %2130 = vmatpush.xpose.msra.mxu0 0.0
        %2131 = vmatpush.xpose.msra.mxu0 0.0
        %2132 = vmatpush.xpose.msra.mxu0 0.0
        %2133 = vmatpush.xpose.msra.mxu0 0.0
        %2134 = vmatpush.xpose.msra.mxu0 0.0
        %2135 = vmatpush.xpose.msra.mxu0 %v2118
        %2136 = vmatmul.f32.gmra.mxu0 %v2116
        %v2137 = vpop.f32.mrf.mxu0
        %v2138 = vadd.f32 0.0, %v2137
        %2139 = vdwg.mxu0
        %2140 = vrot.lane.b32.xlu0 %v1016, 64
        %v2141 = vpop.permute.xlu0 %2140
        %2142 = vrot.lane.b32.xlu0 %v1045, 64
        %v2143 = vpop.permute.xlu0 %2142
        %v2144 = vsel %vm1082, %v2141, 0
        %v2146 = vsel %vm1082, %v2143, 0
        %2148 = vmatpush.xpose.msra.mxu0 0.0
        %2149 = vmatpush.xpose.msra.mxu0 0.0
        %2150 = vmatpush.xpose.msra.mxu0 0.0
        %2151 = vmatpush.xpose.msra.mxu0 0.0
        %2152 = vmatpush.xpose.msra.mxu0 0.0
        %2153 = vmatpush.xpose.msra.mxu0 0.0
        %2154 = vmatpush.xpose.msra.mxu0 0.0
        %2155 = vmatpush.xpose.msra.mxu0 0.0
        %2156 = vmatpush.xpose.msra.mxu0 0.0
        %2157 = vmatpush.xpose.msra.mxu0 0.0
        %2158 = vmatpush.xpose.msra.mxu0 0.0
        %2159 = vmatpush.xpose.msra.mxu0 0.0
        %2160 = vmatpush.xpose.msra.mxu0 0.0
        %2161 = vmatpush.xpose.msra.mxu0 0.0
        %2162 = vmatpush.xpose.msra.mxu0 0.0
        %2163 = vmatpush.xpose.msra.mxu0 %v2146
        %2164 = vmatmul.f32.gmra.mxu0 %v2144
        %v2165 = vpop.f32.mrf.mxu0
        %v2166 = vadd.f32 0.0, %v2165
        %2167 = vdwg.mxu0
        %2168 = vrot.lane.b32.xlu0 %v1019, 64
        %v2169 = vpop.permute.xlu0 %2168
        %2170 = vrot.lane.b32.xlu0 %v1048, 64
        %v2171 = vpop.permute.xlu0 %2170
        %v2172 = vsel %vm1082, %v2169, 0
        %v2174 = vsel %vm1082, %v2171, 0
        %2176 = vmatpush.xpose.msra.mxu0 0.0
        %2177 = vmatpush.xpose.msra.mxu0 0.0
        %2178 = vmatpush.xpose.msra.mxu0 0.0
        %2179 = vmatpush.xpose.msra.mxu0 0.0
        %2180 = vmatpush.xpose.msra.mxu0 0.0
        %2181 = vmatpush.xpose.msra.mxu0 0.0
        %2182 = vmatpush.xpose.msra.mxu0 0.0
        %2183 = vmatpush.xpose.msra.mxu0 0.0
        %2184 = vmatpush.xpose.msra.mxu0 0.0
        %2185 = vmatpush.xpose.msra.mxu0 0.0
        %2186 = vmatpush.xpose.msra.mxu0 0.0
        %2187 = vmatpush.xpose.msra.mxu0 0.0
        %2188 = vmatpush.xpose.msra.mxu0 0.0
        %2189 = vmatpush.xpose.msra.mxu0 0.0
        %2190 = vmatpush.xpose.msra.mxu0 0.0
        %2191 = vmatpush.xpose.msra.mxu0 %v2174
        %2192 = vmatmul.f32.gmra.mxu0 %v2172
        %v2193 = vpop.f32.mrf.mxu0
        %v2194 = vadd.f32 0.0, %v2193
        %2195 = vdwg.mxu0
        %2196 = vrot.lane.b32.xlu0 %v1022, 64
        %v2197 = vpop.permute.xlu0 %2196
        %2198 = vrot.lane.b32.xlu0 %v1051, 64
        %v2199 = vpop.permute.xlu0 %2198
        %v2200 = vsel %vm1082, %v2197, 0
        %v2202 = vsel %vm1082, %v2199, 0
        %2204 = vmatpush.xpose.msra.mxu0 0.0
        %2205 = vmatpush.xpose.msra.mxu0 0.0
        %2206 = vmatpush.xpose.msra.mxu0 0.0
        %2207 = vmatpush.xpose.msra.mxu0 0.0
        %2208 = vmatpush.xpose.msra.mxu0 0.0
        %2209 = vmatpush.xpose.msra.mxu0 0.0
        %2210 = vmatpush.xpose.msra.mxu0 0.0
        %2211 = vmatpush.xpose.msra.mxu0 0.0
        %2212 = vmatpush.xpose.msra.mxu0 0.0
        %2213 = vmatpush.xpose.msra.mxu0 0.0
        %2214 = vmatpush.xpose.msra.mxu0 0.0
        %2215 = vmatpush.xpose.msra.mxu0 0.0
        %2216 = vmatpush.xpose.msra.mxu0 0.0
        %2217 = vmatpush.xpose.msra.mxu0 0.0
        %2218 = vmatpush.xpose.msra.mxu0 0.0
        %2219 = vmatpush.xpose.msra.mxu0 %v2202
        %2220 = vmatmul.f32.gmra.mxu0 %v2200
        %v2221 = vpop.f32.mrf.mxu0
        %v2222 = vadd.f32 0.0, %v2221
        %2223 = vdwg.mxu0
        %v2224 = vsel %vm1187, %v2138, -inf
        %2225 = vmax.xlane.f32.xlu0 %v2224
        %v2226 = vpop.xlane.xlu0 %2225
        %v2227 = vsel %vm1187, %v2166, -inf
        %2228 = vmax.xlane.f32.xlu0 %v2227
        %v2229 = vpop.xlane.xlu0 %2228
        %v2230 = vsel %vm1187, %v2194, -inf
        %2231 = vmax.xlane.f32.xlu0 %v2230
        %v2232 = vpop.xlane.xlu0 %2231
        %v2233 = vsel %vm1187, %v2222, -inf
        %2234 = vmax.xlane.f32.xlu0 %v2233
        %v2235 = vpop.xlane.xlu0 %2234
        %v2236 = vsub.f32 %v2138, %v2226
        %v2237 = vsub.f32 %v2166, %v2229
        %v2238 = vsub.f32 %v2194, %v2232
        %v2239 = vsub.f32 %v2222, %v2235
        %v2240 = vmul.f32 %v2236, 1.442695
        %v2241 = vpow.pop %v2240
        %v2242 = vmul.f32 %v2237, 1.442695
        %v2243 = vpow.pop %v2242
        %v2244 = vmul.f32 %v2238, 1.442695
        %v2245 = vpow.pop %v2244
        %v2246 = vmul.f32 %v2239, 1.442695
        %v2247 = vpow.pop %v2246
        %v2248 = vsel %vm1187, %v2241, 0.0
        %2249 = vadd.xlane.f32.xlu0 %v2248
        %v2250 = vpop.xlane.xlu0 %2249
        %v2251 = vsel %vm1187, %v2243, 0.0
        %2252 = vadd.xlane.f32.xlu0 %v2251
        %v2253 = vpop.xlane.xlu0 %2252
        %v2254 = vsel %vm1187, %v2245, 0.0
        %2255 = vadd.xlane.f32.xlu0 %v2254
        %v2256 = vpop.xlane.xlu0 %2255
        %v2257 = vsel %vm1187, %v2247, 0.0
        %2258 = vadd.xlane.f32.xlu0 %v2257
        %v2259 = vpop.xlane.xlu0 %2258
        %v2260 = vrcp.pop %v2250
        %v2261 = vrcp.pop %v2253
        %v2262 = vrcp.pop %v2256
        %v2263 = vrcp.pop %v2259
        %v2264 = vmul.f32 %v2241, %v2260
        %v2265 = vmul.f32 %v2243, %v2261
        %v2266 = vmul.f32 %v2245, %v2262
        %v2267 = vmul.f32 %v2247, %v2263
        %vm2268 = vcmp.ge.s32.totalorder %v889, 64
        %vm2269 = vcmp.lt.s32.totalorder %v889, 80
        %vm2270 = vmand %vm2268, %vm2269
        %v2271 = vsel %vm2270, 1, 0
        %vm2272 = vcmp.eq.s32.totalorder %v2271, 1
        %v2273 = vsel %vm2272, %v1071, 0.0
        %v2274 = vsel %vm2272, %v1074, 0.0
        %v2275 = vsel %vm2272, %v1077, 0.0
        %v2276 = vsel %vm2272, %v1080, 0.0
        %v2278 = vsel %vm1187, %v2264, 0
        %2280 = vmatpush.msra.mxu0 0.0
        %2281 = vmatpush.msra.mxu0 0.0
        %2282 = vmatpush.msra.mxu0 0.0
        %2283 = vmatpush.msra.mxu0 0.0
        %2284 = vmatpush.msra.mxu0 0.0
        %2285 = vmatpush.msra.mxu0 0.0
        %2286 = vmatpush.msra.mxu0 0.0
        %2287 = vmatpush.msra.mxu0 0.0
        %2288 = vmatpush.msra.mxu0 0.0
        %2289 = vmatpush.msra.mxu0 0.0
        %2290 = vmatpush.msra.mxu0 0.0
        %2291 = vmatpush.msra.mxu0 0.0
        %2292 = vmatpush.msra.mxu0 0.0
        %2293 = vmatpush.msra.mxu0 0.0
        %2294 = vmatpush.msra.mxu0 0.0
        %2295 = vmatpush.msra.mxu0 %v2273
        %2296 = vmatmul.f32.gmra.mxu0 %v2278
        %v2297 = vpop.f32.mrf.mxu0
        %v2298 = vadd.f32 0.0, %v2297
        %2299 = vdwg.mxu0
        %v2301 = vsel %vm1187, %v2265, 0
        %2303 = vmatpush.msra.mxu0 0.0
        %2304 = vmatpush.msra.mxu0 0.0
        %2305 = vmatpush.msra.mxu0 0.0
        %2306 = vmatpush.msra.mxu0 0.0
        %2307 = vmatpush.msra.mxu0 0.0
        %2308 = vmatpush.msra.mxu0 0.0
        %2309 = vmatpush.msra.mxu0 0.0
        %2310 = vmatpush.msra.mxu0 0.0
        %2311 = vmatpush.msra.mxu0 0.0
        %2312 = vmatpush.msra.mxu0 0.0
        %2313 = vmatpush.msra.mxu0 0.0
        %2314 = vmatpush.msra.mxu0 0.0
        %2315 = vmatpush.msra.mxu0 0.0
        %2316 = vmatpush.msra.mxu0 0.0
        %2317 = vmatpush.msra.mxu0 0.0
        %2318 = vmatpush.msra.mxu0 %v2274
        %2319 = vmatmul.f32.gmra.mxu0 %v2301
        %v2320 = vpop.f32.mrf.mxu0
        %v2321 = vadd.f32 0.0, %v2320
        %2322 = vdwg.mxu0
        %v2324 = vsel %vm1187, %v2266, 0
        %2326 = vmatpush.msra.mxu0 0.0
        %2327 = vmatpush.msra.mxu0 0.0
        %2328 = vmatpush.msra.mxu0 0.0
        %2329 = vmatpush.msra.mxu0 0.0
        %2330 = vmatpush.msra.mxu0 0.0
        %2331 = vmatpush.msra.mxu0 0.0
        %2332 = vmatpush.msra.mxu0 0.0
        %2333 = vmatpush.msra.mxu0 0.0
        %2334 = vmatpush.msra.mxu0 0.0
        %2335 = vmatpush.msra.mxu0 0.0
        %2336 = vmatpush.msra.mxu0 0.0
        %2337 = vmatpush.msra.mxu0 0.0
        %2338 = vmatpush.msra.mxu0 0.0
        %2339 = vmatpush.msra.mxu0 0.0
        %2340 = vmatpush.msra.mxu0 0.0
        %2341 = vmatpush.msra.mxu0 %v2275
        %2342 = vmatmul.f32.gmra.mxu0 %v2324
        %v2343 = vpop.f32.mrf.mxu0
        %v2344 = vadd.f32 0.0, %v2343
        %2345 = vdwg.mxu0
        %v2347 = vsel %vm1187, %v2267, 0
        %2349 = vmatpush.msra.mxu0 0.0
        %2350 = vmatpush.msra.mxu0 0.0
        %2351 = vmatpush.msra.mxu0 0.0
        %2352 = vmatpush.msra.mxu0 0.0
        %2353 = vmatpush.msra.mxu0 0.0
        %2354 = vmatpush.msra.mxu0 0.0
        %2355 = vmatpush.msra.mxu0 0.0
        %2356 = vmatpush.msra.mxu0 0.0
        %2357 = vmatpush.msra.mxu0 0.0
        %2358 = vmatpush.msra.mxu0 0.0
        %2359 = vmatpush.msra.mxu0 0.0
        %2360 = vmatpush.msra.mxu0 0.0
        %2361 = vmatpush.msra.mxu0 0.0
        %2362 = vmatpush.msra.mxu0 0.0
        %2363 = vmatpush.msra.mxu0 0.0
        %2364 = vmatpush.msra.mxu0 %v2276
        %2365 = vmatmul.f32.gmra.mxu0 %v2347
        %v2366 = vpop.f32.mrf.mxu0
        %v2367 = vadd.f32 0.0, %v2366
        %2368 = vdwg.mxu0
        %v2369 = vadd.f32 %v2108, %v2298
        %v2370 = vadd.f32 %v2109, %v2321
        %v2371 = vadd.f32 %v2110, %v2344
        %v2372 = vadd.f32 %v2111, %v2367
        %2373 = vrot.lane.b32.xlu0 %v1013, 48
        %v2374 = vpop.permute.xlu0 %2373
        %2375 = vrot.lane.b32.xlu0 %v1042, 48
        %v2376 = vpop.permute.xlu0 %2375
        %v2377 = vsel %vm1082, %v2374, 0
        %v2379 = vsel %vm1082, %v2376, 0
        %2381 = vmatpush.xpose.msra.mxu0 0.0
        %2382 = vmatpush.xpose.msra.mxu0 0.0
        %2383 = vmatpush.xpose.msra.mxu0 0.0
        %2384 = vmatpush.xpose.msra.mxu0 0.0
        %2385 = vmatpush.xpose.msra.mxu0 0.0
        %2386 = vmatpush.xpose.msra.mxu0 0.0
        %2387 = vmatpush.xpose.msra.mxu0 0.0
        %2388 = vmatpush.xpose.msra.mxu0 0.0
        %2389 = vmatpush.xpose.msra.mxu0 0.0
        %2390 = vmatpush.xpose.msra.mxu0 0.0
        %2391 = vmatpush.xpose.msra.mxu0 0.0
        %2392 = vmatpush.xpose.msra.mxu0 0.0
        %2393 = vmatpush.xpose.msra.mxu0 0.0
        %2394 = vmatpush.xpose.msra.mxu0 0.0
        %2395 = vmatpush.xpose.msra.mxu0 0.0
        %2396 = vmatpush.xpose.msra.mxu0 %v2379
        %2397 = vmatmul.f32.gmra.mxu0 %v2377
        %v2398 = vpop.f32.mrf.mxu0
        %v2399 = vadd.f32 0.0, %v2398
        %2400 = vdwg.mxu0
        %2401 = vrot.lane.b32.xlu0 %v1016, 48
        %v2402 = vpop.permute.xlu0 %2401
        %2403 = vrot.lane.b32.xlu0 %v1045, 48
        %v2404 = vpop.permute.xlu0 %2403
        %v2405 = vsel %vm1082, %v2402, 0
        %v2407 = vsel %vm1082, %v2404, 0
        %2409 = vmatpush.xpose.msra.mxu0 0.0
        %2410 = vmatpush.xpose.msra.mxu0 0.0
        %2411 = vmatpush.xpose.msra.mxu0 0.0
        %2412 = vmatpush.xpose.msra.mxu0 0.0
        %2413 = vmatpush.xpose.msra.mxu0 0.0
        %2414 = vmatpush.xpose.msra.mxu0 0.0
        %2415 = vmatpush.xpose.msra.mxu0 0.0
        %2416 = vmatpush.xpose.msra.mxu0 0.0
        %2417 = vmatpush.xpose.msra.mxu0 0.0
        %2418 = vmatpush.xpose.msra.mxu0 0.0
        %2419 = vmatpush.xpose.msra.mxu0 0.0
        %2420 = vmatpush.xpose.msra.mxu0 0.0
        %2421 = vmatpush.xpose.msra.mxu0 0.0
        %2422 = vmatpush.xpose.msra.mxu0 0.0
        %2423 = vmatpush.xpose.msra.mxu0 0.0
        %2424 = vmatpush.xpose.msra.mxu0 %v2407
        %2425 = vmatmul.f32.gmra.mxu0 %v2405
        %v2426 = vpop.f32.mrf.mxu0
        %v2427 = vadd.f32 0.0, %v2426
        %2428 = vdwg.mxu0
        %2429 = vrot.lane.b32.xlu0 %v1019, 48
        %v2430 = vpop.permute.xlu0 %2429
        %2431 = vrot.lane.b32.xlu0 %v1048, 48
        %v2432 = vpop.permute.xlu0 %2431
        %v2433 = vsel %vm1082, %v2430, 0
        %v2435 = vsel %vm1082, %v2432, 0
        %2437 = vmatpush.xpose.msra.mxu0 0.0
        %2438 = vmatpush.xpose.msra.mxu0 0.0
        %2439 = vmatpush.xpose.msra.mxu0 0.0
        %2440 = vmatpush.xpose.msra.mxu0 0.0
        %2441 = vmatpush.xpose.msra.mxu0 0.0
        %2442 = vmatpush.xpose.msra.mxu0 0.0
        %2443 = vmatpush.xpose.msra.mxu0 0.0
        %2444 = vmatpush.xpose.msra.mxu0 0.0
        %2445 = vmatpush.xpose.msra.mxu0 0.0
        %2446 = vmatpush.xpose.msra.mxu0 0.0
        %2447 = vmatpush.xpose.msra.mxu0 0.0
        %2448 = vmatpush.xpose.msra.mxu0 0.0
        %2449 = vmatpush.xpose.msra.mxu0 0.0
        %2450 = vmatpush.xpose.msra.mxu0 0.0
        %2451 = vmatpush.xpose.msra.mxu0 0.0
        %2452 = vmatpush.xpose.msra.mxu0 %v2435
        %2453 = vmatmul.f32.gmra.mxu0 %v2433
        %v2454 = vpop.f32.mrf.mxu0
        %v2455 = vadd.f32 0.0, %v2454
        %2456 = vdwg.mxu0
        %2457 = vrot.lane.b32.xlu0 %v1022, 48
        %v2458 = vpop.permute.xlu0 %2457
        %2459 = vrot.lane.b32.xlu0 %v1051, 48
        %v2460 = vpop.permute.xlu0 %2459
        %v2461 = vsel %vm1082, %v2458, 0
        %v2463 = vsel %vm1082, %v2460, 0
        %2465 = vmatpush.xpose.msra.mxu0 0.0
        %2466 = vmatpush.xpose.msra.mxu0 0.0
        %2467 = vmatpush.xpose.msra.mxu0 0.0
        %2468 = vmatpush.xpose.msra.mxu0 0.0
        %2469 = vmatpush.xpose.msra.mxu0 0.0
        %2470 = vmatpush.xpose.msra.mxu0 0.0
        %2471 = vmatpush.xpose.msra.mxu0 0.0
        %2472 = vmatpush.xpose.msra.mxu0 0.0
        %2473 = vmatpush.xpose.msra.mxu0 0.0
        %2474 = vmatpush.xpose.msra.mxu0 0.0
        %2475 = vmatpush.xpose.msra.mxu0 0.0
        %2476 = vmatpush.xpose.msra.mxu0 0.0
        %2477 = vmatpush.xpose.msra.mxu0 0.0
        %2478 = vmatpush.xpose.msra.mxu0 0.0
        %2479 = vmatpush.xpose.msra.mxu0 0.0
        %2480 = vmatpush.xpose.msra.mxu0 %v2463
        %2481 = vmatmul.f32.gmra.mxu0 %v2461
        %v2482 = vpop.f32.mrf.mxu0
        %v2483 = vadd.f32 0.0, %v2482
        %2484 = vdwg.mxu0
        %v2485 = vsel %vm1187, %v2399, -inf
        %2486 = vmax.xlane.f32.xlu0 %v2485
        %v2487 = vpop.xlane.xlu0 %2486
        %v2488 = vsel %vm1187, %v2427, -inf
        %2489 = vmax.xlane.f32.xlu0 %v2488
        %v2490 = vpop.xlane.xlu0 %2489
        %v2491 = vsel %vm1187, %v2455, -inf
        %2492 = vmax.xlane.f32.xlu0 %v2491
        %v2493 = vpop.xlane.xlu0 %2492
        %v2494 = vsel %vm1187, %v2483, -inf
        %2495 = vmax.xlane.f32.xlu0 %v2494
        %v2496 = vpop.xlane.xlu0 %2495
        %v2497 = vsub.f32 %v2399, %v2487
        %v2498 = vsub.f32 %v2427, %v2490
        %v2499 = vsub.f32 %v2455, %v2493
        %v2500 = vsub.f32 %v2483, %v2496
        %v2501 = vmul.f32 %v2497, 1.442695
        %v2502 = vpow.pop %v2501
        %v2503 = vmul.f32 %v2498, 1.442695
        %v2504 = vpow.pop %v2503
        %v2505 = vmul.f32 %v2499, 1.442695
        %v2506 = vpow.pop %v2505
        %v2507 = vmul.f32 %v2500, 1.442695
        %v2508 = vpow.pop %v2507
        %v2509 = vsel %vm1187, %v2502, 0.0
        %2510 = vadd.xlane.f32.xlu0 %v2509
        %v2511 = vpop.xlane.xlu0 %2510
        %v2512 = vsel %vm1187, %v2504, 0.0
        %2513 = vadd.xlane.f32.xlu0 %v2512
        %v2514 = vpop.xlane.xlu0 %2513
        %v2515 = vsel %vm1187, %v2506, 0.0
        %2516 = vadd.xlane.f32.xlu0 %v2515
        %v2517 = vpop.xlane.xlu0 %2516
        %v2518 = vsel %vm1187, %v2508, 0.0
        %2519 = vadd.xlane.f32.xlu0 %v2518
        %v2520 = vpop.xlane.xlu0 %2519
        %v2521 = vrcp.pop %v2511
        %v2522 = vrcp.pop %v2514
        %v2523 = vrcp.pop %v2517
        %v2524 = vrcp.pop %v2520
        %v2525 = vmul.f32 %v2502, %v2521
        %v2526 = vmul.f32 %v2504, %v2522
        %v2527 = vmul.f32 %v2506, %v2523
        %v2528 = vmul.f32 %v2508, %v2524
        %vm2529 = vcmp.ge.s32.totalorder %v889, 80
        %vm2530 = vcmp.lt.s32.totalorder %v889, 96
        %vm2531 = vmand %vm2529, %vm2530
        %v2532 = vsel %vm2531, 1, 0
        %vm2533 = vcmp.eq.s32.totalorder %v2532, 1
        %v2534 = vsel %vm2533, %v1071, 0.0
        %v2535 = vsel %vm2533, %v1074, 0.0
        %v2536 = vsel %vm2533, %v1077, 0.0
        %v2537 = vsel %vm2533, %v1080, 0.0
        %v2539 = vsel %vm1187, %v2525, 0
        %2541 = vmatpush.msra.mxu0 0.0
        %2542 = vmatpush.msra.mxu0 0.0
        %2543 = vmatpush.msra.mxu0 0.0
        %2544 = vmatpush.msra.mxu0 0.0
        %2545 = vmatpush.msra.mxu0 0.0
        %2546 = vmatpush.msra.mxu0 0.0
        %2547 = vmatpush.msra.mxu0 0.0
        %2548 = vmatpush.msra.mxu0 0.0
        %2549 = vmatpush.msra.mxu0 0.0
        %2550 = vmatpush.msra.mxu0 0.0
        %2551 = vmatpush.msra.mxu0 0.0
        %2552 = vmatpush.msra.mxu0 0.0
        %2553 = vmatpush.msra.mxu0 0.0
        %2554 = vmatpush.msra.mxu0 0.0
        %2555 = vmatpush.msra.mxu0 0.0
        %2556 = vmatpush.msra.mxu0 %v2534
        %2557 = vmatmul.f32.gmra.mxu0 %v2539
        %v2558 = vpop.f32.mrf.mxu0
        %v2559 = vadd.f32 0.0, %v2558
        %2560 = vdwg.mxu0
        %v2562 = vsel %vm1187, %v2526, 0
        %2564 = vmatpush.msra.mxu0 0.0
        %2565 = vmatpush.msra.mxu0 0.0
        %2566 = vmatpush.msra.mxu0 0.0
        %2567 = vmatpush.msra.mxu0 0.0
        %2568 = vmatpush.msra.mxu0 0.0
        %2569 = vmatpush.msra.mxu0 0.0
        %2570 = vmatpush.msra.mxu0 0.0
        %2571 = vmatpush.msra.mxu0 0.0
        %2572 = vmatpush.msra.mxu0 0.0
        %2573 = vmatpush.msra.mxu0 0.0
        %2574 = vmatpush.msra.mxu0 0.0
        %2575 = vmatpush.msra.mxu0 0.0
        %2576 = vmatpush.msra.mxu0 0.0
        %2577 = vmatpush.msra.mxu0 0.0
        %2578 = vmatpush.msra.mxu0 0.0
        %2579 = vmatpush.msra.mxu0 %v2535
        %2580 = vmatmul.f32.gmra.mxu0 %v2562
        %v2581 = vpop.f32.mrf.mxu0
        %v2582 = vadd.f32 0.0, %v2581
        %2583 = vdwg.mxu0
        %v2585 = vsel %vm1187, %v2527, 0
        %2587 = vmatpush.msra.mxu0 0.0
        %2588 = vmatpush.msra.mxu0 0.0
        %2589 = vmatpush.msra.mxu0 0.0
        %2590 = vmatpush.msra.mxu0 0.0
        %2591 = vmatpush.msra.mxu0 0.0
        %2592 = vmatpush.msra.mxu0 0.0
        %2593 = vmatpush.msra.mxu0 0.0
        %2594 = vmatpush.msra.mxu0 0.0
        %2595 = vmatpush.msra.mxu0 0.0
        %2596 = vmatpush.msra.mxu0 0.0
        %2597 = vmatpush.msra.mxu0 0.0
        %2598 = vmatpush.msra.mxu0 0.0
        %2599 = vmatpush.msra.mxu0 0.0
        %2600 = vmatpush.msra.mxu0 0.0
        %2601 = vmatpush.msra.mxu0 0.0
        %2602 = vmatpush.msra.mxu0 %v2536
        %2603 = vmatmul.f32.gmra.mxu0 %v2585
        %v2604 = vpop.f32.mrf.mxu0
        %v2605 = vadd.f32 0.0, %v2604
        %2606 = vdwg.mxu0
        %v2608 = vsel %vm1187, %v2528, 0
        %2610 = vmatpush.msra.mxu0 0.0
        %2611 = vmatpush.msra.mxu0 0.0
        %2612 = vmatpush.msra.mxu0 0.0
        %2613 = vmatpush.msra.mxu0 0.0
        %2614 = vmatpush.msra.mxu0 0.0
        %2615 = vmatpush.msra.mxu0 0.0
        %2616 = vmatpush.msra.mxu0 0.0
        %2617 = vmatpush.msra.mxu0 0.0
        %2618 = vmatpush.msra.mxu0 0.0
        %2619 = vmatpush.msra.mxu0 0.0
        %2620 = vmatpush.msra.mxu0 0.0
        %2621 = vmatpush.msra.mxu0 0.0
        %2622 = vmatpush.msra.mxu0 0.0
        %2623 = vmatpush.msra.mxu0 0.0
        %2624 = vmatpush.msra.mxu0 0.0
        %2625 = vmatpush.msra.mxu0 %v2537
        %2626 = vmatmul.f32.gmra.mxu0 %v2608
        %v2627 = vpop.f32.mrf.mxu0
        %v2628 = vadd.f32 0.0, %v2627
        %2629 = vdwg.mxu0
        %v2630 = vadd.f32 %v2369, %v2559
        %v2631 = vadd.f32 %v2370, %v2582
        %v2632 = vadd.f32 %v2371, %v2605
        %v2633 = vadd.f32 %v2372, %v2628
        %2634 = vrot.lane.b32.xlu0 %v1013, 32
        %v2635 = vpop.permute.xlu0 %2634
        %2636 = vrot.lane.b32.xlu0 %v1042, 32
        %v2637 = vpop.permute.xlu0 %2636
        %v2638 = vsel %vm1082, %v2635, 0
        %v2640 = vsel %vm1082, %v2637, 0
        %2642 = vmatpush.xpose.msra.mxu0 0.0
        %2643 = vmatpush.xpose.msra.mxu0 0.0
        %2644 = vmatpush.xpose.msra.mxu0 0.0
        %2645 = vmatpush.xpose.msra.mxu0 0.0
        %2646 = vmatpush.xpose.msra.mxu0 0.0
        %2647 = vmatpush.xpose.msra.mxu0 0.0
        %2648 = vmatpush.xpose.msra.mxu0 0.0
        %2649 = vmatpush.xpose.msra.mxu0 0.0
        %2650 = vmatpush.xpose.msra.mxu0 0.0
        %2651 = vmatpush.xpose.msra.mxu0 0.0
        %2652 = vmatpush.xpose.msra.mxu0 0.0
        %2653 = vmatpush.xpose.msra.mxu0 0.0
        %2654 = vmatpush.xpose.msra.mxu0 0.0
        %2655 = vmatpush.xpose.msra.mxu0 0.0
        %2656 = vmatpush.xpose.msra.mxu0 0.0
        %2657 = vmatpush.xpose.msra.mxu0 %v2640
        %2658 = vmatmul.f32.gmra.mxu0 %v2638
        %v2659 = vpop.f32.mrf.mxu0
        %v2660 = vadd.f32 0.0, %v2659
        %2661 = vdwg.mxu0
        %2662 = vrot.lane.b32.xlu0 %v1016, 32
        %v2663 = vpop.permute.xlu0 %2662
        %2664 = vrot.lane.b32.xlu0 %v1045, 32
        %v2665 = vpop.permute.xlu0 %2664
        %v2666 = vsel %vm1082, %v2663, 0
        %v2668 = vsel %vm1082, %v2665, 0
        %2670 = vmatpush.xpose.msra.mxu0 0.0
        %2671 = vmatpush.xpose.msra.mxu0 0.0
        %2672 = vmatpush.xpose.msra.mxu0 0.0
        %2673 = vmatpush.xpose.msra.mxu0 0.0
        %2674 = vmatpush.xpose.msra.mxu0 0.0
        %2675 = vmatpush.xpose.msra.mxu0 0.0
        %2676 = vmatpush.xpose.msra.mxu0 0.0
        %2677 = vmatpush.xpose.msra.mxu0 0.0
        %2678 = vmatpush.xpose.msra.mxu0 0.0
        %2679 = vmatpush.xpose.msra.mxu0 0.0
        %2680 = vmatpush.xpose.msra.mxu0 0.0
        %2681 = vmatpush.xpose.msra.mxu0 0.0
        %2682 = vmatpush.xpose.msra.mxu0 0.0
        %2683 = vmatpush.xpose.msra.mxu0 0.0
        %2684 = vmatpush.xpose.msra.mxu0 0.0
        %2685 = vmatpush.xpose.msra.mxu0 %v2668
        %2686 = vmatmul.f32.gmra.mxu0 %v2666
        %v2687 = vpop.f32.mrf.mxu0
        %v2688 = vadd.f32 0.0, %v2687
        %2689 = vdwg.mxu0
        %2690 = vrot.lane.b32.xlu0 %v1019, 32
        %v2691 = vpop.permute.xlu0 %2690
        %2692 = vrot.lane.b32.xlu0 %v1048, 32
        %v2693 = vpop.permute.xlu0 %2692
        %v2694 = vsel %vm1082, %v2691, 0
        %v2696 = vsel %vm1082, %v2693, 0
        %2698 = vmatpush.xpose.msra.mxu0 0.0
        %2699 = vmatpush.xpose.msra.mxu0 0.0
        %2700 = vmatpush.xpose.msra.mxu0 0.0
        %2701 = vmatpush.xpose.msra.mxu0 0.0
        %2702 = vmatpush.xpose.msra.mxu0 0.0
        %2703 = vmatpush.xpose.msra.mxu0 0.0
        %2704 = vmatpush.xpose.msra.mxu0 0.0
        %2705 = vmatpush.xpose.msra.mxu0 0.0
        %2706 = vmatpush.xpose.msra.mxu0 0.0
        %2707 = vmatpush.xpose.msra.mxu0 0.0
        %2708 = vmatpush.xpose.msra.mxu0 0.0
        %2709 = vmatpush.xpose.msra.mxu0 0.0
        %2710 = vmatpush.xpose.msra.mxu0 0.0
        %2711 = vmatpush.xpose.msra.mxu0 0.0
        %2712 = vmatpush.xpose.msra.mxu0 0.0
        %2713 = vmatpush.xpose.msra.mxu0 %v2696
        %2714 = vmatmul.f32.gmra.mxu0 %v2694
        %v2715 = vpop.f32.mrf.mxu0
        %v2716 = vadd.f32 0.0, %v2715
        %2717 = vdwg.mxu0
        %2718 = vrot.lane.b32.xlu0 %v1022, 32
        %v2719 = vpop.permute.xlu0 %2718
        %2720 = vrot.lane.b32.xlu0 %v1051, 32
        %v2721 = vpop.permute.xlu0 %2720
        %v2722 = vsel %vm1082, %v2719, 0
        %v2724 = vsel %vm1082, %v2721, 0
        %2726 = vmatpush.xpose.msra.mxu0 0.0
        %2727 = vmatpush.xpose.msra.mxu0 0.0
        %2728 = vmatpush.xpose.msra.mxu0 0.0
        %2729 = vmatpush.xpose.msra.mxu0 0.0
        %2730 = vmatpush.xpose.msra.mxu0 0.0
        %2731 = vmatpush.xpose.msra.mxu0 0.0
        %2732 = vmatpush.xpose.msra.mxu0 0.0
        %2733 = vmatpush.xpose.msra.mxu0 0.0
        %2734 = vmatpush.xpose.msra.mxu0 0.0
        %2735 = vmatpush.xpose.msra.mxu0 0.0
        %2736 = vmatpush.xpose.msra.mxu0 0.0
        %2737 = vmatpush.xpose.msra.mxu0 0.0
        %2738 = vmatpush.xpose.msra.mxu0 0.0
        %2739 = vmatpush.xpose.msra.mxu0 0.0
        %2740 = vmatpush.xpose.msra.mxu0 0.0
        %2741 = vmatpush.xpose.msra.mxu0 %v2724
        %2742 = vmatmul.f32.gmra.mxu0 %v2722
        %v2743 = vpop.f32.mrf.mxu0
        %v2744 = vadd.f32 0.0, %v2743
        %2745 = vdwg.mxu0
        %v2746 = vsel %vm1187, %v2660, -inf
        %2747 = vmax.xlane.f32.xlu0 %v2746
        %v2748 = vpop.xlane.xlu0 %2747
        %v2749 = vsel %vm1187, %v2688, -inf
        %2750 = vmax.xlane.f32.xlu0 %v2749
        %v2751 = vpop.xlane.xlu0 %2750
        %v2752 = vsel %vm1187, %v2716, -inf
        %2753 = vmax.xlane.f32.xlu0 %v2752
        %v2754 = vpop.xlane.xlu0 %2753
        %v2755 = vsel %vm1187, %v2744, -inf
        %2756 = vmax.xlane.f32.xlu0 %v2755
        %v2757 = vpop.xlane.xlu0 %2756
        %v2758 = vsub.f32 %v2660, %v2748
        %v2759 = vsub.f32 %v2688, %v2751
        %v2760 = vsub.f32 %v2716, %v2754
        %v2761 = vsub.f32 %v2744, %v2757
        %v2762 = vmul.f32 %v2758, 1.442695
        %v2763 = vpow.pop %v2762
        %v2764 = vmul.f32 %v2759, 1.442695
        %v2765 = vpow.pop %v2764
        %v2766 = vmul.f32 %v2760, 1.442695
        %v2767 = vpow.pop %v2766
        %v2768 = vmul.f32 %v2761, 1.442695
        %v2769 = vpow.pop %v2768
        %v2770 = vsel %vm1187, %v2763, 0.0
        %2771 = vadd.xlane.f32.xlu0 %v2770
        %v2772 = vpop.xlane.xlu0 %2771
        %v2773 = vsel %vm1187, %v2765, 0.0
        %2774 = vadd.xlane.f32.xlu0 %v2773
        %v2775 = vpop.xlane.xlu0 %2774
        %v2776 = vsel %vm1187, %v2767, 0.0
        %2777 = vadd.xlane.f32.xlu0 %v2776
        %v2778 = vpop.xlane.xlu0 %2777
        %v2779 = vsel %vm1187, %v2769, 0.0
        %2780 = vadd.xlane.f32.xlu0 %v2779
        %v2781 = vpop.xlane.xlu0 %2780
        %v2782 = vrcp.pop %v2772
        %v2783 = vrcp.pop %v2775
        %v2784 = vrcp.pop %v2778
        %v2785 = vrcp.pop %v2781
        %v2786 = vmul.f32 %v2763, %v2782
        %v2787 = vmul.f32 %v2765, %v2783
        %v2788 = vmul.f32 %v2767, %v2784
        %v2789 = vmul.f32 %v2769, %v2785
        %vm2790 = vcmp.ge.s32.totalorder %v889, 96
        %vm2791 = vcmp.lt.s32.totalorder %v889, 112
        %vm2792 = vmand %vm2790, %vm2791
        %v2793 = vsel %vm2792, 1, 0
        %vm2794 = vcmp.eq.s32.totalorder %v2793, 1
        %v2795 = vsel %vm2794, %v1071, 0.0
        %v2796 = vsel %vm2794, %v1074, 0.0
        %v2797 = vsel %vm2794, %v1077, 0.0
        %v2798 = vsel %vm2794, %v1080, 0.0
        %v2800 = vsel %vm1187, %v2786, 0
        %2802 = vmatpush.msra.mxu0 0.0
        %2803 = vmatpush.msra.mxu0 0.0
        %2804 = vmatpush.msra.mxu0 0.0
        %2805 = vmatpush.msra.mxu0 0.0
        %2806 = vmatpush.msra.mxu0 0.0
        %2807 = vmatpush.msra.mxu0 0.0
        %2808 = vmatpush.msra.mxu0 0.0
        %2809 = vmatpush.msra.mxu0 0.0
        %2810 = vmatpush.msra.mxu0 0.0
        %2811 = vmatpush.msra.mxu0 0.0
        %2812 = vmatpush.msra.mxu0 0.0
        %2813 = vmatpush.msra.mxu0 0.0
        %2814 = vmatpush.msra.mxu0 0.0
        %2815 = vmatpush.msra.mxu0 0.0
        %2816 = vmatpush.msra.mxu0 0.0
        %2817 = vmatpush.msra.mxu0 %v2795
        %2818 = vmatmul.f32.gmra.mxu0 %v2800
        %v2819 = vpop.f32.mrf.mxu0
        %v2820 = vadd.f32 0.0, %v2819
        %2821 = vdwg.mxu0
        %v2823 = vsel %vm1187, %v2787, 0
        %2825 = vmatpush.msra.mxu0 0.0
        %2826 = vmatpush.msra.mxu0 0.0
        %2827 = vmatpush.msra.mxu0 0.0
        %2828 = vmatpush.msra.mxu0 0.0
        %2829 = vmatpush.msra.mxu0 0.0
        %2830 = vmatpush.msra.mxu0 0.0
        %2831 = vmatpush.msra.mxu0 0.0
        %2832 = vmatpush.msra.mxu0 0.0
        %2833 = vmatpush.msra.mxu0 0.0
        %2834 = vmatpush.msra.mxu0 0.0
        %2835 = vmatpush.msra.mxu0 0.0
        %2836 = vmatpush.msra.mxu0 0.0
        %2837 = vmatpush.msra.mxu0 0.0
        %2838 = vmatpush.msra.mxu0 0.0
        %2839 = vmatpush.msra.mxu0 0.0
        %2840 = vmatpush.msra.mxu0 %v2796
        %2841 = vmatmul.f32.gmra.mxu0 %v2823
        %v2842 = vpop.f32.mrf.mxu0
        %v2843 = vadd.f32 0.0, %v2842
        %2844 = vdwg.mxu0
        %v2846 = vsel %vm1187, %v2788, 0
        %2848 = vmatpush.msra.mxu0 0.0
        %2849 = vmatpush.msra.mxu0 0.0
        %2850 = vmatpush.msra.mxu0 0.0
        %2851 = vmatpush.msra.mxu0 0.0
        %2852 = vmatpush.msra.mxu0 0.0
        %2853 = vmatpush.msra.mxu0 0.0
        %2854 = vmatpush.msra.mxu0 0.0
        %2855 = vmatpush.msra.mxu0 0.0
        %2856 = vmatpush.msra.mxu0 0.0
        %2857 = vmatpush.msra.mxu0 0.0
        %2858 = vmatpush.msra.mxu0 0.0
        %2859 = vmatpush.msra.mxu0 0.0
        %2860 = vmatpush.msra.mxu0 0.0
        %2861 = vmatpush.msra.mxu0 0.0
        %2862 = vmatpush.msra.mxu0 0.0
        %2863 = vmatpush.msra.mxu0 %v2797
        %2864 = vmatmul.f32.gmra.mxu0 %v2846
        %v2865 = vpop.f32.mrf.mxu0
        %v2866 = vadd.f32 0.0, %v2865
        %2867 = vdwg.mxu0
        %v2869 = vsel %vm1187, %v2789, 0
        %2871 = vmatpush.msra.mxu0 0.0
        %2872 = vmatpush.msra.mxu0 0.0
        %2873 = vmatpush.msra.mxu0 0.0
        %2874 = vmatpush.msra.mxu0 0.0
        %2875 = vmatpush.msra.mxu0 0.0
        %2876 = vmatpush.msra.mxu0 0.0
        %2877 = vmatpush.msra.mxu0 0.0
        %2878 = vmatpush.msra.mxu0 0.0
        %2879 = vmatpush.msra.mxu0 0.0
        %2880 = vmatpush.msra.mxu0 0.0
        %2881 = vmatpush.msra.mxu0 0.0
        %2882 = vmatpush.msra.mxu0 0.0
        %2883 = vmatpush.msra.mxu0 0.0
        %2884 = vmatpush.msra.mxu0 0.0
        %2885 = vmatpush.msra.mxu0 0.0
        %2886 = vmatpush.msra.mxu0 %v2798
        %2887 = vmatmul.f32.gmra.mxu0 %v2869
        %v2888 = vpop.f32.mrf.mxu0
        %v2889 = vadd.f32 0.0, %v2888
        %2890 = vdwg.mxu0
        %v2891 = vadd.f32 %v2630, %v2820
        %v2892 = vadd.f32 %v2631, %v2843
        %v2893 = vadd.f32 %v2632, %v2866
        %v2894 = vadd.f32 %v2633, %v2889
        %2895 = vrot.lane.b32.xlu0 %v1013, 16
        %v2896 = vpop.permute.xlu0 %2895
        %2897 = vrot.lane.b32.xlu0 %v1042, 16
        %v2898 = vpop.permute.xlu0 %2897
        %v2899 = vsel %vm1082, %v2896, 0
        %v2901 = vsel %vm1082, %v2898, 0
        %2903 = vmatpush.xpose.msra.mxu0 0.0
        %2904 = vmatpush.xpose.msra.mxu0 0.0
        %2905 = vmatpush.xpose.msra.mxu0 0.0
        %2906 = vmatpush.xpose.msra.mxu0 0.0
        %2907 = vmatpush.xpose.msra.mxu0 0.0
        %2908 = vmatpush.xpose.msra.mxu0 0.0
        %2909 = vmatpush.xpose.msra.mxu0 0.0
        %2910 = vmatpush.xpose.msra.mxu0 0.0
        %2911 = vmatpush.xpose.msra.mxu0 0.0
        %2912 = vmatpush.xpose.msra.mxu0 0.0
        %2913 = vmatpush.xpose.msra.mxu0 0.0
        %2914 = vmatpush.xpose.msra.mxu0 0.0
        %2915 = vmatpush.xpose.msra.mxu0 0.0
        %2916 = vmatpush.xpose.msra.mxu0 0.0
        %2917 = vmatpush.xpose.msra.mxu0 0.0
        %2918 = vmatpush.xpose.msra.mxu0 %v2901
        %2919 = vmatmul.f32.gmra.mxu0 %v2899
        %v2920 = vpop.f32.mrf.mxu0
        %v2921 = vadd.f32 0.0, %v2920
        %2922 = vdwg.mxu0
        %2923 = vrot.lane.b32.xlu0 %v1016, 16
        %v2924 = vpop.permute.xlu0 %2923
        %2925 = vrot.lane.b32.xlu0 %v1045, 16
        %v2926 = vpop.permute.xlu0 %2925
        %v2927 = vsel %vm1082, %v2924, 0
        %v2929 = vsel %vm1082, %v2926, 0
        %2931 = vmatpush.xpose.msra.mxu0 0.0
        %2932 = vmatpush.xpose.msra.mxu0 0.0
        %2933 = vmatpush.xpose.msra.mxu0 0.0
        %2934 = vmatpush.xpose.msra.mxu0 0.0
        %2935 = vmatpush.xpose.msra.mxu0 0.0
        %2936 = vmatpush.xpose.msra.mxu0 0.0
        %2937 = vmatpush.xpose.msra.mxu0 0.0
        %2938 = vmatpush.xpose.msra.mxu0 0.0
        %2939 = vmatpush.xpose.msra.mxu0 0.0
        %2940 = vmatpush.xpose.msra.mxu0 0.0
        %2941 = vmatpush.xpose.msra.mxu0 0.0
        %2942 = vmatpush.xpose.msra.mxu0 0.0
        %2943 = vmatpush.xpose.msra.mxu0 0.0
        %2944 = vmatpush.xpose.msra.mxu0 0.0
        %2945 = vmatpush.xpose.msra.mxu0 0.0
        %2946 = vmatpush.xpose.msra.mxu0 %v2929
        %2947 = vmatmul.f32.gmra.mxu0 %v2927
        %v2948 = vpop.f32.mrf.mxu0
        %v2949 = vadd.f32 0.0, %v2948
        %2950 = vdwg.mxu0
        %2951 = vrot.lane.b32.xlu0 %v1019, 16
        %v2952 = vpop.permute.xlu0 %2951
        %2953 = vrot.lane.b32.xlu0 %v1048, 16
        %v2954 = vpop.permute.xlu0 %2953
        %v2955 = vsel %vm1082, %v2952, 0
        %v2957 = vsel %vm1082, %v2954, 0
        %2959 = vmatpush.xpose.msra.mxu0 0.0
        %2960 = vmatpush.xpose.msra.mxu0 0.0
        %2961 = vmatpush.xpose.msra.mxu0 0.0
        %2962 = vmatpush.xpose.msra.mxu0 0.0
        %2963 = vmatpush.xpose.msra.mxu0 0.0
        %2964 = vmatpush.xpose.msra.mxu0 0.0
        %2965 = vmatpush.xpose.msra.mxu0 0.0
        %2966 = vmatpush.xpose.msra.mxu0 0.0
        %2967 = vmatpush.xpose.msra.mxu0 0.0
        %2968 = vmatpush.xpose.msra.mxu0 0.0
        %2969 = vmatpush.xpose.msra.mxu0 0.0
        %2970 = vmatpush.xpose.msra.mxu0 0.0
        %2971 = vmatpush.xpose.msra.mxu0 0.0
        %2972 = vmatpush.xpose.msra.mxu0 0.0
        %2973 = vmatpush.xpose.msra.mxu0 0.0
        %2974 = vmatpush.xpose.msra.mxu0 %v2957
        %2975 = vmatmul.f32.gmra.mxu0 %v2955
        %v2976 = vpop.f32.mrf.mxu0
        %v2977 = vadd.f32 0.0, %v2976
        %2978 = vdwg.mxu0
        %2979 = vrot.lane.b32.xlu0 %v1022, 16
        %v2980 = vpop.permute.xlu0 %2979
        %2981 = vrot.lane.b32.xlu0 %v1051, 16
        %v2982 = vpop.permute.xlu0 %2981
        %v2983 = vsel %vm1082, %v2980, 0
        %v2985 = vsel %vm1082, %v2982, 0
        %2987 = vmatpush.xpose.msra.mxu0 0.0
        %2988 = vmatpush.xpose.msra.mxu0 0.0
        %2989 = vmatpush.xpose.msra.mxu0 0.0
        %2990 = vmatpush.xpose.msra.mxu0 0.0
        %2991 = vmatpush.xpose.msra.mxu0 0.0
        %2992 = vmatpush.xpose.msra.mxu0 0.0
        %2993 = vmatpush.xpose.msra.mxu0 0.0
        %2994 = vmatpush.xpose.msra.mxu0 0.0
        %2995 = vmatpush.xpose.msra.mxu0 0.0
        %2996 = vmatpush.xpose.msra.mxu0 0.0
        %2997 = vmatpush.xpose.msra.mxu0 0.0
        %2998 = vmatpush.xpose.msra.mxu0 0.0
        %2999 = vmatpush.xpose.msra.mxu0 0.0
        %3000 = vmatpush.xpose.msra.mxu0 0.0
        %3001 = vmatpush.xpose.msra.mxu0 0.0
        %3002 = vmatpush.xpose.msra.mxu0 %v2985
        %3003 = vmatmul.f32.gmra.mxu0 %v2983
        %v3004 = vpop.f32.mrf.mxu0
        %v3005 = vadd.f32 0.0, %v3004
        %3006 = vdwg.mxu0
        %v3007 = vsel %vm1187, %v2921, -inf
        %3008 = vmax.xlane.f32.xlu0 %v3007
        %v3009 = vpop.xlane.xlu0 %3008
        %v3010 = vsel %vm1187, %v2949, -inf
        %3011 = vmax.xlane.f32.xlu0 %v3010
        %v3012 = vpop.xlane.xlu0 %3011
        %v3013 = vsel %vm1187, %v2977, -inf
        %3014 = vmax.xlane.f32.xlu0 %v3013
        %v3015 = vpop.xlane.xlu0 %3014
        %v3016 = vsel %vm1187, %v3005, -inf
        %3017 = vmax.xlane.f32.xlu0 %v3016
        %v3018 = vpop.xlane.xlu0 %3017
        %v3019 = vsub.f32 %v2921, %v3009
        %v3020 = vsub.f32 %v2949, %v3012
        %v3021 = vsub.f32 %v2977, %v3015
        %v3022 = vsub.f32 %v3005, %v3018
        %v3023 = vmul.f32 %v3019, 1.442695
        %v3024 = vpow.pop %v3023
        %v3025 = vmul.f32 %v3020, 1.442695
        %v3026 = vpow.pop %v3025
        %v3027 = vmul.f32 %v3021, 1.442695
        %v3028 = vpow.pop %v3027
        %v3029 = vmul.f32 %v3022, 1.442695
        %v3030 = vpow.pop %v3029
        %v3031 = vsel %vm1187, %v3024, 0.0
        %3032 = vadd.xlane.f32.xlu0 %v3031
        %v3033 = vpop.xlane.xlu0 %3032
        %v3034 = vsel %vm1187, %v3026, 0.0
        %3035 = vadd.xlane.f32.xlu0 %v3034
        %v3036 = vpop.xlane.xlu0 %3035
        %v3037 = vsel %vm1187, %v3028, 0.0
        %3038 = vadd.xlane.f32.xlu0 %v3037
        %v3039 = vpop.xlane.xlu0 %3038
        %v3040 = vsel %vm1187, %v3030, 0.0
        %3041 = vadd.xlane.f32.xlu0 %v3040
        %v3042 = vpop.xlane.xlu0 %3041
        %v3043 = vrcp.pop %v3033
        %v3044 = vrcp.pop %v3036
        %v3045 = vrcp.pop %v3039
        %v3046 = vrcp.pop %v3042
        %v3047 = vmul.f32 %v3024, %v3043
        %v3048 = vmul.f32 %v3026, %v3044
        %v3049 = vmul.f32 %v3028, %v3045
        %v3050 = vmul.f32 %v3030, %v3046
        %vm3051 = vcmp.ge.s32.totalorder %v889, 112
        %vm3052 = vcmp.lt.s32.totalorder %v889, 128
        %vm3053 = vmand %vm3051, %vm3052
        %v3054 = vsel %vm3053, 1, 0
        %vm3055 = vcmp.eq.s32.totalorder %v3054, 1
        %v3056 = vsel %vm3055, %v1071, 0.0
        %v3057 = vsel %vm3055, %v1074, 0.0
        %v3058 = vsel %vm3055, %v1077, 0.0
        %v3059 = vsel %vm3055, %v1080, 0.0
        %v3061 = vsel %vm1187, %v3047, 0
        %3063 = vmatpush.msra.mxu0 0.0
        %3064 = vmatpush.msra.mxu0 0.0
        %3065 = vmatpush.msra.mxu0 0.0
        %3066 = vmatpush.msra.mxu0 0.0
        %3067 = vmatpush.msra.mxu0 0.0
        %3068 = vmatpush.msra.mxu0 0.0
        %3069 = vmatpush.msra.mxu0 0.0
        %3070 = vmatpush.msra.mxu0 0.0
        %3071 = vmatpush.msra.mxu0 0.0
        %3072 = vmatpush.msra.mxu0 0.0
        %3073 = vmatpush.msra.mxu0 0.0
        %3074 = vmatpush.msra.mxu0 0.0
        %3075 = vmatpush.msra.mxu0 0.0
        %3076 = vmatpush.msra.mxu0 0.0
        %3077 = vmatpush.msra.mxu0 0.0
        %3078 = vmatpush.msra.mxu0 %v3056
        %3079 = vmatmul.f32.gmra.mxu0 %v3061
        %v3080 = vpop.f32.mrf.mxu0
        %v3081 = vadd.f32 0.0, %v3080
        %3082 = vdwg.mxu0
        %v3084 = vsel %vm1187, %v3048, 0
        %3086 = vmatpush.msra.mxu0 0.0
        %3087 = vmatpush.msra.mxu0 0.0
        %3088 = vmatpush.msra.mxu0 0.0
        %3089 = vmatpush.msra.mxu0 0.0
        %3090 = vmatpush.msra.mxu0 0.0
        %3091 = vmatpush.msra.mxu0 0.0
        %3092 = vmatpush.msra.mxu0 0.0
        %3093 = vmatpush.msra.mxu0 0.0
        %3094 = vmatpush.msra.mxu0 0.0
        %3095 = vmatpush.msra.mxu0 0.0
        %3096 = vmatpush.msra.mxu0 0.0
        %3097 = vmatpush.msra.mxu0 0.0
        %3098 = vmatpush.msra.mxu0 0.0
        %3099 = vmatpush.msra.mxu0 0.0
        %3100 = vmatpush.msra.mxu0 0.0
        %3101 = vmatpush.msra.mxu0 %v3057
        %3102 = vmatmul.f32.gmra.mxu0 %v3084
        %v3103 = vpop.f32.mrf.mxu0
        %v3104 = vadd.f32 0.0, %v3103
        %3105 = vdwg.mxu0
        %v3107 = vsel %vm1187, %v3049, 0
        %3109 = vmatpush.msra.mxu0 0.0
        %3110 = vmatpush.msra.mxu0 0.0
        %3111 = vmatpush.msra.mxu0 0.0
        %3112 = vmatpush.msra.mxu0 0.0
        %3113 = vmatpush.msra.mxu0 0.0
        %3114 = vmatpush.msra.mxu0 0.0
        %3115 = vmatpush.msra.mxu0 0.0
        %3116 = vmatpush.msra.mxu0 0.0
        %3117 = vmatpush.msra.mxu0 0.0
        %3118 = vmatpush.msra.mxu0 0.0
        %3119 = vmatpush.msra.mxu0 0.0
        %3120 = vmatpush.msra.mxu0 0.0
        %3121 = vmatpush.msra.mxu0 0.0
        %3122 = vmatpush.msra.mxu0 0.0
        %3123 = vmatpush.msra.mxu0 0.0
        %3124 = vmatpush.msra.mxu0 %v3058
        %3125 = vmatmul.f32.gmra.mxu0 %v3107
        %v3126 = vpop.f32.mrf.mxu0
        %v3127 = vadd.f32 0.0, %v3126
        %3128 = vdwg.mxu0
        %v3130 = vsel %vm1187, %v3050, 0
        %3132 = vmatpush.msra.mxu0 0.0
        %3133 = vmatpush.msra.mxu0 0.0
        %3134 = vmatpush.msra.mxu0 0.0
        %3135 = vmatpush.msra.mxu0 0.0
        %3136 = vmatpush.msra.mxu0 0.0
        %3137 = vmatpush.msra.mxu0 0.0
        %3138 = vmatpush.msra.mxu0 0.0
        %3139 = vmatpush.msra.mxu0 0.0
        %3140 = vmatpush.msra.mxu0 0.0
        %3141 = vmatpush.msra.mxu0 0.0
        %3142 = vmatpush.msra.mxu0 0.0
        %3143 = vmatpush.msra.mxu0 0.0
        %3144 = vmatpush.msra.mxu0 0.0
        %3145 = vmatpush.msra.mxu0 0.0
        %3146 = vmatpush.msra.mxu0 0.0
        %3147 = vmatpush.msra.mxu0 %v3059
        %3148 = vmatmul.f32.gmra.mxu0 %v3130
        %v3149 = vpop.f32.mrf.mxu0
        %v3150 = vadd.f32 0.0, %v3149
        %3151 = vdwg.mxu0
        %v3152 = vadd.f32 %v2891, %v3081
        %v3153 = vadd.f32 %v2892, %v3104
        %v3154 = vadd.f32 %v2893, %v3127
        %v3155 = vadd.f32 %v2894, %v3150
        %v3156 = vld [vmem:[#allocation11] sm:$0xff]
        %v3157 = vld [vmem:[#allocation11 + $0x8] sm:$0xff]
        %v3158 = vld [vmem:[#allocation11 + $0x10] sm:$0xff]
        %v3159 = vld [vmem:[#allocation11 + $0x18] sm:$0xff]
        %v3160 = vld [vmem:[#allocation11 + $0x20] sm:$0xff]
        %v3161 = vld [vmem:[#allocation11 + $0x28] sm:$0xff]
        %v3162 = vld [vmem:[#allocation11 + $0x30] sm:$0xff]
        %v3163 = vld [vmem:[#allocation11 + $0x38] sm:$0xff]
        %v3164 = vld [vmem:[#allocation11 + $0x40] sm:$0xff]
        %v3165 = vld [vmem:[#allocation11 + $0x48] sm:$0xff]
        %v3166 = vld [vmem:[#allocation11 + $0x50] sm:$0xff]
        %v3167 = vld [vmem:[#allocation11 + $0x58] sm:$0xff]
        %v3168 = vld [vmem:[#allocation11 + $0x60] sm:$0xff]
        %v3169 = vld [vmem:[#allocation11 + $0x68] sm:$0xff]
        %v3170 = vld [vmem:[#allocation11 + $0x70] sm:$0xff]
        %v3171 = vld [vmem:[#allocation11 + $0x78] sm:$0xff]
        %v3172 = vld [vmem:[%s7] sm:$0x1]
        %v3174 = vperm.slane %v3172, 0
        %3176 = vmatpush.msra.mxu0 %v3171
        %3177 = vmatpush.msra.mxu0 %v3170
        %3178 = vmatpush.msra.mxu0 %v3169
        %3179 = vmatpush.msra.mxu0 %v3168
        %3180 = vmatpush.msra.mxu0 %v3167
        %3181 = vmatpush.msra.mxu0 %v3166
        %3182 = vmatpush.msra.mxu0 %v3165
        %3183 = vmatpush.msra.mxu0 %v3164
        %3184 = vmatpush.msra.mxu0 %v3163
        %3185 = vmatpush.msra.mxu0 %v3162
        %3186 = vmatpush.msra.mxu0 %v3161
        %3187 = vmatpush.msra.mxu0 %v3160
        %3188 = vmatpush.msra.mxu0 %v3159
        %3189 = vmatpush.msra.mxu0 %v3158
        %3190 = vmatpush.msra.mxu0 %v3157
        %3191 = vmatpush.msra.mxu0 %v3156
        %3192 = vmatmul.f32.gmra.mxu0 %v3152
        %v3193 = vpop.f32.mrf.mxu0
        %v3194 = vadd.f32 %v3174, %v3193
        %3195 = vmatmul.f32.gmra.mxu0 %v3153
        %v3196 = vpop.f32.mrf.mxu0
        %v3197 = vadd.f32 %v3174, %v3196
        %3198 = vmatmul.f32.gmra.mxu0 %v3154
        %v3199 = vpop.f32.mrf.mxu0
        %v3200 = vadd.f32 %v3174, %v3199
        %3201 = vmatmul.f32.gmra.mxu0 %v3155
        %v3202 = vpop.f32.mrf.mxu0
        %v3203 = vadd.f32 %v3174, %v3202
        %3204 = vdwg.mxu0
        %v3205 = vadd.f32 %v3194, %v876
        %v3206 = vadd.f32 %v3197, %v877
        %v3207 = vadd.f32 %v3200, %v878
        %v3208 = vadd.f32 %v3203, %v879
        %3209 = vadd.xlane.f32.xlu0 %v3205
        %v3210 = vpop.xlane.xlu0 %3209
        %3211 = vadd.xlane.f32.xlu0 %v3206
        %v3212 = vpop.xlane.xlu0 %3211
        %3213 = vadd.xlane.f32.xlu0 %v3207
        %v3214 = vpop.xlane.xlu0 %3213
        %3215 = vadd.xlane.f32.xlu0 %v3208
        %v3216 = vpop.xlane.xlu0 %3215
        %v3217 = vrcp.pop 128.0
        %v3218 = vmul.f32 128.0, %v3217
        %v3219 = vsub.f32 1.0, %v3218
        %v3220 = vmul.f32 %v3217, %v3219
        %v3221 = vadd.f32 %v3217, %v3220
        %vm3222 = vweird.f32 %v3217
        %v3223 = vsel %vm3222, %v3217, %v3221
        %v3224 = vmul.f32 %v3210, %v3223
        %v3225 = vmul.f32 %v3212, %v3223
        %v3226 = vmul.f32 %v3214, %v3223
        %v3227 = vmul.f32 %v3216, %v3223
        %v3228 = vsub.f32 %v3205, %v3224
        %v3229 = vsub.f32 %v3206, %v3225
        %v3230 = vsub.f32 %v3207, %v3226
        %v3231 = vsub.f32 %v3208, %v3227
        %v3232 = vmul.f32 %v3228, %v3228
        %v3233 = vmul.f32 %v3229, %v3229
        %v3234 = vmul.f32 %v3230, %v3230
        %v3235 = vmul.f32 %v3231, %v3231
        %3236 = vadd.xlane.f32.xlu0 %v3232
        %v3237 = vpop.xlane.xlu0 %3236
        %3238 = vadd.xlane.f32.xlu0 %v3233
        %v3239 = vpop.xlane.xlu0 %3238
        %3240 = vadd.xlane.f32.xlu0 %v3234
        %v3241 = vpop.xlane.xlu0 %3240
        %3242 = vadd.xlane.f32.xlu0 %v3235
        %v3243 = vpop.xlane.xlu0 %3242
        %v3244 = vmul.f32 %v3237, %v3223
        %v3245 = vmul.f32 %v3239, %v3223
        %v3246 = vmul.f32 %v3241, %v3223
        %v3247 = vmul.f32 %v3243, %v3223
        %v3248 = vadd.f32 %v3244, 1e-05
        %v3249 = vadd.f32 %v3245, 1e-05
        %v3250 = vadd.f32 %v3246, 1e-05
        %v3251 = vadd.f32 %v3247, 1e-05
        %v3252 = vrsqrt.pop %v3248
        %v3253 = vmul.f32 %v3252, %v3248
        %v3254 = vmul.f32 %v3253, %v3252
        %v3255 = vmul.f32 0.5, %v3254
        %v3256 = vsub.f32 1.5, %v3255
        %v3257 = vmul.f32 %v3252, %v3256
        %vm3258 = vweird.f32 %v3248
        %vm3259 = vweird.f32 %v3252
        %vm3260 = vmor %vm3258, %vm3259
        %v3261 = vsel %vm3260, %v3252, %v3257
        %v3262 = vrsqrt.pop %v3249
        %v3263 = vmul.f32 %v3262, %v3249
        %v3264 = vmul.f32 %v3263, %v3262
        %v3265 = vmul.f32 0.5, %v3264
        %v3266 = vsub.f32 1.5, %v3265
        %v3267 = vmul.f32 %v3262, %v3266
        %vm3268 = vweird.f32 %v3249
        %vm3269 = vweird.f32 %v3262
        %vm3270 = vmor %vm3268, %vm3269
        %v3271 = vsel %vm3270, %v3262, %v3267
        %v3272 = vrsqrt.pop %v3250
        %v3273 = vmul.f32 %v3272, %v3250
        %v3274 = vmul.f32 %v3273, %v3272
        %v3275 = vmul.f32 0.5, %v3274
        %v3276 = vsub.f32 1.5, %v3275
        %v3277 = vmul.f32 %v3272, %v3276
        %vm3278 = vweird.f32 %v3250
        %vm3279 = vweird.f32 %v3272
        %vm3280 = vmor %vm3278, %vm3279
        %v3281 = vsel %vm3280, %v3272, %v3277
        %v3282 = vrsqrt.pop %v3251
        %v3283 = vmul.f32 %v3282, %v3251
        %v3284 = vmul.f32 %v3283, %v3282
        %v3285 = vmul.f32 0.5, %v3284
        %v3286 = vsub.f32 1.5, %v3285
        %v3287 = vmul.f32 %v3282, %v3286
        %vm3288 = vweird.f32 %v3251
        %vm3289 = vweird.f32 %v3282
        %vm3290 = vmor %vm3288, %vm3289
        %v3291 = vsel %vm3290, %v3282, %v3287
        %v3292 = vmul.f32 %v3228, %v3261
        %v3293 = vmul.f32 %v3229, %v3271
        %v3294 = vmul.f32 %v3230, %v3281
        %v3295 = vmul.f32 %v3231, %v3291
        %v3296 = vld [vmem:[%s16] sm:$0x1]
        %v3298 = vperm.slane %v3296, 0
        %v3300 = vmul.f32 %v3292, %v3298
        %v3301 = vmul.f32 %v3293, %v3298
        %v3302 = vmul.f32 %v3294, %v3298
        %v3303 = vmul.f32 %v3295, %v3298
        %v3304 = vld [vmem:[%s17] sm:$0x1]
        %v3306 = vperm.slane %v3304, 0
        %v3308 = vadd.f32 %v3300, %v3306
        %v3309 = vadd.f32 %v3301, %v3306
        %v3310 = vadd.f32 %v3302, %v3306
        %v3311 = vadd.f32 %v3303, %v3306
        %v3312 = vld [vmem:[#allocation13] sm:$0xff]
        %v3313 = vld [vmem:[#allocation13 + $0x8] sm:$0xff]
        %v3314 = vld [vmem:[#allocation13 + $0x10] sm:$0xff]
        %v3315 = vld [vmem:[#allocation13 + $0x18] sm:$0xff]
        %v3316 = vld [vmem:[#allocation13 + $0x20] sm:$0xff]
        %v3317 = vld [vmem:[#allocation13 + $0x28] sm:$0xff]
        %v3318 = vld [vmem:[#allocation13 + $0x30] sm:$0xff]
        %v3319 = vld [vmem:[#allocation13 + $0x38] sm:$0xff]
        %v3320 = vld [vmem:[#allocation13 + $0x40] sm:$0xff]
        %v3321 = vld [vmem:[#allocation13 + $0x48] sm:$0xff]
        %v3322 = vld [vmem:[#allocation13 + $0x50] sm:$0xff]
        %v3323 = vld [vmem:[#allocation13 + $0x58] sm:$0xff]
        %v3324 = vld [vmem:[#allocation13 + $0x60] sm:$0xff]
        %v3325 = vld [vmem:[#allocation13 + $0x68] sm:$0xff]
        %v3326 = vld [vmem:[#allocation13 + $0x70] sm:$0xff]
        %v3327 = vld [vmem:[#allocation13 + $0x78] sm:$0xff]
        %v3328 = vld [vmem:[%s9] sm:$0x1]
        %v3330 = vperm.slane %v3328, 0
        %3332 = vmatpush.msra.mxu0 %v3327
        %3333 = vmatpush.msra.mxu0 %v3326
        %3334 = vmatpush.msra.mxu0 %v3325
        %3335 = vmatpush.msra.mxu0 %v3324
        %3336 = vmatpush.msra.mxu0 %v3323
        %3337 = vmatpush.msra.mxu0 %v3322
        %3338 = vmatpush.msra.mxu0 %v3321
        %3339 = vmatpush.msra.mxu0 %v3320
        %3340 = vmatpush.msra.mxu0 %v3319
        %3341 = vmatpush.msra.mxu0 %v3318
        %3342 = vmatpush.msra.mxu0 %v3317
        %3343 = vmatpush.msra.mxu0 %v3316
        %3344 = vmatpush.msra.mxu0 %v3315
        %3345 = vmatpush.msra.mxu0 %v3314
        %3346 = vmatpush.msra.mxu0 %v3313
        %3347 = vmatpush.msra.mxu0 %v3312
        %3348 = vmatmul.f32.gmra.mxu0 %v3308
        %v3349 = vpop.f32.mrf.mxu0
        %v3350 = vadd.f32 %v3330, %v3349
        %3351 = vmatmul.f32.gmra.mxu0 %v3309
        %v3352 = vpop.f32.mrf.mxu0
        %v3353 = vadd.f32 %v3330, %v3352
        %3354 = vmatmul.f32.gmra.mxu0 %v3310
        %v3355 = vpop.f32.mrf.mxu0
        %v3356 = vadd.f32 %v3330, %v3355
        %3357 = vmatmul.f32.gmra.mxu0 %v3311
        %v3358 = vpop.f32.mrf.mxu0
        %v3359 = vadd.f32 %v3330, %v3358
        %3360 = vdwg.mxu0
        %v3361 = vld [vmem:[#allocation14] sm:$0xff]
        %v3362 = vld [vmem:[#allocation14 + $0x8] sm:$0xff]
        %v3363 = vld [vmem:[#allocation14 + $0x10] sm:$0xff]
        %v3364 = vld [vmem:[#allocation14 + $0x18] sm:$0xff]
        %v3365 = vld [vmem:[#allocation14 + $0x20] sm:$0xff]
        %v3366 = vld [vmem:[#allocation14 + $0x28] sm:$0xff]
        %v3367 = vld [vmem:[#allocation14 + $0x30] sm:$0xff]
        %v3368 = vld [vmem:[#allocation14 + $0x38] sm:$0xff]
        %v3369 = vld [vmem:[#allocation14 + $0x40] sm:$0xff]
        %v3370 = vld [vmem:[#allocation14 + $0x48] sm:$0xff]
        %v3371 = vld [vmem:[#allocation14 + $0x50] sm:$0xff]
        %v3372 = vld [vmem:[#allocation14 + $0x58] sm:$0xff]
        %v3373 = vld [vmem:[#allocation14 + $0x60] sm:$0xff]
        %v3374 = vld [vmem:[#allocation14 + $0x68] sm:$0xff]
        %v3375 = vld [vmem:[#allocation14 + $0x70] sm:$0xff]
        %v3376 = vld [vmem:[#allocation14 + $0x78] sm:$0xff]
        %v3377 = vld [vmem:[%s11] sm:$0x1]
        %v3379 = vperm.slane %v3377, 0
        %3381 = vmatpush.msra.mxu0 %v3376
        %3382 = vmatpush.msra.mxu0 %v3375
        %3383 = vmatpush.msra.mxu0 %v3374
        %3384 = vmatpush.msra.mxu0 %v3373
        %3385 = vmatpush.msra.mxu0 %v3372
        %3386 = vmatpush.msra.mxu0 %v3371
        %3387 = vmatpush.msra.mxu0 %v3370
        %3388 = vmatpush.msra.mxu0 %v3369
        %3389 = vmatpush.msra.mxu0 %v3368
        %3390 = vmatpush.msra.mxu0 %v3367
        %3391 = vmatpush.msra.mxu0 %v3366
        %3392 = vmatpush.msra.mxu0 %v3365
        %3393 = vmatpush.msra.mxu0 %v3364
        %3394 = vmatpush.msra.mxu0 %v3363
        %3395 = vmatpush.msra.mxu0 %v3362
        %3396 = vmatpush.msra.mxu0 %v3361
        %3397 = vmatmul.f32.gmra.mxu0 %v3350
        %v3398 = vpop.f32.mrf.mxu0
        %v3399 = vadd.f32 %v3379, %v3398
        %3400 = vmatmul.f32.gmra.mxu0 %v3353
        %v3401 = vpop.f32.mrf.mxu0
        %v3402 = vadd.f32 %v3379, %v3401
        %3403 = vmatmul.f32.gmra.mxu0 %v3356
        %v3404 = vpop.f32.mrf.mxu0
        %v3405 = vadd.f32 %v3379, %v3404
        %3406 = vmatmul.f32.gmra.mxu0 %v3359
        %v3407 = vpop.f32.mrf.mxu0
        %v3408 = vadd.f32 %v3379, %v3407
        %3409 = vdwg.mxu0
        %v3410 = vld [vmem:[#allocation16] sm:$0xff]
        %v3411 = vld [vmem:[#allocation16 + $0x8] sm:$0xff]
        %v3412 = vld [vmem:[#allocation16 + $0x10] sm:$0xff]
        %v3413 = vld [vmem:[#allocation16 + $0x18] sm:$0xff]
        %v3414 = vld [vmem:[#allocation16 + $0x20] sm:$0xff]
        %v3415 = vld [vmem:[#allocation16 + $0x28] sm:$0xff]
        %v3416 = vld [vmem:[#allocation16 + $0x30] sm:$0xff]
        %v3417 = vld [vmem:[#allocation16 + $0x38] sm:$0xff]
        %v3418 = vld [vmem:[#allocation16 + $0x40] sm:$0xff]
        %v3419 = vld [vmem:[#allocation16 + $0x48] sm:$0xff]
        %v3420 = vld [vmem:[#allocation16 + $0x50] sm:$0xff]
        %v3421 = vld [vmem:[#allocation16 + $0x58] sm:$0xff]
        %v3422 = vld [vmem:[#allocation16 + $0x60] sm:$0xff]
        %v3423 = vld [vmem:[#allocation16 + $0x68] sm:$0xff]
        %v3424 = vld [vmem:[#allocation16 + $0x70] sm:$0xff]
        %v3425 = vld [vmem:[#allocation16 + $0x78] sm:$0xff]
        %v3426 = vld [vmem:[#allocation16 + $0x80] sm:$0xff]
        %v3427 = vld [vmem:[#allocation16 + $0x88] sm:$0xff]
        %v3428 = vld [vmem:[#allocation16 + $0x90] sm:$0xff]
        %v3429 = vld [vmem:[#allocation16 + $0x98] sm:$0xff]
        %v3430 = vld [vmem:[#allocation16 + $0xa0] sm:$0xff]
        %v3431 = vld [vmem:[#allocation16 + $0xa8] sm:$0xff]
        %v3432 = vld [vmem:[#allocation16 + $0xb0] sm:$0xff]
        %v3433 = vld [vmem:[#allocation16 + $0xb8] sm:$0xff]
        %v3434 = vld [vmem:[#allocation16 + $0xc0] sm:$0xff]
        %v3435 = vld [vmem:[#allocation16 + $0xc8] sm:$0xff]
        %v3436 = vld [vmem:[#allocation16 + $0xd0] sm:$0xff]
        %v3437 = vld [vmem:[#allocation16 + $0xd8] sm:$0xff]
        %v3438 = vld [vmem:[#allocation16 + $0xe0] sm:$0xff]
        %v3439 = vld [vmem:[#allocation16 + $0xe8] sm:$0xff]
        %v3440 = vld [vmem:[#allocation16 + $0xf0] sm:$0xff]
        %v3441 = vld [vmem:[#allocation16 + $0xf8] sm:$0xff]
        %v3442 = vld [vmem:[%s13] sm:$0x3]
        %v3444 = vperm.slane %v3442, 0
        %v3445 = vperm.slane %v3442, 1
        %3448 = vmatpush.msra.mxu0 %v3440
        %3449 = vmatpush.msra.mxu0 %v3438
        %3450 = vmatpush.msra.mxu0 %v3436
        %3451 = vmatpush.msra.mxu0 %v3434
        %3452 = vmatpush.msra.mxu0 %v3432
        %3453 = vmatpush.msra.mxu0 %v3430
        %3454 = vmatpush.msra.mxu0 %v3428
        %3455 = vmatpush.msra.mxu0 %v3426
        %3456 = vmatpush.msra.mxu0 %v3424
        %3457 = vmatpush.msra.mxu0 %v3422
        %3458 = vmatpush.msra.mxu0 %v3420
        %3459 = vmatpush.msra.mxu0 %v3418
        %3460 = vmatpush.msra.mxu0 %v3416
        %3461 = vmatpush.msra.mxu0 %v3414
        %3462 = vmatpush.msra.mxu0 %v3412
        %3463 = vmatpush.msra.mxu0 %v3410
        %3464 = vmatmul.f32.gmra.mxu0 %v880
        %v3465 = vpop.f32.mrf.mxu0
        %v3466 = vadd.f32 %v3444, %v3465
        %3467 = vmatmul.f32.gmra.mxu0 %v881
        %v3468 = vpop.f32.mrf.mxu0
        %v3469 = vadd.f32 %v3444, %v3468
        %3470 = vmatmul.f32.gmra.mxu0 %v882
        %v3471 = vpop.f32.mrf.mxu0
        %v3472 = vadd.f32 %v3444, %v3471
        %3473 = vmatmul.f32.gmra.mxu0 %v883
        %v3474 = vpop.f32.mrf.mxu0
        %v3475 = vadd.f32 %v3444, %v3474
        %3476 = vmatmul.f32.gmra.mxu0 %v884
        %v3477 = vpop.f32.mrf.mxu0
        %v3478 = vadd.f32 %v3444, %v3477
        %3479 = vmatmul.f32.gmra.mxu0 %v885
        %v3480 = vpop.f32.mrf.mxu0
        %v3481 = vadd.f32 %v3444, %v3480
        %3482 = vmatmul.f32.gmra.mxu0 %v886
        %v3483 = vpop.f32.mrf.mxu0
        %v3484 = vadd.f32 %v3444, %v3483
        %3485 = vmatmul.f32.gmra.mxu0 %v887
        %v3486 = vpop.f32.mrf.mxu0
        %v3487 = vadd.f32 %v3444, %v3486
        %3488 = vdwg.mxu0
        %3489 = vmatpush.msra.mxu0 %v3441
        %3490 = vmatpush.msra.mxu0 %v3439
        %3491 = vmatpush.msra.mxu0 %v3437
        %3492 = vmatpush.msra.mxu0 %v3435
        %3493 = vmatpush.msra.mxu0 %v3433
        %3494 = vmatpush.msra.mxu0 %v3431
        %3495 = vmatpush.msra.mxu0 %v3429
        %3496 = vmatpush.msra.mxu0 %v3427
        %3497 = vmatpush.msra.mxu0 %v3425
        %3498 = vmatpush.msra.mxu0 %v3423
        %3499 = vmatpush.msra.mxu0 %v3421
        %3500 = vmatpush.msra.mxu0 %v3419
        %3501 = vmatpush.msra.mxu0 %v3417
        %3502 = vmatpush.msra.mxu0 %v3415
        %3503 = vmatpush.msra.mxu0 %v3413
        %3504 = vmatpush.msra.mxu0 %v3411
        %3505 = vmatmul.f32.gmra.mxu0 %v880
        %v3506 = vpop.f32.mrf.mxu0
        %v3507 = vadd.f32 %v3445, %v3506
        %3508 = vmatmul.f32.gmra.mxu0 %v881
        %v3509 = vpop.f32.mrf.mxu0
        %v3510 = vadd.f32 %v3445, %v3509
        %3511 = vmatmul.f32.gmra.mxu0 %v882
        %v3512 = vpop.f32.mrf.mxu0
        %v3513 = vadd.f32 %v3445, %v3512
        %3514 = vmatmul.f32.gmra.mxu0 %v883
        %v3515 = vpop.f32.mrf.mxu0
        %v3516 = vadd.f32 %v3445, %v3515
        %3517 = vmatmul.f32.gmra.mxu0 %v884
        %v3518 = vpop.f32.mrf.mxu0
        %v3519 = vadd.f32 %v3445, %v3518
        %3520 = vmatmul.f32.gmra.mxu0 %v885
        %v3521 = vpop.f32.mrf.mxu0
        %v3522 = vadd.f32 %v3445, %v3521
        %3523 = vmatmul.f32.gmra.mxu0 %v886
        %v3524 = vpop.f32.mrf.mxu0
        %v3525 = vadd.f32 %v3445, %v3524
        %3526 = vmatmul.f32.gmra.mxu0 %v887
        %v3527 = vpop.f32.mrf.mxu0
        %v3528 = vadd.f32 %v3445, %v3527
        %3529 = vdwg.mxu0
        %v3531 = vsel %vm1082, %v3399, 0
        %v3534 = vsel %vm1082, %v3466, 0
        %v3537 = vsel %vm1082, %v3469, 0
        %3539 = vmatpush.xpose.msra.mxu0 0.0
        %3540 = vmatpush.xpose.msra.mxu0 0.0
        %3541 = vmatpush.xpose.msra.mxu0 0.0
        %3542 = vmatpush.xpose.msra.mxu0 0.0
        %3543 = vmatpush.xpose.msra.mxu0 0.0
        %3544 = vmatpush.xpose.msra.mxu0 0.0
        %3545 = vmatpush.xpose.msra.mxu0 0.0
        %3546 = vmatpush.xpose.msra.mxu0 0.0
        %3547 = vmatpush.xpose.msra.mxu0 0.0
        %3548 = vmatpush.xpose.msra.mxu0 0.0
        %3549 = vmatpush.xpose.msra.mxu0 0.0
        %3550 = vmatpush.xpose.msra.mxu0 0.0
        %3551 = vmatpush.xpose.msra.mxu0 0.0
        %3552 = vmatpush.xpose.msra.mxu0 0.0
        %3553 = vmatpush.xpose.msra.mxu0 %v3537
        %3554 = vmatpush.xpose.msra.mxu0 %v3534
        %3555 = vmatmul.f32.gmra.mxu0 %v3531
        %v3556 = vpop.f32.mrf.mxu0
        %v3557 = vadd.f32 0.0, %v3556
        %3558 = vdwg.mxu0
        %v3560 = vsel %vm1082, %v3402, 0
        %v3563 = vsel %vm1082, %v3472, 0
        %v3566 = vsel %vm1082, %v3475, 0
        %3568 = vmatpush.xpose.msra.mxu0 0.0
        %3569 = vmatpush.xpose.msra.mxu0 0.0
        %3570 = vmatpush.xpose.msra.mxu0 0.0
        %3571 = vmatpush.xpose.msra.mxu0 0.0
        %3572 = vmatpush.xpose.msra.mxu0 0.0
        %3573 = vmatpush.xpose.msra.mxu0 0.0
        %3574 = vmatpush.xpose.msra.mxu0 0.0
        %3575 = vmatpush.xpose.msra.mxu0 0.0
        %3576 = vmatpush.xpose.msra.mxu0 0.0
        %3577 = vmatpush.xpose.msra.mxu0 0.0
        %3578 = vmatpush.xpose.msra.mxu0 0.0
        %3579 = vmatpush.xpose.msra.mxu0 0.0
        %3580 = vmatpush.xpose.msra.mxu0 0.0
        %3581 = vmatpush.xpose.msra.mxu0 0.0
        %3582 = vmatpush.xpose.msra.mxu0 %v3566
        %3583 = vmatpush.xpose.msra.mxu0 %v3563
        %3584 = vmatmul.f32.gmra.mxu0 %v3560
        %v3585 = vpop.f32.mrf.mxu0
        %v3586 = vadd.f32 0.0, %v3585
        %3587 = vdwg.mxu0
        %v3589 = vsel %vm1082, %v3405, 0
        %v3592 = vsel %vm1082, %v3478, 0
        %v3595 = vsel %vm1082, %v3481, 0
        %3597 = vmatpush.xpose.msra.mxu0 0.0
        %3598 = vmatpush.xpose.msra.mxu0 0.0
        %3599 = vmatpush.xpose.msra.mxu0 0.0
        %3600 = vmatpush.xpose.msra.mxu0 0.0
        %3601 = vmatpush.xpose.msra.mxu0 0.0
        %3602 = vmatpush.xpose.msra.mxu0 0.0
        %3603 = vmatpush.xpose.msra.mxu0 0.0
        %3604 = vmatpush.xpose.msra.mxu0 0.0
        %3605 = vmatpush.xpose.msra.mxu0 0.0
        %3606 = vmatpush.xpose.msra.mxu0 0.0
        %3607 = vmatpush.xpose.msra.mxu0 0.0
        %3608 = vmatpush.xpose.msra.mxu0 0.0
        %3609 = vmatpush.xpose.msra.mxu0 0.0
        %3610 = vmatpush.xpose.msra.mxu0 0.0
        %3611 = vmatpush.xpose.msra.mxu0 %v3595
        %3612 = vmatpush.xpose.msra.mxu0 %v3592
        %3613 = vmatmul.f32.gmra.mxu0 %v3589
        %v3614 = vpop.f32.mrf.mxu0
        %v3615 = vadd.f32 0.0, %v3614
        %3616 = vdwg.mxu0
        %v3618 = vsel %vm1082, %v3408, 0
        %v3621 = vsel %vm1082, %v3484, 0
        %v3624 = vsel %vm1082, %v3487, 0
        %3626 = vmatpush.xpose.msra.mxu0 0.0
        %3627 = vmatpush.xpose.msra.mxu0 0.0
        %3628 = vmatpush.xpose.msra.mxu0 0.0
        %3629 = vmatpush.xpose.msra.mxu0 0.0
        %3630 = vmatpush.xpose.msra.mxu0 0.0
        %3631 = vmatpush.xpose.msra.mxu0 0.0
        %3632 = vmatpush.xpose.msra.mxu0 0.0
        %3633 = vmatpush.xpose.msra.mxu0 0.0
        %3634 = vmatpush.xpose.msra.mxu0 0.0
        %3635 = vmatpush.xpose.msra.mxu0 0.0
        %3636 = vmatpush.xpose.msra.mxu0 0.0
        %3637 = vmatpush.xpose.msra.mxu0 0.0
        %3638 = vmatpush.xpose.msra.mxu0 0.0
        %3639 = vmatpush.xpose.msra.mxu0 0.0
        %3640 = vmatpush.xpose.msra.mxu0 %v3624
        %3641 = vmatpush.xpose.msra.mxu0 %v3621
        %3642 = vmatmul.f32.gmra.mxu0 %v3618
        %v3643 = vpop.f32.mrf.mxu0
        %v3644 = vadd.f32 0.0, %v3643
        %3645 = vdwg.mxu0
        %v3646 = vsel %vm1082, %v3557, -inf
        %3647 = vmax.xlane.f32.xlu0 %v3646
        %v3648 = vpop.xlane.xlu0 %3647
        %v3649 = vsel %vm1082, %v3586, -inf
        %3650 = vmax.xlane.f32.xlu0 %v3649
        %v3651 = vpop.xlane.xlu0 %3650
        %v3652 = vsel %vm1082, %v3615, -inf
        %3653 = vmax.xlane.f32.xlu0 %v3652
        %v3654 = vpop.xlane.xlu0 %3653
        %v3655 = vsel %vm1082, %v3644, -inf
        %3656 = vmax.xlane.f32.xlu0 %v3655
        %v3657 = vpop.xlane.xlu0 %3656
        %v3658 = vsub.f32 %v3557, %v3648
        %v3659 = vsub.f32 %v3586, %v3651
        %v3660 = vsub.f32 %v3615, %v3654
        %v3661 = vsub.f32 %v3644, %v3657
        %v3662 = vmul.f32 %v3658, 1.442695
        %v3663 = vpow.pop %v3662
        %v3664 = vmul.f32 %v3659, 1.442695
        %v3665 = vpow.pop %v3664
        %v3666 = vmul.f32 %v3660, 1.442695
        %v3667 = vpow.pop %v3666
        %v3668 = vmul.f32 %v3661, 1.442695
        %v3669 = vpow.pop %v3668
        %v3670 = vsel %vm1082, %v3663, 0.0
        %3671 = vadd.xlane.f32.xlu0 %v3670
        %v3672 = vpop.xlane.xlu0 %3671
        %v3673 = vsel %vm1082, %v3665, 0.0
        %3674 = vadd.xlane.f32.xlu0 %v3673
        %v3675 = vpop.xlane.xlu0 %3674
        %v3676 = vsel %vm1082, %v3667, 0.0
        %3677 = vadd.xlane.f32.xlu0 %v3676
        %v3678 = vpop.xlane.xlu0 %3677
        %v3679 = vsel %vm1082, %v3669, 0.0
        %3680 = vadd.xlane.f32.xlu0 %v3679
        %v3681 = vpop.xlane.xlu0 %3680
        %v3682 = vrcp.pop %v3672
        %v3683 = vrcp.pop %v3675
        %v3684 = vrcp.pop %v3678
        %v3685 = vrcp.pop %v3681
        %v3686 = vmul.f32 %v3663, %v3682
        %v3687 = vmul.f32 %v3665, %v3683
        %v3688 = vmul.f32 %v3667, %v3684
        %v3689 = vmul.f32 %v3669, %v3685
        %v3690 = vsel %vm1236, %v3507, 0.0
        %v3691 = vsel %vm1236, %v3510, 0.0
        %v3692 = vsel %vm1236, %v3513, 0.0
        %v3693 = vsel %vm1236, %v3516, 0.0
        %v3694 = vsel %vm1236, %v3519, 0.0
        %v3695 = vsel %vm1236, %v3522, 0.0
        %v3696 = vsel %vm1236, %v3525, 0.0
        %v3697 = vsel %vm1236, %v3528, 0.0
        %3698 = vrot.lane.b32.xlu0 %v3399, 112
        %v3699 = vpop.permute.xlu0 %3698
        %3700 = vrot.lane.b32.xlu0 %v3466, 112
        %v3701 = vpop.permute.xlu0 %3700
        %3702 = vrot.lane.b32.xlu0 %v3469, 112
        %v3703 = vpop.permute.xlu0 %3702
        %v3704 = vsel %vm1082, %v3699, 0
        %v3706 = vsel %vm1082, %v3701, 0
        %v3708 = vsel %vm1082, %v3703, 0
        %3710 = vmatpush.xpose.msra.mxu0 0.0
        %3711 = vmatpush.xpose.msra.mxu0 0.0
        %3712 = vmatpush.xpose.msra.mxu0 0.0
        %3713 = vmatpush.xpose.msra.mxu0 0.0
        %3714 = vmatpush.xpose.msra.mxu0 0.0
        %3715 = vmatpush.xpose.msra.mxu0 0.0
        %3716 = vmatpush.xpose.msra.mxu0 0.0
        %3717 = vmatpush.xpose.msra.mxu0 0.0
        %3718 = vmatpush.xpose.msra.mxu0 0.0
        %3719 = vmatpush.xpose.msra.mxu0 0.0
        %3720 = vmatpush.xpose.msra.mxu0 0.0
        %3721 = vmatpush.xpose.msra.mxu0 0.0
        %3722 = vmatpush.xpose.msra.mxu0 0.0
        %3723 = vmatpush.xpose.msra.mxu0 0.0
        %3724 = vmatpush.xpose.msra.mxu0 %v3708
        %3725 = vmatpush.xpose.msra.mxu0 %v3706
        %3726 = vmatmul.f32.gmra.mxu0 %v3704
        %v3727 = vpop.f32.mrf.mxu0
        %v3728 = vadd.f32 0.0, %v3727
        %3729 = vdwg.mxu0
        %3730 = vrot.lane.b32.xlu0 %v3402, 112
        %v3731 = vpop.permute.xlu0 %3730
        %3732 = vrot.lane.b32.xlu0 %v3472, 112
        %v3733 = vpop.permute.xlu0 %3732
        %3734 = vrot.lane.b32.xlu0 %v3475, 112
        %v3735 = vpop.permute.xlu0 %3734
        %v3736 = vsel %vm1082, %v3731, 0
        %v3738 = vsel %vm1082, %v3733, 0
        %v3740 = vsel %vm1082, %v3735, 0
        %3742 = vmatpush.xpose.msra.mxu0 0.0
        %3743 = vmatpush.xpose.msra.mxu0 0.0
        %3744 = vmatpush.xpose.msra.mxu0 0.0
        %3745 = vmatpush.xpose.msra.mxu0 0.0
        %3746 = vmatpush.xpose.msra.mxu0 0.0
        %3747 = vmatpush.xpose.msra.mxu0 0.0
        %3748 = vmatpush.xpose.msra.mxu0 0.0
        %3749 = vmatpush.xpose.msra.mxu0 0.0
        %3750 = vmatpush.xpose.msra.mxu0 0.0
        %3751 = vmatpush.xpose.msra.mxu0 0.0
        %3752 = vmatpush.xpose.msra.mxu0 0.0
        %3753 = vmatpush.xpose.msra.mxu0 0.0
        %3754 = vmatpush.xpose.msra.mxu0 0.0
        %3755 = vmatpush.xpose.msra.mxu0 0.0
        %3756 = vmatpush.xpose.msra.mxu0 %v3740
        %3757 = vmatpush.xpose.msra.mxu0 %v3738
        %3758 = vmatmul.f32.gmra.mxu0 %v3736
        %v3759 = vpop.f32.mrf.mxu0
        %v3760 = vadd.f32 0.0, %v3759
        %3761 = vdwg.mxu0
        %3762 = vrot.lane.b32.xlu0 %v3405, 112
        %v3763 = vpop.permute.xlu0 %3762
        %3764 = vrot.lane.b32.xlu0 %v3478, 112
        %v3765 = vpop.permute.xlu0 %3764
        %3766 = vrot.lane.b32.xlu0 %v3481, 112
        %v3767 = vpop.permute.xlu0 %3766
        %v3768 = vsel %vm1082, %v3763, 0
        %v3770 = vsel %vm1082, %v3765, 0
        %v3772 = vsel %vm1082, %v3767, 0
        %3774 = vmatpush.xpose.msra.mxu0 0.0
        %3775 = vmatpush.xpose.msra.mxu0 0.0
        %3776 = vmatpush.xpose.msra.mxu0 0.0
        %3777 = vmatpush.xpose.msra.mxu0 0.0
        %3778 = vmatpush.xpose.msra.mxu0 0.0
        %3779 = vmatpush.xpose.msra.mxu0 0.0
        %3780 = vmatpush.xpose.msra.mxu0 0.0
        %3781 = vmatpush.xpose.msra.mxu0 0.0
        %3782 = vmatpush.xpose.msra.mxu0 0.0
        %3783 = vmatpush.xpose.msra.mxu0 0.0
        %3784 = vmatpush.xpose.msra.mxu0 0.0
        %3785 = vmatpush.xpose.msra.mxu0 0.0
        %3786 = vmatpush.xpose.msra.mxu0 0.0
        %3787 = vmatpush.xpose.msra.mxu0 0.0
        %3788 = vmatpush.xpose.msra.mxu0 %v3772
        %3789 = vmatpush.xpose.msra.mxu0 %v3770
        %3790 = vmatmul.f32.gmra.mxu0 %v3768
        %v3791 = vpop.f32.mrf.mxu0
        %v3792 = vadd.f32 0.0, %v3791
        %3793 = vdwg.mxu0
        %3794 = vrot.lane.b32.xlu0 %v3408, 112
        %v3795 = vpop.permute.xlu0 %3794
        %3796 = vrot.lane.b32.xlu0 %v3484, 112
        %v3797 = vpop.permute.xlu0 %3796
        %3798 = vrot.lane.b32.xlu0 %v3487, 112
        %v3799 = vpop.permute.xlu0 %3798
        %v3800 = vsel %vm1082, %v3795, 0
        %v3802 = vsel %vm1082, %v3797, 0
        %v3804 = vsel %vm1082, %v3799, 0
        %3806 = vmatpush.xpose.msra.mxu0 0.0
        %3807 = vmatpush.xpose.msra.mxu0 0.0
        %3808 = vmatpush.xpose.msra.mxu0 0.0
        %3809 = vmatpush.xpose.msra.mxu0 0.0
        %3810 = vmatpush.xpose.msra.mxu0 0.0
        %3811 = vmatpush.xpose.msra.mxu0 0.0
        %3812 = vmatpush.xpose.msra.mxu0 0.0
        %3813 = vmatpush.xpose.msra.mxu0 0.0
        %3814 = vmatpush.xpose.msra.mxu0 0.0
        %3815 = vmatpush.xpose.msra.mxu0 0.0
        %3816 = vmatpush.xpose.msra.mxu0 0.0
        %3817 = vmatpush.xpose.msra.mxu0 0.0
        %3818 = vmatpush.xpose.msra.mxu0 0.0
        %3819 = vmatpush.xpose.msra.mxu0 0.0
        %3820 = vmatpush.xpose.msra.mxu0 %v3804
        %3821 = vmatpush.xpose.msra.mxu0 %v3802
        %3822 = vmatmul.f32.gmra.mxu0 %v3800
        %v3823 = vpop.f32.mrf.mxu0
        %v3824 = vadd.f32 0.0, %v3823
        %3825 = vdwg.mxu0
        %v3826 = vsel %vm1082, %v3728, -inf
        %3827 = vmax.xlane.f32.xlu0 %v3826
        %v3828 = vpop.xlane.xlu0 %3827
        %v3829 = vsel %vm1082, %v3760, -inf
        %3830 = vmax.xlane.f32.xlu0 %v3829
        %v3831 = vpop.xlane.xlu0 %3830
        %v3832 = vsel %vm1082, %v3792, -inf
        %3833 = vmax.xlane.f32.xlu0 %v3832
        %v3834 = vpop.xlane.xlu0 %3833
        %v3835 = vsel %vm1082, %v3824, -inf
        %3836 = vmax.xlane.f32.xlu0 %v3835
        %v3837 = vpop.xlane.xlu0 %3836
        %v3838 = vsub.f32 %v3728, %v3828
        %v3839 = vsub.f32 %v3760, %v3831
        %v3840 = vsub.f32 %v3792, %v3834
        %v3841 = vsub.f32 %v3824, %v3837
        %v3842 = vmul.f32 %v3838, 1.442695
        %v3843 = vpow.pop %v3842
        %v3844 = vmul.f32 %v3839, 1.442695
        %v3845 = vpow.pop %v3844
        %v3846 = vmul.f32 %v3840, 1.442695
        %v3847 = vpow.pop %v3846
        %v3848 = vmul.f32 %v3841, 1.442695
        %v3849 = vpow.pop %v3848
        %v3850 = vsel %vm1082, %v3843, 0.0
        %3851 = vadd.xlane.f32.xlu0 %v3850
        %v3852 = vpop.xlane.xlu0 %3851
        %v3853 = vsel %vm1082, %v3845, 0.0
        %3854 = vadd.xlane.f32.xlu0 %v3853
        %v3855 = vpop.xlane.xlu0 %3854
        %v3856 = vsel %vm1082, %v3847, 0.0
        %3857 = vadd.xlane.f32.xlu0 %v3856
        %v3858 = vpop.xlane.xlu0 %3857
        %v3859 = vsel %vm1082, %v3849, 0.0
        %3860 = vadd.xlane.f32.xlu0 %v3859
        %v3861 = vpop.xlane.xlu0 %3860
        %v3862 = vrcp.pop %v3852
        %v3863 = vrcp.pop %v3855
        %v3864 = vrcp.pop %v3858
        %v3865 = vrcp.pop %v3861
        %v3866 = vmul.f32 %v3843, %v3862
        %v3867 = vmul.f32 %v3845, %v3863
        %v3868 = vmul.f32 %v3847, %v3864
        %v3869 = vmul.f32 %v3849, %v3865
        %v3870 = vsel %vm1401, %v3507, 0.0
        %v3871 = vsel %vm1401, %v3510, 0.0
        %v3872 = vsel %vm1401, %v3513, 0.0
        %v3873 = vsel %vm1401, %v3516, 0.0
        %v3874 = vsel %vm1401, %v3519, 0.0
        %v3875 = vsel %vm1401, %v3522, 0.0
        %v3876 = vsel %vm1401, %v3525, 0.0
        %v3877 = vsel %vm1401, %v3528, 0.0
        %v3879 = vsel %vm1082, %v3866, 0
        %3881 = vmatpush.msra.mxu0 0.0
        %3882 = vmatpush.msra.mxu0 0.0
        %3883 = vmatpush.msra.mxu0 0.0
        %3884 = vmatpush.msra.mxu0 0.0
        %3885 = vmatpush.msra.mxu0 0.0
        %3886 = vmatpush.msra.mxu0 0.0
        %3887 = vmatpush.msra.mxu0 0.0
        %3888 = vmatpush.msra.mxu0 0.0
        %3889 = vmatpush.msra.mxu0 0.0
        %3890 = vmatpush.msra.mxu0 0.0
        %3891 = vmatpush.msra.mxu0 0.0
        %3892 = vmatpush.msra.mxu0 0.0
        %3893 = vmatpush.msra.mxu0 0.0
        %3894 = vmatpush.msra.mxu0 0.0
        %3895 = vmatpush.msra.mxu0 %v3871
        %3896 = vmatpush.msra.mxu0 %v3870
        %3897 = vmatmul.f32.gmra.mxu0 %v3879
        %v3898 = vpop.f32.mrf.mxu0
        %v3899 = vadd.f32 0.0, %v3898
        %3900 = vdwg.mxu0
        %v3902 = vsel %vm1082, %v3867, 0
        %3904 = vmatpush.msra.mxu0 0.0
        %3905 = vmatpush.msra.mxu0 0.0
        %3906 = vmatpush.msra.mxu0 0.0
        %3907 = vmatpush.msra.mxu0 0.0
        %3908 = vmatpush.msra.mxu0 0.0
        %3909 = vmatpush.msra.mxu0 0.0
        %3910 = vmatpush.msra.mxu0 0.0
        %3911 = vmatpush.msra.mxu0 0.0
        %3912 = vmatpush.msra.mxu0 0.0
        %3913 = vmatpush.msra.mxu0 0.0
        %3914 = vmatpush.msra.mxu0 0.0
        %3915 = vmatpush.msra.mxu0 0.0
        %3916 = vmatpush.msra.mxu0 0.0
        %3917 = vmatpush.msra.mxu0 0.0
        %3918 = vmatpush.msra.mxu0 %v3873
        %3919 = vmatpush.msra.mxu0 %v3872
        %3920 = vmatmul.f32.gmra.mxu0 %v3902
        %v3921 = vpop.f32.mrf.mxu0
        %v3922 = vadd.f32 0.0, %v3921
        %3923 = vdwg.mxu0
        %v3925 = vsel %vm1082, %v3868, 0
        %3927 = vmatpush.msra.mxu0 0.0
        %3928 = vmatpush.msra.mxu0 0.0
        %3929 = vmatpush.msra.mxu0 0.0
        %3930 = vmatpush.msra.mxu0 0.0
        %3931 = vmatpush.msra.mxu0 0.0
        %3932 = vmatpush.msra.mxu0 0.0
        %3933 = vmatpush.msra.mxu0 0.0
        %3934 = vmatpush.msra.mxu0 0.0
        %3935 = vmatpush.msra.mxu0 0.0
        %3936 = vmatpush.msra.mxu0 0.0
        %3937 = vmatpush.msra.mxu0 0.0
        %3938 = vmatpush.msra.mxu0 0.0
        %3939 = vmatpush.msra.mxu0 0.0
        %3940 = vmatpush.msra.mxu0 0.0
        %3941 = vmatpush.msra.mxu0 %v3875
        %3942 = vmatpush.msra.mxu0 %v3874
        %3943 = vmatmul.f32.gmra.mxu0 %v3925
        %v3944 = vpop.f32.mrf.mxu0
        %v3945 = vadd.f32 0.0, %v3944
        %3946 = vdwg.mxu0
        %v3948 = vsel %vm1082, %v3869, 0
        %3950 = vmatpush.msra.mxu0 0.0
        %3951 = vmatpush.msra.mxu0 0.0
        %3952 = vmatpush.msra.mxu0 0.0
        %3953 = vmatpush.msra.mxu0 0.0
        %3954 = vmatpush.msra.mxu0 0.0
        %3955 = vmatpush.msra.mxu0 0.0
        %3956 = vmatpush.msra.mxu0 0.0
        %3957 = vmatpush.msra.mxu0 0.0
        %3958 = vmatpush.msra.mxu0 0.0
        %3959 = vmatpush.msra.mxu0 0.0
        %3960 = vmatpush.msra.mxu0 0.0
        %3961 = vmatpush.msra.mxu0 0.0
        %3962 = vmatpush.msra.mxu0 0.0
        %3963 = vmatpush.msra.mxu0 0.0
        %3964 = vmatpush.msra.mxu0 %v3877
        %3965 = vmatpush.msra.mxu0 %v3876
        %3966 = vmatmul.f32.gmra.mxu0 %v3948
        %v3967 = vpop.f32.mrf.mxu0
        %v3968 = vadd.f32 0.0, %v3967
        %3969 = vdwg.mxu0
        %v3971 = vsel %vm1082, %v3686, 0
        %3973 = vmatpush.msra.mxu0 0.0
        %3974 = vmatpush.msra.mxu0 0.0
        %3975 = vmatpush.msra.mxu0 0.0
        %3976 = vmatpush.msra.mxu0 0.0
        %3977 = vmatpush.msra.mxu0 0.0
        %3978 = vmatpush.msra.mxu0 0.0
        %3979 = vmatpush.msra.mxu0 0.0
        %3980 = vmatpush.msra.mxu0 0.0
        %3981 = vmatpush.msra.mxu0 0.0
        %3982 = vmatpush.msra.mxu0 0.0
        %3983 = vmatpush.msra.mxu0 0.0
        %3984 = vmatpush.msra.mxu0 0.0
        %3985 = vmatpush.msra.mxu0 0.0
        %3986 = vmatpush.msra.mxu0 0.0
        %3987 = vmatpush.msra.mxu0 %v3691
        %3988 = vmatpush.msra.mxu0 %v3690
        %3989 = vmatmul.f32.gmra.mxu0 %v3971
        %v3990 = vpop.f32.mrf.mxu0
        %v3991 = vadd.f32 %v3899, %v3990
        %3992 = vdwg.mxu0
        %v3994 = vsel %vm1082, %v3687, 0
        %3996 = vmatpush.msra.mxu0 0.0
        %3997 = vmatpush.msra.mxu0 0.0
        %3998 = vmatpush.msra.mxu0 0.0
        %3999 = vmatpush.msra.mxu0 0.0
        %4000 = vmatpush.msra.mxu0 0.0
        %4001 = vmatpush.msra.mxu0 0.0
        %4002 = vmatpush.msra.mxu0 0.0
        %4003 = vmatpush.msra.mxu0 0.0
        %4004 = vmatpush.msra.mxu0 0.0
        %4005 = vmatpush.msra.mxu0 0.0
        %4006 = vmatpush.msra.mxu0 0.0
        %4007 = vmatpush.msra.mxu0 0.0
        %4008 = vmatpush.msra.mxu0 0.0
        %4009 = vmatpush.msra.mxu0 0.0
        %4010 = vmatpush.msra.mxu0 %v3693
        %4011 = vmatpush.msra.mxu0 %v3692
        %4012 = vmatmul.f32.gmra.mxu0 %v3994
        %v4013 = vpop.f32.mrf.mxu0
        %v4014 = vadd.f32 %v3922, %v4013
        %4015 = vdwg.mxu0
        %v4017 = vsel %vm1082, %v3688, 0
        %4019 = vmatpush.msra.mxu0 0.0
        %4020 = vmatpush.msra.mxu0 0.0
        %4021 = vmatpush.msra.mxu0 0.0
        %4022 = vmatpush.msra.mxu0 0.0
        %4023 = vmatpush.msra.mxu0 0.0
        %4024 = vmatpush.msra.mxu0 0.0
        %4025 = vmatpush.msra.mxu0 0.0
        %4026 = vmatpush.msra.mxu0 0.0
        %4027 = vmatpush.msra.mxu0 0.0
        %4028 = vmatpush.msra.mxu0 0.0
        %4029 = vmatpush.msra.mxu0 0.0
        %4030 = vmatpush.msra.mxu0 0.0
        %4031 = vmatpush.msra.mxu0 0.0
        %4032 = vmatpush.msra.mxu0 0.0
        %4033 = vmatpush.msra.mxu0 %v3695
        %4034 = vmatpush.msra.mxu0 %v3694
        %4035 = vmatmul.f32.gmra.mxu0 %v4017
        %v4036 = vpop.f32.mrf.mxu0
        %v4037 = vadd.f32 %v3945, %v4036
        %4038 = vdwg.mxu0
        %v4040 = vsel %vm1082, %v3689, 0
        %4042 = vmatpush.msra.mxu0 0.0
        %4043 = vmatpush.msra.mxu0 0.0
        %4044 = vmatpush.msra.mxu0 0.0
        %4045 = vmatpush.msra.mxu0 0.0
        %4046 = vmatpush.msra.mxu0 0.0
        %4047 = vmatpush.msra.mxu0 0.0
        %4048 = vmatpush.msra.mxu0 0.0
        %4049 = vmatpush.msra.mxu0 0.0
        %4050 = vmatpush.msra.mxu0 0.0
        %4051 = vmatpush.msra.mxu0 0.0
        %4052 = vmatpush.msra.mxu0 0.0
        %4053 = vmatpush.msra.mxu0 0.0
        %4054 = vmatpush.msra.mxu0 0.0
        %4055 = vmatpush.msra.mxu0 0.0
        %4056 = vmatpush.msra.mxu0 %v3697
        %4057 = vmatpush.msra.mxu0 %v3696
        %4058 = vmatmul.f32.gmra.mxu0 %v4040
        %v4059 = vpop.f32.mrf.mxu0
        %v4060 = vadd.f32 %v3968, %v4059
        %4061 = vdwg.mxu0
        %4062 = vrot.lane.b32.xlu0 %v3399, 96
        %v4063 = vpop.permute.xlu0 %4062
        %4064 = vrot.lane.b32.xlu0 %v3466, 96
        %v4065 = vpop.permute.xlu0 %4064
        %4066 = vrot.lane.b32.xlu0 %v3469, 96
        %v4067 = vpop.permute.xlu0 %4066
        %v4068 = vsel %vm1082, %v4063, 0
        %v4070 = vsel %vm1082, %v4065, 0
        %v4072 = vsel %vm1082, %v4067, 0
        %4074 = vmatpush.xpose.msra.mxu0 0.0
        %4075 = vmatpush.xpose.msra.mxu0 0.0
        %4076 = vmatpush.xpose.msra.mxu0 0.0
        %4077 = vmatpush.xpose.msra.mxu0 0.0
        %4078 = vmatpush.xpose.msra.mxu0 0.0
        %4079 = vmatpush.xpose.msra.mxu0 0.0
        %4080 = vmatpush.xpose.msra.mxu0 0.0
        %4081 = vmatpush.xpose.msra.mxu0 0.0
        %4082 = vmatpush.xpose.msra.mxu0 0.0
        %4083 = vmatpush.xpose.msra.mxu0 0.0
        %4084 = vmatpush.xpose.msra.mxu0 0.0
        %4085 = vmatpush.xpose.msra.mxu0 0.0
        %4086 = vmatpush.xpose.msra.mxu0 0.0
        %4087 = vmatpush.xpose.msra.mxu0 0.0
        %4088 = vmatpush.xpose.msra.mxu0 %v4072
        %4089 = vmatpush.xpose.msra.mxu0 %v4070
        %4090 = vmatmul.f32.gmra.mxu0 %v4068
        %v4091 = vpop.f32.mrf.mxu0
        %v4092 = vadd.f32 0.0, %v4091
        %4093 = vdwg.mxu0
        %4094 = vrot.lane.b32.xlu0 %v3402, 96
        %v4095 = vpop.permute.xlu0 %4094
        %4096 = vrot.lane.b32.xlu0 %v3472, 96
        %v4097 = vpop.permute.xlu0 %4096
        %4098 = vrot.lane.b32.xlu0 %v3475, 96
        %v4099 = vpop.permute.xlu0 %4098
        %v4100 = vsel %vm1082, %v4095, 0
        %v4102 = vsel %vm1082, %v4097, 0
        %v4104 = vsel %vm1082, %v4099, 0
        %4106 = vmatpush.xpose.msra.mxu0 0.0
        %4107 = vmatpush.xpose.msra.mxu0 0.0
        %4108 = vmatpush.xpose.msra.mxu0 0.0
        %4109 = vmatpush.xpose.msra.mxu0 0.0
        %4110 = vmatpush.xpose.msra.mxu0 0.0
        %4111 = vmatpush.xpose.msra.mxu0 0.0
        %4112 = vmatpush.xpose.msra.mxu0 0.0
        %4113 = vmatpush.xpose.msra.mxu0 0.0
        %4114 = vmatpush.xpose.msra.mxu0 0.0
        %4115 = vmatpush.xpose.msra.mxu0 0.0
        %4116 = vmatpush.xpose.msra.mxu0 0.0
        %4117 = vmatpush.xpose.msra.mxu0 0.0
        %4118 = vmatpush.xpose.msra.mxu0 0.0
        %4119 = vmatpush.xpose.msra.mxu0 0.0
        %4120 = vmatpush.xpose.msra.mxu0 %v4104
        %4121 = vmatpush.xpose.msra.mxu0 %v4102
        %4122 = vmatmul.f32.gmra.mxu0 %v4100
        %v4123 = vpop.f32.mrf.mxu0
        %v4124 = vadd.f32 0.0, %v4123
        %4125 = vdwg.mxu0
        %4126 = vrot.lane.b32.xlu0 %v3405, 96
        %v4127 = vpop.permute.xlu0 %4126
        %4128 = vrot.lane.b32.xlu0 %v3478, 96
        %v4129 = vpop.permute.xlu0 %4128
        %4130 = vrot.lane.b32.xlu0 %v3481, 96
        %v4131 = vpop.permute.xlu0 %4130
        %v4132 = vsel %vm1082, %v4127, 0
        %v4134 = vsel %vm1082, %v4129, 0
        %v4136 = vsel %vm1082, %v4131, 0
        %4138 = vmatpush.xpose.msra.mxu0 0.0
        %4139 = vmatpush.xpose.msra.mxu0 0.0
        %4140 = vmatpush.xpose.msra.mxu0 0.0
        %4141 = vmatpush.xpose.msra.mxu0 0.0
        %4142 = vmatpush.xpose.msra.mxu0 0.0
        %4143 = vmatpush.xpose.msra.mxu0 0.0
        %4144 = vmatpush.xpose.msra.mxu0 0.0
        %4145 = vmatpush.xpose.msra.mxu0 0.0
        %4146 = vmatpush.xpose.msra.mxu0 0.0
        %4147 = vmatpush.xpose.msra.mxu0 0.0
        %4148 = vmatpush.xpose.msra.mxu0 0.0
        %4149 = vmatpush.xpose.msra.mxu0 0.0
        %4150 = vmatpush.xpose.msra.mxu0 0.0
        %4151 = vmatpush.xpose.msra.mxu0 0.0
        %4152 = vmatpush.xpose.msra.mxu0 %v4136
        %4153 = vmatpush.xpose.msra.mxu0 %v4134
        %4154 = vmatmul.f32.gmra.mxu0 %v4132
        %v4155 = vpop.f32.mrf.mxu0
        %v4156 = vadd.f32 0.0, %v4155
        %4157 = vdwg.mxu0
        %4158 = vrot.lane.b32.xlu0 %v3408, 96
        %v4159 = vpop.permute.xlu0 %4158
        %4160 = vrot.lane.b32.xlu0 %v3484, 96
        %v4161 = vpop.permute.xlu0 %4160
        %4162 = vrot.lane.b32.xlu0 %v3487, 96
        %v4163 = vpop.permute.xlu0 %4162
        %v4164 = vsel %vm1082, %v4159, 0
        %v4166 = vsel %vm1082, %v4161, 0
        %v4168 = vsel %vm1082, %v4163, 0
        %4170 = vmatpush.xpose.msra.mxu0 0.0
        %4171 = vmatpush.xpose.msra.mxu0 0.0
        %4172 = vmatpush.xpose.msra.mxu0 0.0
        %4173 = vmatpush.xpose.msra.mxu0 0.0
        %4174 = vmatpush.xpose.msra.mxu0 0.0
        %4175 = vmatpush.xpose.msra.mxu0 0.0
        %4176 = vmatpush.xpose.msra.mxu0 0.0
        %4177 = vmatpush.xpose.msra.mxu0 0.0
        %4178 = vmatpush.xpose.msra.mxu0 0.0
        %4179 = vmatpush.xpose.msra.mxu0 0.0
        %4180 = vmatpush.xpose.msra.mxu0 0.0
        %4181 = vmatpush.xpose.msra.mxu0 0.0
        %4182 = vmatpush.xpose.msra.mxu0 0.0
        %4183 = vmatpush.xpose.msra.mxu0 0.0
        %4184 = vmatpush.xpose.msra.mxu0 %v4168
        %4185 = vmatpush.xpose.msra.mxu0 %v4166
        %4186 = vmatmul.f32.gmra.mxu0 %v4164
        %v4187 = vpop.f32.mrf.mxu0
        %v4188 = vadd.f32 0.0, %v4187
        %4189 = vdwg.mxu0
        %v4190 = vsel %vm1082, %v4092, -inf
        %4191 = vmax.xlane.f32.xlu0 %v4190
        %v4192 = vpop.xlane.xlu0 %4191
        %v4193 = vsel %vm1082, %v4124, -inf
        %4194 = vmax.xlane.f32.xlu0 %v4193
        %v4195 = vpop.xlane.xlu0 %4194
        %v4196 = vsel %vm1082, %v4156, -inf
        %4197 = vmax.xlane.f32.xlu0 %v4196
        %v4198 = vpop.xlane.xlu0 %4197
        %v4199 = vsel %vm1082, %v4188, -inf
        %4200 = vmax.xlane.f32.xlu0 %v4199
        %v4201 = vpop.xlane.xlu0 %4200
        %v4202 = vsub.f32 %v4092, %v4192
        %v4203 = vsub.f32 %v4124, %v4195
        %v4204 = vsub.f32 %v4156, %v4198
        %v4205 = vsub.f32 %v4188, %v4201
        %v4206 = vmul.f32 %v4202, 1.442695
        %v4207 = vpow.pop %v4206
        %v4208 = vmul.f32 %v4203, 1.442695
        %v4209 = vpow.pop %v4208
        %v4210 = vmul.f32 %v4204, 1.442695
        %v4211 = vpow.pop %v4210
        %v4212 = vmul.f32 %v4205, 1.442695
        %v4213 = vpow.pop %v4212
        %v4214 = vsel %vm1082, %v4207, 0.0
        %4215 = vadd.xlane.f32.xlu0 %v4214
        %v4216 = vpop.xlane.xlu0 %4215
        %v4217 = vsel %vm1082, %v4209, 0.0
        %4218 = vadd.xlane.f32.xlu0 %v4217
        %v4219 = vpop.xlane.xlu0 %4218
        %v4220 = vsel %vm1082, %v4211, 0.0
        %4221 = vadd.xlane.f32.xlu0 %v4220
        %v4222 = vpop.xlane.xlu0 %4221
        %v4223 = vsel %vm1082, %v4213, 0.0
        %4224 = vadd.xlane.f32.xlu0 %v4223
        %v4225 = vpop.xlane.xlu0 %4224
        %v4226 = vrcp.pop %v4216
        %v4227 = vrcp.pop %v4219
        %v4228 = vrcp.pop %v4222
        %v4229 = vrcp.pop %v4225
        %v4230 = vmul.f32 %v4207, %v4226
        %v4231 = vmul.f32 %v4209, %v4227
        %v4232 = vmul.f32 %v4211, %v4228
        %v4233 = vmul.f32 %v4213, %v4229
        %v4234 = vsel %vm1750, %v3507, 0.0
        %v4235 = vsel %vm1750, %v3510, 0.0
        %v4236 = vsel %vm1750, %v3513, 0.0
        %v4237 = vsel %vm1750, %v3516, 0.0
        %v4238 = vsel %vm1750, %v3519, 0.0
        %v4239 = vsel %vm1750, %v3522, 0.0
        %v4240 = vsel %vm1750, %v3525, 0.0
        %v4241 = vsel %vm1750, %v3528, 0.0
        %v4243 = vsel %vm1082, %v4230, 0
        %4245 = vmatpush.msra.mxu0 0.0
        %4246 = vmatpush.msra.mxu0 0.0
        %4247 = vmatpush.msra.mxu0 0.0
        %4248 = vmatpush.msra.mxu0 0.0
        %4249 = vmatpush.msra.mxu0 0.0
        %4250 = vmatpush.msra.mxu0 0.0
        %4251 = vmatpush.msra.mxu0 0.0
        %4252 = vmatpush.msra.mxu0 0.0
        %4253 = vmatpush.msra.mxu0 0.0
        %4254 = vmatpush.msra.mxu0 0.0
        %4255 = vmatpush.msra.mxu0 0.0
        %4256 = vmatpush.msra.mxu0 0.0
        %4257 = vmatpush.msra.mxu0 0.0
        %4258 = vmatpush.msra.mxu0 0.0
        %4259 = vmatpush.msra.mxu0 %v4235
        %4260 = vmatpush.msra.mxu0 %v4234
        %4261 = vmatmul.f32.gmra.mxu0 %v4243
        %v4262 = vpop.f32.mrf.mxu0
        %v4263 = vadd.f32 0.0, %v4262
        %4264 = vdwg.mxu0
        %v4266 = vsel %vm1082, %v4231, 0
        %4268 = vmatpush.msra.mxu0 0.0
        %4269 = vmatpush.msra.mxu0 0.0
        %4270 = vmatpush.msra.mxu0 0.0
        %4271 = vmatpush.msra.mxu0 0.0
        %4272 = vmatpush.msra.mxu0 0.0
        %4273 = vmatpush.msra.mxu0 0.0
        %4274 = vmatpush.msra.mxu0 0.0
        %4275 = vmatpush.msra.mxu0 0.0
        %4276 = vmatpush.msra.mxu0 0.0
        %4277 = vmatpush.msra.mxu0 0.0
        %4278 = vmatpush.msra.mxu0 0.0
        %4279 = vmatpush.msra.mxu0 0.0
        %4280 = vmatpush.msra.mxu0 0.0
        %4281 = vmatpush.msra.mxu0 0.0
        %4282 = vmatpush.msra.mxu0 %v4237
        %4283 = vmatpush.msra.mxu0 %v4236
        %4284 = vmatmul.f32.gmra.mxu0 %v4266
        %v4285 = vpop.f32.mrf.mxu0
        %v4286 = vadd.f32 0.0, %v4285
        %4287 = vdwg.mxu0
        %v4289 = vsel %vm1082, %v4232, 0
        %4291 = vmatpush.msra.mxu0 0.0
        %4292 = vmatpush.msra.mxu0 0.0
        %4293 = vmatpush.msra.mxu0 0.0
        %4294 = vmatpush.msra.mxu0 0.0
        %4295 = vmatpush.msra.mxu0 0.0
        %4296 = vmatpush.msra.mxu0 0.0
        %4297 = vmatpush.msra.mxu0 0.0
        %4298 = vmatpush.msra.mxu0 0.0
        %4299 = vmatpush.msra.mxu0 0.0
        %4300 = vmatpush.msra.mxu0 0.0
        %4301 = vmatpush.msra.mxu0 0.0
        %4302 = vmatpush.msra.mxu0 0.0
        %4303 = vmatpush.msra.mxu0 0.0
        %4304 = vmatpush.msra.mxu0 0.0
        %4305 = vmatpush.msra.mxu0 %v4239
        %4306 = vmatpush.msra.mxu0 %v4238
        %4307 = vmatmul.f32.gmra.mxu0 %v4289
        %v4308 = vpop.f32.mrf.mxu0
        %v4309 = vadd.f32 0.0, %v4308
        %4310 = vdwg.mxu0
        %v4312 = vsel %vm1082, %v4233, 0
        %4314 = vmatpush.msra.mxu0 0.0
        %4315 = vmatpush.msra.mxu0 0.0
        %4316 = vmatpush.msra.mxu0 0.0
        %4317 = vmatpush.msra.mxu0 0.0
        %4318 = vmatpush.msra.mxu0 0.0
        %4319 = vmatpush.msra.mxu0 0.0
        %4320 = vmatpush.msra.mxu0 0.0
        %4321 = vmatpush.msra.mxu0 0.0
        %4322 = vmatpush.msra.mxu0 0.0
        %4323 = vmatpush.msra.mxu0 0.0
        %4324 = vmatpush.msra.mxu0 0.0
        %4325 = vmatpush.msra.mxu0 0.0
        %4326 = vmatpush.msra.mxu0 0.0
        %4327 = vmatpush.msra.mxu0 0.0
        %4328 = vmatpush.msra.mxu0 %v4241
        %4329 = vmatpush.msra.mxu0 %v4240
        %4330 = vmatmul.f32.gmra.mxu0 %v4312
        %v4331 = vpop.f32.mrf.mxu0
        %v4332 = vadd.f32 0.0, %v4331
        %4333 = vdwg.mxu0
        %v4334 = vadd.f32 %v3991, %v4263
        %v4335 = vadd.f32 %v4014, %v4286
        %v4336 = vadd.f32 %v4037, %v4309
        %v4337 = vadd.f32 %v4060, %v4332
        %4338 = vrot.lane.b32.xlu0 %v3399, 80
        %v4339 = vpop.permute.xlu0 %4338
        %4340 = vrot.lane.b32.xlu0 %v3466, 80
        %v4341 = vpop.permute.xlu0 %4340
        %4342 = vrot.lane.b32.xlu0 %v3469, 80
        %v4343 = vpop.permute.xlu0 %4342
        %v4344 = vsel %vm1082, %v4339, 0
        %v4346 = vsel %vm1082, %v4341, 0
        %v4348 = vsel %vm1082, %v4343, 0
        %4350 = vmatpush.xpose.msra.mxu0 0.0
        %4351 = vmatpush.xpose.msra.mxu0 0.0
        %4352 = vmatpush.xpose.msra.mxu0 0.0
        %4353 = vmatpush.xpose.msra.mxu0 0.0
        %4354 = vmatpush.xpose.msra.mxu0 0.0
        %4355 = vmatpush.xpose.msra.mxu0 0.0
        %4356 = vmatpush.xpose.msra.mxu0 0.0
        %4357 = vmatpush.xpose.msra.mxu0 0.0
        %4358 = vmatpush.xpose.msra.mxu0 0.0
        %4359 = vmatpush.xpose.msra.mxu0 0.0
        %4360 = vmatpush.xpose.msra.mxu0 0.0
        %4361 = vmatpush.xpose.msra.mxu0 0.0
        %4362 = vmatpush.xpose.msra.mxu0 0.0
        %4363 = vmatpush.xpose.msra.mxu0 0.0
        %4364 = vmatpush.xpose.msra.mxu0 %v4348
        %4365 = vmatpush.xpose.msra.mxu0 %v4346
        %4366 = vmatmul.f32.gmra.mxu0 %v4344
        %v4367 = vpop.f32.mrf.mxu0
        %v4368 = vadd.f32 0.0, %v4367
        %4369 = vdwg.mxu0
        %4370 = vrot.lane.b32.xlu0 %v3402, 80
        %v4371 = vpop.permute.xlu0 %4370
        %4372 = vrot.lane.b32.xlu0 %v3472, 80
        %v4373 = vpop.permute.xlu0 %4372
        %4374 = vrot.lane.b32.xlu0 %v3475, 80
        %v4375 = vpop.permute.xlu0 %4374
        %v4376 = vsel %vm1082, %v4371, 0
        %v4378 = vsel %vm1082, %v4373, 0
        %v4380 = vsel %vm1082, %v4375, 0
        %4382 = vmatpush.xpose.msra.mxu0 0.0
        %4383 = vmatpush.xpose.msra.mxu0 0.0
        %4384 = vmatpush.xpose.msra.mxu0 0.0
        %4385 = vmatpush.xpose.msra.mxu0 0.0
        %4386 = vmatpush.xpose.msra.mxu0 0.0
        %4387 = vmatpush.xpose.msra.mxu0 0.0
        %4388 = vmatpush.xpose.msra.mxu0 0.0
        %4389 = vmatpush.xpose.msra.mxu0 0.0
        %4390 = vmatpush.xpose.msra.mxu0 0.0
        %4391 = vmatpush.xpose.msra.mxu0 0.0
        %4392 = vmatpush.xpose.msra.mxu0 0.0
        %4393 = vmatpush.xpose.msra.mxu0 0.0
        %4394 = vmatpush.xpose.msra.mxu0 0.0
        %4395 = vmatpush.xpose.msra.mxu0 0.0
        %4396 = vmatpush.xpose.msra.mxu0 %v4380
        %4397 = vmatpush.xpose.msra.mxu0 %v4378
        %4398 = vmatmul.f32.gmra.mxu0 %v4376
        %v4399 = vpop.f32.mrf.mxu0
        %v4400 = vadd.f32 0.0, %v4399
        %4401 = vdwg.mxu0
        %4402 = vrot.lane.b32.xlu0 %v3405, 80
        %v4403 = vpop.permute.xlu0 %4402
        %4404 = vrot.lane.b32.xlu0 %v3478, 80
        %v4405 = vpop.permute.xlu0 %4404
        %4406 = vrot.lane.b32.xlu0 %v3481, 80
        %v4407 = vpop.permute.xlu0 %4406
        %v4408 = vsel %vm1082, %v4403, 0
        %v4410 = vsel %vm1082, %v4405, 0
        %v4412 = vsel %vm1082, %v4407, 0
        %4414 = vmatpush.xpose.msra.mxu0 0.0
        %4415 = vmatpush.xpose.msra.mxu0 0.0
        %4416 = vmatpush.xpose.msra.mxu0 0.0
        %4417 = vmatpush.xpose.msra.mxu0 0.0
        %4418 = vmatpush.xpose.msra.mxu0 0.0
        %4419 = vmatpush.xpose.msra.mxu0 0.0
        %4420 = vmatpush.xpose.msra.mxu0 0.0
        %4421 = vmatpush.xpose.msra.mxu0 0.0
        %4422 = vmatpush.xpose.msra.mxu0 0.0
        %4423 = vmatpush.xpose.msra.mxu0 0.0
        %4424 = vmatpush.xpose.msra.mxu0 0.0
        %4425 = vmatpush.xpose.msra.mxu0 0.0
        %4426 = vmatpush.xpose.msra.mxu0 0.0
        %4427 = vmatpush.xpose.msra.mxu0 0.0
        %4428 = vmatpush.xpose.msra.mxu0 %v4412
        %4429 = vmatpush.xpose.msra.mxu0 %v4410
        %4430 = vmatmul.f32.gmra.mxu0 %v4408
        %v4431 = vpop.f32.mrf.mxu0
        %v4432 = vadd.f32 0.0, %v4431
        %4433 = vdwg.mxu0
        %4434 = vrot.lane.b32.xlu0 %v3408, 80
        %v4435 = vpop.permute.xlu0 %4434
        %4436 = vrot.lane.b32.xlu0 %v3484, 80
        %v4437 = vpop.permute.xlu0 %4436
        %4438 = vrot.lane.b32.xlu0 %v3487, 80
        %v4439 = vpop.permute.xlu0 %4438
        %v4440 = vsel %vm1082, %v4435, 0
        %v4442 = vsel %vm1082, %v4437, 0
        %v4444 = vsel %vm1082, %v4439, 0
        %4446 = vmatpush.xpose.msra.mxu0 0.0
        %4447 = vmatpush.xpose.msra.mxu0 0.0
        %4448 = vmatpush.xpose.msra.mxu0 0.0
        %4449 = vmatpush.xpose.msra.mxu0 0.0
        %4450 = vmatpush.xpose.msra.mxu0 0.0
        %4451 = vmatpush.xpose.msra.mxu0 0.0
        %4452 = vmatpush.xpose.msra.mxu0 0.0
        %4453 = vmatpush.xpose.msra.mxu0 0.0
        %4454 = vmatpush.xpose.msra.mxu0 0.0
        %4455 = vmatpush.xpose.msra.mxu0 0.0
        %4456 = vmatpush.xpose.msra.mxu0 0.0
        %4457 = vmatpush.xpose.msra.mxu0 0.0
        %4458 = vmatpush.xpose.msra.mxu0 0.0
        %4459 = vmatpush.xpose.msra.mxu0 0.0
        %4460 = vmatpush.xpose.msra.mxu0 %v4444
        %4461 = vmatpush.xpose.msra.mxu0 %v4442
        %4462 = vmatmul.f32.gmra.mxu0 %v4440
        %v4463 = vpop.f32.mrf.mxu0
        %v4464 = vadd.f32 0.0, %v4463
        %4465 = vdwg.mxu0
        %v4466 = vsel %vm1082, %v4368, -inf
        %4467 = vmax.xlane.f32.xlu0 %v4466
        %v4468 = vpop.xlane.xlu0 %4467
        %v4469 = vsel %vm1082, %v4400, -inf
        %4470 = vmax.xlane.f32.xlu0 %v4469
        %v4471 = vpop.xlane.xlu0 %4470
        %v4472 = vsel %vm1082, %v4432, -inf
        %4473 = vmax.xlane.f32.xlu0 %v4472
        %v4474 = vpop.xlane.xlu0 %4473
        %v4475 = vsel %vm1082, %v4464, -inf
        %4476 = vmax.xlane.f32.xlu0 %v4475
        %v4477 = vpop.xlane.xlu0 %4476
        %v4478 = vsub.f32 %v4368, %v4468
        %v4479 = vsub.f32 %v4400, %v4471
        %v4480 = vsub.f32 %v4432, %v4474
        %v4481 = vsub.f32 %v4464, %v4477
        %v4482 = vmul.f32 %v4478, 1.442695
        %v4483 = vpow.pop %v4482
        %v4484 = vmul.f32 %v4479, 1.442695
        %v4485 = vpow.pop %v4484
        %v4486 = vmul.f32 %v4480, 1.442695
        %v4487 = vpow.pop %v4486
        %v4488 = vmul.f32 %v4481, 1.442695
        %v4489 = vpow.pop %v4488
        %v4490 = vsel %vm1082, %v4483, 0.0
        %4491 = vadd.xlane.f32.xlu0 %v4490
        %v4492 = vpop.xlane.xlu0 %4491
        %v4493 = vsel %vm1082, %v4485, 0.0
        %4494 = vadd.xlane.f32.xlu0 %v4493
        %v4495 = vpop.xlane.xlu0 %4494
        %v4496 = vsel %vm1082, %v4487, 0.0
        %4497 = vadd.xlane.f32.xlu0 %v4496
        %v4498 = vpop.xlane.xlu0 %4497
        %v4499 = vsel %vm1082, %v4489, 0.0
        %4500 = vadd.xlane.f32.xlu0 %v4499
        %v4501 = vpop.xlane.xlu0 %4500
        %v4502 = vrcp.pop %v4492
        %v4503 = vrcp.pop %v4495
        %v4504 = vrcp.pop %v4498
        %v4505 = vrcp.pop %v4501
        %v4506 = vmul.f32 %v4483, %v4502
        %v4507 = vmul.f32 %v4485, %v4503
        %v4508 = vmul.f32 %v4487, %v4504
        %v4509 = vmul.f32 %v4489, %v4505
        %v4510 = vsel %vm2011, %v3507, 0.0
        %v4511 = vsel %vm2011, %v3510, 0.0
        %v4512 = vsel %vm2011, %v3513, 0.0
        %v4513 = vsel %vm2011, %v3516, 0.0
        %v4514 = vsel %vm2011, %v3519, 0.0
        %v4515 = vsel %vm2011, %v3522, 0.0
        %v4516 = vsel %vm2011, %v3525, 0.0
        %v4517 = vsel %vm2011, %v3528, 0.0
        %v4519 = vsel %vm1082, %v4506, 0
        %4521 = vmatpush.msra.mxu0 0.0
        %4522 = vmatpush.msra.mxu0 0.0
        %4523 = vmatpush.msra.mxu0 0.0
        %4524 = vmatpush.msra.mxu0 0.0
        %4525 = vmatpush.msra.mxu0 0.0
        %4526 = vmatpush.msra.mxu0 0.0
        %4527 = vmatpush.msra.mxu0 0.0
        %4528 = vmatpush.msra.mxu0 0.0
        %4529 = vmatpush.msra.mxu0 0.0
        %4530 = vmatpush.msra.mxu0 0.0
        %4531 = vmatpush.msra.mxu0 0.0
        %4532 = vmatpush.msra.mxu0 0.0
        %4533 = vmatpush.msra.mxu0 0.0
        %4534 = vmatpush.msra.mxu0 0.0
        %4535 = vmatpush.msra.mxu0 %v4511
        %4536 = vmatpush.msra.mxu0 %v4510
        %4537 = vmatmul.f32.gmra.mxu0 %v4519
        %v4538 = vpop.f32.mrf.mxu0
        %v4539 = vadd.f32 0.0, %v4538
        %4540 = vdwg.mxu0
        %v4542 = vsel %vm1082, %v4507, 0
        %4544 = vmatpush.msra.mxu0 0.0
        %4545 = vmatpush.msra.mxu0 0.0
        %4546 = vmatpush.msra.mxu0 0.0
        %4547 = vmatpush.msra.mxu0 0.0
        %4548 = vmatpush.msra.mxu0 0.0
        %4549 = vmatpush.msra.mxu0 0.0
        %4550 = vmatpush.msra.mxu0 0.0
        %4551 = vmatpush.msra.mxu0 0.0
        %4552 = vmatpush.msra.mxu0 0.0
        %4553 = vmatpush.msra.mxu0 0.0
        %4554 = vmatpush.msra.mxu0 0.0
        %4555 = vmatpush.msra.mxu0 0.0
        %4556 = vmatpush.msra.mxu0 0.0
        %4557 = vmatpush.msra.mxu0 0.0
        %4558 = vmatpush.msra.mxu0 %v4513
        %4559 = vmatpush.msra.mxu0 %v4512
        %4560 = vmatmul.f32.gmra.mxu0 %v4542
        %v4561 = vpop.f32.mrf.mxu0
        %v4562 = vadd.f32 0.0, %v4561
        %4563 = vdwg.mxu0
        %v4565 = vsel %vm1082, %v4508, 0
        %4567 = vmatpush.msra.mxu0 0.0
        %4568 = vmatpush.msra.mxu0 0.0
        %4569 = vmatpush.msra.mxu0 0.0
        %4570 = vmatpush.msra.mxu0 0.0
        %4571 = vmatpush.msra.mxu0 0.0
        %4572 = vmatpush.msra.mxu0 0.0
        %4573 = vmatpush.msra.mxu0 0.0
        %4574 = vmatpush.msra.mxu0 0.0
        %4575 = vmatpush.msra.mxu0 0.0
        %4576 = vmatpush.msra.mxu0 0.0
        %4577 = vmatpush.msra.mxu0 0.0
        %4578 = vmatpush.msra.mxu0 0.0
        %4579 = vmatpush.msra.mxu0 0.0
        %4580 = vmatpush.msra.mxu0 0.0
        %4581 = vmatpush.msra.mxu0 %v4515
        %4582 = vmatpush.msra.mxu0 %v4514
        %4583 = vmatmul.f32.gmra.mxu0 %v4565
        %v4584 = vpop.f32.mrf.mxu0
        %v4585 = vadd.f32 0.0, %v4584
        %4586 = vdwg.mxu0
        %v4588 = vsel %vm1082, %v4509, 0
        %4590 = vmatpush.msra.mxu0 0.0
        %4591 = vmatpush.msra.mxu0 0.0
        %4592 = vmatpush.msra.mxu0 0.0
        %4593 = vmatpush.msra.mxu0 0.0
        %4594 = vmatpush.msra.mxu0 0.0
        %4595 = vmatpush.msra.mxu0 0.0
        %4596 = vmatpush.msra.mxu0 0.0
        %4597 = vmatpush.msra.mxu0 0.0
        %4598 = vmatpush.msra.mxu0 0.0
        %4599 = vmatpush.msra.mxu0 0.0
        %4600 = vmatpush.msra.mxu0 0.0
        %4601 = vmatpush.msra.mxu0 0.0
        %4602 = vmatpush.msra.mxu0 0.0
        %4603 = vmatpush.msra.mxu0 0.0
        %4604 = vmatpush.msra.mxu0 %v4517
        %4605 = vmatpush.msra.mxu0 %v4516
        %4606 = vmatmul.f32.gmra.mxu0 %v4588
        %v4607 = vpop.f32.mrf.mxu0
        %v4608 = vadd.f32 0.0, %v4607
        %4609 = vdwg.mxu0
        %v4610 = vadd.f32 %v4334, %v4539
        %v4611 = vadd.f32 %v4335, %v4562
        %v4612 = vadd.f32 %v4336, %v4585
        %v4613 = vadd.f32 %v4337, %v4608
        %4614 = vrot.lane.b32.xlu0 %v3399, 64
        %v4615 = vpop.permute.xlu0 %4614
        %4616 = vrot.lane.b32.xlu0 %v3466, 64
        %v4617 = vpop.permute.xlu0 %4616
        %4618 = vrot.lane.b32.xlu0 %v3469, 64
        %v4619 = vpop.permute.xlu0 %4618
        %v4620 = vsel %vm1082, %v4615, 0
        %v4622 = vsel %vm1082, %v4617, 0
        %v4624 = vsel %vm1082, %v4619, 0
        %4626 = vmatpush.xpose.msra.mxu0 0.0
        %4627 = vmatpush.xpose.msra.mxu0 0.0
        %4628 = vmatpush.xpose.msra.mxu0 0.0
        %4629 = vmatpush.xpose.msra.mxu0 0.0
        %4630 = vmatpush.xpose.msra.mxu0 0.0
        %4631 = vmatpush.xpose.msra.mxu0 0.0
        %4632 = vmatpush.xpose.msra.mxu0 0.0
        %4633 = vmatpush.xpose.msra.mxu0 0.0
        %4634 = vmatpush.xpose.msra.mxu0 0.0
        %4635 = vmatpush.xpose.msra.mxu0 0.0
        %4636 = vmatpush.xpose.msra.mxu0 0.0
        %4637 = vmatpush.xpose.msra.mxu0 0.0
        %4638 = vmatpush.xpose.msra.mxu0 0.0
        %4639 = vmatpush.xpose.msra.mxu0 0.0
        %4640 = vmatpush.xpose.msra.mxu0 %v4624
        %4641 = vmatpush.xpose.msra.mxu0 %v4622
        %4642 = vmatmul.f32.gmra.mxu0 %v4620
        %v4643 = vpop.f32.mrf.mxu0
        %v4644 = vadd.f32 0.0, %v4643
        %4645 = vdwg.mxu0
        %4646 = vrot.lane.b32.xlu0 %v3402, 64
        %v4647 = vpop.permute.xlu0 %4646
        %4648 = vrot.lane.b32.xlu0 %v3472, 64
        %v4649 = vpop.permute.xlu0 %4648
        %4650 = vrot.lane.b32.xlu0 %v3475, 64
        %v4651 = vpop.permute.xlu0 %4650
        %v4652 = vsel %vm1082, %v4647, 0
        %v4654 = vsel %vm1082, %v4649, 0
        %v4656 = vsel %vm1082, %v4651, 0
        %4658 = vmatpush.xpose.msra.mxu0 0.0
        %4659 = vmatpush.xpose.msra.mxu0 0.0
        %4660 = vmatpush.xpose.msra.mxu0 0.0
        %4661 = vmatpush.xpose.msra.mxu0 0.0
        %4662 = vmatpush.xpose.msra.mxu0 0.0
        %4663 = vmatpush.xpose.msra.mxu0 0.0
        %4664 = vmatpush.xpose.msra.mxu0 0.0
        %4665 = vmatpush.xpose.msra.mxu0 0.0
        %4666 = vmatpush.xpose.msra.mxu0 0.0
        %4667 = vmatpush.xpose.msra.mxu0 0.0
        %4668 = vmatpush.xpose.msra.mxu0 0.0
        %4669 = vmatpush.xpose.msra.mxu0 0.0
        %4670 = vmatpush.xpose.msra.mxu0 0.0
        %4671 = vmatpush.xpose.msra.mxu0 0.0
        %4672 = vmatpush.xpose.msra.mxu0 %v4656
        %4673 = vmatpush.xpose.msra.mxu0 %v4654
        %4674 = vmatmul.f32.gmra.mxu0 %v4652
        %v4675 = vpop.f32.mrf.mxu0
        %v4676 = vadd.f32 0.0, %v4675
        %4677 = vdwg.mxu0
        %4678 = vrot.lane.b32.xlu0 %v3405, 64
        %v4679 = vpop.permute.xlu0 %4678
        %4680 = vrot.lane.b32.xlu0 %v3478, 64
        %v4681 = vpop.permute.xlu0 %4680
        %4682 = vrot.lane.b32.xlu0 %v3481, 64
        %v4683 = vpop.permute.xlu0 %4682
        %v4684 = vsel %vm1082, %v4679, 0
        %v4686 = vsel %vm1082, %v4681, 0
        %v4688 = vsel %vm1082, %v4683, 0
        %4690 = vmatpush.xpose.msra.mxu0 0.0
        %4691 = vmatpush.xpose.msra.mxu0 0.0
        %4692 = vmatpush.xpose.msra.mxu0 0.0
        %4693 = vmatpush.xpose.msra.mxu0 0.0
        %4694 = vmatpush.xpose.msra.mxu0 0.0
        %4695 = vmatpush.xpose.msra.mxu0 0.0
        %4696 = vmatpush.xpose.msra.mxu0 0.0
        %4697 = vmatpush.xpose.msra.mxu0 0.0
        %4698 = vmatpush.xpose.msra.mxu0 0.0
        %4699 = vmatpush.xpose.msra.mxu0 0.0
        %4700 = vmatpush.xpose.msra.mxu0 0.0
        %4701 = vmatpush.xpose.msra.mxu0 0.0
        %4702 = vmatpush.xpose.msra.mxu0 0.0
        %4703 = vmatpush.xpose.msra.mxu0 0.0
        %4704 = vmatpush.xpose.msra.mxu0 %v4688
        %4705 = vmatpush.xpose.msra.mxu0 %v4686
        %4706 = vmatmul.f32.gmra.mxu0 %v4684
        %v4707 = vpop.f32.mrf.mxu0
        %v4708 = vadd.f32 0.0, %v4707
        %4709 = vdwg.mxu0
        %4710 = vrot.lane.b32.xlu0 %v3408, 64
        %v4711 = vpop.permute.xlu0 %4710
        %4712 = vrot.lane.b32.xlu0 %v3484, 64
        %v4713 = vpop.permute.xlu0 %4712
        %4714 = vrot.lane.b32.xlu0 %v3487, 64
        %v4715 = vpop.permute.xlu0 %4714
        %v4716 = vsel %vm1082, %v4711, 0
        %v4718 = vsel %vm1082, %v4713, 0
        %v4720 = vsel %vm1082, %v4715, 0
        %4722 = vmatpush.xpose.msra.mxu0 0.0
        %4723 = vmatpush.xpose.msra.mxu0 0.0
        %4724 = vmatpush.xpose.msra.mxu0 0.0
        %4725 = vmatpush.xpose.msra.mxu0 0.0
        %4726 = vmatpush.xpose.msra.mxu0 0.0
        %4727 = vmatpush.xpose.msra.mxu0 0.0
        %4728 = vmatpush.xpose.msra.mxu0 0.0
        %4729 = vmatpush.xpose.msra.mxu0 0.0
        %4730 = vmatpush.xpose.msra.mxu0 0.0
        %4731 = vmatpush.xpose.msra.mxu0 0.0
        %4732 = vmatpush.xpose.msra.mxu0 0.0
        %4733 = vmatpush.xpose.msra.mxu0 0.0
        %4734 = vmatpush.xpose.msra.mxu0 0.0
        %4735 = vmatpush.xpose.msra.mxu0 0.0
        %4736 = vmatpush.xpose.msra.mxu0 %v4720
        %4737 = vmatpush.xpose.msra.mxu0 %v4718
        %4738 = vmatmul.f32.gmra.mxu0 %v4716
        %v4739 = vpop.f32.mrf.mxu0
        %v4740 = vadd.f32 0.0, %v4739
        %4741 = vdwg.mxu0
        %v4742 = vsel %vm1082, %v4644, -inf
        %4743 = vmax.xlane.f32.xlu0 %v4742
        %v4744 = vpop.xlane.xlu0 %4743
        %v4745 = vsel %vm1082, %v4676, -inf
        %4746 = vmax.xlane.f32.xlu0 %v4745
        %v4747 = vpop.xlane.xlu0 %4746
        %v4748 = vsel %vm1082, %v4708, -inf
        %4749 = vmax.xlane.f32.xlu0 %v4748
        %v4750 = vpop.xlane.xlu0 %4749
        %v4751 = vsel %vm1082, %v4740, -inf
        %4752 = vmax.xlane.f32.xlu0 %v4751
        %v4753 = vpop.xlane.xlu0 %4752
        %v4754 = vsub.f32 %v4644, %v4744
        %v4755 = vsub.f32 %v4676, %v4747
        %v4756 = vsub.f32 %v4708, %v4750
        %v4757 = vsub.f32 %v4740, %v4753
        %v4758 = vmul.f32 %v4754, 1.442695
        %v4759 = vpow.pop %v4758
        %v4760 = vmul.f32 %v4755, 1.442695
        %v4761 = vpow.pop %v4760
        %v4762 = vmul.f32 %v4756, 1.442695
        %v4763 = vpow.pop %v4762
        %v4764 = vmul.f32 %v4757, 1.442695
        %v4765 = vpow.pop %v4764
        %v4766 = vsel %vm1082, %v4759, 0.0
        %4767 = vadd.xlane.f32.xlu0 %v4766
        %v4768 = vpop.xlane.xlu0 %4767
        %v4769 = vsel %vm1082, %v4761, 0.0
        %4770 = vadd.xlane.f32.xlu0 %v4769
        %v4771 = vpop.xlane.xlu0 %4770
        %v4772 = vsel %vm1082, %v4763, 0.0
        %4773 = vadd.xlane.f32.xlu0 %v4772
        %v4774 = vpop.xlane.xlu0 %4773
        %v4775 = vsel %vm1082, %v4765, 0.0
        %4776 = vadd.xlane.f32.xlu0 %v4775
        %v4777 = vpop.xlane.xlu0 %4776
        %v4778 = vrcp.pop %v4768
        %v4779 = vrcp.pop %v4771
        %v4780 = vrcp.pop %v4774
        %v4781 = vrcp.pop %v4777
        %v4782 = vmul.f32 %v4759, %v4778
        %v4783 = vmul.f32 %v4761, %v4779
        %v4784 = vmul.f32 %v4763, %v4780
        %v4785 = vmul.f32 %v4765, %v4781
        %v4786 = vsel %vm2272, %v3507, 0.0
        %v4787 = vsel %vm2272, %v3510, 0.0
        %v4788 = vsel %vm2272, %v3513, 0.0
        %v4789 = vsel %vm2272, %v3516, 0.0
        %v4790 = vsel %vm2272, %v3519, 0.0
        %v4791 = vsel %vm2272, %v3522, 0.0
        %v4792 = vsel %vm2272, %v3525, 0.0
        %v4793 = vsel %vm2272, %v3528, 0.0
        %v4795 = vsel %vm1082, %v4782, 0
        %4797 = vmatpush.msra.mxu0 0.0
        %4798 = vmatpush.msra.mxu0 0.0
        %4799 = vmatpush.msra.mxu0 0.0
        %4800 = vmatpush.msra.mxu0 0.0
        %4801 = vmatpush.msra.mxu0 0.0
        %4802 = vmatpush.msra.mxu0 0.0
        %4803 = vmatpush.msra.mxu0 0.0
        %4804 = vmatpush.msra.mxu0 0.0
        %4805 = vmatpush.msra.mxu0 0.0
        %4806 = vmatpush.msra.mxu0 0.0
        %4807 = vmatpush.msra.mxu0 0.0
        %4808 = vmatpush.msra.mxu0 0.0
        %4809 = vmatpush.msra.mxu0 0.0
        %4810 = vmatpush.msra.mxu0 0.0
        %4811 = vmatpush.msra.mxu0 %v4787
        %4812 = vmatpush.msra.mxu0 %v4786
        %4813 = vmatmul.f32.gmra.mxu0 %v4795
        %v4814 = vpop.f32.mrf.mxu0
        %v4815 = vadd.f32 0.0, %v4814
        %4816 = vdwg.mxu0
        %v4818 = vsel %vm1082, %v4783, 0
        %4820 = vmatpush.msra.mxu0 0.0
        %4821 = vmatpush.msra.mxu0 0.0
        %4822 = vmatpush.msra.mxu0 0.0
        %4823 = vmatpush.msra.mxu0 0.0
        %4824 = vmatpush.msra.mxu0 0.0
        %4825 = vmatpush.msra.mxu0 0.0
        %4826 = vmatpush.msra.mxu0 0.0
        %4827 = vmatpush.msra.mxu0 0.0
        %4828 = vmatpush.msra.mxu0 0.0
        %4829 = vmatpush.msra.mxu0 0.0
        %4830 = vmatpush.msra.mxu0 0.0
        %4831 = vmatpush.msra.mxu0 0.0
        %4832 = vmatpush.msra.mxu0 0.0
        %4833 = vmatpush.msra.mxu0 0.0
        %4834 = vmatpush.msra.mxu0 %v4789
        %4835 = vmatpush.msra.mxu0 %v4788
        %4836 = vmatmul.f32.gmra.mxu0 %v4818
        %v4837 = vpop.f32.mrf.mxu0
        %v4838 = vadd.f32 0.0, %v4837
        %4839 = vdwg.mxu0
        %v4841 = vsel %vm1082, %v4784, 0
        %4843 = vmatpush.msra.mxu0 0.0
        %4844 = vmatpush.msra.mxu0 0.0
        %4845 = vmatpush.msra.mxu0 0.0
        %4846 = vmatpush.msra.mxu0 0.0
        %4847 = vmatpush.msra.mxu0 0.0
        %4848 = vmatpush.msra.mxu0 0.0
        %4849 = vmatpush.msra.mxu0 0.0
        %4850 = vmatpush.msra.mxu0 0.0
        %4851 = vmatpush.msra.mxu0 0.0
        %4852 = vmatpush.msra.mxu0 0.0
        %4853 = vmatpush.msra.mxu0 0.0
        %4854 = vmatpush.msra.mxu0 0.0
        %4855 = vmatpush.msra.mxu0 0.0
        %4856 = vmatpush.msra.mxu0 0.0
        %4857 = vmatpush.msra.mxu0 %v4791
        %4858 = vmatpush.msra.mxu0 %v4790
        %4859 = vmatmul.f32.gmra.mxu0 %v4841
        %v4860 = vpop.f32.mrf.mxu0
        %v4861 = vadd.f32 0.0, %v4860
        %4862 = vdwg.mxu0
        %v4864 = vsel %vm1082, %v4785, 0
        %4866 = vmatpush.msra.mxu0 0.0
        %4867 = vmatpush.msra.mxu0 0.0
        %4868 = vmatpush.msra.mxu0 0.0
        %4869 = vmatpush.msra.mxu0 0.0
        %4870 = vmatpush.msra.mxu0 0.0
        %4871 = vmatpush.msra.mxu0 0.0
        %4872 = vmatpush.msra.mxu0 0.0
        %4873 = vmatpush.msra.mxu0 0.0
        %4874 = vmatpush.msra.mxu0 0.0
        %4875 = vmatpush.msra.mxu0 0.0
        %4876 = vmatpush.msra.mxu0 0.0
        %4877 = vmatpush.msra.mxu0 0.0
        %4878 = vmatpush.msra.mxu0 0.0
        %4879 = vmatpush.msra.mxu0 0.0
        %4880 = vmatpush.msra.mxu0 %v4793
        %4881 = vmatpush.msra.mxu0 %v4792
        %4882 = vmatmul.f32.gmra.mxu0 %v4864
        %v4883 = vpop.f32.mrf.mxu0
        %v4884 = vadd.f32 0.0, %v4883
        %4885 = vdwg.mxu0
        %v4886 = vadd.f32 %v4610, %v4815
        %v4887 = vadd.f32 %v4611, %v4838
        %v4888 = vadd.f32 %v4612, %v4861
        %v4889 = vadd.f32 %v4613, %v4884
        %4890 = vrot.lane.b32.xlu0 %v3399, 48
        %v4891 = vpop.permute.xlu0 %4890
        %4892 = vrot.lane.b32.xlu0 %v3466, 48
        %v4893 = vpop.permute.xlu0 %4892
        %4894 = vrot.lane.b32.xlu0 %v3469, 48
        %v4895 = vpop.permute.xlu0 %4894
        %v4896 = vsel %vm1082, %v4891, 0
        %v4898 = vsel %vm1082, %v4893, 0
        %v4900 = vsel %vm1082, %v4895, 0
        %4902 = vmatpush.xpose.msra.mxu0 0.0
        %4903 = vmatpush.xpose.msra.mxu0 0.0
        %4904 = vmatpush.xpose.msra.mxu0 0.0
        %4905 = vmatpush.xpose.msra.mxu0 0.0
        %4906 = vmatpush.xpose.msra.mxu0 0.0
        %4907 = vmatpush.xpose.msra.mxu0 0.0
        %4908 = vmatpush.xpose.msra.mxu0 0.0
        %4909 = vmatpush.xpose.msra.mxu0 0.0
        %4910 = vmatpush.xpose.msra.mxu0 0.0
        %4911 = vmatpush.xpose.msra.mxu0 0.0
        %4912 = vmatpush.xpose.msra.mxu0 0.0
        %4913 = vmatpush.xpose.msra.mxu0 0.0
        %4914 = vmatpush.xpose.msra.mxu0 0.0
        %4915 = vmatpush.xpose.msra.mxu0 0.0
        %4916 = vmatpush.xpose.msra.mxu0 %v4900
        %4917 = vmatpush.xpose.msra.mxu0 %v4898
        %4918 = vmatmul.f32.gmra.mxu0 %v4896
        %v4919 = vpop.f32.mrf.mxu0
        %v4920 = vadd.f32 0.0, %v4919
        %4921 = vdwg.mxu0
        %4922 = vrot.lane.b32.xlu0 %v3402, 48
        %v4923 = vpop.permute.xlu0 %4922
        %4924 = vrot.lane.b32.xlu0 %v3472, 48
        %v4925 = vpop.permute.xlu0 %4924
        %4926 = vrot.lane.b32.xlu0 %v3475, 48
        %v4927 = vpop.permute.xlu0 %4926
        %v4928 = vsel %vm1082, %v4923, 0
        %v4930 = vsel %vm1082, %v4925, 0
        %v4932 = vsel %vm1082, %v4927, 0
        %4934 = vmatpush.xpose.msra.mxu0 0.0
        %4935 = vmatpush.xpose.msra.mxu0 0.0
        %4936 = vmatpush.xpose.msra.mxu0 0.0
        %4937 = vmatpush.xpose.msra.mxu0 0.0
        %4938 = vmatpush.xpose.msra.mxu0 0.0
        %4939 = vmatpush.xpose.msra.mxu0 0.0
        %4940 = vmatpush.xpose.msra.mxu0 0.0
        %4941 = vmatpush.xpose.msra.mxu0 0.0
        %4942 = vmatpush.xpose.msra.mxu0 0.0
        %4943 = vmatpush.xpose.msra.mxu0 0.0
        %4944 = vmatpush.xpose.msra.mxu0 0.0
        %4945 = vmatpush.xpose.msra.mxu0 0.0
        %4946 = vmatpush.xpose.msra.mxu0 0.0
        %4947 = vmatpush.xpose.msra.mxu0 0.0
        %4948 = vmatpush.xpose.msra.mxu0 %v4932
        %4949 = vmatpush.xpose.msra.mxu0 %v4930
        %4950 = vmatmul.f32.gmra.mxu0 %v4928
        %v4951 = vpop.f32.mrf.mxu0
        %v4952 = vadd.f32 0.0, %v4951
        %4953 = vdwg.mxu0
        %4954 = vrot.lane.b32.xlu0 %v3405, 48
        %v4955 = vpop.permute.xlu0 %4954
        %4956 = vrot.lane.b32.xlu0 %v3478, 48
        %v4957 = vpop.permute.xlu0 %4956
        %4958 = vrot.lane.b32.xlu0 %v3481, 48
        %v4959 = vpop.permute.xlu0 %4958
        %v4960 = vsel %vm1082, %v4955, 0
        %v4962 = vsel %vm1082, %v4957, 0
        %v4964 = vsel %vm1082, %v4959, 0
        %4966 = vmatpush.xpose.msra.mxu0 0.0
        %4967 = vmatpush.xpose.msra.mxu0 0.0
        %4968 = vmatpush.xpose.msra.mxu0 0.0
        %4969 = vmatpush.xpose.msra.mxu0 0.0
        %4970 = vmatpush.xpose.msra.mxu0 0.0
        %4971 = vmatpush.xpose.msra.mxu0 0.0
        %4972 = vmatpush.xpose.msra.mxu0 0.0
        %4973 = vmatpush.xpose.msra.mxu0 0.0
        %4974 = vmatpush.xpose.msra.mxu0 0.0
        %4975 = vmatpush.xpose.msra.mxu0 0.0
        %4976 = vmatpush.xpose.msra.mxu0 0.0
        %4977 = vmatpush.xpose.msra.mxu0 0.0
        %4978 = vmatpush.xpose.msra.mxu0 0.0
        %4979 = vmatpush.xpose.msra.mxu0 0.0
        %4980 = vmatpush.xpose.msra.mxu0 %v4964
        %4981 = vmatpush.xpose.msra.mxu0 %v4962
        %4982 = vmatmul.f32.gmra.mxu0 %v4960
        %v4983 = vpop.f32.mrf.mxu0
        %v4984 = vadd.f32 0.0, %v4983
        %4985 = vdwg.mxu0
        %4986 = vrot.lane.b32.xlu0 %v3408, 48
        %v4987 = vpop.permute.xlu0 %4986
        %4988 = vrot.lane.b32.xlu0 %v3484, 48
        %v4989 = vpop.permute.xlu0 %4988
        %4990 = vrot.lane.b32.xlu0 %v3487, 48
        %v4991 = vpop.permute.xlu0 %4990
        %v4992 = vsel %vm1082, %v4987, 0
        %v4994 = vsel %vm1082, %v4989, 0
        %v4996 = vsel %vm1082, %v4991, 0
        %4998 = vmatpush.xpose.msra.mxu0 0.0
        %4999 = vmatpush.xpose.msra.mxu0 0.0
        %5000 = vmatpush.xpose.msra.mxu0 0.0
        %5001 = vmatpush.xpose.msra.mxu0 0.0
        %5002 = vmatpush.xpose.msra.mxu0 0.0
        %5003 = vmatpush.xpose.msra.mxu0 0.0
        %5004 = vmatpush.xpose.msra.mxu0 0.0
        %5005 = vmatpush.xpose.msra.mxu0 0.0
        %5006 = vmatpush.xpose.msra.mxu0 0.0
        %5007 = vmatpush.xpose.msra.mxu0 0.0
        %5008 = vmatpush.xpose.msra.mxu0 0.0
        %5009 = vmatpush.xpose.msra.mxu0 0.0
        %5010 = vmatpush.xpose.msra.mxu0 0.0
        %5011 = vmatpush.xpose.msra.mxu0 0.0
        %5012 = vmatpush.xpose.msra.mxu0 %v4996
        %5013 = vmatpush.xpose.msra.mxu0 %v4994
        %5014 = vmatmul.f32.gmra.mxu0 %v4992
        %v5015 = vpop.f32.mrf.mxu0
        %v5016 = vadd.f32 0.0, %v5015
        %5017 = vdwg.mxu0
        %v5018 = vsel %vm1082, %v4920, -inf
        %5019 = vmax.xlane.f32.xlu0 %v5018
        %v5020 = vpop.xlane.xlu0 %5019
        %v5021 = vsel %vm1082, %v4952, -inf
        %5022 = vmax.xlane.f32.xlu0 %v5021
        %v5023 = vpop.xlane.xlu0 %5022
        %v5024 = vsel %vm1082, %v4984, -inf
        %5025 = vmax.xlane.f32.xlu0 %v5024
        %v5026 = vpop.xlane.xlu0 %5025
        %v5027 = vsel %vm1082, %v5016, -inf
        %5028 = vmax.xlane.f32.xlu0 %v5027
        %v5029 = vpop.xlane.xlu0 %5028
        %v5030 = vsub.f32 %v4920, %v5020
        %v5031 = vsub.f32 %v4952, %v5023
        %v5032 = vsub.f32 %v4984, %v5026
        %v5033 = vsub.f32 %v5016, %v5029
        %v5034 = vmul.f32 %v5030, 1.442695
        %v5035 = vpow.pop %v5034
        %v5036 = vmul.f32 %v5031, 1.442695
        %v5037 = vpow.pop %v5036
        %v5038 = vmul.f32 %v5032, 1.442695
        %v5039 = vpow.pop %v5038
        %v5040 = vmul.f32 %v5033, 1.442695
        %v5041 = vpow.pop %v5040
        %v5042 = vsel %vm1082, %v5035, 0.0
        %5043 = vadd.xlane.f32.xlu0 %v5042
        %v5044 = vpop.xlane.xlu0 %5043
        %v5045 = vsel %vm1082, %v5037, 0.0
        %5046 = vadd.xlane.f32.xlu0 %v5045
        %v5047 = vpop.xlane.xlu0 %5046
        %v5048 = vsel %vm1082, %v5039, 0.0
        %5049 = vadd.xlane.f32.xlu0 %v5048
        %v5050 = vpop.xlane.xlu0 %5049
        %v5051 = vsel %vm1082, %v5041, 0.0
        %5052 = vadd.xlane.f32.xlu0 %v5051
        %v5053 = vpop.xlane.xlu0 %5052
        %v5054 = vrcp.pop %v5044
        %v5055 = vrcp.pop %v5047
        %v5056 = vrcp.pop %v5050
        %v5057 = vrcp.pop %v5053
        %v5058 = vmul.f32 %v5035, %v5054
        %v5059 = vmul.f32 %v5037, %v5055
        %v5060 = vmul.f32 %v5039, %v5056
        %v5061 = vmul.f32 %v5041, %v5057
        %v5062 = vsel %vm2533, %v3507, 0.0
        %v5063 = vsel %vm2533, %v3510, 0.0
        %v5064 = vsel %vm2533, %v3513, 0.0
        %v5065 = vsel %vm2533, %v3516, 0.0
        %v5066 = vsel %vm2533, %v3519, 0.0
        %v5067 = vsel %vm2533, %v3522, 0.0
        %v5068 = vsel %vm2533, %v3525, 0.0
        %v5069 = vsel %vm2533, %v3528, 0.0
        %v5071 = vsel %vm1082, %v5058, 0
        %5073 = vmatpush.msra.mxu0 0.0
        %5074 = vmatpush.msra.mxu0 0.0
        %5075 = vmatpush.msra.mxu0 0.0
        %5076 = vmatpush.msra.mxu0 0.0
        %5077 = vmatpush.msra.mxu0 0.0
        %5078 = vmatpush.msra.mxu0 0.0
        %5079 = vmatpush.msra.mxu0 0.0
        %5080 = vmatpush.msra.mxu0 0.0
        %5081 = vmatpush.msra.mxu0 0.0
        %5082 = vmatpush.msra.mxu0 0.0
        %5083 = vmatpush.msra.mxu0 0.0
        %5084 = vmatpush.msra.mxu0 0.0
        %5085 = vmatpush.msra.mxu0 0.0
        %5086 = vmatpush.msra.mxu0 0.0
        %5087 = vmatpush.msra.mxu0 %v5063
        %5088 = vmatpush.msra.mxu0 %v5062
        %5089 = vmatmul.f32.gmra.mxu0 %v5071
        %v5090 = vpop.f32.mrf.mxu0
        %v5091 = vadd.f32 0.0, %v5090
        %5092 = vdwg.mxu0
        %v5094 = vsel %vm1082, %v5059, 0
        %5096 = vmatpush.msra.mxu0 0.0
        %5097 = vmatpush.msra.mxu0 0.0
        %5098 = vmatpush.msra.mxu0 0.0
        %5099 = vmatpush.msra.mxu0 0.0
        %5100 = vmatpush.msra.mxu0 0.0
        %5101 = vmatpush.msra.mxu0 0.0
        %5102 = vmatpush.msra.mxu0 0.0
        %5103 = vmatpush.msra.mxu0 0.0
        %5104 = vmatpush.msra.mxu0 0.0
        %5105 = vmatpush.msra.mxu0 0.0
        %5106 = vmatpush.msra.mxu0 0.0
        %5107 = vmatpush.msra.mxu0 0.0
        %5108 = vmatpush.msra.mxu0 0.0
        %5109 = vmatpush.msra.mxu0 0.0
        %5110 = vmatpush.msra.mxu0 %v5065
        %5111 = vmatpush.msra.mxu0 %v5064
        %5112 = vmatmul.f32.gmra.mxu0 %v5094
        %v5113 = vpop.f32.mrf.mxu0
        %v5114 = vadd.f32 0.0, %v5113
        %5115 = vdwg.mxu0
        %v5117 = vsel %vm1082, %v5060, 0
        %5119 = vmatpush.msra.mxu0 0.0
        %5120 = vmatpush.msra.mxu0 0.0
        %5121 = vmatpush.msra.mxu0 0.0
        %5122 = vmatpush.msra.mxu0 0.0
        %5123 = vmatpush.msra.mxu0 0.0
        %5124 = vmatpush.msra.mxu0 0.0
        %5125 = vmatpush.msra.mxu0 0.0
        %5126 = vmatpush.msra.mxu0 0.0
        %5127 = vmatpush.msra.mxu0 0.0
        %5128 = vmatpush.msra.mxu0 0.0
        %5129 = vmatpush.msra.mxu0 0.0
        %5130 = vmatpush.msra.mxu0 0.0
        %5131 = vmatpush.msra.mxu0 0.0
        %5132 = vmatpush.msra.mxu0 0.0
        %5133 = vmatpush.msra.mxu0 %v5067
        %5134 = vmatpush.msra.mxu0 %v5066
        %5135 = vmatmul.f32.gmra.mxu0 %v5117
        %v5136 = vpop.f32.mrf.mxu0
        %v5137 = vadd.f32 0.0, %v5136
        %5138 = vdwg.mxu0
        %v5140 = vsel %vm1082, %v5061, 0
        %5142 = vmatpush.msra.mxu0 0.0
        %5143 = vmatpush.msra.mxu0 0.0
        %5144 = vmatpush.msra.mxu0 0.0
        %5145 = vmatpush.msra.mxu0 0.0
        %5146 = vmatpush.msra.mxu0 0.0
        %5147 = vmatpush.msra.mxu0 0.0
        %5148 = vmatpush.msra.mxu0 0.0
        %5149 = vmatpush.msra.mxu0 0.0
        %5150 = vmatpush.msra.mxu0 0.0
        %5151 = vmatpush.msra.mxu0 0.0
        %5152 = vmatpush.msra.mxu0 0.0
        %5153 = vmatpush.msra.mxu0 0.0
        %5154 = vmatpush.msra.mxu0 0.0
        %5155 = vmatpush.msra.mxu0 0.0
        %5156 = vmatpush.msra.mxu0 %v5069
        %5157 = vmatpush.msra.mxu0 %v5068
        %5158 = vmatmul.f32.gmra.mxu0 %v5140
        %v5159 = vpop.f32.mrf.mxu0
        %v5160 = vadd.f32 0.0, %v5159
        %5161 = vdwg.mxu0
        %v5162 = vadd.f32 %v4886, %v5091
        %v5163 = vadd.f32 %v4887, %v5114
        %v5164 = vadd.f32 %v4888, %v5137
        %v5165 = vadd.f32 %v4889, %v5160
        %5166 = vrot.lane.b32.xlu0 %v3399, 32
        %v5167 = vpop.permute.xlu0 %5166
        %5168 = vrot.lane.b32.xlu0 %v3466, 32
        %v5169 = vpop.permute.xlu0 %5168
        %5170 = vrot.lane.b32.xlu0 %v3469, 32
        %v5171 = vpop.permute.xlu0 %5170
        %v5172 = vsel %vm1082, %v5167, 0
        %v5174 = vsel %vm1082, %v5169, 0
        %v5176 = vsel %vm1082, %v5171, 0
        %5178 = vmatpush.xpose.msra.mxu0 0.0
        %5179 = vmatpush.xpose.msra.mxu0 0.0
        %5180 = vmatpush.xpose.msra.mxu0 0.0
        %5181 = vmatpush.xpose.msra.mxu0 0.0
        %5182 = vmatpush.xpose.msra.mxu0 0.0
        %5183 = vmatpush.xpose.msra.mxu0 0.0
        %5184 = vmatpush.xpose.msra.mxu0 0.0
        %5185 = vmatpush.xpose.msra.mxu0 0.0
        %5186 = vmatpush.xpose.msra.mxu0 0.0
        %5187 = vmatpush.xpose.msra.mxu0 0.0
        %5188 = vmatpush.xpose.msra.mxu0 0.0
        %5189 = vmatpush.xpose.msra.mxu0 0.0
        %5190 = vmatpush.xpose.msra.mxu0 0.0
        %5191 = vmatpush.xpose.msra.mxu0 0.0
        %5192 = vmatpush.xpose.msra.mxu0 %v5176
        %5193 = vmatpush.xpose.msra.mxu0 %v5174
        %5194 = vmatmul.f32.gmra.mxu0 %v5172
        %v5195 = vpop.f32.mrf.mxu0
        %v5196 = vadd.f32 0.0, %v5195
        %5197 = vdwg.mxu0
        %5198 = vrot.lane.b32.xlu0 %v3402, 32
        %v5199 = vpop.permute.xlu0 %5198
        %5200 = vrot.lane.b32.xlu0 %v3472, 32
        %v5201 = vpop.permute.xlu0 %5200
        %5202 = vrot.lane.b32.xlu0 %v3475, 32
        %v5203 = vpop.permute.xlu0 %5202
        %v5204 = vsel %vm1082, %v5199, 0
        %v5206 = vsel %vm1082, %v5201, 0
        %v5208 = vsel %vm1082, %v5203, 0
        %5210 = vmatpush.xpose.msra.mxu0 0.0
        %5211 = vmatpush.xpose.msra.mxu0 0.0
        %5212 = vmatpush.xpose.msra.mxu0 0.0
        %5213 = vmatpush.xpose.msra.mxu0 0.0
        %5214 = vmatpush.xpose.msra.mxu0 0.0
        %5215 = vmatpush.xpose.msra.mxu0 0.0
        %5216 = vmatpush.xpose.msra.mxu0 0.0
        %5217 = vmatpush.xpose.msra.mxu0 0.0
        %5218 = vmatpush.xpose.msra.mxu0 0.0
        %5219 = vmatpush.xpose.msra.mxu0 0.0
        %5220 = vmatpush.xpose.msra.mxu0 0.0
        %5221 = vmatpush.xpose.msra.mxu0 0.0
        %5222 = vmatpush.xpose.msra.mxu0 0.0
        %5223 = vmatpush.xpose.msra.mxu0 0.0
        %5224 = vmatpush.xpose.msra.mxu0 %v5208
        %5225 = vmatpush.xpose.msra.mxu0 %v5206
        %5226 = vmatmul.f32.gmra.mxu0 %v5204
        %v5227 = vpop.f32.mrf.mxu0
        %v5228 = vadd.f32 0.0, %v5227
        %5229 = vdwg.mxu0
        %5230 = vrot.lane.b32.xlu0 %v3405, 32
        %v5231 = vpop.permute.xlu0 %5230
        %5232 = vrot.lane.b32.xlu0 %v3478, 32
        %v5233 = vpop.permute.xlu0 %5232
        %5234 = vrot.lane.b32.xlu0 %v3481, 32
        %v5235 = vpop.permute.xlu0 %5234
        %v5236 = vsel %vm1082, %v5231, 0
        %v5238 = vsel %vm1082, %v5233, 0
        %v5240 = vsel %vm1082, %v5235, 0
        %5242 = vmatpush.xpose.msra.mxu0 0.0
        %5243 = vmatpush.xpose.msra.mxu0 0.0
        %5244 = vmatpush.xpose.msra.mxu0 0.0
        %5245 = vmatpush.xpose.msra.mxu0 0.0
        %5246 = vmatpush.xpose.msra.mxu0 0.0
        %5247 = vmatpush.xpose.msra.mxu0 0.0
        %5248 = vmatpush.xpose.msra.mxu0 0.0
        %5249 = vmatpush.xpose.msra.mxu0 0.0
        %5250 = vmatpush.xpose.msra.mxu0 0.0
        %5251 = vmatpush.xpose.msra.mxu0 0.0
        %5252 = vmatpush.xpose.msra.mxu0 0.0
        %5253 = vmatpush.xpose.msra.mxu0 0.0
        %5254 = vmatpush.xpose.msra.mxu0 0.0
        %5255 = vmatpush.xpose.msra.mxu0 0.0
        %5256 = vmatpush.xpose.msra.mxu0 %v5240
        %5257 = vmatpush.xpose.msra.mxu0 %v5238
        %5258 = vmatmul.f32.gmra.mxu0 %v5236
        %v5259 = vpop.f32.mrf.mxu0
        %v5260 = vadd.f32 0.0, %v5259
        %5261 = vdwg.mxu0
        %5262 = vrot.lane.b32.xlu0 %v3408, 32
        %v5263 = vpop.permute.xlu0 %5262
        %5264 = vrot.lane.b32.xlu0 %v3484, 32
        %v5265 = vpop.permute.xlu0 %5264
        %5266 = vrot.lane.b32.xlu0 %v3487, 32
        %v5267 = vpop.permute.xlu0 %5266
        %v5268 = vsel %vm1082, %v5263, 0
        %v5270 = vsel %vm1082, %v5265, 0
        %v5272 = vsel %vm1082, %v5267, 0
        %5274 = vmatpush.xpose.msra.mxu0 0.0
        %5275 = vmatpush.xpose.msra.mxu0 0.0
        %5276 = vmatpush.xpose.msra.mxu0 0.0
        %5277 = vmatpush.xpose.msra.mxu0 0.0
        %5278 = vmatpush.xpose.msra.mxu0 0.0
        %5279 = vmatpush.xpose.msra.mxu0 0.0
        %5280 = vmatpush.xpose.msra.mxu0 0.0
        %5281 = vmatpush.xpose.msra.mxu0 0.0
        %5282 = vmatpush.xpose.msra.mxu0 0.0
        %5283 = vmatpush.xpose.msra.mxu0 0.0
        %5284 = vmatpush.xpose.msra.mxu0 0.0
        %5285 = vmatpush.xpose.msra.mxu0 0.0
        %5286 = vmatpush.xpose.msra.mxu0 0.0
        %5287 = vmatpush.xpose.msra.mxu0 0.0
        %5288 = vmatpush.xpose.msra.mxu0 %v5272
        %5289 = vmatpush.xpose.msra.mxu0 %v5270
        %5290 = vmatmul.f32.gmra.mxu0 %v5268
        %v5291 = vpop.f32.mrf.mxu0
        %v5292 = vadd.f32 0.0, %v5291
        %5293 = vdwg.mxu0
        %v5294 = vsel %vm1082, %v5196, -inf
        %5295 = vmax.xlane.f32.xlu0 %v5294
        %v5296 = vpop.xlane.xlu0 %5295
        %v5297 = vsel %vm1082, %v5228, -inf
        %5298 = vmax.xlane.f32.xlu0 %v5297
        %v5299 = vpop.xlane.xlu0 %5298
        %v5300 = vsel %vm1082, %v5260, -inf
        %5301 = vmax.xlane.f32.xlu0 %v5300
        %v5302 = vpop.xlane.xlu0 %5301
        %v5303 = vsel %vm1082, %v5292, -inf
        %5304 = vmax.xlane.f32.xlu0 %v5303
        %v5305 = vpop.xlane.xlu0 %5304
        %v5306 = vsub.f32 %v5196, %v5296
        %v5307 = vsub.f32 %v5228, %v5299
        %v5308 = vsub.f32 %v5260, %v5302
        %v5309 = vsub.f32 %v5292, %v5305
        %v5310 = vmul.f32 %v5306, 1.442695
        %v5311 = vpow.pop %v5310
        %v5312 = vmul.f32 %v5307, 1.442695
        %v5313 = vpow.pop %v5312
        %v5314 = vmul.f32 %v5308, 1.442695
        %v5315 = vpow.pop %v5314
        %v5316 = vmul.f32 %v5309, 1.442695
        %v5317 = vpow.pop %v5316
        %v5318 = vsel %vm1082, %v5311, 0.0
        %5319 = vadd.xlane.f32.xlu0 %v5318
        %v5320 = vpop.xlane.xlu0 %5319
        %v5321 = vsel %vm1082, %v5313, 0.0
        %5322 = vadd.xlane.f32.xlu0 %v5321
        %v5323 = vpop.xlane.xlu0 %5322
        %v5324 = vsel %vm1082, %v5315, 0.0
        %5325 = vadd.xlane.f32.xlu0 %v5324
        %v5326 = vpop.xlane.xlu0 %5325
        %v5327 = vsel %vm1082, %v5317, 0.0
        %5328 = vadd.xlane.f32.xlu0 %v5327
        %v5329 = vpop.xlane.xlu0 %5328
        %v5330 = vrcp.pop %v5320
        %v5331 = vrcp.pop %v5323
        %v5332 = vrcp.pop %v5326
        %v5333 = vrcp.pop %v5329
        %v5334 = vmul.f32 %v5311, %v5330
        %v5335 = vmul.f32 %v5313, %v5331
        %v5336 = vmul.f32 %v5315, %v5332
        %v5337 = vmul.f32 %v5317, %v5333
        %v5338 = vsel %vm2794, %v3507, 0.0
        %v5339 = vsel %vm2794, %v3510, 0.0
        %v5340 = vsel %vm2794, %v3513, 0.0
        %v5341 = vsel %vm2794, %v3516, 0.0
        %v5342 = vsel %vm2794, %v3519, 0.0
        %v5343 = vsel %vm2794, %v3522, 0.0
        %v5344 = vsel %vm2794, %v3525, 0.0
        %v5345 = vsel %vm2794, %v3528, 0.0
        %v5347 = vsel %vm1082, %v5334, 0
        %5349 = vmatpush.msra.mxu0 0.0
        %5350 = vmatpush.msra.mxu0 0.0
        %5351 = vmatpush.msra.mxu0 0.0
        %5352 = vmatpush.msra.mxu0 0.0
        %5353 = vmatpush.msra.mxu0 0.0
        %5354 = vmatpush.msra.mxu0 0.0
        %5355 = vmatpush.msra.mxu0 0.0
        %5356 = vmatpush.msra.mxu0 0.0
        %5357 = vmatpush.msra.mxu0 0.0
        %5358 = vmatpush.msra.mxu0 0.0
        %5359 = vmatpush.msra.mxu0 0.0
        %5360 = vmatpush.msra.mxu0 0.0
        %5361 = vmatpush.msra.mxu0 0.0
        %5362 = vmatpush.msra.mxu0 0.0
        %5363 = vmatpush.msra.mxu0 %v5339
        %5364 = vmatpush.msra.mxu0 %v5338
        %5365 = vmatmul.f32.gmra.mxu0 %v5347
        %v5366 = vpop.f32.mrf.mxu0
        %v5367 = vadd.f32 0.0, %v5366
        %5368 = vdwg.mxu0
        %v5370 = vsel %vm1082, %v5335, 0
        %5372 = vmatpush.msra.mxu0 0.0
        %5373 = vmatpush.msra.mxu0 0.0
        %5374 = vmatpush.msra.mxu0 0.0
        %5375 = vmatpush.msra.mxu0 0.0
        %5376 = vmatpush.msra.mxu0 0.0
        %5377 = vmatpush.msra.mxu0 0.0
        %5378 = vmatpush.msra.mxu0 0.0
        %5379 = vmatpush.msra.mxu0 0.0
        %5380 = vmatpush.msra.mxu0 0.0
        %5381 = vmatpush.msra.mxu0 0.0
        %5382 = vmatpush.msra.mxu0 0.0
        %5383 = vmatpush.msra.mxu0 0.0
        %5384 = vmatpush.msra.mxu0 0.0
        %5385 = vmatpush.msra.mxu0 0.0
        %5386 = vmatpush.msra.mxu0 %v5341
        %5387 = vmatpush.msra.mxu0 %v5340
        %5388 = vmatmul.f32.gmra.mxu0 %v5370
        %v5389 = vpop.f32.mrf.mxu0
        %v5390 = vadd.f32 0.0, %v5389
        %5391 = vdwg.mxu0
        %v5393 = vsel %vm1082, %v5336, 0
        %5395 = vmatpush.msra.mxu0 0.0
        %5396 = vmatpush.msra.mxu0 0.0
        %5397 = vmatpush.msra.mxu0 0.0
        %5398 = vmatpush.msra.mxu0 0.0
        %5399 = vmatpush.msra.mxu0 0.0
        %5400 = vmatpush.msra.mxu0 0.0
        %5401 = vmatpush.msra.mxu0 0.0
        %5402 = vmatpush.msra.mxu0 0.0
        %5403 = vmatpush.msra.mxu0 0.0
        %5404 = vmatpush.msra.mxu0 0.0
        %5405 = vmatpush.msra.mxu0 0.0
        %5406 = vmatpush.msra.mxu0 0.0
        %5407 = vmatpush.msra.mxu0 0.0
        %5408 = vmatpush.msra.mxu0 0.0
        %5409 = vmatpush.msra.mxu0 %v5343
        %5410 = vmatpush.msra.mxu0 %v5342
        %5411 = vmatmul.f32.gmra.mxu0 %v5393
        %v5412 = vpop.f32.mrf.mxu0
        %v5413 = vadd.f32 0.0, %v5412
        %5414 = vdwg.mxu0
        %v5416 = vsel %vm1082, %v5337, 0
        %5418 = vmatpush.msra.mxu0 0.0
        %5419 = vmatpush.msra.mxu0 0.0
        %5420 = vmatpush.msra.mxu0 0.0
        %5421 = vmatpush.msra.mxu0 0.0
        %5422 = vmatpush.msra.mxu0 0.0
        %5423 = vmatpush.msra.mxu0 0.0
        %5424 = vmatpush.msra.mxu0 0.0
        %5425 = vmatpush.msra.mxu0 0.0
        %5426 = vmatpush.msra.mxu0 0.0
        %5427 = vmatpush.msra.mxu0 0.0
        %5428 = vmatpush.msra.mxu0 0.0
        %5429 = vmatpush.msra.mxu0 0.0
        %5430 = vmatpush.msra.mxu0 0.0
        %5431 = vmatpush.msra.mxu0 0.0
        %5432 = vmatpush.msra.mxu0 %v5345
        %5433 = vmatpush.msra.mxu0 %v5344
        %5434 = vmatmul.f32.gmra.mxu0 %v5416
        %v5435 = vpop.f32.mrf.mxu0
        %v5436 = vadd.f32 0.0, %v5435
        %5437 = vdwg.mxu0
        %v5438 = vadd.f32 %v5162, %v5367
        %v5439 = vadd.f32 %v5163, %v5390
        %v5440 = vadd.f32 %v5164, %v5413
        %v5441 = vadd.f32 %v5165, %v5436
        %5442 = vrot.lane.b32.xlu0 %v3399, 16
        %v5443 = vpop.permute.xlu0 %5442
        %5444 = vrot.lane.b32.xlu0 %v3466, 16
        %v5445 = vpop.permute.xlu0 %5444
        %5446 = vrot.lane.b32.xlu0 %v3469, 16
        %v5447 = vpop.permute.xlu0 %5446
        %v5448 = vsel %vm1082, %v5443, 0
        %v5450 = vsel %vm1082, %v5445, 0
        %v5452 = vsel %vm1082, %v5447, 0
        %5454 = vmatpush.xpose.msra.mxu0 0.0
        %5455 = vmatpush.xpose.msra.mxu0 0.0
        %5456 = vmatpush.xpose.msra.mxu0 0.0
        %5457 = vmatpush.xpose.msra.mxu0 0.0
        %5458 = vmatpush.xpose.msra.mxu0 0.0
        %5459 = vmatpush.xpose.msra.mxu0 0.0
        %5460 = vmatpush.xpose.msra.mxu0 0.0
        %5461 = vmatpush.xpose.msra.mxu0 0.0
        %5462 = vmatpush.xpose.msra.mxu0 0.0
        %5463 = vmatpush.xpose.msra.mxu0 0.0
        %5464 = vmatpush.xpose.msra.mxu0 0.0
        %5465 = vmatpush.xpose.msra.mxu0 0.0
        %5466 = vmatpush.xpose.msra.mxu0 0.0
        %5467 = vmatpush.xpose.msra.mxu0 0.0
        %5468 = vmatpush.xpose.msra.mxu0 %v5452
        %5469 = vmatpush.xpose.msra.mxu0 %v5450
        %5470 = vmatmul.f32.gmra.mxu0 %v5448
        %v5471 = vpop.f32.mrf.mxu0
        %v5472 = vadd.f32 0.0, %v5471
        %5473 = vdwg.mxu0
        %5474 = vrot.lane.b32.xlu0 %v3402, 16
        %v5475 = vpop.permute.xlu0 %5474
        %5476 = vrot.lane.b32.xlu0 %v3472, 16
        %v5477 = vpop.permute.xlu0 %5476
        %5478 = vrot.lane.b32.xlu0 %v3475, 16
        %v5479 = vpop.permute.xlu0 %5478
        %v5480 = vsel %vm1082, %v5475, 0
        %v5482 = vsel %vm1082, %v5477, 0
        %v5484 = vsel %vm1082, %v5479, 0
        %5486 = vmatpush.xpose.msra.mxu0 0.0
        %5487 = vmatpush.xpose.msra.mxu0 0.0
        %5488 = vmatpush.xpose.msra.mxu0 0.0
        %5489 = vmatpush.xpose.msra.mxu0 0.0
        %5490 = vmatpush.xpose.msra.mxu0 0.0
        %5491 = vmatpush.xpose.msra.mxu0 0.0
        %5492 = vmatpush.xpose.msra.mxu0 0.0
        %5493 = vmatpush.xpose.msra.mxu0 0.0
        %5494 = vmatpush.xpose.msra.mxu0 0.0
        %5495 = vmatpush.xpose.msra.mxu0 0.0
        %5496 = vmatpush.xpose.msra.mxu0 0.0
        %5497 = vmatpush.xpose.msra.mxu0 0.0
        %5498 = vmatpush.xpose.msra.mxu0 0.0
        %5499 = vmatpush.xpose.msra.mxu0 0.0
        %5500 = vmatpush.xpose.msra.mxu0 %v5484
        %5501 = vmatpush.xpose.msra.mxu0 %v5482
        %5502 = vmatmul.f32.gmra.mxu0 %v5480
        %v5503 = vpop.f32.mrf.mxu0
        %v5504 = vadd.f32 0.0, %v5503
        %5505 = vdwg.mxu0
        %5506 = vrot.lane.b32.xlu0 %v3405, 16
        %v5507 = vpop.permute.xlu0 %5506
        %5508 = vrot.lane.b32.xlu0 %v3478, 16
        %v5509 = vpop.permute.xlu0 %5508
        %5510 = vrot.lane.b32.xlu0 %v3481, 16
        %v5511 = vpop.permute.xlu0 %5510
        %v5512 = vsel %vm1082, %v5507, 0
        %v5514 = vsel %vm1082, %v5509, 0
        %v5516 = vsel %vm1082, %v5511, 0
        %5518 = vmatpush.xpose.msra.mxu0 0.0
        %5519 = vmatpush.xpose.msra.mxu0 0.0
        %5520 = vmatpush.xpose.msra.mxu0 0.0
        %5521 = vmatpush.xpose.msra.mxu0 0.0
        %5522 = vmatpush.xpose.msra.mxu0 0.0
        %5523 = vmatpush.xpose.msra.mxu0 0.0
        %5524 = vmatpush.xpose.msra.mxu0 0.0
        %5525 = vmatpush.xpose.msra.mxu0 0.0
        %5526 = vmatpush.xpose.msra.mxu0 0.0
        %5527 = vmatpush.xpose.msra.mxu0 0.0
        %5528 = vmatpush.xpose.msra.mxu0 0.0
        %5529 = vmatpush.xpose.msra.mxu0 0.0
        %5530 = vmatpush.xpose.msra.mxu0 0.0
        %5531 = vmatpush.xpose.msra.mxu0 0.0
        %5532 = vmatpush.xpose.msra.mxu0 %v5516
        %5533 = vmatpush.xpose.msra.mxu0 %v5514
        %5534 = vmatmul.f32.gmra.mxu0 %v5512
        %v5535 = vpop.f32.mrf.mxu0
        %v5536 = vadd.f32 0.0, %v5535
        %5537 = vdwg.mxu0
        %5538 = vrot.lane.b32.xlu0 %v3408, 16
        %v5539 = vpop.permute.xlu0 %5538
        %5540 = vrot.lane.b32.xlu0 %v3484, 16
        %v5541 = vpop.permute.xlu0 %5540
        %5542 = vrot.lane.b32.xlu0 %v3487, 16
        %v5543 = vpop.permute.xlu0 %5542
        %v5544 = vsel %vm1082, %v5539, 0
        %v5546 = vsel %vm1082, %v5541, 0
        %v5548 = vsel %vm1082, %v5543, 0
        %5550 = vmatpush.xpose.msra.mxu0 0.0
        %5551 = vmatpush.xpose.msra.mxu0 0.0
        %5552 = vmatpush.xpose.msra.mxu0 0.0
        %5553 = vmatpush.xpose.msra.mxu0 0.0
        %5554 = vmatpush.xpose.msra.mxu0 0.0
        %5555 = vmatpush.xpose.msra.mxu0 0.0
        %5556 = vmatpush.xpose.msra.mxu0 0.0
        %5557 = vmatpush.xpose.msra.mxu0 0.0
        %5558 = vmatpush.xpose.msra.mxu0 0.0
        %5559 = vmatpush.xpose.msra.mxu0 0.0
        %5560 = vmatpush.xpose.msra.mxu0 0.0
        %5561 = vmatpush.xpose.msra.mxu0 0.0
        %5562 = vmatpush.xpose.msra.mxu0 0.0
        %5563 = vmatpush.xpose.msra.mxu0 0.0
        %5564 = vmatpush.xpose.msra.mxu0 %v5548
        %5565 = vmatpush.xpose.msra.mxu0 %v5546
        %5566 = vmatmul.f32.gmra.mxu0 %v5544
        %v5567 = vpop.f32.mrf.mxu0
        %v5568 = vadd.f32 0.0, %v5567
        %5569 = vdwg.mxu0
        %v5570 = vsel %vm1082, %v5472, -inf
        %5571 = vmax.xlane.f32.xlu0 %v5570
        %v5572 = vpop.xlane.xlu0 %5571
        %v5573 = vsel %vm1082, %v5504, -inf
        %5574 = vmax.xlane.f32.xlu0 %v5573
        %v5575 = vpop.xlane.xlu0 %5574
        %v5576 = vsel %vm1082, %v5536, -inf
        %5577 = vmax.xlane.f32.xlu0 %v5576
        %v5578 = vpop.xlane.xlu0 %5577
        %v5579 = vsel %vm1082, %v5568, -inf
        %5580 = vmax.xlane.f32.xlu0 %v5579
        %v5581 = vpop.xlane.xlu0 %5580
        %v5582 = vsub.f32 %v5472, %v5572
        %v5583 = vsub.f32 %v5504, %v5575
        %v5584 = vsub.f32 %v5536, %v5578
        %v5585 = vsub.f32 %v5568, %v5581
        %v5586 = vmul.f32 %v5582, 1.442695
        %v5587 = vpow.pop %v5586
        %v5588 = vmul.f32 %v5583, 1.442695
        %v5589 = vpow.pop %v5588
        %v5590 = vmul.f32 %v5584, 1.442695
        %v5591 = vpow.pop %v5590
        %v5592 = vmul.f32 %v5585, 1.442695
        %v5593 = vpow.pop %v5592
        %v5594 = vsel %vm1082, %v5587, 0.0
        %5595 = vadd.xlane.f32.xlu0 %v5594
        %v5596 = vpop.xlane.xlu0 %5595
        %v5597 = vsel %vm1082, %v5589, 0.0
        %5598 = vadd.xlane.f32.xlu0 %v5597
        %v5599 = vpop.xlane.xlu0 %5598
        %v5600 = vsel %vm1082, %v5591, 0.0
        %5601 = vadd.xlane.f32.xlu0 %v5600
        %v5602 = vpop.xlane.xlu0 %5601
        %v5603 = vsel %vm1082, %v5593, 0.0
        %5604 = vadd.xlane.f32.xlu0 %v5603
        %v5605 = vpop.xlane.xlu0 %5604
        %v5606 = vrcp.pop %v5596
        %v5607 = vrcp.pop %v5599
        %v5608 = vrcp.pop %v5602
        %v5609 = vrcp.pop %v5605
        %v5610 = vmul.f32 %v5587, %v5606
        %v5611 = vmul.f32 %v5589, %v5607
        %v5612 = vmul.f32 %v5591, %v5608
        %v5613 = vmul.f32 %v5593, %v5609
        %v5614 = vsel %vm3055, %v3507, 0.0
        %v5615 = vsel %vm3055, %v3510, 0.0
        %v5616 = vsel %vm3055, %v3513, 0.0
        %v5617 = vsel %vm3055, %v3516, 0.0
        %v5618 = vsel %vm3055, %v3519, 0.0
        %v5619 = vsel %vm3055, %v3522, 0.0
        %v5620 = vsel %vm3055, %v3525, 0.0
        %v5621 = vsel %vm3055, %v3528, 0.0
        %v5623 = vsel %vm1082, %v5610, 0
        %5625 = vmatpush.msra.mxu0 0.0
        %5626 = vmatpush.msra.mxu0 0.0
        %5627 = vmatpush.msra.mxu0 0.0
        %5628 = vmatpush.msra.mxu0 0.0
        %5629 = vmatpush.msra.mxu0 0.0
        %5630 = vmatpush.msra.mxu0 0.0
        %5631 = vmatpush.msra.mxu0 0.0
        %5632 = vmatpush.msra.mxu0 0.0
        %5633 = vmatpush.msra.mxu0 0.0
        %5634 = vmatpush.msra.mxu0 0.0
        %5635 = vmatpush.msra.mxu0 0.0
        %5636 = vmatpush.msra.mxu0 0.0
        %5637 = vmatpush.msra.mxu0 0.0
        %5638 = vmatpush.msra.mxu0 0.0
        %5639 = vmatpush.msra.mxu0 %v5615
        %5640 = vmatpush.msra.mxu0 %v5614
        %5641 = vmatmul.f32.gmra.mxu0 %v5623
        %v5642 = vpop.f32.mrf.mxu0
        %v5643 = vadd.f32 0.0, %v5642
        %5644 = vdwg.mxu0
        %v5646 = vsel %vm1082, %v5611, 0
        %5648 = vmatpush.msra.mxu0 0.0
        %5649 = vmatpush.msra.mxu0 0.0
        %5650 = vmatpush.msra.mxu0 0.0
        %5651 = vmatpush.msra.mxu0 0.0
        %5652 = vmatpush.msra.mxu0 0.0
        %5653 = vmatpush.msra.mxu0 0.0
        %5654 = vmatpush.msra.mxu0 0.0
        %5655 = vmatpush.msra.mxu0 0.0
        %5656 = vmatpush.msra.mxu0 0.0
        %5657 = vmatpush.msra.mxu0 0.0
        %5658 = vmatpush.msra.mxu0 0.0
        %5659 = vmatpush.msra.mxu0 0.0
        %5660 = vmatpush.msra.mxu0 0.0
        %5661 = vmatpush.msra.mxu0 0.0
        %5662 = vmatpush.msra.mxu0 %v5617
        %5663 = vmatpush.msra.mxu0 %v5616
        %5664 = vmatmul.f32.gmra.mxu0 %v5646
        %v5665 = vpop.f32.mrf.mxu0
        %v5666 = vadd.f32 0.0, %v5665
        %5667 = vdwg.mxu0
        %v5669 = vsel %vm1082, %v5612, 0
        %5671 = vmatpush.msra.mxu0 0.0
        %5672 = vmatpush.msra.mxu0 0.0
        %5673 = vmatpush.msra.mxu0 0.0
        %5674 = vmatpush.msra.mxu0 0.0
        %5675 = vmatpush.msra.mxu0 0.0
        %5676 = vmatpush.msra.mxu0 0.0
        %5677 = vmatpush.msra.mxu0 0.0
        %5678 = vmatpush.msra.mxu0 0.0
        %5679 = vmatpush.msra.mxu0 0.0
        %5680 = vmatpush.msra.mxu0 0.0
        %5681 = vmatpush.msra.mxu0 0.0
        %5682 = vmatpush.msra.mxu0 0.0
        %5683 = vmatpush.msra.mxu0 0.0
        %5684 = vmatpush.msra.mxu0 0.0
        %5685 = vmatpush.msra.mxu0 %v5619
        %5686 = vmatpush.msra.mxu0 %v5618
        %5687 = vmatmul.f32.gmra.mxu0 %v5669
        %v5688 = vpop.f32.mrf.mxu0
        %v5689 = vadd.f32 0.0, %v5688
        %5690 = vdwg.mxu0
        %v5692 = vsel %vm1082, %v5613, 0
        %5694 = vmatpush.msra.mxu0 0.0
        %5695 = vmatpush.msra.mxu0 0.0
        %5696 = vmatpush.msra.mxu0 0.0
        %5697 = vmatpush.msra.mxu0 0.0
        %5698 = vmatpush.msra.mxu0 0.0
        %5699 = vmatpush.msra.mxu0 0.0
        %5700 = vmatpush.msra.mxu0 0.0
        %5701 = vmatpush.msra.mxu0 0.0
        %5702 = vmatpush.msra.mxu0 0.0
        %5703 = vmatpush.msra.mxu0 0.0
        %5704 = vmatpush.msra.mxu0 0.0
        %5705 = vmatpush.msra.mxu0 0.0
        %5706 = vmatpush.msra.mxu0 0.0
        %5707 = vmatpush.msra.mxu0 0.0
        %5708 = vmatpush.msra.mxu0 %v5621
        %5709 = vmatpush.msra.mxu0 %v5620
        %5710 = vmatmul.f32.gmra.mxu0 %v5692
        %v5711 = vpop.f32.mrf.mxu0
        %v5712 = vadd.f32 0.0, %v5711
        %5713 = vdwg.mxu0
        %v5714 = vadd.f32 %v5438, %v5643
        %v5715 = vadd.f32 %v5439, %v5666
        %v5716 = vadd.f32 %v5440, %v5689
        %v5717 = vadd.f32 %v5441, %v5712
        %v5718 = vld [vmem:[#allocation17] sm:$0xff]
        %v5719 = vld [vmem:[#allocation17 + $0x8] sm:$0xff]
        %v5720 = vld [vmem:[#allocation17 + $0x10] sm:$0xff]
        %v5721 = vld [vmem:[#allocation17 + $0x18] sm:$0xff]
        %v5722 = vld [vmem:[#allocation17 + $0x20] sm:$0xff]
        %v5723 = vld [vmem:[#allocation17 + $0x28] sm:$0xff]
        %v5724 = vld [vmem:[#allocation17 + $0x30] sm:$0xff]
        %v5725 = vld [vmem:[#allocation17 + $0x38] sm:$0xff]
        %v5726 = vld [vmem:[#allocation17 + $0x40] sm:$0xff]
        %v5727 = vld [vmem:[#allocation17 + $0x48] sm:$0xff]
        %v5728 = vld [vmem:[#allocation17 + $0x50] sm:$0xff]
        %v5729 = vld [vmem:[#allocation17 + $0x58] sm:$0xff]
        %v5730 = vld [vmem:[#allocation17 + $0x60] sm:$0xff]
        %v5731 = vld [vmem:[#allocation17 + $0x68] sm:$0xff]
        %v5732 = vld [vmem:[#allocation17 + $0x70] sm:$0xff]
        %v5733 = vld [vmem:[#allocation17 + $0x78] sm:$0xff]
        %v5734 = vld [vmem:[%s15] sm:$0x1]
        %v5736 = vperm.slane %v5734, 0
        %5738 = vmatpush.msra.mxu0 %v5733
        %5739 = vmatpush.msra.mxu0 %v5732
        %5740 = vmatpush.msra.mxu0 %v5731
        %5741 = vmatpush.msra.mxu0 %v5730
        %5742 = vmatpush.msra.mxu0 %v5729
        %5743 = vmatpush.msra.mxu0 %v5728
        %5744 = vmatpush.msra.mxu0 %v5727
        %5745 = vmatpush.msra.mxu0 %v5726
        %5746 = vmatpush.msra.mxu0 %v5725
        %5747 = vmatpush.msra.mxu0 %v5724
        %5748 = vmatpush.msra.mxu0 %v5723
        %5749 = vmatpush.msra.mxu0 %v5722
        %5750 = vmatpush.msra.mxu0 %v5721
        %5751 = vmatpush.msra.mxu0 %v5720
        %5752 = vmatpush.msra.mxu0 %v5719
        %5753 = vmatpush.msra.mxu0 %v5718
        %5754 = vmatmul.f32.gmra.mxu0 %v5714
        %v5755 = vpop.f32.mrf.mxu0
        %v5756 = vadd.f32 %v5736, %v5755
        %5757 = vmatmul.f32.gmra.mxu0 %v5715
        %v5758 = vpop.f32.mrf.mxu0
        %v5759 = vadd.f32 %v5736, %v5758
        %5760 = vmatmul.f32.gmra.mxu0 %v5716
        %v5761 = vpop.f32.mrf.mxu0
        %v5762 = vadd.f32 %v5736, %v5761
        %5763 = vmatmul.f32.gmra.mxu0 %v5717
        %v5764 = vpop.f32.mrf.mxu0
        %v5765 = vadd.f32 %v5736, %v5764
        %5766 = vdwg.mxu0
        %v5767 = vadd.f32 %v3308, %v5756
        %v5768 = vadd.f32 %v3309, %v5759
        %v5769 = vadd.f32 %v3310, %v5762
        %v5770 = vadd.f32 %v3311, %v5765
        %5771 = vadd.xlane.f32.xlu0 %v5767
        %v5772 = vpop.xlane.xlu0 %5771
        %5773 = vadd.xlane.f32.xlu0 %v5768
        %v5774 = vpop.xlane.xlu0 %5773
        %5775 = vadd.xlane.f32.xlu0 %v5769
        %v5776 = vpop.xlane.xlu0 %5775
        %5777 = vadd.xlane.f32.xlu0 %v5770
        %v5778 = vpop.xlane.xlu0 %5777
        %v5779 = vmul.f32 %v5772, %v3223
        %v5780 = vmul.f32 %v5774, %v3223
        %v5781 = vmul.f32 %v5776, %v3223
        %v5782 = vmul.f32 %v5778, %v3223
        %v5783 = vsub.f32 %v5767, %v5779
        %v5784 = vsub.f32 %v5768, %v5780
        %v5785 = vsub.f32 %v5769, %v5781
        %v5786 = vsub.f32 %v5770, %v5782
        %v5787 = vmul.f32 %v5783, %v5783
        %v5788 = vmul.f32 %v5784, %v5784
        %v5789 = vmul.f32 %v5785, %v5785
        %v5790 = vmul.f32 %v5786, %v5786
        %5791 = vadd.xlane.f32.xlu0 %v5787
        %v5792 = vpop.xlane.xlu0 %5791
        %5793 = vadd.xlane.f32.xlu0 %v5788
        %v5794 = vpop.xlane.xlu0 %5793
        %5795 = vadd.xlane.f32.xlu0 %v5789
        %v5796 = vpop.xlane.xlu0 %5795
        %5797 = vadd.xlane.f32.xlu0 %v5790
        %v5798 = vpop.xlane.xlu0 %5797
        %v5799 = vmul.f32 %v5792, %v3223
        %v5800 = vmul.f32 %v5794, %v3223
        %v5801 = vmul.f32 %v5796, %v3223
        %v5802 = vmul.f32 %v5798, %v3223
        %v5803 = vadd.f32 %v5799, 1e-05
        %v5804 = vadd.f32 %v5800, 1e-05
        %v5805 = vadd.f32 %v5801, 1e-05
        %v5806 = vadd.f32 %v5802, 1e-05
        %v5807 = vrsqrt.pop %v5803
        %v5808 = vmul.f32 %v5807, %v5803
        %v5809 = vmul.f32 %v5808, %v5807
        %v5810 = vmul.f32 0.5, %v5809
        %v5811 = vsub.f32 1.5, %v5810
        %v5812 = vmul.f32 %v5807, %v5811
        %vm5813 = vweird.f32 %v5803
        %vm5814 = vweird.f32 %v5807
        %vm5815 = vmor %vm5813, %vm5814
        %v5816 = vsel %vm5815, %v5807, %v5812
        %v5817 = vrsqrt.pop %v5804
        %v5818 = vmul.f32 %v5817, %v5804
        %v5819 = vmul.f32 %v5818, %v5817
        %v5820 = vmul.f32 0.5, %v5819
        %v5821 = vsub.f32 1.5, %v5820
        %v5822 = vmul.f32 %v5817, %v5821
        %vm5823 = vweird.f32 %v5804
        %vm5824 = vweird.f32 %v5817
        %vm5825 = vmor %vm5823, %vm5824
        %v5826 = vsel %vm5825, %v5817, %v5822
        %v5827 = vrsqrt.pop %v5805
        %v5828 = vmul.f32 %v5827, %v5805
        %v5829 = vmul.f32 %v5828, %v5827
        %v5830 = vmul.f32 0.5, %v5829
        %v5831 = vsub.f32 1.5, %v5830
        %v5832 = vmul.f32 %v5827, %v5831
        %vm5833 = vweird.f32 %v5805
        %vm5834 = vweird.f32 %v5827
        %vm5835 = vmor %vm5833, %vm5834
        %v5836 = vsel %vm5835, %v5827, %v5832
        %v5837 = vrsqrt.pop %v5806
        %v5838 = vmul.f32 %v5837, %v5806
        %v5839 = vmul.f32 %v5838, %v5837
        %v5840 = vmul.f32 0.5, %v5839
        %v5841 = vsub.f32 1.5, %v5840
        %v5842 = vmul.f32 %v5837, %v5841
        %vm5843 = vweird.f32 %v5806
        %vm5844 = vweird.f32 %v5837
        %vm5845 = vmor %vm5843, %vm5844
        %v5846 = vsel %vm5845, %v5837, %v5842
        %v5847 = vmul.f32 %v5783, %v5816
        %v5848 = vmul.f32 %v5784, %v5826
        %v5849 = vmul.f32 %v5785, %v5836
        %v5850 = vmul.f32 %v5786, %v5846
        %v5851 = vld [vmem:[%s16] sm:$0x1]
        %v5853 = vperm.slane %v5851, 0
        %v5855 = vmul.f32 %v5847, %v5853
        %v5856 = vmul.f32 %v5848, %v5853
        %v5857 = vmul.f32 %v5849, %v5853
        %v5858 = vmul.f32 %v5850, %v5853
        %v5859 = vld [vmem:[%s17] sm:$0x1]
        %v5861 = vperm.slane %v5859, 0
        %v5863 = vadd.f32 %v5855, %v5861
        %v5864 = vadd.f32 %v5856, %v5861
        %v5865 = vadd.f32 %v5857, %v5861
        %v5866 = vadd.f32 %v5858, %v5861
        %v5867 = vld [vmem:[%s18] sm:$0xff]
        %v5868 = vld [vmem:[%s18 + $0x8] sm:$0xff]
        %v5869 = vld [vmem:[%s18 + $0x10] sm:$0xff]
        %v5870 = vld [vmem:[%s18 + $0x18] sm:$0xff]
        %v5871 = vld [vmem:[%s18 + $0x20] sm:$0xff]
        %v5872 = vld [vmem:[%s18 + $0x28] sm:$0xff]
        %v5873 = vld [vmem:[%s18 + $0x30] sm:$0xff]
        %v5874 = vld [vmem:[%s18 + $0x38] sm:$0xff]
        %v5875 = vld [vmem:[%s18 + $0x40] sm:$0xff]
        %v5876 = vld [vmem:[%s18 + $0x48] sm:$0xff]
        %v5877 = vld [vmem:[%s18 + $0x50] sm:$0xff]
        %v5878 = vld [vmem:[%s18 + $0x58] sm:$0xff]
        %v5879 = vld [vmem:[%s18 + $0x60] sm:$0xff]
        %v5880 = vld [vmem:[%s18 + $0x68] sm:$0xff]
        %v5881 = vld [vmem:[%s18 + $0x70] sm:$0xff]
        %v5882 = vld [vmem:[%s18 + $0x78] sm:$0xff]
        %v5883 = vld [vmem:[%s19] sm:$0x1]
        %v5885 = vperm.slane %v5883, 0
        %5887 = vmatpush.msra.mxu0 %v5882
        %5888 = vmatpush.msra.mxu0 %v5881
        %5889 = vmatpush.msra.mxu0 %v5880
        %5890 = vmatpush.msra.mxu0 %v5879
        %5891 = vmatpush.msra.mxu0 %v5878
        %5892 = vmatpush.msra.mxu0 %v5877
        %5893 = vmatpush.msra.mxu0 %v5876
        %5894 = vmatpush.msra.mxu0 %v5875
        %5895 = vmatpush.msra.mxu0 %v5874
        %5896 = vmatpush.msra.mxu0 %v5873
        %5897 = vmatpush.msra.mxu0 %v5872
        %5898 = vmatpush.msra.mxu0 %v5871
        %5899 = vmatpush.msra.mxu0 %v5870
        %5900 = vmatpush.msra.mxu0 %v5869
        %5901 = vmatpush.msra.mxu0 %v5868
        %5902 = vmatpush.msra.mxu0 %v5867
        %5903 = vmatmul.f32.gmra.mxu0 %v5863
        %v5904 = vpop.f32.mrf.mxu0
        %v5905 = vadd.f32 %v5885, %v5904
        %5906 = vmatmul.f32.gmra.mxu0 %v5864
        %v5907 = vpop.f32.mrf.mxu0
        %v5908 = vadd.f32 %v5885, %v5907
        %5909 = vmatmul.f32.gmra.mxu0 %v5865
        %v5910 = vpop.f32.mrf.mxu0
        %v5911 = vadd.f32 %v5885, %v5910
        %5912 = vmatmul.f32.gmra.mxu0 %v5866
        %v5913 = vpop.f32.mrf.mxu0
        %v5914 = vadd.f32 %v5885, %v5913
        %5915 = vdwg.mxu0
        %v5916 = vmax.f32 %v5905, 0.0
        %v5917 = vmax.f32 %v5908, 0.0
        %v5918 = vmax.f32 %v5911, 0.0
        %v5919 = vmax.f32 %v5914, 0.0
        %v5920 = vld [vmem:[%s20] sm:$0xff]
        %v5921 = vld [vmem:[%s20 + $0x8] sm:$0xff]
        %v5922 = vld [vmem:[%s20 + $0x10] sm:$0xff]
        %v5923 = vld [vmem:[%s20 + $0x18] sm:$0xff]
        %v5924 = vld [vmem:[%s20 + $0x20] sm:$0xff]
        %v5925 = vld [vmem:[%s20 + $0x28] sm:$0xff]
        %v5926 = vld [vmem:[%s20 + $0x30] sm:$0xff]
        %v5927 = vld [vmem:[%s20 + $0x38] sm:$0xff]
        %v5928 = vld [vmem:[%s20 + $0x40] sm:$0xff]
        %v5929 = vld [vmem:[%s20 + $0x48] sm:$0xff]
        %v5930 = vld [vmem:[%s21] sm:$0x1]
        %v5932 = vperm.slane %v5930, 0
        %vm5934 = vcmask 654336
        %v5936 = vsel %vm5934, %v5916, 0
        %v5939 = vsel %vm5934, %v5917, 0
        %v5942 = vsel %vm5934, %v5918, 0
        %v5945 = vsel %vm5934, %v5919, 0
        %5947 = vmatpush.msra.mxu0 0.0
        %5948 = vmatpush.msra.mxu0 0.0
        %5949 = vmatpush.msra.mxu0 0.0
        %5950 = vmatpush.msra.mxu0 0.0
        %5951 = vmatpush.msra.mxu0 0.0
        %5952 = vmatpush.msra.mxu0 0.0
        %5953 = vmatpush.msra.mxu0 %v5929
        %5954 = vmatpush.msra.mxu0 %v5928
        %5955 = vmatpush.msra.mxu0 %v5927
        %5956 = vmatpush.msra.mxu0 %v5926
        %5957 = vmatpush.msra.mxu0 %v5925
        %5958 = vmatpush.msra.mxu0 %v5924
        %5959 = vmatpush.msra.mxu0 %v5923
        %5960 = vmatpush.msra.mxu0 %v5922
        %5961 = vmatpush.msra.mxu0 %v5921
        %5962 = vmatpush.msra.mxu0 %v5920
        %5963 = vmatmul.f32.gmra.mxu0 %v5936
        %v5964 = vpop.f32.mrf.mxu0
        %v5965 = vadd.f32 %v5932, %v5964
        %5966 = vmatmul.f32.gmra.mxu0 %v5939
        %v5967 = vpop.f32.mrf.mxu0
        %v5968 = vadd.f32 %v5932, %v5967
        %5969 = vmatmul.f32.gmra.mxu0 %v5942
        %v5970 = vpop.f32.mrf.mxu0
        %v5971 = vadd.f32 %v5932, %v5970
        %5972 = vmatmul.f32.gmra.mxu0 %v5945
        %v5973 = vpop.f32.mrf.mxu0
        %v5974 = vadd.f32 %v5932, %v5973
        %5975 = vdwg.mxu0
        %v5976 = vadd.f32 %v5965, %v5863
        %v5977 = vadd.f32 %v5968, %v5864
        %v5978 = vadd.f32 %v5971, %v5865
        %v5979 = vadd.f32 %v5974, %v5866
        %5980 = vadd.xlane.f32.xlu0 %v5976
        %v5981 = vpop.xlane.xlu0 %5980
        %5982 = vadd.xlane.f32.xlu0 %v5977
        %v5983 = vpop.xlane.xlu0 %5982
        %5984 = vadd.xlane.f32.xlu0 %v5978
        %v5985 = vpop.xlane.xlu0 %5984
        %5986 = vadd.xlane.f32.xlu0 %v5979
        %v5987 = vpop.xlane.xlu0 %5986
        %v5988 = vmul.f32 %v5981, %v3223
        %v5989 = vmul.f32 %v5983, %v3223
        %v5990 = vmul.f32 %v5985, %v3223
        %v5991 = vmul.f32 %v5987, %v3223
        %v5992 = vsub.f32 %v5976, %v5988
        %v5993 = vsub.f32 %v5977, %v5989
        %v5994 = vsub.f32 %v5978, %v5990
        %v5995 = vsub.f32 %v5979, %v5991
        %v5996 = vmul.f32 %v5992, %v5992
        %v5997 = vmul.f32 %v5993, %v5993
        %v5998 = vmul.f32 %v5994, %v5994
        %v5999 = vmul.f32 %v5995, %v5995
        %6000 = vadd.xlane.f32.xlu0 %v5996
        %v6001 = vpop.xlane.xlu0 %6000
        %6002 = vadd.xlane.f32.xlu0 %v5997
        %v6003 = vpop.xlane.xlu0 %6002
        %6004 = vadd.xlane.f32.xlu0 %v5998
        %v6005 = vpop.xlane.xlu0 %6004
        %6006 = vadd.xlane.f32.xlu0 %v5999
        %v6007 = vpop.xlane.xlu0 %6006
        %v6008 = vmul.f32 %v6001, %v3223
        %v6009 = vmul.f32 %v6003, %v3223
        %v6010 = vmul.f32 %v6005, %v3223
        %v6011 = vmul.f32 %v6007, %v3223
        %v6012 = vadd.f32 %v6008, 1e-05
        %v6013 = vadd.f32 %v6009, 1e-05
        %v6014 = vadd.f32 %v6010, 1e-05
        %v6015 = vadd.f32 %v6011, 1e-05
        %v6016 = vrsqrt.pop %v6012
        %v6017 = vmul.f32 %v6016, %v6012
        %v6018 = vmul.f32 %v6017, %v6016
        %v6019 = vmul.f32 0.5, %v6018
        %v6020 = vsub.f32 1.5, %v6019
        %v6021 = vmul.f32 %v6016, %v6020
        %vm6022 = vweird.f32 %v6012
        %vm6023 = vweird.f32 %v6016
        %vm6024 = vmor %vm6022, %vm6023
        %v6025 = vsel %vm6024, %v6016, %v6021
        %v6026 = vrsqrt.pop %v6013
        %v6027 = vmul.f32 %v6026, %v6013
        %v6028 = vmul.f32 %v6027, %v6026
        %v6029 = vmul.f32 0.5, %v6028
        %v6030 = vsub.f32 1.5, %v6029
        %v6031 = vmul.f32 %v6026, %v6030
        %vm6032 = vweird.f32 %v6013
        %vm6033 = vweird.f32 %v6026
        %vm6034 = vmor %vm6032, %vm6033
        %v6035 = vsel %vm6034, %v6026, %v6031
        %v6036 = vrsqrt.pop %v6014
        %v6037 = vmul.f32 %v6036, %v6014
        %v6038 = vmul.f32 %v6037, %v6036
        %v6039 = vmul.f32 0.5, %v6038
        %v6040 = vsub.f32 1.5, %v6039
        %v6041 = vmul.f32 %v6036, %v6040
        %vm6042 = vweird.f32 %v6014
        %vm6043 = vweird.f32 %v6036
        %vm6044 = vmor %vm6042, %vm6043
        %v6045 = vsel %vm6044, %v6036, %v6041
        %v6046 = vrsqrt.pop %v6015
        %v6047 = vmul.f32 %v6046, %v6015
        %v6048 = vmul.f32 %v6047, %v6046
        %v6049 = vmul.f32 0.5, %v6048
        %v6050 = vsub.f32 1.5, %v6049
        %v6051 = vmul.f32 %v6046, %v6050
        %vm6052 = vweird.f32 %v6015
        %vm6053 = vweird.f32 %v6046
        %vm6054 = vmor %vm6052, %vm6053
        %v6055 = vsel %vm6054, %v6046, %v6051
        %v6056 = vmul.f32 %v5992, %v6025
        %v6057 = vmul.f32 %v5993, %v6035
        %v6058 = vmul.f32 %v5994, %v6045
        %v6059 = vmul.f32 %v5995, %v6055
        %v6060 = vmul.f32 %v6056, %v5853
        %v6061 = vmul.f32 %v6057, %v5853
        %v6062 = vmul.f32 %v6058, %v5853
        %v6063 = vmul.f32 %v6059, %v5853
        %v6064 = vadd.f32 %v6060, %v5861
        %v6065 = vadd.f32 %v6061, %v5861
        %v6066 = vadd.f32 %v6062, %v5861
        %v6067 = vadd.f32 %v6063, %v5861
        %6068 = vst [vmem:[%s866] sm:$0xff] %v6064
        %6069 = vst [vmem:[%s866 + $0x8] sm:$0xff] %v6065
        %6070 = vst [vmem:[%s866 + $0x10] sm:$0xff] %v6066
        %6071 = vst [vmem:[%s866 + $0x18] sm:$0xff] %v6067
        %s6072 = sand.u32 %s524, 1
        %s6073 = scalar_lea.sflag [#allocation4], %s6072
        %s6074 = sand.u32 %s524, 1
        %s6075 = smul.addr %s6074, 32
        %s6076 = scalar_lea.vmem [#allocation19], %s6075
        // Predicated region
        $region149: #{tpu_custom_call.1} parent=107 // pred_check
          %p6077 = pneg %p534
        $region150: #{tpu_custom_call.1} parent=107 // pred_check_branch
          %6079 = sbr.rel (%p6077) target = $region152
        $region151: #{tpu_custom_call.1} parent=107 // pred_region
          %s6080 = smul.u32 4, %s44
          %6082 = vsyncadd %s6073, 0
          %s6083 = smul.addr %s6080, 8
          %s6084 = scalar_lea.hbm %s22, %s6083
          %s6085 = sshll.u32 %s6076, 4
          %s6086 = int_to_ptr.vmem [resolvable:$true] %s6085
          %s6087 = sshll.u32 %s6084, 4
          %s6088 = int_to_ptr.hbm [resolvable:$true] %s6087
          %6093 = dma.vmem_to_hbm [thread:$0]  %s6086, 512, %s6088, %s6073, 128, 128, 8
        $region152: #{tpu_custom_call.1} parent=107 // pred_fallthru
          _
      $region108: #{tpu_custom_call.1} parent=5 // pred_fallthru
        _
      %p6094 = scmp.le.s32.totalorder 2, %s39
      // Predicated region
      $region153: #{tpu_custom_call.1} parent=5 // pred_check
        %p6095 = pneg %p6094
      $region154: #{tpu_custom_call.1} parent=5 // pred_check_branch
        %6097 = sbr.rel (%p6095) target = $region156
      $region155: #{tpu_custom_call.1} parent=5 // pred_region
        %s6098 = ssub.s32 %s39, 2
        // Predicated region
        $region157: #{tpu_custom_call.1} parent=155 // pred_check
          %p6099 = pneg %p540
        $region158: #{tpu_custom_call.1} parent=155 // pred_check_branch
          %6101 = sbr.rel (%p6099) target = $region160
        $region159: #{tpu_custom_call.1} parent=155 // pred_region
          %s6102 = sand.u32 %s525, 1
          %s6103 = scalar_lea.sflag [#allocation4], %s6102
          %s6104 = sand.u32 %s525, 1
          %s6105 = smul.addr %s6104, 32
          %s6106 = scalar_lea.vmem [#allocation19], %s6105
          %6108 = dma.done %s6103, 512
        $region160: #{tpu_custom_call.1} parent=155 // pred_fallthru
          _
      $region156: #{tpu_custom_call.1} parent=5 // pred_fallthru
        _
    $region6: #{tpu_custom_call.1} parent=1 // loop_footer
      %s43 = sadd.s32 1, %s39
    $region7: #{tpu_custom_call.1} parent=1 // loop_footer_branch
      %38 = sbr.rel target = $region3
    $region8: #{tpu_custom_call.1} parent=1 // loop_exit
      _
    %6109 = vsyncpa [#allocation3], 1
    %s6110 = scalar_lea.sflag [#allocation3], 1
    %6111 = vsyncpa %s6110, 1
    %6112 = vsyncpa [#allocation6], 1
    %6113 = vsyncpa [#allocation9], 1
    %6114 = vsyncpa [#allocation12], 1
    %6115 = vsyncpa [#allocation15], 1
    %6116 = vsyncpa [#allocation18], 1
    %6117 = vsyncpa [#allocation4], 1
    %s6118 = scalar_lea.sflag [#allocation4], 1
    %6119 = vsyncpa %s6118, 1

</llo_original>
